<compile_context>
chip_gen: v7x
topology: tpu7x:2x2x1
jax: 0.10.0
libtpu: 0.0.40
codegen_flags: <defaults>
</compile_context>

<pallas_src>
import math
from functools import partial

import jax
import jax.numpy as jnp
from jax.experimental import pallas as pl
from jax.experimental.pallas import tpu as pltpu

# ---- model config (TransformerEncoder8M defaults; small batch/seq demo) ----
VOCAB_SIZE = 32
INPUT_DIM = 128
HIDDEN_DIM = 256
OUTPUT_DIM = 2
NUM_HEADS = 8
HEAD_DIM = HIDDEN_DIM // NUM_HEADS
MLP_DIM = 1024
NUM_LAYERS = 5
TIME_DIM = 4 * HIDDEN_DIM
LN_EPS = 1e-5
WEIGHT_DTYPE = jnp.bfloat16   # matmul weights in HBM (halves weight traffic)


# --------------------------------------------------------------- kernel ----
def _fused_forward_kernel(
        x_ref, te_ref, pos_ref,
        in0_w, in0_b, in1_w, in1_b,
        t0_w, t0_b, t1_w, t1_b,
        ln_g, ln_b,
        wqkv, bqkv, wo, bo, n1_g, n1_b,
        w1, b1, w2, b2, n2_g, n2_b,
        out_w, out_b,
        o_ref, h_scr, *, eps):
    """One grid step = (batch element b, encoder layer l).

    l == 0            : also computes the embedding stage into h_scr.
    every l           : one post-LN TransformerEncoderLayer on h_scr.
    l == num_layers-1 : fused output-projection epilogue -> o_ref.
    """
    l = pl.program_id(1)

    def lin(x, w_ref, b_ref):
        # bf16 MXU matmul with f32 accumulation; bias add in f32.
        y = jnp.dot(x.astype(WEIGHT_DTYPE), w_ref[...],
                    preferred_element_type=jnp.float32)
        return y + b_ref[...]

    def layer_norm(x, g_ref, b_ref):
        mu = jnp.mean(x, axis=-1, keepdims=True)
        xc = x - mu
        var = jnp.mean(xc * xc, axis=-1, keepdims=True)
        return xc * jax.lax.rsqrt(var + eps) * g_ref[...] + b_ref[...]

    def gelu(x):
        # TODO(synk): tanh-form GELU (EUP-friendly) instead of PyTorch's exact
        # erf GELU; max abs deviation ~1e-3.
        c = math.sqrt(2.0 / math.pi)
        return 0.5 * x * (1.0 + jnp.tanh(c * (x + 0.044715 * x * x * x)))

    # ---- embedding stage: runs once per batch element (first layer step) ----
    @pl.when(l == 0)
    def _():
        xb = x_ref[...]                                     # [S, 128] f32
        h1 = jnp.tanh(lin(xb, in0_w, in0_b))                # input_proj[0..1]
        emb_x = lin(h1, in1_w, in1_b)                       # input_proj[2]
        e = lin(te_ref[...], t0_w, t0_b)                    # time_embed[0]
        e = e * (1.0 / (1.0 + jnp.exp(-e)))                 # SiLU
        emb = lin(e, t1_w, t1_b)                            # time_embed[2]
        z = pos_ref[...] + emb_x + emb                      # broadcast over S
        # dropout (p=0.01) is eval-mode identity.
        h_scr[...] = layer_norm(z, ln_g, ln_b)

    # ---- one post-LN (norm_first=False) encoder layer per grid step --------
    xcur = h_scr[...]                                       # [S, 256] f32
    qkv = lin(xcur, wqkv, bqkv)                             # [S, 768]

    scale = 1.0 / math.sqrt(HEAD_DIM)
    head_outs = []
    for h in range(NUM_HEADS):                              # static unroll
        q = qkv[:, h * HEAD_DIM:(h + 1) * HEAD_DIM]
        k = qkv[:, HIDDEN_DIM + h * HEAD_DIM:
                   HIDDEN_DIM + (h + 1) * HEAD_DIM]
        v = qkv[:, 2 * HIDDEN_DIM + h * HEAD_DIM:
                   2 * HIDDEN_DIM + (h + 1) * HEAD_DIM]
        s = jax.lax.dot_general(
            q.astype(WEIGHT_DTYPE), k.astype(WEIGHT_DTYPE),
            (((1,), (1,)), ((), ())),
            preferred_element_type=jnp.float32) * scale     # [S, S]
        s = s - jnp.max(s, axis=-1, keepdims=True)
        p = jnp.exp(s)
        p = p * pl.reciprocal(jnp.sum(p, axis=-1, keepdims=True), approx=True)
        head_outs.append(
            jnp.dot(p.astype(WEIGHT_DTYPE), v.astype(WEIGHT_DTYPE),
                    preferred_element_type=jnp.float32))    # [S, 32]
    attn = jnp.concatenate(head_outs, axis=-1)              # [S, 256]
    attn = lin(attn, wo, bo)                                # out_proj

    x1 = layer_norm(xcur + attn, n1_g, n1_b)                # residual + LN1
    hmid = gelu(lin(x1, w1, b1))                            # [S, 1024]
    ffn = lin(hmid, w2, b2)                                 # [S, 256]
    x2 = layer_norm(x1 + ffn, n2_g, n2_b)                   # residual + LN2
    h_scr[...] = x2

    # ---- fused output-projection epilogue (written once per batch) ---------
    @pl.when(l == pl.num_programs(1) - 1)
    def _():
        y = jnp.dot(x2, out_w[...], preferred_element_type=jnp.float32)
        o_ref[...] = (y + out_b[...]).astype(o_ref.dtype)


# ------------------------------------------------------ model (JAX glue) ----
def timestep_embedding(t, dim, max_period=10000.0):
    # TODO(synk): the PyTorch call passes a third positional `True` whose
    # meaning (repeat_only vs. max_period) depends on the source repo; the
    # standard sinusoidal embedding with max_period=10000 is used here.
    half = dim // 2
    freqs = jnp.exp(-math.log(max_period)
                    * jnp.arange(half, dtype=jnp.float32) / half)
    args = t.astype(jnp.float32)[:, None] * freqs[None, :]
    return jnp.concatenate([jnp.cos(args), jnp.sin(args)], axis=-1)


@jax.jit
def transformer_encoder_8m(params, x, t):
    """x: [B, S, INPUT_DIM] f32, t: [B] f32 -> [B, S, OUTPUT_DIM] f32."""
    bsz, seq, _ = x.shape
    te = timestep_embedding(t, INPUT_DIM).reshape(bsz, 1, INPUT_DIM)
    pos = params["pos_emb"][:seq]                           # [S, D]
    # TODO(synk): the PyTorch module stores self.emb_norm as a side effect; it
    # does not affect the returned output and is not reproduced here.

    S, D, IN, M = seq, HIDDEN_DIM, INPUT_DIM, MLP_DIM

    def const_spec(*shape):                 # fetched once, stays resident
        return pl.BlockSpec(shape, lambda b, l: (0,) * len(shape))

    def batch_spec(*shape):                 # leading batch dim, squeezed
        return pl.BlockSpec((None,) + shape,
                            lambda b, l: (b,) + (0,) * len(shape))

    def layer_spec(*shape):                 # leading layer dim, squeezed
        return pl.BlockSpec((None,) + shape,
                            lambda b, l: (l,) + (0,) * len(shape))

    in_specs = [
        batch_spec(S, IN),                                  # x
        batch_spec(1, IN),                                  # timestep emb
        const_spec(S, D),                                   # positional emb
        const_spec(IN, D), const_spec(1, D),                # input_proj[0]
        const_spec(D, D), const_spec(1, D),                 # input_proj[2]
        const_spec(IN, TIME_DIM), const_spec(1, TIME_DIM),  # time_embed[0]
        const_spec(TIME_DIM, D), const_spec(1, D),          # time_embed[2]
        const_spec(1, D), const_spec(1, D),                 # embedding LN
        layer_spec(D, 3 * D), layer_spec(1, 3 * D),         # qkv proj
        layer_spec(D, D), layer_spec(1, D),                 # attn out proj
        layer_spec(1, D), layer_spec(1, D),                 # norm1
        layer_spec(D, M), layer_spec(1, M),                 # ffn linear1
        layer_spec(M, D), layer_spec(1, D),                 # ffn linear2
        layer_spec(1, D), layer_spec(1, D),                 # norm2
        const_spec(D, OUTPUT_DIM), const_spec(1, OUTPUT_DIM),  # output_proj
    ]

    fused = pl.pallas_call(
        partial(_fused_forward_kernel, eps=LN_EPS),
        out_shape=jax.ShapeDtypeStruct((bsz, seq, OUTPUT_DIM), jnp.float32),
        grid_spec=pltpu.PrefetchScalarGridSpec(
            num_scalar_prefetch=0,
            grid=(bsz, NUM_LAYERS),
            in_specs=in_specs,
            out_specs=pl.BlockSpec((None, S, OUTPUT_DIM),
                                   lambda b, l: (b, 0, 0)),
            scratch_shapes=[pltpu.VMEM((S, D), jnp.float32)],
        ),
        compiler_params=pltpu.CompilerParams(
            dimension_semantics=("parallel", "arbitrary"),
            vmem_limit_bytes=32 * 1024 * 1024),
    )
    return fused(
        x, te, pos,
        params["in0_w"], params["in0_b"], params["in1_w"], params["in1_b"],
        params["t0_w"], params["t0_b"], params["t1_w"], params["t1_b"],
        params["ln_g"], params["ln_b"],
        params["wqkv"], params["bqkv"], params["wo"], params["bo"],
        params["n1_g"], params["n1_b"],
        params["w1"], params["b1"], params["w2"], params["b2"],
        params["n2_g"], params["n2_b"],
        params["out_w"], params["out_b"],
    )


# ------------------------------------------------------------ parameters ----
def init_params(key):
    keys = iter(jax.random.split(key, 32))

    def w(shape, scale=0.02, dtype=WEIGHT_DTYPE):
        return (scale * jax.random.normal(next(keys), shape)).astype(dtype)

    zeros = lambda shape: jnp.zeros(shape, jnp.float32)
    ones = lambda shape: jnp.ones(shape, jnp.float32)

    L, D, IN, M = NUM_LAYERS, HIDDEN_DIM, INPUT_DIM, MLP_DIM
    return {
        # input_proj: Linear -> Tanh -> Linear
        "in0_w": w((IN, D)), "in0_b": zeros((1, D)),
        "in1_w": w((D, D)), "in1_b": zeros((1, D)),
        # time_embed: Linear -> SiLU -> Linear
        "t0_w": w((IN, TIME_DIM)), "t0_b": zeros((1, TIME_DIM)),
        "t1_w": w((TIME_DIM, D)), "t1_b": zeros((1, D)),
        # position embeddings + embedding LayerNorm
        "pos_emb": w((VOCAB_SIZE, D), dtype=jnp.float32),
        "ln_g": ones((1, D)), "ln_b": zeros((1, D)),
        # stacked encoder-layer weights [NUM_LAYERS, ...]
        "wqkv": w((L, D, 3 * D)), "bqkv": zeros((L, 1, 3 * D)),
        "wo": w((L, D, D)), "bo": zeros((L, 1, D)),
        "n1_g": ones((L, 1, D)), "n1_b": zeros((L, 1, D)),
        "w1": w((L, D, M)), "b1": zeros((L, 1, M)),
        "w2": w((L, M, D)), "b2": zeros((L, 1, D)),
        "n2_g": ones((L, 1, D)), "n2_b": zeros((L, 1, D)),
        # output projection (f32: tiny one-shot epilogue matmul)
        "out_w": w((D, OUTPUT_DIM), dtype=jnp.float32),
        "out_b": zeros((1, OUTPUT_DIM)),
    }


if __name__ == "__main__":
    key = jax.random.PRNGKey(0)
    kp, kx, kt = jax.random.split(key, 3)

    params = init_params(kp)

    B, S = 2, 8
    x = jax.random.normal(kx, (B, S, INPUT_DIM), dtype=jnp.float32)
    t = jax.random.uniform(kt, (B,), dtype=jnp.float32) * 1000.0

    out = transformer_encoder_8m(params, x, t)
    out = jax.block_until_ready(out)
    assert out.shape == (B, S, OUTPUT_DIM), out.shape
    assert bool(jnp.all(jnp.isfinite(out)))
    print("KERNEL_OK")
</pallas_src>

<mosaic_0001>
module attributes {stable_mosaic.version = 11 : i64} {
  func.func @_fused_forward_kernel(%arg0: i32, %arg1: i32, %arg2: memref<1x8x128xf32, #tpu.memory_space<vmem>>, %arg3: memref<1x1x128xf32, #tpu.memory_space<vmem>>, %arg4: memref<8x256xf32, #tpu.memory_space<vmem>>, %arg5: memref<128x256xbf16, #tpu.memory_space<vmem>>, %arg6: memref<1x256xf32, #tpu.memory_space<vmem>>, %arg7: memref<256x256xbf16, #tpu.memory_space<vmem>>, %arg8: memref<1x256xf32, #tpu.memory_space<vmem>>, %arg9: memref<128x1024xbf16, #tpu.memory_space<vmem>>, %arg10: memref<1x1024xf32, #tpu.memory_space<vmem>>, %arg11: memref<1024x256xbf16, #tpu.memory_space<vmem>>, %arg12: memref<1x256xf32, #tpu.memory_space<vmem>>, %arg13: memref<1x256xf32, #tpu.memory_space<vmem>>, %arg14: memref<1x256xf32, #tpu.memory_space<vmem>>, %arg15: memref<1x256x768xbf16, #tpu.memory_space<vmem>>, %arg16: memref<1x1x768xf32, #tpu.memory_space<vmem>>, %arg17: memref<1x256x256xbf16, #tpu.memory_space<vmem>>, %arg18: memref<1x1x256xf32, #tpu.memory_space<vmem>>, %arg19: memref<1x1x256xf32, #tpu.memory_space<vmem>>, %arg20: memref<1x1x256xf32, #tpu.memory_space<vmem>>, %arg21: memref<1x256x1024xbf16, #tpu.memory_space<vmem>>, %arg22: memref<1x1x1024xf32, #tpu.memory_space<vmem>>, %arg23: memref<1x1024x256xbf16, #tpu.memory_space<vmem>>, %arg24: memref<1x1x256xf32, #tpu.memory_space<vmem>>, %arg25: memref<1x1x256xf32, #tpu.memory_space<vmem>>, %arg26: memref<1x1x256xf32, #tpu.memory_space<vmem>>, %arg27: memref<256x2xf32, #tpu.memory_space<vmem>>, %arg28: memref<1x2xf32, #tpu.memory_space<vmem>>, %arg29: memref<1x8x2xf32, #tpu.memory_space<vmem>>, %arg30: memref<8x256xf32, #tpu.memory_space<vmem>>) attributes {dimension_semantics = [#tpu.dimension_semantics<parallel>, #tpu.dimension_semantics<arbitrary>], iteration_bounds = array<i64: 2, 5>, scalar_prefetch = 0 : i64, scratch_operands = 1 : i64, tpu.core_type = #tpu.core_type<tc>, window_params = [{transform_indices = @transform_0, window_bounds = array<i64: 1, 8, 128>}, {transform_indices = @transform_1, window_bounds = array<i64: 1, 1, 128>}, {pipeline_mode = #tpu.pipeline_mode<synchronous>, transform_indices = @transform_2, window_bounds = array<i64: 8, 256>}, {pipeline_mode = #tpu.pipeline_mode<synchronous>, transform_indices = @transform_3, window_bounds = array<i64: 128, 256>}, {pipeline_mode = #tpu.pipeline_mode<synchronous>, transform_indices = @transform_4, window_bounds = array<i64: 1, 256>}, {pipeline_mode = #tpu.pipeline_mode<synchronous>, transform_indices = @transform_5, window_bounds = array<i64: 256, 256>}, {pipeline_mode = #tpu.pipeline_mode<synchronous>, transform_indices = @transform_6, window_bounds = array<i64: 1, 256>}, {pipeline_mode = #tpu.pipeline_mode<synchronous>, transform_indices = @transform_7, window_bounds = array<i64: 128, 1024>}, {pipeline_mode = #tpu.pipeline_mode<synchronous>, transform_indices = @transform_8, window_bounds = array<i64: 1, 1024>}, {pipeline_mode = #tpu.pipeline_mode<synchronous>, transform_indices = @transform_9, window_bounds = array<i64: 1024, 256>}, {pipeline_mode = #tpu.pipeline_mode<synchronous>, transform_indices = @transform_10, window_bounds = array<i64: 1, 256>}, {pipeline_mode = #tpu.pipeline_mode<synchronous>, transform_indices = @transform_11, window_bounds = array<i64: 1, 256>}, {pipeline_mode = #tpu.pipeline_mode<synchronous>, transform_indices = @transform_12, window_bounds = array<i64: 1, 256>}, {transform_indices = @transform_13, window_bounds = array<i64: 1, 256, 768>}, {transform_indices = @transform_14, window_bounds = array<i64: 1, 1, 768>}, {transform_indices = @transform_15, window_bounds = array<i64: 1, 256, 256>}, {transform_indices = @transform_16, window_bounds = array<i64: 1, 1, 256>}, {transform_indices = @transform_17, window_bounds = array<i64: 1, 1, 256>}, {transform_indices = @transform_18, window_bounds = array<i64: 1, 1, 256>}, {transform_indices = @transform_19, window_bounds = array<i64: 1, 256, 1024>}, {transform_indices = @transform_20, window_bounds = array<i64: 1, 1, 1024>}, {transform_indices = @transform_21, window_bounds = array<i64: 1, 1024, 256>}, {transform_indices = @transform_22, window_bounds = array<i64: 1, 1, 256>}, {transform_indices = @transform_23, window_bounds = array<i64: 1, 1, 256>}, {transform_indices = @transform_24, window_bounds = array<i64: 1, 1, 256>}, {pipeline_mode = #tpu.pipeline_mode<synchronous>, transform_indices = @transform_25, window_bounds = array<i64: 256, 2>}, {pipeline_mode = #tpu.pipeline_mode<synchronous>, transform_indices = @transform_26, window_bounds = array<i64: 1, 2>}, {transform_indices = @transform_27, window_bounds = array<i64: 1, 8, 2>}]} {
    %c0_i32 = arith.constant 0 : i32
    %0 = arith.cmpi eq, %arg1, %c0_i32 : i32
    %1 = arith.extui %0 : i1 to i32
    %c0_i32_0 = arith.constant 0 : i32
    %2 = arith.cmpi ne, %1, %c0_i32_0 : i32
    scf.if %2 {
      %c0_98 = arith.constant 0 : index
      %c0_99 = arith.constant 0 : index
      %c0_100 = arith.constant 0 : index
      %272 = vector.load %arg2[%c0_98, %c0_99, %c0_100] : memref<1x8x128xf32, #tpu.memory_space<vmem>>, vector<1x8x128xf32>
      %273 = vector.shape_cast %272 : vector<1x8x128xf32> to vector<8x128xf32>
      %274 = arith.truncf %273 : vector<8x128xf32> to vector<8x128xbf16>
      %c0_101 = arith.constant 0 : index
      %c0_102 = arith.constant 0 : index
      %275 = vector.load %arg5[%c0_101, %c0_102] : memref<128x256xbf16, #tpu.memory_space<vmem>>, vector<128x256xbf16>
      %cst_103 = arith.constant dense<0.000000e+00> : vector<8x256xf32>
      %276 = tpu.matmul %274, %275, %cst_103 {dimension_numbers = #tpu.dot_dimension_numbers<[1], [0], [0], [1], [0, 0, 1, 1], [], []>} : vector<8x128xbf16>, vector<128x256xbf16>, vector<8x256xf32> -> vector<8x256xf32>
      %c0_104 = arith.constant 0 : index
      %c0_105 = arith.constant 0 : index
      %277 = vector.load %arg6[%c0_104, %c0_105] : memref<1x256xf32, #tpu.memory_space<vmem>>, vector<1x256xf32>
      %278 = vector.broadcast %277 : vector<1x256xf32> to vector<8x256xf32>
      %279 = arith.addf %276, %278 : vector<8x256xf32>
      %280 = math.tanh %279 : vector<8x256xf32>
      %281 = arith.truncf %280 : vector<8x256xf32> to vector<8x256xbf16>
      %c0_106 = arith.constant 0 : index
      %c0_107 = arith.constant 0 : index
      %282 = vector.load %arg7[%c0_106, %c0_107] : memref<256x256xbf16, #tpu.memory_space<vmem>>, vector<256x256xbf16>
      %cst_108 = arith.constant dense<0.000000e+00> : vector<8x256xf32>
      %283 = tpu.matmul %281, %282, %cst_108 {dimension_numbers = #tpu.dot_dimension_numbers<[1], [0], [0], [1], [0, 0, 1, 1], [], []>} : vector<8x256xbf16>, vector<256x256xbf16>, vector<8x256xf32> -> vector<8x256xf32>
      %c0_109 = arith.constant 0 : index
      %c0_110 = arith.constant 0 : index
      %284 = vector.load %arg8[%c0_109, %c0_110] : memref<1x256xf32, #tpu.memory_space<vmem>>, vector<1x256xf32>
      %285 = vector.broadcast %284 : vector<1x256xf32> to vector<8x256xf32>
      %286 = arith.addf %283, %285 : vector<8x256xf32>
      %c0_111 = arith.constant 0 : index
      %c0_112 = arith.constant 0 : index
      %c0_113 = arith.constant 0 : index
      %287 = vector.load %arg3[%c0_111, %c0_112, %c0_113] : memref<1x1x128xf32, #tpu.memory_space<vmem>>, vector<1x1x128xf32>
      %288 = vector.shape_cast %287 : vector<1x1x128xf32> to vector<1x128xf32>
      %289 = arith.truncf %288 : vector<1x128xf32> to vector<1x128xbf16>
      %c0_114 = arith.constant 0 : index
      %c0_115 = arith.constant 0 : index
      %290 = vector.load %arg9[%c0_114, %c0_115] : memref<128x1024xbf16, #tpu.memory_space<vmem>>, vector<128x1024xbf16>
      %cst_116 = arith.constant dense<0.000000e+00> : vector<1x1024xf32>
      %291 = tpu.matmul %289, %290, %cst_116 {dimension_numbers = #tpu.dot_dimension_numbers<[1], [0], [0], [1], [0, 0, 1, 1], [], []>} : vector<1x128xbf16>, vector<128x1024xbf16>, vector<1x1024xf32> -> vector<1x1024xf32>
      %c0_117 = arith.constant 0 : index
      %c0_118 = arith.constant 0 : index
      %292 = vector.load %arg10[%c0_117, %c0_118] : memref<1x1024xf32, #tpu.memory_space<vmem>>, vector<1x1024xf32>
      %293 = arith.addf %291, %292 : vector<1x1024xf32>
      %cst_119 = arith.constant 0.000000e+00 : f32
      %294 = vector.broadcast %cst_119 : f32 to vector<1x1024xf32>
      %295 = arith.subf %294, %293 : vector<1x1024xf32>
      %296 = math.exp %295 : vector<1x1024xf32>
      %cst_120 = arith.constant 1.000000e+00 : f32
      %297 = vector.broadcast %cst_120 : f32 to vector<1x1024xf32>
      %298 = arith.addf %297, %296 : vector<1x1024xf32>
      %cst_121 = arith.constant 1.000000e+00 : f32
      %299 = vector.broadcast %cst_121 : f32 to vector<1x1024xf32>
      %300 = arith.divf %299, %298 : vector<1x1024xf32>
      %301 = arith.mulf %293, %300 : vector<1x1024xf32>
      %302 = arith.truncf %301 : vector<1x1024xf32> to vector<1x1024xbf16>
      %c0_122 = arith.constant 0 : index
      %c0_123 = arith.constant 0 : index
      %303 = vector.load %arg11[%c0_122, %c0_123] : memref<1024x256xbf16, #tpu.memory_space<vmem>>, vector<1024x256xbf16>
      %cst_124 = arith.constant dense<0.000000e+00> : vector<1x256xf32>
      %304 = tpu.matmul %302, %303, %cst_124 {dimension_numbers = #tpu.dot_dimension_numbers<[1], [0], [0], [1], [0, 0, 1, 1], [], []>} : vector<1x1024xbf16>, vector<1024x256xbf16>, vector<1x256xf32> -> vector<1x256xf32>
      %c0_125 = arith.constant 0 : index
      %c0_126 = arith.constant 0 : index
      %305 = vector.load %arg12[%c0_125, %c0_126] : memref<1x256xf32, #tpu.memory_space<vmem>>, vector<1x256xf32>
      %306 = arith.addf %304, %305 : vector<1x256xf32>
      %c0_127 = arith.constant 0 : index
      %c0_128 = arith.constant 0 : index
      %307 = vector.load %arg4[%c0_127, %c0_128] : memref<8x256xf32, #tpu.memory_space<vmem>>, vector<8x256xf32>
      %308 = arith.addf %307, %286 : vector<8x256xf32>
      %309 = vector.broadcast %306 : vector<1x256xf32> to vector<8x256xf32>
      %310 = arith.addf %308, %309 : vector<8x256xf32>
      %cst_129 = arith.constant dense<0.000000e+00> : vector<8xf32>
      %311 = vector.multi_reduction <add>, %310, %cst_129 [1] : vector<8x256xf32> to vector<8xf32>
      %312 = vector.shape_cast %311 : vector<8xf32> to vector<8x1xf32>
      %cst_130 = arith.constant 2.560000e+02 : f32
      %313 = vector.broadcast %cst_130 : f32 to vector<8x1xf32>
      %314 = arith.divf %312, %313 : vector<8x1xf32>
      %315 = vector.broadcast %314 : vector<8x1xf32> to vector<8x256xf32>
      %316 = arith.subf %310, %315 : vector<8x256xf32>
      %317 = arith.mulf %316, %316 : vector<8x256xf32>
      %cst_131 = arith.constant dense<0.000000e+00> : vector<8xf32>
      %318 = vector.multi_reduction <add>, %317, %cst_131 [1] : vector<8x256xf32> to vector<8xf32>
      %319 = vector.shape_cast %318 : vector<8xf32> to vector<8x1xf32>
      %cst_132 = arith.constant 2.560000e+02 : f32
      %320 = vector.broadcast %cst_132 : f32 to vector<8x1xf32>
      %321 = arith.divf %319, %320 : vector<8x1xf32>
      %cst_133 = arith.constant 9.99999974E-6 : f32
      %322 = vector.broadcast %cst_133 : f32 to vector<8x1xf32>
      %323 = arith.addf %321, %322 : vector<8x1xf32>
      %324 = math.rsqrt %323 : vector<8x1xf32>
      %325 = vector.broadcast %324 : vector<8x1xf32> to vector<8x256xf32>
      %326 = arith.mulf %316, %325 : vector<8x256xf32>
      %c0_134 = arith.constant 0 : index
      %c0_135 = arith.constant 0 : index
      %327 = vector.load %arg13[%c0_134, %c0_135] : memref<1x256xf32, #tpu.memory_space<vmem>>, vector<1x256xf32>
      %328 = vector.broadcast %327 : vector<1x256xf32> to vector<8x256xf32>
      %329 = arith.mulf %326, %328 : vector<8x256xf32>
      %c0_136 = arith.constant 0 : index
      %c0_137 = arith.constant 0 : index
      %330 = vector.load %arg14[%c0_136, %c0_137] : memref<1x256xf32, #tpu.memory_space<vmem>>, vector<1x256xf32>
      %331 = vector.broadcast %330 : vector<1x256xf32> to vector<8x256xf32>
      %332 = arith.addf %329, %331 : vector<8x256xf32>
      %c0_138 = arith.constant 0 : index
      %c0_139 = arith.constant 0 : index
      %333 = vector.load %arg30[%c0_138, %c0_139] : memref<8x256xf32, #tpu.memory_space<vmem>>, vector<8x256xf32>
      tpu.vector_store %arg30[%c0_138, %c0_139], %332 {strides = array<i32>} : memref<8x256xf32, #tpu.memory_space<vmem>>, vector<8x256xf32>,
    } else {
    }
    %c0 = arith.constant 0 : index
    %c0_1 = arith.constant 0 : index
    %3 = vector.load %arg30[%c0, %c0_1] : memref<8x256xf32, #tpu.memory_space<vmem>>, vector<8x256xf32>
    %4 = arith.truncf %3 : vector<8x256xf32> to vector<8x256xbf16>
    %c0_2 = arith.constant 0 : index
    %c0_3 = arith.constant 0 : index
    %c0_4 = arith.constant 0 : index
    %5 = vector.load %arg15[%c0_2, %c0_3, %c0_4] : memref<1x256x768xbf16, #tpu.memory_space<vmem>>, vector<1x256x768xbf16>
    %6 = vector.shape_cast %5 : vector<1x256x768xbf16> to vector<256x768xbf16>
    %cst = arith.constant dense<0.000000e+00> : vector<8x768xf32>
    %7 = tpu.matmul %4, %6, %cst {dimension_numbers = #tpu.dot_dimension_numbers<[1], [0], [0], [1], [0, 0, 1, 1], [], []>} : vector<8x256xbf16>, vector<256x768xbf16>, vector<8x768xf32> -> vector<8x768xf32>
    %c0_5 = arith.constant 0 : index
    %c0_6 = arith.constant 0 : index
    %c0_7 = arith.constant 0 : index
    %8 = vector.load %arg16[%c0_5, %c0_6, %c0_7] : memref<1x1x768xf32, #tpu.memory_space<vmem>>, vector<1x1x768xf32>
    %9 = vector.shape_cast %8 : vector<1x1x768xf32> to vector<1x768xf32>
    %10 = vector.broadcast %9 : vector<1x768xf32> to vector<8x768xf32>
    %11 = arith.addf %7, %10 : vector<8x768xf32>
    %12 = vector.extract_strided_slice %11 {offsets = [0, 0], sizes = [8, 32], strides = [1, 1]} : vector<8x768xf32> to vector<8x32xf32>
    %13 = vector.extract_strided_slice %11 {offsets = [0, 256], sizes = [8, 32], strides = [1, 1]} : vector<8x768xf32> to vector<8x32xf32>
    %14 = vector.extract_strided_slice %11 {offsets = [0, 512], sizes = [8, 32], strides = [1, 1]} : vector<8x768xf32> to vector<8x32xf32>
    %15 = arith.truncf %12 : vector<8x32xf32> to vector<8x32xbf16>
    %16 = arith.truncf %13 : vector<8x32xf32> to vector<8x32xbf16>
    %cst_8 = arith.constant dense<0.000000e+00> : vector<8x8xf32>
    %17 = tpu.matmul %15, %16, %cst_8 {dimension_numbers = #tpu.dot_dimension_numbers<[1], [1], [0], [0], [0, 0, 1, 0], [], []>} : vector<8x32xbf16>, vector<8x32xbf16>, vector<8x8xf32> -> vector<8x8xf32>
    %cst_9 = arith.constant 0.176776692 : f32
    %18 = vector.broadcast %cst_9 : f32 to vector<8x8xf32>
    %19 = arith.mulf %17, %18 : vector<8x8xf32>
    %cst_10 = arith.constant dense<0xFF800000> : vector<8xf32>
    %20 = vector.multi_reduction <maximumf>, %19, %cst_10 [1] : vector<8x8xf32> to vector<8xf32>
    %21 = vector.shape_cast %20 : vector<8xf32> to vector<8x1xf32>
    %22 = vector.broadcast %21 : vector<8x1xf32> to vector<8x8xf32>
    %23 = arith.subf %19, %22 : vector<8x8xf32>
    %24 = math.exp %23 : vector<8x8xf32>
    %cst_11 = arith.constant dense<0.000000e+00> : vector<8xf32>
    %25 = vector.multi_reduction <add>, %24, %cst_11 [1] : vector<8x8xf32> to vector<8xf32>
    %26 = vector.shape_cast %25 : vector<8xf32> to vector<8x1xf32>
    %27 = tpu.reciprocal %26 {approx = true} : vector<8x1xf32> -> vector<8x1xf32>
    %28 = vector.broadcast %27 : vector<8x1xf32> to vector<8x8xf32>
    %29 = arith.mulf %24, %28 : vector<8x8xf32>
    %30 = arith.truncf %29 : vector<8x8xf32> to vector<8x8xbf16>
    %31 = arith.truncf %14 : vector<8x32xf32> to vector<8x32xbf16>
    %cst_12 = arith.constant dense<0.000000e+00> : vector<8x32xf32>
    %32 = tpu.matmul %30, %31, %cst_12 {dimension_numbers = #tpu.dot_dimension_numbers<[1], [0], [0], [1], [0, 0, 1, 1], [], []>} : vector<8x8xbf16>, vector<8x32xbf16>, vector<8x32xf32> -> vector<8x32xf32>
    %33 = vector.extract_strided_slice %11 {offsets = [0, 32], sizes = [8, 32], strides = [1, 1]} : vector<8x768xf32> to vector<8x32xf32>
    %34 = vector.extract_strided_slice %11 {offsets = [0, 288], sizes = [8, 32], strides = [1, 1]} : vector<8x768xf32> to vector<8x32xf32>
    %35 = vector.extract_strided_slice %11 {offsets = [0, 544], sizes = [8, 32], strides = [1, 1]} : vector<8x768xf32> to vector<8x32xf32>
    %36 = arith.truncf %33 : vector<8x32xf32> to vector<8x32xbf16>
    %37 = arith.truncf %34 : vector<8x32xf32> to vector<8x32xbf16>
    %cst_13 = arith.constant dense<0.000000e+00> : vector<8x8xf32>
    %38 = tpu.matmul %36, %37, %cst_13 {dimension_numbers = #tpu.dot_dimension_numbers<[1], [1], [0], [0], [0, 0, 1, 0], [], []>} : vector<8x32xbf16>, vector<8x32xbf16>, vector<8x8xf32> -> vector<8x8xf32>
    %cst_14 = arith.constant 0.176776692 : f32
    %39 = vector.broadcast %cst_14 : f32 to vector<8x8xf32>
    %40 = arith.mulf %38, %39 : vector<8x8xf32>
    %cst_15 = arith.constant dense<0xFF800000> : vector<8xf32>
    %41 = vector.multi_reduction <maximumf>, %40, %cst_15 [1] : vector<8x8xf32> to vector<8xf32>
    %42 = vector.shape_cast %41 : vector<8xf32> to vector<8x1xf32>
    %43 = vector.broadcast %42 : vector<8x1xf32> to vector<8x8xf32>
    %44 = arith.subf %40, %43 : vector<8x8xf32>
    %45 = math.exp %44 : vector<8x8xf32>
    %cst_16 = arith.constant dense<0.000000e+00> : vector<8xf32>
    %46 = vector.multi_reduction <add>, %45, %cst_16 [1] : vector<8x8xf32> to vector<8xf32>
    %47 = vector.shape_cast %46 : vector<8xf32> to vector<8x1xf32>
    %48 = tpu.reciprocal %47 {approx = true} : vector<8x1xf32> -> vector<8x1xf32>
    %49 = vector.broadcast %48 : vector<8x1xf32> to vector<8x8xf32>
    %50 = arith.mulf %45, %49 : vector<8x8xf32>
    %51 = arith.truncf %50 : vector<8x8xf32> to vector<8x8xbf16>
    %52 = arith.truncf %35 : vector<8x32xf32> to vector<8x32xbf16>
    %cst_17 = arith.constant dense<0.000000e+00> : vector<8x32xf32>
    %53 = tpu.matmul %51, %52, %cst_17 {dimension_numbers = #tpu.dot_dimension_numbers<[1], [0], [0], [1], [0, 0, 1, 1], [], []>} : vector<8x8xbf16>, vector<8x32xbf16>, vector<8x32xf32> -> vector<8x32xf32>
    %54 = vector.extract_strided_slice %11 {offsets = [0, 64], sizes = [8, 32], strides = [1, 1]} : vector<8x768xf32> to vector<8x32xf32>
    %55 = vector.extract_strided_slice %11 {offsets = [0, 320], sizes = [8, 32], strides = [1, 1]} : vector<8x768xf32> to vector<8x32xf32>
    %56 = vector.extract_strided_slice %11 {offsets = [0, 576], sizes = [8, 32], strides = [1, 1]} : vector<8x768xf32> to vector<8x32xf32>
    %57 = arith.truncf %54 : vector<8x32xf32> to vector<8x32xbf16>
    %58 = arith.truncf %55 : vector<8x32xf32> to vector<8x32xbf16>
    %cst_18 = arith.constant dense<0.000000e+00> : vector<8x8xf32>
    %59 = tpu.matmul %57, %58, %cst_18 {dimension_numbers = #tpu.dot_dimension_numbers<[1], [1], [0], [0], [0, 0, 1, 0], [], []>} : vector<8x32xbf16>, vector<8x32xbf16>, vector<8x8xf32> -> vector<8x8xf32>
    %cst_19 = arith.constant 0.176776692 : f32
    %60 = vector.broadcast %cst_19 : f32 to vector<8x8xf32>
    %61 = arith.mulf %59, %60 : vector<8x8xf32>
    %cst_20 = arith.constant dense<0xFF800000> : vector<8xf32>
    %62 = vector.multi_reduction <maximumf>, %61, %cst_20 [1] : vector<8x8xf32> to vector<8xf32>
    %63 = vector.shape_cast %62 : vector<8xf32> to vector<8x1xf32>
    %64 = vector.broadcast %63 : vector<8x1xf32> to vector<8x8xf32>
    %65 = arith.subf %61, %64 : vector<8x8xf32>
    %66 = math.exp %65 : vector<8x8xf32>
    %cst_21 = arith.constant dense<0.000000e+00> : vector<8xf32>
    %67 = vector.multi_reduction <add>, %66, %cst_21 [1] : vector<8x8xf32> to vector<8xf32>
    %68 = vector.shape_cast %67 : vector<8xf32> to vector<8x1xf32>
    %69 = tpu.reciprocal %68 {approx = true} : vector<8x1xf32> -> vector<8x1xf32>
    %70 = vector.broadcast %69 : vector<8x1xf32> to vector<8x8xf32>
    %71 = arith.mulf %66, %70 : vector<8x8xf32>
    %72 = arith.truncf %71 : vector<8x8xf32> to vector<8x8xbf16>
    %73 = arith.truncf %56 : vector<8x32xf32> to vector<8x32xbf16>
    %cst_22 = arith.constant dense<0.000000e+00> : vector<8x32xf32>
    %74 = tpu.matmul %72, %73, %cst_22 {dimension_numbers = #tpu.dot_dimension_numbers<[1], [0], [0], [1], [0, 0, 1, 1], [], []>} : vector<8x8xbf16>, vector<8x32xbf16>, vector<8x32xf32> -> vector<8x32xf32>
    %75 = vector.extract_strided_slice %11 {offsets = [0, 96], sizes = [8, 32], strides = [1, 1]} : vector<8x768xf32> to vector<8x32xf32>
    %76 = vector.extract_strided_slice %11 {offsets = [0, 352], sizes = [8, 32], strides = [1, 1]} : vector<8x768xf32> to vector<8x32xf32>
    %77 = vector.extract_strided_slice %11 {offsets = [0, 608], sizes = [8, 32], strides = [1, 1]} : vector<8x768xf32> to vector<8x32xf32>
    %78 = arith.truncf %75 : vector<8x32xf32> to vector<8x32xbf16>
    %79 = arith.truncf %76 : vector<8x32xf32> to vector<8x32xbf16>
    %cst_23 = arith.constant dense<0.000000e+00> : vector<8x8xf32>
    %80 = tpu.matmul %78, %79, %cst_23 {dimension_numbers = #tpu.dot_dimension_numbers<[1], [1], [0], [0], [0, 0, 1, 0], [], []>} : vector<8x32xbf16>, vector<8x32xbf16>, vector<8x8xf32> -> vector<8x8xf32>
    %cst_24 = arith.constant 0.176776692 : f32
    %81 = vector.broadcast %cst_24 : f32 to vector<8x8xf32>
    %82 = arith.mulf %80, %81 : vector<8x8xf32>
    %cst_25 = arith.constant dense<0xFF800000> : vector<8xf32>
    %83 = vector.multi_reduction <maximumf>, %82, %cst_25 [1] : vector<8x8xf32> to vector<8xf32>
    %84 = vector.shape_cast %83 : vector<8xf32> to vector<8x1xf32>
    %85 = vector.broadcast %84 : vector<8x1xf32> to vector<8x8xf32>
    %86 = arith.subf %82, %85 : vector<8x8xf32>
    %87 = math.exp %86 : vector<8x8xf32>
    %cst_26 = arith.constant dense<0.000000e+00> : vector<8xf32>
    %88 = vector.multi_reduction <add>, %87, %cst_26 [1] : vector<8x8xf32> to vector<8xf32>
    %89 = vector.shape_cast %88 : vector<8xf32> to vector<8x1xf32>
    %90 = tpu.reciprocal %89 {approx = true} : vector<8x1xf32> -> vector<8x1xf32>
    %91 = vector.broadcast %90 : vector<8x1xf32> to vector<8x8xf32>
    %92 = arith.mulf %87, %91 : vector<8x8xf32>
    %93 = arith.truncf %92 : vector<8x8xf32> to vector<8x8xbf16>
    %94 = arith.truncf %77 : vector<8x32xf32> to vector<8x32xbf16>
    %cst_27 = arith.constant dense<0.000000e+00> : vector<8x32xf32>
    %95 = tpu.matmul %93, %94, %cst_27 {dimension_numbers = #tpu.dot_dimension_numbers<[1], [0], [0], [1], [0, 0, 1, 1], [], []>} : vector<8x8xbf16>, vector<8x32xbf16>, vector<8x32xf32> -> vector<8x32xf32>
    %96 = vector.extract_strided_slice %11 {offsets = [0, 128], sizes = [8, 32], strides = [1, 1]} : vector<8x768xf32> to vector<8x32xf32>
    %97 = vector.extract_strided_slice %11 {offsets = [0, 384], sizes = [8, 32], strides = [1, 1]} : vector<8x768xf32> to vector<8x32xf32>
    %98 = vector.extract_strided_slice %11 {offsets = [0, 640], sizes = [8, 32], strides = [1, 1]} : vector<8x768xf32> to vector<8x32xf32>
    %99 = arith.truncf %96 : vector<8x32xf32> to vector<8x32xbf16>
    %100 = arith.truncf %97 : vector<8x32xf32> to vector<8x32xbf16>
    %cst_28 = arith.constant dense<0.000000e+00> : vector<8x8xf32>
    %101 = tpu.matmul %99, %100, %cst_28 {dimension_numbers = #tpu.dot_dimension_numbers<[1], [1], [0], [0], [0, 0, 1, 0], [], []>} : vector<8x32xbf16>, vector<8x32xbf16>, vector<8x8xf32> -> vector<8x8xf32>
    %cst_29 = arith.constant 0.176776692 : f32
    %102 = vector.broadcast %cst_29 : f32 to vector<8x8xf32>
    %103 = arith.mulf %101, %102 : vector<8x8xf32>
    %cst_30 = arith.constant dense<0xFF800000> : vector<8xf32>
    %104 = vector.multi_reduction <maximumf>, %103, %cst_30 [1] : vector<8x8xf32> to vector<8xf32>
    %105 = vector.shape_cast %104 : vector<8xf32> to vector<8x1xf32>
    %106 = vector.broadcast %105 : vector<8x1xf32> to vector<8x8xf32>
    %107 = arith.subf %103, %106 : vector<8x8xf32>
    %108 = math.exp %107 : vector<8x8xf32>
    %cst_31 = arith.constant dense<0.000000e+00> : vector<8xf32>
    %109 = vector.multi_reduction <add>, %108, %cst_31 [1] : vector<8x8xf32> to vector<8xf32>
    %110 = vector.shape_cast %109 : vector<8xf32> to vector<8x1xf32>
    %111 = tpu.reciprocal %110 {approx = true} : vector<8x1xf32> -> vector<8x1xf32>
    %112 = vector.broadcast %111 : vector<8x1xf32> to vector<8x8xf32>
    %113 = arith.mulf %108, %112 : vector<8x8xf32>
    %114 = arith.truncf %113 : vector<8x8xf32> to vector<8x8xbf16>
    %115 = arith.truncf %98 : vector<8x32xf32> to vector<8x32xbf16>
    %cst_32 = arith.constant dense<0.000000e+00> : vector<8x32xf32>
    %116 = tpu.matmul %114, %115, %cst_32 {dimension_numbers = #tpu.dot_dimension_numbers<[1], [0], [0], [1], [0, 0, 1, 1], [], []>} : vector<8x8xbf16>, vector<8x32xbf16>, vector<8x32xf32> -> vector<8x32xf32>
    %117 = vector.extract_strided_slice %11 {offsets = [0, 160], sizes = [8, 32], strides = [1, 1]} : vector<8x768xf32> to vector<8x32xf32>
    %118 = vector.extract_strided_slice %11 {offsets = [0, 416], sizes = [8, 32], strides = [1, 1]} : vector<8x768xf32> to vector<8x32xf32>
    %119 = vector.extract_strided_slice %11 {offsets = [0, 672], sizes = [8, 32], strides = [1, 1]} : vector<8x768xf32> to vector<8x32xf32>
    %120 = arith.truncf %117 : vector<8x32xf32> to vector<8x32xbf16>
    %121 = arith.truncf %118 : vector<8x32xf32> to vector<8x32xbf16>
    %cst_33 = arith.constant dense<0.000000e+00> : vector<8x8xf32>
    %122 = tpu.matmul %120, %121, %cst_33 {dimension_numbers = #tpu.dot_dimension_numbers<[1], [1], [0], [0], [0, 0, 1, 0], [], []>} : vector<8x32xbf16>, vector<8x32xbf16>, vector<8x8xf32> -> vector<8x8xf32>
    %cst_34 = arith.constant 0.176776692 : f32
    %123 = vector.broadcast %cst_34 : f32 to vector<8x8xf32>
    %124 = arith.mulf %122, %123 : vector<8x8xf32>
    %cst_35 = arith.constant dense<0xFF800000> : vector<8xf32>
    %125 = vector.multi_reduction <maximumf>, %124, %cst_35 [1] : vector<8x8xf32> to vector<8xf32>
    %126 = vector.shape_cast %125 : vector<8xf32> to vector<8x1xf32>
    %127 = vector.broadcast %126 : vector<8x1xf32> to vector<8x8xf32>
    %128 = arith.subf %124, %127 : vector<8x8xf32>
    %129 = math.exp %128 : vector<8x8xf32>
    %cst_36 = arith.constant dense<0.000000e+00> : vector<8xf32>
    %130 = vector.multi_reduction <add>, %129, %cst_36 [1] : vector<8x8xf32> to vector<8xf32>
    %131 = vector.shape_cast %130 : vector<8xf32> to vector<8x1xf32>
    %132 = tpu.reciprocal %131 {approx = true} : vector<8x1xf32> -> vector<8x1xf32>
    %133 = vector.broadcast %132 : vector<8x1xf32> to vector<8x8xf32>
    %134 = arith.mulf %129, %133 : vector<8x8xf32>
    %135 = arith.truncf %134 : vector<8x8xf32> to vector<8x8xbf16>
    %136 = arith.truncf %119 : vector<8x32xf32> to vector<8x32xbf16>
    %cst_37 = arith.constant dense<0.000000e+00> : vector<8x32xf32>
    %137 = tpu.matmul %135, %136, %cst_37 {dimension_numbers = #tpu.dot_dimension_numbers<[1], [0], [0], [1], [0, 0, 1, 1], [], []>} : vector<8x8xbf16>, vector<8x32xbf16>, vector<8x32xf32> -> vector<8x32xf32>
    %138 = vector.extract_strided_slice %11 {offsets = [0, 192], sizes = [8, 32], strides = [1, 1]} : vector<8x768xf32> to vector<8x32xf32>
    %139 = vector.extract_strided_slice %11 {offsets = [0, 448], sizes = [8, 32], strides = [1, 1]} : vector<8x768xf32> to vector<8x32xf32>
    %140 = vector.extract_strided_slice %11 {offsets = [0, 704], sizes = [8, 32], strides = [1, 1]} : vector<8x768xf32> to vector<8x32xf32>
    %141 = arith.truncf %138 : vector<8x32xf32> to vector<8x32xbf16>
    %142 = arith.truncf %139 : vector<8x32xf32> to vector<8x32xbf16>
    %cst_38 = arith.constant dense<0.000000e+00> : vector<8x8xf32>
    %143 = tpu.matmul %141, %142, %cst_38 {dimension_numbers = #tpu.dot_dimension_numbers<[1], [1], [0], [0], [0, 0, 1, 0], [], []>} : vector<8x32xbf16>, vector<8x32xbf16>, vector<8x8xf32> -> vector<8x8xf32>
    %cst_39 = arith.constant 0.176776692 : f32
    %144 = vector.broadcast %cst_39 : f32 to vector<8x8xf32>
    %145 = arith.mulf %143, %144 : vector<8x8xf32>
    %cst_40 = arith.constant dense<0xFF800000> : vector<8xf32>
    %146 = vector.multi_reduction <maximumf>, %145, %cst_40 [1] : vector<8x8xf32> to vector<8xf32>
    %147 = vector.shape_cast %146 : vector<8xf32> to vector<8x1xf32>
    %148 = vector.broadcast %147 : vector<8x1xf32> to vector<8x8xf32>
    %149 = arith.subf %145, %148 : vector<8x8xf32>
    %150 = math.exp %149 : vector<8x8xf32>
    %cst_41 = arith.constant dense<0.000000e+00> : vector<8xf32>
    %151 = vector.multi_reduction <add>, %150, %cst_41 [1] : vector<8x8xf32> to vector<8xf32>
    %152 = vector.shape_cast %151 : vector<8xf32> to vector<8x1xf32>
    %153 = tpu.reciprocal %152 {approx = true} : vector<8x1xf32> -> vector<8x1xf32>
    %154 = vector.broadcast %153 : vector<8x1xf32> to vector<8x8xf32>
    %155 = arith.mulf %150, %154 : vector<8x8xf32>
    %156 = arith.truncf %155 : vector<8x8xf32> to vector<8x8xbf16>
    %157 = arith.truncf %140 : vector<8x32xf32> to vector<8x32xbf16>
    %cst_42 = arith.constant dense<0.000000e+00> : vector<8x32xf32>
    %158 = tpu.matmul %156, %157, %cst_42 {dimension_numbers = #tpu.dot_dimension_numbers<[1], [0], [0], [1], [0, 0, 1, 1], [], []>} : vector<8x8xbf16>, vector<8x32xbf16>, vector<8x32xf32> -> vector<8x32xf32>
    %159 = vector.extract_strided_slice %11 {offsets = [0, 224], sizes = [8, 32], strides = [1, 1]} : vector<8x768xf32> to vector<8x32xf32>
    %160 = vector.extract_strided_slice %11 {offsets = [0, 480], sizes = [8, 32], strides = [1, 1]} : vector<8x768xf32> to vector<8x32xf32>
    %161 = vector.extract_strided_slice %11 {offsets = [0, 736], sizes = [8, 32], strides = [1, 1]} : vector<8x768xf32> to vector<8x32xf32>
    %162 = arith.truncf %159 : vector<8x32xf32> to vector<8x32xbf16>
    %163 = arith.truncf %160 : vector<8x32xf32> to vector<8x32xbf16>
    %cst_43 = arith.constant dense<0.000000e+00> : vector<8x8xf32>
    %164 = tpu.matmul %162, %163, %cst_43 {dimension_numbers = #tpu.dot_dimension_numbers<[1], [1], [0], [0], [0, 0, 1, 0], [], []>} : vector<8x32xbf16>, vector<8x32xbf16>, vector<8x8xf32> -> vector<8x8xf32>
    %cst_44 = arith.constant 0.176776692 : f32
    %165 = vector.broadcast %cst_44 : f32 to vector<8x8xf32>
    %166 = arith.mulf %164, %165 : vector<8x8xf32>
    %cst_45 = arith.constant dense<0xFF800000> : vector<8xf32>
    %167 = vector.multi_reduction <maximumf>, %166, %cst_45 [1] : vector<8x8xf32> to vector<8xf32>
    %168 = vector.shape_cast %167 : vector<8xf32> to vector<8x1xf32>
    %169 = vector.broadcast %168 : vector<8x1xf32> to vector<8x8xf32>
    %170 = arith.subf %166, %169 : vector<8x8xf32>
    %171 = math.exp %170 : vector<8x8xf32>
    %cst_46 = arith.constant dense<0.000000e+00> : vector<8xf32>
    %172 = vector.multi_reduction <add>, %171, %cst_46 [1] : vector<8x8xf32> to vector<8xf32>
    %173 = vector.shape_cast %172 : vector<8xf32> to vector<8x1xf32>
    %174 = tpu.reciprocal %173 {approx = true} : vector<8x1xf32> -> vector<8x1xf32>
    %175 = vector.broadcast %174 : vector<8x1xf32> to vector<8x8xf32>
    %176 = arith.mulf %171, %175 : vector<8x8xf32>
    %177 = arith.truncf %176 : vector<8x8xf32> to vector<8x8xbf16>
    %178 = arith.truncf %161 : vector<8x32xf32> to vector<8x32xbf16>
    %cst_47 = arith.constant dense<0.000000e+00> : vector<8x32xf32>
    %179 = tpu.matmul %177, %178, %cst_47 {dimension_numbers = #tpu.dot_dimension_numbers<[1], [0], [0], [1], [0, 0, 1, 1], [], []>} : vector<8x8xbf16>, vector<8x32xbf16>, vector<8x32xf32> -> vector<8x32xf32>
    %180 = tpu.concatenate %32, %53, %74, %95, %116, %137, %158, %179 in 1 : vector<8x32xf32>, vector<8x32xf32>, vector<8x32xf32>, vector<8x32xf32>, vector<8x32xf32>, vector<8x32xf32>, vector<8x32xf32>, vector<8x32xf32> -> vector<8x256xf32>
    %181 = arith.truncf %180 : vector<8x256xf32> to vector<8x256xbf16>
    %c0_48 = arith.constant 0 : index
    %c0_49 = arith.constant 0 : index
    %c0_50 = arith.constant 0 : index
    %182 = vector.load %arg17[%c0_48, %c0_49, %c0_50] : memref<1x256x256xbf16, #tpu.memory_space<vmem>>, vector<1x256x256xbf16>
    %183 = vector.shape_cast %182 : vector<1x256x256xbf16> to vector<256x256xbf16>
    %cst_51 = arith.constant dense<0.000000e+00> : vector<8x256xf32>
    %184 = tpu.matmul %181, %183, %cst_51 {dimension_numbers = #tpu.dot_dimension_numbers<[1], [0], [0], [1], [0, 0, 1, 1], [], []>} : vector<8x256xbf16>, vector<256x256xbf16>, vector<8x256xf32> -> vector<8x256xf32>
    %c0_52 = arith.constant 0 : index
    %c0_53 = arith.constant 0 : index
    %c0_54 = arith.constant 0 : index
    %185 = vector.load %arg18[%c0_52, %c0_53, %c0_54] : memref<1x1x256xf32, #tpu.memory_space<vmem>>, vector<1x1x256xf32>
    %186 = vector.shape_cast %185 : vector<1x1x256xf32> to vector<1x256xf32>
    %187 = vector.broadcast %186 : vector<1x256xf32> to vector<8x256xf32>
    %188 = arith.addf %184, %187 : vector<8x256xf32>
    %189 = arith.addf %3, %188 : vector<8x256xf32>
    %cst_55 = arith.constant dense<0.000000e+00> : vector<8xf32>
    %190 = vector.multi_reduction <add>, %189, %cst_55 [1] : vector<8x256xf32> to vector<8xf32>
    %191 = vector.shape_cast %190 : vector<8xf32> to vector<8x1xf32>
    %cst_56 = arith.constant 2.560000e+02 : f32
    %192 = vector.broadcast %cst_56 : f32 to vector<8x1xf32>
    %193 = arith.divf %191, %192 : vector<8x1xf32>
    %194 = vector.broadcast %193 : vector<8x1xf32> to vector<8x256xf32>
    %195 = arith.subf %189, %194 : vector<8x256xf32>
    %196 = arith.mulf %195, %195 : vector<8x256xf32>
    %cst_57 = arith.constant dense<0.000000e+00> : vector<8xf32>
    %197 = vector.multi_reduction <add>, %196, %cst_57 [1] : vector<8x256xf32> to vector<8xf32>
    %198 = vector.shape_cast %197 : vector<8xf32> to vector<8x1xf32>
    %cst_58 = arith.constant 2.560000e+02 : f32
    %199 = vector.broadcast %cst_58 : f32 to vector<8x1xf32>
    %200 = arith.divf %198, %199 : vector<8x1xf32>
    %cst_59 = arith.constant 9.99999974E-6 : f32
    %201 = vector.broadcast %cst_59 : f32 to vector<8x1xf32>
    %202 = arith.addf %200, %201 : vector<8x1xf32>
    %203 = math.rsqrt %202 : vector<8x1xf32>
    %204 = vector.broadcast %203 : vector<8x1xf32> to vector<8x256xf32>
    %205 = arith.mulf %195, %204 : vector<8x256xf32>
    %c0_60 = arith.constant 0 : index
    %c0_61 = arith.constant 0 : index
    %c0_62 = arith.constant 0 : index
    %206 = vector.load %arg19[%c0_60, %c0_61, %c0_62] : memref<1x1x256xf32, #tpu.memory_space<vmem>>, vector<1x1x256xf32>
    %207 = vector.shape_cast %206 : vector<1x1x256xf32> to vector<1x256xf32>
    %208 = vector.broadcast %207 : vector<1x256xf32> to vector<8x256xf32>
    %209 = arith.mulf %205, %208 : vector<8x256xf32>
    %c0_63 = arith.constant 0 : index
    %c0_64 = arith.constant 0 : index
    %c0_65 = arith.constant 0 : index
    %210 = vector.load %arg20[%c0_63, %c0_64, %c0_65] : memref<1x1x256xf32, #tpu.memory_space<vmem>>, vector<1x1x256xf32>
    %211 = vector.shape_cast %210 : vector<1x1x256xf32> to vector<1x256xf32>
    %212 = vector.broadcast %211 : vector<1x256xf32> to vector<8x256xf32>
    %213 = arith.addf %209, %212 : vector<8x256xf32>
    %214 = arith.truncf %213 : vector<8x256xf32> to vector<8x256xbf16>
    %c0_66 = arith.constant 0 : index
    %c0_67 = arith.constant 0 : index
    %c0_68 = arith.constant 0 : index
    %215 = vector.load %arg21[%c0_66, %c0_67, %c0_68] : memref<1x256x1024xbf16, #tpu.memory_space<vmem>>, vector<1x256x1024xbf16>
    %216 = vector.shape_cast %215 : vector<1x256x1024xbf16> to vector<256x1024xbf16>
    %cst_69 = arith.constant dense<0.000000e+00> : vector<8x1024xf32>
    %217 = tpu.matmul %214, %216, %cst_69 {dimension_numbers = #tpu.dot_dimension_numbers<[1], [0], [0], [1], [0, 0, 1, 1], [], []>} : vector<8x256xbf16>, vector<256x1024xbf16>, vector<8x1024xf32> -> vector<8x1024xf32>
    %c0_70 = arith.constant 0 : index
    %c0_71 = arith.constant 0 : index
    %c0_72 = arith.constant 0 : index
    %218 = vector.load %arg22[%c0_70, %c0_71, %c0_72] : memref<1x1x1024xf32, #tpu.memory_space<vmem>>, vector<1x1x1024xf32>
    %219 = vector.shape_cast %218 : vector<1x1x1024xf32> to vector<1x1024xf32>
    %220 = vector.broadcast %219 : vector<1x1024xf32> to vector<8x1024xf32>
    %221 = arith.addf %217, %220 : vector<8x1024xf32>
    %cst_73 = arith.constant 5.000000e-01 : f32
    %222 = vector.broadcast %cst_73 : f32 to vector<8x1024xf32>
    %223 = arith.mulf %222, %221 : vector<8x1024xf32>
    %cst_74 = arith.constant 4.471500e-02 : f32
    %224 = vector.broadcast %cst_74 : f32 to vector<8x1024xf32>
    %225 = arith.mulf %224, %221 : vector<8x1024xf32>
    %226 = arith.mulf %225, %221 : vector<8x1024xf32>
    %227 = arith.mulf %226, %221 : vector<8x1024xf32>
    %228 = arith.addf %221, %227 : vector<8x1024xf32>
    %cst_75 = arith.constant 0.797884583 : f32
    %229 = vector.broadcast %cst_75 : f32 to vector<8x1024xf32>
    %230 = arith.mulf %229, %228 : vector<8x1024xf32>
    %231 = math.tanh %230 : vector<8x1024xf32>
    %cst_76 = arith.constant 1.000000e+00 : f32
    %232 = vector.broadcast %cst_76 : f32 to vector<8x1024xf32>
    %233 = arith.addf %232, %231 : vector<8x1024xf32>
    %234 = arith.mulf %223, %233 : vector<8x1024xf32>
    %235 = arith.truncf %234 : vector<8x1024xf32> to vector<8x1024xbf16>
    %c0_77 = arith.constant 0 : index
    %c0_78 = arith.constant 0 : index
    %c0_79 = arith.constant 0 : index
    %236 = vector.load %arg23[%c0_77, %c0_78, %c0_79] : memref<1x1024x256xbf16, #tpu.memory_space<vmem>>, vector<1x1024x256xbf16>
    %237 = vector.shape_cast %236 : vector<1x1024x256xbf16> to vector<1024x256xbf16>
    %cst_80 = arith.constant dense<0.000000e+00> : vector<8x256xf32>
    %238 = tpu.matmul %235, %237, %cst_80 {dimension_numbers = #tpu.dot_dimension_numbers<[1], [0], [0], [1], [0, 0, 1, 1], [], []>} : vector<8x1024xbf16>, vector<1024x256xbf16>, vector<8x256xf32> -> vector<8x256xf32>
    %c0_81 = arith.constant 0 : index
    %c0_82 = arith.constant 0 : index
    %c0_83 = arith.constant 0 : index
    %239 = vector.load %arg24[%c0_81, %c0_82, %c0_83] : memref<1x1x256xf32, #tpu.memory_space<vmem>>, vector<1x1x256xf32>
    %240 = vector.shape_cast %239 : vector<1x1x256xf32> to vector<1x256xf32>
    %241 = vector.broadcast %240 : vector<1x256xf32> to vector<8x256xf32>
    %242 = arith.addf %238, %241 : vector<8x256xf32>
    %243 = arith.addf %213, %242 : vector<8x256xf32>
    %cst_84 = arith.constant dense<0.000000e+00> : vector<8xf32>
    %244 = vector.multi_reduction <add>, %243, %cst_84 [1] : vector<8x256xf32> to vector<8xf32>
    %245 = vector.shape_cast %244 : vector<8xf32> to vector<8x1xf32>
    %cst_85 = arith.constant 2.560000e+02 : f32
    %246 = vector.broadcast %cst_85 : f32 to vector<8x1xf32>
    %247 = arith.divf %245, %246 : vector<8x1xf32>
    %248 = vector.broadcast %247 : vector<8x1xf32> to vector<8x256xf32>
    %249 = arith.subf %243, %248 : vector<8x256xf32>
    %250 = arith.mulf %249, %249 : vector<8x256xf32>
    %cst_86 = arith.constant dense<0.000000e+00> : vector<8xf32>
    %251 = vector.multi_reduction <add>, %250, %cst_86 [1] : vector<8x256xf32> to vector<8xf32>
    %252 = vector.shape_cast %251 : vector<8xf32> to vector<8x1xf32>
    %cst_87 = arith.constant 2.560000e+02 : f32
    %253 = vector.broadcast %cst_87 : f32 to vector<8x1xf32>
    %254 = arith.divf %252, %253 : vector<8x1xf32>
    %cst_88 = arith.constant 9.99999974E-6 : f32
    %255 = vector.broadcast %cst_88 : f32 to vector<8x1xf32>
    %256 = arith.addf %254, %255 : vector<8x1xf32>
    %257 = math.rsqrt %256 : vector<8x1xf32>
    %258 = vector.broadcast %257 : vector<8x1xf32> to vector<8x256xf32>
    %259 = arith.mulf %249, %258 : vector<8x256xf32>
    %c0_89 = arith.constant 0 : index
    %c0_90 = arith.constant 0 : index
    %c0_91 = arith.constant 0 : index
    %260 = vector.load %arg25[%c0_89, %c0_90, %c0_91] : memref<1x1x256xf32, #tpu.memory_space<vmem>>, vector<1x1x256xf32>
    %261 = vector.shape_cast %260 : vector<1x1x256xf32> to vector<1x256xf32>
    %262 = vector.broadcast %261 : vector<1x256xf32> to vector<8x256xf32>
    %263 = arith.mulf %259, %262 : vector<8x256xf32>
    %c0_92 = arith.constant 0 : index
    %c0_93 = arith.constant 0 : index
    %c0_94 = arith.constant 0 : index
    %264 = vector.load %arg26[%c0_92, %c0_93, %c0_94] : memref<1x1x256xf32, #tpu.memory_space<vmem>>, vector<1x1x256xf32>
    %265 = vector.shape_cast %264 : vector<1x1x256xf32> to vector<1x256xf32>
    %266 = vector.broadcast %265 : vector<1x256xf32> to vector<8x256xf32>
    %267 = arith.addf %263, %266 : vector<8x256xf32>
    %c0_95 = arith.constant 0 : index
    %c0_96 = arith.constant 0 : index
    %268 = vector.load %arg30[%c0_95, %c0_96] : memref<8x256xf32, #tpu.memory_space<vmem>>, vector<8x256xf32>
    tpu.vector_store %arg30[%c0_95, %c0_96], %267 {strides = array<i32>} : memref<8x256xf32, #tpu.memory_space<vmem>>, vector<8x256xf32>,
    %c4_i32 = arith.constant 4 : i32
    %269 = arith.cmpi eq, %arg1, %c4_i32 : i32
    %270 = arith.extui %269 : i1 to i32
    %c0_i32_97 = arith.constant 0 : i32
    %271 = arith.cmpi ne, %270, %c0_i32_97 : i32
    scf.if %271 {
      %c0_98 = arith.constant 0 : index
      %c0_99 = arith.constant 0 : index
      %272 = vector.load %arg27[%c0_98, %c0_99] : memref<256x2xf32, #tpu.memory_space<vmem>>, vector<256x2xf32>
      %cst_100 = arith.constant dense<0.000000e+00> : vector<8x2xf32>
      %273 = tpu.matmul %267, %272, %cst_100 {dimension_numbers = #tpu.dot_dimension_numbers<[1], [0], [0], [1], [0, 0, 1, 1], [], []>} : vector<8x256xf32>, vector<256x2xf32>, vector<8x2xf32> -> vector<8x2xf32>
      %c0_101 = arith.constant 0 : index
      %c0_102 = arith.constant 0 : index
      %274 = vector.load %arg28[%c0_101, %c0_102] : memref<1x2xf32, #tpu.memory_space<vmem>>, vector<1x2xf32>
      %275 = vector.broadcast %274 : vector<1x2xf32> to vector<8x2xf32>
      %276 = arith.addf %273, %275 : vector<8x2xf32>
      %c0_103 = arith.constant 0 : index
      %c0_104 = arith.constant 0 : index
      %c0_105 = arith.constant 0 : index
      %277 = vector.load %arg29[%c0_103, %c0_104, %c0_105] : memref<1x8x2xf32, #tpu.memory_space<vmem>>, vector<1x8x2xf32>
      %278 = vector.shape_cast %277 : vector<1x8x2xf32> to vector<8x2xf32>
      %279 = vector.shape_cast %276 : vector<8x2xf32> to vector<1x8x2xf32>
      tpu.vector_store %arg29[%c0_103, %c0_104, %c0_105], %279 {strides = array<i32>} : memref<1x8x2xf32, #tpu.memory_space<vmem>>, vector<1x8x2xf32>,
    } else {
    }
    return
  }
  func.func @transform_0(%arg0: i32, %arg1: i32) -> (i32, i32, i32) {
    %c0_i32 = arith.constant 0 : i32
    %c0_i32_0 = arith.constant 0 : i32
    %c0_i32_1 = arith.constant 0 : i32
    return %arg0, %c0_i32, %c0_i32_0 : i32, i32, i32
  }
  func.func @transform_1(%arg0: i32, %arg1: i32) -> (i32, i32, i32) {
    %c0_i32 = arith.constant 0 : i32
    %c0_i32_0 = arith.constant 0 : i32
    %c0_i32_1 = arith.constant 0 : i32
    return %arg0, %c0_i32, %c0_i32_0 : i32, i32, i32
  }
  func.func @transform_2(%arg0: i32, %arg1: i32) -> (i32, i32) {
    %c0_i32 = arith.constant 0 : i32
    %c0_i32_0 = arith.constant 0 : i32
    %c0_i32_1 = arith.constant 0 : i32
    return %c0_i32, %c0_i32_0 : i32, i32
  }
  func.func @transform_3(%arg0: i32, %arg1: i32) -> (i32, i32) {
    %c0_i32 = arith.constant 0 : i32
    %c0_i32_0 = arith.constant 0 : i32
    %c0_i32_1 = arith.constant 0 : i32
    return %c0_i32, %c0_i32_0 : i32, i32
  }
  func.func @transform_4(%arg0: i32, %arg1: i32) -> (i32, i32) {
    %c0_i32 = arith.constant 0 : i32
    %c0_i32_0 = arith.constant 0 : i32
    %c0_i32_1 = arith.constant 0 : i32
    return %c0_i32, %c0_i32_0 : i32, i32
  }
  func.func @transform_5(%arg0: i32, %arg1: i32) -> (i32, i32) {
    %c0_i32 = arith.constant 0 : i32
    %c0_i32_0 = arith.constant 0 : i32
    %c0_i32_1 = arith.constant 0 : i32
    return %c0_i32, %c0_i32_0 : i32, i32
  }
  func.func @transform_6(%arg0: i32, %arg1: i32) -> (i32, i32) {
    %c0_i32 = arith.constant 0 : i32
    %c0_i32_0 = arith.constant 0 : i32
    %c0_i32_1 = arith.constant 0 : i32
    return %c0_i32, %c0_i32_0 : i32, i32
  }
  func.func @transform_7(%arg0: i32, %arg1: i32) -> (i32, i32) {
    %c0_i32 = arith.constant 0 : i32
    %c0_i32_0 = arith.constant 0 : i32
    %c0_i32_1 = arith.constant 0 : i32
    return %c0_i32, %c0_i32_0 : i32, i32
  }
  func.func @transform_8(%arg0: i32, %arg1: i32) -> (i32, i32) {
    %c0_i32 = arith.constant 0 : i32
    %c0_i32_0 = arith.constant 0 : i32
    %c0_i32_1 = arith.constant 0 : i32
    return %c0_i32, %c0_i32_0 : i32, i32
  }
  func.func @transform_9(%arg0: i32, %arg1: i32) -> (i32, i32) {
    %c0_i32 = arith.constant 0 : i32
    %c0_i32_0 = arith.constant 0 : i32
    %c0_i32_1 = arith.constant 0 : i32
    return %c0_i32, %c0_i32_0 : i32, i32
  }
  func.func @transform_10(%arg0: i32, %arg1: i32) -> (i32, i32) {
    %c0_i32 = arith.constant 0 : i32
    %c0_i32_0 = arith.constant 0 : i32
    %c0_i32_1 = arith.constant 0 : i32
    return %c0_i32, %c0_i32_0 : i32, i32
  }
  func.func @transform_11(%arg0: i32, %arg1: i32) -> (i32, i32) {
    %c0_i32 = arith.constant 0 : i32
    %c0_i32_0 = arith.constant 0 : i32
    %c0_i32_1 = arith.constant 0 : i32
    return %c0_i32, %c0_i32_0 : i32, i32
  }
  func.func @transform_12(%arg0: i32, %arg1: i32) -> (i32, i32) {
    %c0_i32 = arith.constant 0 : i32
    %c0_i32_0 = arith.constant 0 : i32
    %c0_i32_1 = arith.constant 0 : i32
    return %c0_i32, %c0_i32_0 : i32, i32
  }
  func.func @transform_13(%arg0: i32, %arg1: i32) -> (i32, i32, i32) {
    %c0_i32 = arith.constant 0 : i32
    %c0_i32_0 = arith.constant 0 : i32
    %c0_i32_1 = arith.constant 0 : i32
    return %arg1, %c0_i32, %c0_i32_0 : i32, i32, i32
  }
  func.func @transform_14(%arg0: i32, %arg1: i32) -> (i32, i32, i32) {
    %c0_i32 = arith.constant 0 : i32
    %c0_i32_0 = arith.constant 0 : i32
    %c0_i32_1 = arith.constant 0 : i32
    return %arg1, %c0_i32, %c0_i32_0 : i32, i32, i32
  }
  func.func @transform_15(%arg0: i32, %arg1: i32) -> (i32, i32, i32) {
    %c0_i32 = arith.constant 0 : i32
    %c0_i32_0 = arith.constant 0 : i32
    %c0_i32_1 = arith.constant 0 : i32
    return %arg1, %c0_i32, %c0_i32_0 : i32, i32, i32
  }
  func.func @transform_16(%arg0: i32, %arg1: i32) -> (i32, i32, i32) {
    %c0_i32 = arith.constant 0 : i32
    %c0_i32_0 = arith.constant 0 : i32
    %c0_i32_1 = arith.constant 0 : i32
    return %arg1, %c0_i32, %c0_i32_0 : i32, i32, i32
  }
  func.func @transform_17(%arg0: i32, %arg1: i32) -> (i32, i32, i32) {
    %c0_i32 = arith.constant 0 : i32
    %c0_i32_0 = arith.constant 0 : i32
    %c0_i32_1 = arith.constant 0 : i32
    return %arg1, %c0_i32, %c0_i32_0 : i32, i32, i32
  }
  func.func @transform_18(%arg0: i32, %arg1: i32) -> (i32, i32, i32) {
    %c0_i32 = arith.constant 0 : i32
    %c0_i32_0 = arith.constant 0 : i32
    %c0_i32_1 = arith.constant 0 : i32
    return %arg1, %c0_i32, %c0_i32_0 : i32, i32, i32
  }
  func.func @transform_19(%arg0: i32, %arg1: i32) -> (i32, i32, i32) {
    %c0_i32 = arith.constant 0 : i32
    %c0_i32_0 = arith.constant 0 : i32
    %c0_i32_1 = arith.constant 0 : i32
    return %arg1, %c0_i32, %c0_i32_0 : i32, i32, i32
  }
  func.func @transform_20(%arg0: i32, %arg1: i32) -> (i32, i32, i32) {
    %c0_i32 = arith.constant 0 : i32
    %c0_i32_0 = arith.constant 0 : i32
    %c0_i32_1 = arith.constant 0 : i32
    return %arg1, %c0_i32, %c0_i32_0 : i32, i32, i32
  }
  func.func @transform_21(%arg0: i32, %arg1: i32) -> (i32, i32, i32) {
    %c0_i32 = arith.constant 0 : i32
    %c0_i32_0 = arith.constant 0 : i32
    %c0_i32_1 = arith.constant 0 : i32
    return %arg1, %c0_i32, %c0_i32_0 : i32, i32, i32
  }
  func.func @transform_22(%arg0: i32, %arg1: i32) -> (i32, i32, i32) {
    %c0_i32 = arith.constant 0 : i32
    %c0_i32_0 = arith.constant 0 : i32
    %c0_i32_1 = arith.constant 0 : i32
    return %arg1, %c0_i32, %c0_i32_0 : i32, i32, i32
  }
  func.func @transform_23(%arg0: i32, %arg1: i32) -> (i32, i32, i32) {
    %c0_i32 = arith.constant 0 : i32
    %c0_i32_0 = arith.constant 0 : i32
    %c0_i32_1 = arith.constant 0 : i32
    return %arg1, %c0_i32, %c0_i32_0 : i32, i32, i32
  }
  func.func @transform_24(%arg0: i32, %arg1: i32) -> (i32, i32, i32) {
    %c0_i32 = arith.constant 0 : i32
    %c0_i32_0 = arith.constant 0 : i32
    %c0_i32_1 = arith.constant 0 : i32
    return %arg1, %c0_i32, %c0_i32_0 : i32, i32, i32
  }
  func.func @transform_25(%arg0: i32, %arg1: i32) -> (i32, i32) {
    %c0_i32 = arith.constant 0 : i32
    %c0_i32_0 = arith.constant 0 : i32
    %c0_i32_1 = arith.constant 0 : i32
    return %c0_i32, %c0_i32_0 : i32, i32
  }
  func.func @transform_26(%arg0: i32, %arg1: i32) -> (i32, i32) {
    %c0_i32 = arith.constant 0 : i32
    %c0_i32_0 = arith.constant 0 : i32
    %c0_i32_1 = arith.constant 0 : i32
    return %c0_i32, %c0_i32_0 : i32, i32
  }
  func.func @transform_27(%arg0: i32, %arg1: i32) -> (i32, i32, i32) {
    %c0_i32 = arith.constant 0 : i32
    %c0_i32_0 = arith.constant 0 : i32
    %c0_i32_1 = arith.constant 0 : i32
    return %arg0, %c0_i32, %c0_i32_0 : i32, i32, i32
  }
}

</mosaic_0001>

<llo_original>
// kernel: transformer_encoder_8m.1
$region0: #{transformer_encoder_8m.1}
  #allocation0 [shape = 'u32[]', space=smem, size = 0x4, offset = 0x4, fixed_abs, tag = 'smem constant byte address 0x4 - core index']
  #allocation1 [shape = 'u32[144,128]{1,0:T(1,128)}', space=vmem, size = 0x12000, scoped, tag = 'internal scratch']
  #allocation2 [shape = 'f32[8,256]{1,0:T(8,128)}', space=vmem, size = 0x2000, scoped, tag = 'scratch operand']
  %s0 = inlined_call_operand.hbm [shape: f32[2,8,128], index: 0, kind: input, shape index: {}]
  %s1 = inlined_call_operand.vmem [shape: f32[2,1,128], index: 1, kind: input, shape index: {}]
  %s2 = inlined_call_operand.vmem [shape: f32[8,256], index: 2, kind: input, shape index: {}]
  %s3 = inlined_call_operand.hbm [shape: bf16[128,256], index: 3, kind: input, shape index: {}]
  %s4 = inlined_call_operand.hbm [shape: f32[1,256], index: 4, kind: input, shape index: {}]
  %s5 = inlined_call_operand.hbm [shape: bf16[256,256], index: 5, kind: input, shape index: {}]
  %s6 = inlined_call_operand.hbm [shape: f32[1,256], index: 6, kind: input, shape index: {}]
  %s7 = inlined_call_operand.hbm [shape: bf16[128,1024], index: 7, kind: input, shape index: {}]
  %s8 = inlined_call_operand.hbm [shape: f32[1,1024], index: 8, kind: input, shape index: {}]
  %s9 = inlined_call_operand.hbm [shape: bf16[1024,256], index: 9, kind: input, shape index: {}]
  %s10 = inlined_call_operand.hbm [shape: f32[1,256], index: 10, kind: input, shape index: {}]
  %s11 = inlined_call_operand.hbm [shape: f32[1,256], index: 11, kind: input, shape index: {}]
  %s12 = inlined_call_operand.hbm [shape: f32[1,256], index: 12, kind: input, shape index: {}]
  %s13 = inlined_call_operand.hbm [shape: bf16[5,256,768], index: 13, kind: input, shape index: {}]
  %s14 = inlined_call_operand.hbm [shape: f32[5,1,768], index: 14, kind: input, shape index: {}]
  %s15 = inlined_call_operand.hbm [shape: bf16[5,256,256], index: 15, kind: input, shape index: {}]
  %s16 = inlined_call_operand.hbm [shape: f32[5,1,256], index: 16, kind: input, shape index: {}]
  %s17 = inlined_call_operand.hbm [shape: f32[5,1,256], index: 17, kind: input, shape index: {}]
  %s18 = inlined_call_operand.hbm [shape: f32[5,1,256], index: 18, kind: input, shape index: {}]
  %s19 = inlined_call_operand.hbm [shape: bf16[5,256,1024], index: 19, kind: input, shape index: {}]
  %s20 = inlined_call_operand.hbm [shape: f32[5,1,1024], index: 20, kind: input, shape index: {}]
  %s21 = inlined_call_operand.hbm [shape: bf16[5,1024,256], index: 21, kind: input, shape index: {}]
  %s22 = inlined_call_operand.hbm [shape: f32[5,1,256], index: 22, kind: input, shape index: {}]
  %s23 = inlined_call_operand.hbm [shape: f32[5,1,256], index: 23, kind: input, shape index: {}]
  %s24 = inlined_call_operand.hbm [shape: f32[5,1,256], index: 24, kind: input, shape index: {}]
  %s25 = inlined_call_operand.vmem [shape: f32[256,2], index: 25, kind: input, shape index: {}]
  %s26 = inlined_call_operand.hbm [shape: f32[1,2], index: 26, kind: input, shape index: {}]
  %s27 = inlined_call_operand.vmem [shape: f32[2,8,2], index: 27, kind: output, shape index: {}]
  %s28 = sld [smem:[#allocation0]]
  $region245: #{transformer_encoder_8m.1} parent=0
    _
  %s30 = ssub.s32 1, %s28
  %s31 = scalar_select 0, %s30, %s28
  $region1: #{transformer_encoder_8m.1} parent=0
    #allocation3 [shape = 'u8[8192]{0}', space=vmem, size = 0x2000, scoped, tag = 'input window, operand 0']
    #allocation4 [shape = 's32[2]{0}', space=sflag, size = 0x8, scoped, tag = 'scoped memory for transformer_encoder_8m.1']
    #allocation5 [shape = 'u8[65536]{0}', space=vmem, size = 0x10000, scoped, tag = 'input window, operand 3, single buffered']
    #allocation6 [shape = 's32[1]{0}', space=sflag, size = 0x4, scoped, tag = 'scoped memory for transformer_encoder_8m.1']
    #allocation7 [shape = 'u8[1024]{0}', space=vmem, size = 0x400, scoped, tag = 'input window, operand 4, single buffered']
    #allocation8 [shape = 'u8[131072]{0}', space=vmem, size = 0x20000, scoped, tag = 'input window, operand 5, single buffered']
    #allocation9 [shape = 's32[1]{0}', space=sflag, size = 0x4, scoped, tag = 'scoped memory for transformer_encoder_8m.1']
    #allocation10 [shape = 'u8[1024]{0}', space=vmem, size = 0x400, scoped, tag = 'input window, operand 6, single buffered']
    #allocation11 [shape = 'u8[262144]{0}', space=vmem, size = 0x40000, scoped, tag = 'input window, operand 7, single buffered']
    #allocation12 [shape = 's32[1]{0}', space=sflag, size = 0x4, scoped, tag = 'scoped memory for transformer_encoder_8m.1']
    #allocation13 [shape = 'u8[4096]{0}', space=vmem, size = 0x1000, scoped, tag = 'input window, operand 8, single buffered']
    #allocation14 [shape = 'u8[524288]{0}', space=vmem, size = 0x80000, scoped, tag = 'input window, operand 9, single buffered']
    #allocation15 [shape = 's32[1]{0}', space=sflag, size = 0x4, scoped, tag = 'scoped memory for transformer_encoder_8m.1']
    #allocation16 [shape = 'u8[1024]{0}', space=vmem, size = 0x400, scoped, tag = 'input window, operand 10, single buffered']
    #allocation17 [shape = 'u8[1024]{0}', space=vmem, size = 0x400, scoped, tag = 'input window, operand 11, single buffered']
    #allocation18 [shape = 's32[1]{0}', space=sflag, size = 0x4, scoped, tag = 'scoped memory for transformer_encoder_8m.1']
    #allocation19 [shape = 'u8[1024]{0}', space=vmem, size = 0x400, scoped, tag = 'input window, operand 12, single buffered']
    #allocation20 [shape = 'u8[786432]{0}', space=vmem, size = 0xc0000, scoped, tag = 'input window, operand 13']
    #allocation21 [shape = 's32[2]{0}', space=sflag, size = 0x8, scoped, tag = 'scoped memory for transformer_encoder_8m.1']
    #allocation22 [shape = 'u8[6144]{0}', space=vmem, size = 0x1800, scoped, tag = 'input window, operand 14']
    #allocation23 [shape = 'u8[262144]{0}', space=vmem, size = 0x40000, scoped, tag = 'input window, operand 15']
    #allocation24 [shape = 's32[2]{0}', space=sflag, size = 0x8, scoped, tag = 'scoped memory for transformer_encoder_8m.1']
    #allocation25 [shape = 'u8[2048]{0}', space=vmem, size = 0x800, scoped, tag = 'input window, operand 16']
    #allocation26 [shape = 'u8[2048]{0}', space=vmem, size = 0x800, scoped, tag = 'input window, operand 17']
    #allocation27 [shape = 's32[2]{0}', space=sflag, size = 0x8, scoped, tag = 'scoped memory for transformer_encoder_8m.1']
    #allocation28 [shape = 'u8[2048]{0}', space=vmem, size = 0x800, scoped, tag = 'input window, operand 18']
    #allocation29 [shape = 'u8[1048576]{0}', space=vmem, size = 0x100000, scoped, tag = 'input window, operand 19']
    #allocation30 [shape = 's32[2]{0}', space=sflag, size = 0x8, scoped, tag = 'scoped memory for transformer_encoder_8m.1']
    #allocation31 [shape = 'u8[8192]{0}', space=vmem, size = 0x2000, scoped, tag = 'input window, operand 20']
    #allocation32 [shape = 'u8[1048576]{0}', space=vmem, size = 0x100000, scoped, tag = 'input window, operand 21']
    #allocation33 [shape = 's32[2]{0}', space=sflag, size = 0x8, scoped, tag = 'scoped memory for transformer_encoder_8m.1']
    #allocation34 [shape = 'u8[2048]{0}', space=vmem, size = 0x800, scoped, tag = 'input window, operand 22']
    #allocation35 [shape = 'u8[2048]{0}', space=vmem, size = 0x800, scoped, tag = 'input window, operand 23']
    #allocation36 [shape = 's32[2]{0}', space=sflag, size = 0x8, scoped, tag = 'scoped memory for transformer_encoder_8m.1']
    #allocation37 [shape = 'u8[2048]{0}', space=vmem, size = 0x800, scoped, tag = 'input window, operand 24']
    #allocation38 [shape = 'u8[512]{0}', space=vmem, size = 0x400, scoped, tag = 'input window, operand 26, single buffered']
    #allocation39 [shape = 's32[1]{0}', space=sflag, size = 0x4, scoped, tag = 'scoped memory for transformer_encoder_8m.1']
    %32 = vsyncpa [#allocation4], 0
    %s33 = scalar_lea.sflag [#allocation4], 1
    %34 = vsyncpa %s33, 0
    %35 = vsyncpa [#allocation6], 0
    %36 = vsyncpa [#allocation9], 0
    %37 = vsyncpa [#allocation12], 0
    %38 = vsyncpa [#allocation15], 0
    %39 = vsyncpa [#allocation18], 0
    %40 = vsyncpa [#allocation21], 0
    %s41 = scalar_lea.sflag [#allocation21], 1
    %42 = vsyncpa %s41, 0
    %43 = vsyncpa [#allocation24], 0
    %s44 = scalar_lea.sflag [#allocation24], 1
    %45 = vsyncpa %s44, 0
    %46 = vsyncpa [#allocation27], 0
    %s47 = scalar_lea.sflag [#allocation27], 1
    %48 = vsyncpa %s47, 0
    %49 = vsyncpa [#allocation30], 0
    %s50 = scalar_lea.sflag [#allocation30], 1
    %51 = vsyncpa %s50, 0
    %52 = vsyncpa [#allocation33], 0
    %s53 = scalar_lea.sflag [#allocation33], 1
    %54 = vsyncpa %s53, 0
    %55 = vsyncpa [#allocation36], 0
    %s56 = scalar_lea.sflag [#allocation36], 1
    %57 = vsyncpa %s56, 0
    %58 = vsyncpa [#allocation39], 0
    loop: start=0, step=1, limit=12
    $region2: #{transformer_encoder_8m.1} parent=1 // loop_pre_header
      _
    $region3: #{transformer_encoder_8m.1} parent=1 // loop_header
      %s60 = sphi 0, %s64
      %p61 = scmp.ge.s32.totalorder %s60, 12
      %s67 = sphi 0, %s79
      %s68 = sphi 0, %s75
      %s69 = sphi 0, %s67
      %s70 = sphi 0, %s68
      %s71 = sphi 0, %s69
      %s72 = sphi 0, %s70
      %s82 = sphi 0, %s84
      %s85 = sphi 0, %s82
      %s86 = sphi 0, %s85
      %s102 = sphi 0, %s86
      %s108 = sphi 0, %s110
      %s111 = sphi 0, %s108
      %s112 = sphi 0, %s111
      %s128 = sphi 0, %s112
      %s132 = sphi 0, %s132
      %s134 = sphi 0, %s132
      %s135 = sphi 0, %s134
      %s149 = sphi 0, %s135
      %s153 = sphi 0, %s153
      %s155 = sphi 0, %s153
      %s156 = sphi 0, %s155
      %s170 = sphi 0, %s156
      %s174 = sphi 0, %s174
      %s176 = sphi 0, %s174
      %s177 = sphi 0, %s176
      %s191 = sphi 0, %s177
      %s195 = sphi 0, %s195
      %s197 = sphi 0, %s195
      %s198 = sphi 0, %s197
      %s212 = sphi 0, %s198
      %s216 = sphi 0, %s216
      %s218 = sphi 0, %s216
      %s219 = sphi 0, %s218
      %s233 = sphi 0, %s219
      %s237 = sphi 0, %s237
      %s239 = sphi 0, %s237
      %s240 = sphi 0, %s239
      %s254 = sphi 0, %s240
      %s258 = sphi 0, %s258
      %s260 = sphi 0, %s258
      %s261 = sphi 0, %s260
      %s275 = sphi 0, %s261
      %s279 = sphi 0, %s279
      %s281 = sphi 0, %s279
      %s282 = sphi 0, %s281
      %s296 = sphi 0, %s282
      %s300 = sphi 0, %s300
      %s302 = sphi 0, %s300
      %s303 = sphi 0, %s302
      %s317 = sphi 0, %s303
      %s321 = sphi 0, %s321
      %s323 = sphi 0, %s321
      %s324 = sphi 0, %s323
      %s338 = sphi 0, %s324
      %s342 = sphi 0, %s342
      %s344 = sphi 0, %s342
      %s345 = sphi 0, %s344
      %s359 = sphi 0, %s345
      %s365 = sphi 0, %s367
      %s368 = sphi 0, %s365
      %s369 = sphi 0, %s368
      %s385 = sphi 0, %s369
      %s391 = sphi 0, %s393
      %s394 = sphi 0, %s391
      %s395 = sphi 0, %s394
      %s411 = sphi 0, %s395
      %s417 = sphi 0, %s419
      %s420 = sphi 0, %s417
      %s421 = sphi 0, %s420
      %s437 = sphi 0, %s421
      %s443 = sphi 0, %s445
      %s446 = sphi 0, %s443
      %s447 = sphi 0, %s446
      %s463 = sphi 0, %s447
      %s469 = sphi 0, %s471
      %s472 = sphi 0, %s469
      %s473 = sphi 0, %s472
      %s489 = sphi 0, %s473
      %s495 = sphi 0, %s497
      %s498 = sphi 0, %s495
      %s499 = sphi 0, %s498
      %s515 = sphi 0, %s499
      %s521 = sphi 0, %s523
      %s524 = sphi 0, %s521
      %s525 = sphi 0, %s524
      %s541 = sphi 0, %s525
      %s547 = sphi 0, %s549
      %s550 = sphi 0, %s547
      %s551 = sphi 0, %s550
      %s567 = sphi 0, %s551
      %s573 = sphi 0, %s575
      %s576 = sphi 0, %s573
      %s577 = sphi 0, %s576
      %s593 = sphi 0, %s577
      %s599 = sphi 0, %s601
      %s602 = sphi 0, %s599
      %s603 = sphi 0, %s602
      %s619 = sphi 0, %s603
      %s625 = sphi 0, %s627
      %s628 = sphi 0, %s625
      %s629 = sphi 0, %s628
      %s645 = sphi 0, %s629
      %s651 = sphi 0, %s653
      %s654 = sphi 0, %s651
      %s655 = sphi 0, %s654
      %s671 = sphi 0, %s655
      %s675 = sphi 0, %s675
      %s677 = sphi 0, %s675
      %s678 = sphi 0, %s677
      %s692 = sphi 0, %s678
      %s696 = sphi 0, %s696
      %s698 = sphi 0, %s696
      %s699 = sphi 0, %s698
      %s713 = sphi 0, %s699
      %s719 = sphi 0, %s721
      %s722 = sphi 0, %s719
      %s723 = sphi 0, %s722
      %s739 = sphi 0, %s723
    $region4: #{transformer_encoder_8m.1} parent=1 // loop_header_branch
      %63 = sbr.rel (%p61) target = $region8
    $region5: #{transformer_encoder_8m.1} parent=1 // loop_body
      %s65 = ssub.s32 %s60, 1
      %s66 = ssub.s32 %s60, 2
      %s73 = sadd.s32 1, %s68
      %p74 = scmp.ge.s32.totalorder %s73, 5
      %s75 = scalar_select %p74, 0, %s73
      %s76 = sadd.s32 1, %s67
      %s77 = scalar_select %p74, %s76, %s67
      %p78 = scmp.ge.s32.totalorder %s77, 2
      %s79 = scalar_select %p78, 0, %s77
      %s80 = ssub.s32 %s67, %s79
      %p81 = scmp.eq.s32.totalorder %s80, 0
      %s83 = sadd.s32 %s82, 1
      %s84 = scalar_select %p81, %s82, %s83
      %p87 = pneg %p81
      %p88 = scmp.eq.s32.totalorder %s60, 9
      %p89 = por %p87, %p88
      %p90 = scmp.ne.s32.totalorder %s82, %s85
      %p91 = scmp.eq.s32.totalorder %s60, 0
      %p92 = por %p90, %p91
      %p93 = scmp.ne.s32.totalorder %s82, %s85
      %p94 = scmp.eq.s32.totalorder %s65, 9
      %p95 = por %p93, %p94
      %p96 = scmp.ne.s32.totalorder %s85, %s86
      %p97 = scmp.eq.s32.totalorder %s65, 0
      %p98 = por %p96, %p97
      %p99 = scmp.ne.s32.totalorder %s85, %s86
      %p100 = scmp.eq.s32.totalorder %s66, 9
      %p101 = por %p99, %p100
      %p103 = scmp.ne.s32.totalorder %s86, %s102
      %p104 = scmp.eq.s32.totalorder %s66, 0
      %p105 = por %p103, %p104
      %s106 = ssub.s32 %s67, %s79
      %p107 = scmp.eq.s32.totalorder %s106, 0
      %s109 = sadd.s32 %s108, 1
      %s110 = scalar_select %p107, %s108, %s109
      %p113 = pneg %p107
      %p114 = scmp.eq.s32.totalorder %s60, 9
      %p115 = por %p113, %p114
      %p116 = scmp.ne.s32.totalorder %s108, %s111
      %p117 = scmp.eq.s32.totalorder %s60, 0
      %p118 = por %p116, %p117
      %p119 = scmp.ne.s32.totalorder %s108, %s111
      %p120 = scmp.eq.s32.totalorder %s65, 9
      %p121 = por %p119, %p120
      %p122 = scmp.ne.s32.totalorder %s111, %s112
      %p123 = scmp.eq.s32.totalorder %s65, 0
      %p124 = por %p122, %p123
      %p125 = scmp.ne.s32.totalorder %s111, %s112
      %p126 = scmp.eq.s32.totalorder %s66, 9
      %p127 = por %p125, %p126
      %p129 = scmp.ne.s32.totalorder %s112, %s128
      %p130 = scmp.eq.s32.totalorder %s66, 0
      %p131 = por %p129, %p130
      %s133 = sadd.s32 %s132, 1
      %p136 = scmp.eq.s32.totalorder %s60, 9
      %p137 = scmp.ne.s32.totalorder %s132, %s134
      %p138 = scmp.eq.s32.totalorder %s60, 0
      %p139 = por %p137, %p138
      %p140 = scmp.ne.s32.totalorder %s132, %s134
      %p141 = scmp.eq.s32.totalorder %s65, 9
      %p142 = por %p140, %p141
      %p143 = scmp.ne.s32.totalorder %s134, %s135
      %p144 = scmp.eq.s32.totalorder %s65, 0
      %p145 = por %p143, %p144
      %p146 = scmp.ne.s32.totalorder %s134, %s135
      %p147 = scmp.eq.s32.totalorder %s66, 9
      %p148 = por %p146, %p147
      %p150 = scmp.ne.s32.totalorder %s135, %s149
      %p151 = scmp.eq.s32.totalorder %s66, 0
      %p152 = por %p150, %p151
      %s154 = sadd.s32 %s153, 1
      %p157 = scmp.eq.s32.totalorder %s60, 9
      %p158 = scmp.ne.s32.totalorder %s153, %s155
      %p159 = scmp.eq.s32.totalorder %s60, 0
      %p160 = por %p158, %p159
      %p161 = scmp.ne.s32.totalorder %s153, %s155
      %p162 = scmp.eq.s32.totalorder %s65, 9
      %p163 = por %p161, %p162
      %p164 = scmp.ne.s32.totalorder %s155, %s156
      %p165 = scmp.eq.s32.totalorder %s65, 0
      %p166 = por %p164, %p165
      %p167 = scmp.ne.s32.totalorder %s155, %s156
      %p168 = scmp.eq.s32.totalorder %s66, 9
      %p169 = por %p167, %p168
      %p171 = scmp.ne.s32.totalorder %s156, %s170
      %p172 = scmp.eq.s32.totalorder %s66, 0
      %p173 = por %p171, %p172
      %s175 = sadd.s32 %s174, 1
      %p178 = scmp.eq.s32.totalorder %s60, 9
      %p179 = scmp.ne.s32.totalorder %s174, %s176
      %p180 = scmp.eq.s32.totalorder %s60, 0
      %p181 = por %p179, %p180
      %p182 = scmp.ne.s32.totalorder %s174, %s176
      %p183 = scmp.eq.s32.totalorder %s65, 9
      %p184 = por %p182, %p183
      %p185 = scmp.ne.s32.totalorder %s176, %s177
      %p186 = scmp.eq.s32.totalorder %s65, 0
      %p187 = por %p185, %p186
      %p188 = scmp.ne.s32.totalorder %s176, %s177
      %p189 = scmp.eq.s32.totalorder %s66, 9
      %p190 = por %p188, %p189
      %p192 = scmp.ne.s32.totalorder %s177, %s191
      %p193 = scmp.eq.s32.totalorder %s66, 0
      %p194 = por %p192, %p193
      %s196 = sadd.s32 %s195, 1
      %p199 = scmp.eq.s32.totalorder %s60, 9
      %p200 = scmp.ne.s32.totalorder %s195, %s197
      %p201 = scmp.eq.s32.totalorder %s60, 0
      %p202 = por %p200, %p201
      %p203 = scmp.ne.s32.totalorder %s195, %s197
      %p204 = scmp.eq.s32.totalorder %s65, 9
      %p205 = por %p203, %p204
      %p206 = scmp.ne.s32.totalorder %s197, %s198
      %p207 = scmp.eq.s32.totalorder %s65, 0
      %p208 = por %p206, %p207
      %p209 = scmp.ne.s32.totalorder %s197, %s198
      %p210 = scmp.eq.s32.totalorder %s66, 9
      %p211 = por %p209, %p210
      %p213 = scmp.ne.s32.totalorder %s198, %s212
      %p214 = scmp.eq.s32.totalorder %s66, 0
      %p215 = por %p213, %p214
      %s217 = sadd.s32 %s216, 1
      %p220 = scmp.eq.s32.totalorder %s60, 9
      %p221 = scmp.ne.s32.totalorder %s216, %s218
      %p222 = scmp.eq.s32.totalorder %s60, 0
      %p223 = por %p221, %p222
      %p224 = scmp.ne.s32.totalorder %s216, %s218
      %p225 = scmp.eq.s32.totalorder %s65, 9
      %p226 = por %p224, %p225
      %p227 = scmp.ne.s32.totalorder %s218, %s219
      %p228 = scmp.eq.s32.totalorder %s65, 0
      %p229 = por %p227, %p228
      %p230 = scmp.ne.s32.totalorder %s218, %s219
      %p231 = scmp.eq.s32.totalorder %s66, 9
      %p232 = por %p230, %p231
      %p234 = scmp.ne.s32.totalorder %s219, %s233
      %p235 = scmp.eq.s32.totalorder %s66, 0
      %p236 = por %p234, %p235
      %s238 = sadd.s32 %s237, 1
      %p241 = scmp.eq.s32.totalorder %s60, 9
      %p242 = scmp.ne.s32.totalorder %s237, %s239
      %p243 = scmp.eq.s32.totalorder %s60, 0
      %p244 = por %p242, %p243
      %p245 = scmp.ne.s32.totalorder %s237, %s239
      %p246 = scmp.eq.s32.totalorder %s65, 9
      %p247 = por %p245, %p246
      %p248 = scmp.ne.s32.totalorder %s239, %s240
      %p249 = scmp.eq.s32.totalorder %s65, 0
      %p250 = por %p248, %p249
      %p251 = scmp.ne.s32.totalorder %s239, %s240
      %p252 = scmp.eq.s32.totalorder %s66, 9
      %p253 = por %p251, %p252
      %p255 = scmp.ne.s32.totalorder %s240, %s254
      %p256 = scmp.eq.s32.totalorder %s66, 0
      %p257 = por %p255, %p256
      %s259 = sadd.s32 %s258, 1
      %p262 = scmp.eq.s32.totalorder %s60, 9
      %p263 = scmp.ne.s32.totalorder %s258, %s260
      %p264 = scmp.eq.s32.totalorder %s60, 0
      %p265 = por %p263, %p264
      %p266 = scmp.ne.s32.totalorder %s258, %s260
      %p267 = scmp.eq.s32.totalorder %s65, 9
      %p268 = por %p266, %p267
      %p269 = scmp.ne.s32.totalorder %s260, %s261
      %p270 = scmp.eq.s32.totalorder %s65, 0
      %p271 = por %p269, %p270
      %p272 = scmp.ne.s32.totalorder %s260, %s261
      %p273 = scmp.eq.s32.totalorder %s66, 9
      %p274 = por %p272, %p273
      %p276 = scmp.ne.s32.totalorder %s261, %s275
      %p277 = scmp.eq.s32.totalorder %s66, 0
      %p278 = por %p276, %p277
      %s280 = sadd.s32 %s279, 1
      %p283 = scmp.eq.s32.totalorder %s60, 9
      %p284 = scmp.ne.s32.totalorder %s279, %s281
      %p285 = scmp.eq.s32.totalorder %s60, 0
      %p286 = por %p284, %p285
      %p287 = scmp.ne.s32.totalorder %s279, %s281
      %p288 = scmp.eq.s32.totalorder %s65, 9
      %p289 = por %p287, %p288
      %p290 = scmp.ne.s32.totalorder %s281, %s282
      %p291 = scmp.eq.s32.totalorder %s65, 0
      %p292 = por %p290, %p291
      %p293 = scmp.ne.s32.totalorder %s281, %s282
      %p294 = scmp.eq.s32.totalorder %s66, 9
      %p295 = por %p293, %p294
      %p297 = scmp.ne.s32.totalorder %s282, %s296
      %p298 = scmp.eq.s32.totalorder %s66, 0
      %p299 = por %p297, %p298
      %s301 = sadd.s32 %s300, 1
      %p304 = scmp.eq.s32.totalorder %s60, 9
      %p305 = scmp.ne.s32.totalorder %s300, %s302
      %p306 = scmp.eq.s32.totalorder %s60, 0
      %p307 = por %p305, %p306
      %p308 = scmp.ne.s32.totalorder %s300, %s302
      %p309 = scmp.eq.s32.totalorder %s65, 9
      %p310 = por %p308, %p309
      %p311 = scmp.ne.s32.totalorder %s302, %s303
      %p312 = scmp.eq.s32.totalorder %s65, 0
      %p313 = por %p311, %p312
      %p314 = scmp.ne.s32.totalorder %s302, %s303
      %p315 = scmp.eq.s32.totalorder %s66, 9
      %p316 = por %p314, %p315
      %p318 = scmp.ne.s32.totalorder %s303, %s317
      %p319 = scmp.eq.s32.totalorder %s66, 0
      %p320 = por %p318, %p319
      %s322 = sadd.s32 %s321, 1
      %p325 = scmp.eq.s32.totalorder %s60, 9
      %p326 = scmp.ne.s32.totalorder %s321, %s323
      %p327 = scmp.eq.s32.totalorder %s60, 0
      %p328 = por %p326, %p327
      %p329 = scmp.ne.s32.totalorder %s321, %s323
      %p330 = scmp.eq.s32.totalorder %s65, 9
      %p331 = por %p329, %p330
      %p332 = scmp.ne.s32.totalorder %s323, %s324
      %p333 = scmp.eq.s32.totalorder %s65, 0
      %p334 = por %p332, %p333
      %p335 = scmp.ne.s32.totalorder %s323, %s324
      %p336 = scmp.eq.s32.totalorder %s66, 9
      %p337 = por %p335, %p336
      %p339 = scmp.ne.s32.totalorder %s324, %s338
      %p340 = scmp.eq.s32.totalorder %s66, 0
      %p341 = por %p339, %p340
      %s343 = sadd.s32 %s342, 1
      %p346 = scmp.eq.s32.totalorder %s60, 9
      %p347 = scmp.ne.s32.totalorder %s342, %s344
      %p348 = scmp.eq.s32.totalorder %s60, 0
      %p349 = por %p347, %p348
      %p350 = scmp.ne.s32.totalorder %s342, %s344
      %p351 = scmp.eq.s32.totalorder %s65, 9
      %p352 = por %p350, %p351
      %p353 = scmp.ne.s32.totalorder %s344, %s345
      %p354 = scmp.eq.s32.totalorder %s65, 0
      %p355 = por %p353, %p354
      %p356 = scmp.ne.s32.totalorder %s344, %s345
      %p357 = scmp.eq.s32.totalorder %s66, 9
      %p358 = por %p356, %p357
      %p360 = scmp.ne.s32.totalorder %s345, %s359
      %p361 = scmp.eq.s32.totalorder %s66, 0
      %p362 = por %p360, %p361
      %s363 = ssub.s32 %s68, %s75
      %p364 = scmp.eq.s32.totalorder %s363, 0
      %s366 = sadd.s32 %s365, 1
      %s367 = scalar_select %p364, %s365, %s366
      %p370 = pneg %p364
      %p371 = scmp.eq.s32.totalorder %s60, 9
      %p372 = por %p370, %p371
      %p373 = scmp.ne.s32.totalorder %s365, %s368
      %p374 = scmp.eq.s32.totalorder %s60, 0
      %p375 = por %p373, %p374
      %p376 = scmp.ne.s32.totalorder %s365, %s368
      %p377 = scmp.eq.s32.totalorder %s65, 9
      %p378 = por %p376, %p377
      %p379 = scmp.ne.s32.totalorder %s368, %s369
      %p380 = scmp.eq.s32.totalorder %s65, 0
      %p381 = por %p379, %p380
      %p382 = scmp.ne.s32.totalorder %s368, %s369
      %p383 = scmp.eq.s32.totalorder %s66, 9
      %p384 = por %p382, %p383
      %p386 = scmp.ne.s32.totalorder %s369, %s385
      %p387 = scmp.eq.s32.totalorder %s66, 0
      %p388 = por %p386, %p387
      %s389 = ssub.s32 %s68, %s75
      %p390 = scmp.eq.s32.totalorder %s389, 0
      %s392 = sadd.s32 %s391, 1
      %s393 = scalar_select %p390, %s391, %s392
      %p396 = pneg %p390
      %p397 = scmp.eq.s32.totalorder %s60, 9
      %p398 = por %p396, %p397
      %p399 = scmp.ne.s32.totalorder %s391, %s394
      %p400 = scmp.eq.s32.totalorder %s60, 0
      %p401 = por %p399, %p400
      %p402 = scmp.ne.s32.totalorder %s391, %s394
      %p403 = scmp.eq.s32.totalorder %s65, 9
      %p404 = por %p402, %p403
      %p405 = scmp.ne.s32.totalorder %s394, %s395
      %p406 = scmp.eq.s32.totalorder %s65, 0
      %p407 = por %p405, %p406
      %p408 = scmp.ne.s32.totalorder %s394, %s395
      %p409 = scmp.eq.s32.totalorder %s66, 9
      %p410 = por %p408, %p409
      %p412 = scmp.ne.s32.totalorder %s395, %s411
      %p413 = scmp.eq.s32.totalorder %s66, 0
      %p414 = por %p412, %p413
      %s415 = ssub.s32 %s68, %s75
      %p416 = scmp.eq.s32.totalorder %s415, 0
      %s418 = sadd.s32 %s417, 1
      %s419 = scalar_select %p416, %s417, %s418
      %p422 = pneg %p416
      %p423 = scmp.eq.s32.totalorder %s60, 9
      %p424 = por %p422, %p423
      %p425 = scmp.ne.s32.totalorder %s417, %s420
      %p426 = scmp.eq.s32.totalorder %s60, 0
      %p427 = por %p425, %p426
      %p428 = scmp.ne.s32.totalorder %s417, %s420
      %p429 = scmp.eq.s32.totalorder %s65, 9
      %p430 = por %p428, %p429
      %p431 = scmp.ne.s32.totalorder %s420, %s421
      %p432 = scmp.eq.s32.totalorder %s65, 0
      %p433 = por %p431, %p432
      %p434 = scmp.ne.s32.totalorder %s420, %s421
      %p435 = scmp.eq.s32.totalorder %s66, 9
      %p436 = por %p434, %p435
      %p438 = scmp.ne.s32.totalorder %s421, %s437
      %p439 = scmp.eq.s32.totalorder %s66, 0
      %p440 = por %p438, %p439
      %s441 = ssub.s32 %s68, %s75
      %p442 = scmp.eq.s32.totalorder %s441, 0
      %s444 = sadd.s32 %s443, 1
      %s445 = scalar_select %p442, %s443, %s444
      %p448 = pneg %p442
      %p449 = scmp.eq.s32.totalorder %s60, 9
      %p450 = por %p448, %p449
      %p451 = scmp.ne.s32.totalorder %s443, %s446
      %p452 = scmp.eq.s32.totalorder %s60, 0
      %p453 = por %p451, %p452
      %p454 = scmp.ne.s32.totalorder %s443, %s446
      %p455 = scmp.eq.s32.totalorder %s65, 9
      %p456 = por %p454, %p455
      %p457 = scmp.ne.s32.totalorder %s446, %s447
      %p458 = scmp.eq.s32.totalorder %s65, 0
      %p459 = por %p457, %p458
      %p460 = scmp.ne.s32.totalorder %s446, %s447
      %p461 = scmp.eq.s32.totalorder %s66, 9
      %p462 = por %p460, %p461
      %p464 = scmp.ne.s32.totalorder %s447, %s463
      %p465 = scmp.eq.s32.totalorder %s66, 0
      %p466 = por %p464, %p465
      %s467 = ssub.s32 %s68, %s75
      %p468 = scmp.eq.s32.totalorder %s467, 0
      %s470 = sadd.s32 %s469, 1
      %s471 = scalar_select %p468, %s469, %s470
      %p474 = pneg %p468
      %p475 = scmp.eq.s32.totalorder %s60, 9
      %p476 = por %p474, %p475
      %p477 = scmp.ne.s32.totalorder %s469, %s472
      %p478 = scmp.eq.s32.totalorder %s60, 0
      %p479 = por %p477, %p478
      %p480 = scmp.ne.s32.totalorder %s469, %s472
      %p481 = scmp.eq.s32.totalorder %s65, 9
      %p482 = por %p480, %p481
      %p483 = scmp.ne.s32.totalorder %s472, %s473
      %p484 = scmp.eq.s32.totalorder %s65, 0
      %p485 = por %p483, %p484
      %p486 = scmp.ne.s32.totalorder %s472, %s473
      %p487 = scmp.eq.s32.totalorder %s66, 9
      %p488 = por %p486, %p487
      %p490 = scmp.ne.s32.totalorder %s473, %s489
      %p491 = scmp.eq.s32.totalorder %s66, 0
      %p492 = por %p490, %p491
      %s493 = ssub.s32 %s68, %s75
      %p494 = scmp.eq.s32.totalorder %s493, 0
      %s496 = sadd.s32 %s495, 1
      %s497 = scalar_select %p494, %s495, %s496
      %p500 = pneg %p494
      %p501 = scmp.eq.s32.totalorder %s60, 9
      %p502 = por %p500, %p501
      %p503 = scmp.ne.s32.totalorder %s495, %s498
      %p504 = scmp.eq.s32.totalorder %s60, 0
      %p505 = por %p503, %p504
      %p506 = scmp.ne.s32.totalorder %s495, %s498
      %p507 = scmp.eq.s32.totalorder %s65, 9
      %p508 = por %p506, %p507
      %p509 = scmp.ne.s32.totalorder %s498, %s499
      %p510 = scmp.eq.s32.totalorder %s65, 0
      %p511 = por %p509, %p510
      %p512 = scmp.ne.s32.totalorder %s498, %s499
      %p513 = scmp.eq.s32.totalorder %s66, 9
      %p514 = por %p512, %p513
      %p516 = scmp.ne.s32.totalorder %s499, %s515
      %p517 = scmp.eq.s32.totalorder %s66, 0
      %p518 = por %p516, %p517
      %s519 = ssub.s32 %s68, %s75
      %p520 = scmp.eq.s32.totalorder %s519, 0
      %s522 = sadd.s32 %s521, 1
      %s523 = scalar_select %p520, %s521, %s522
      %p526 = pneg %p520
      %p527 = scmp.eq.s32.totalorder %s60, 9
      %p528 = por %p526, %p527
      %p529 = scmp.ne.s32.totalorder %s521, %s524
      %p530 = scmp.eq.s32.totalorder %s60, 0
      %p531 = por %p529, %p530
      %p532 = scmp.ne.s32.totalorder %s521, %s524
      %p533 = scmp.eq.s32.totalorder %s65, 9
      %p534 = por %p532, %p533
      %p535 = scmp.ne.s32.totalorder %s524, %s525
      %p536 = scmp.eq.s32.totalorder %s65, 0
      %p537 = por %p535, %p536
      %p538 = scmp.ne.s32.totalorder %s524, %s525
      %p539 = scmp.eq.s32.totalorder %s66, 9
      %p540 = por %p538, %p539
      %p542 = scmp.ne.s32.totalorder %s525, %s541
      %p543 = scmp.eq.s32.totalorder %s66, 0
      %p544 = por %p542, %p543
      %s545 = ssub.s32 %s68, %s75
      %p546 = scmp.eq.s32.totalorder %s545, 0
      %s548 = sadd.s32 %s547, 1
      %s549 = scalar_select %p546, %s547, %s548
      %p552 = pneg %p546
      %p553 = scmp.eq.s32.totalorder %s60, 9
      %p554 = por %p552, %p553
      %p555 = scmp.ne.s32.totalorder %s547, %s550
      %p556 = scmp.eq.s32.totalorder %s60, 0
      %p557 = por %p555, %p556
      %p558 = scmp.ne.s32.totalorder %s547, %s550
      %p559 = scmp.eq.s32.totalorder %s65, 9
      %p560 = por %p558, %p559
      %p561 = scmp.ne.s32.totalorder %s550, %s551
      %p562 = scmp.eq.s32.totalorder %s65, 0
      %p563 = por %p561, %p562
      %p564 = scmp.ne.s32.totalorder %s550, %s551
      %p565 = scmp.eq.s32.totalorder %s66, 9
      %p566 = por %p564, %p565
      %p568 = scmp.ne.s32.totalorder %s551, %s567
      %p569 = scmp.eq.s32.totalorder %s66, 0
      %p570 = por %p568, %p569
      %s571 = ssub.s32 %s68, %s75
      %p572 = scmp.eq.s32.totalorder %s571, 0
      %s574 = sadd.s32 %s573, 1
      %s575 = scalar_select %p572, %s573, %s574
      %p578 = pneg %p572
      %p579 = scmp.eq.s32.totalorder %s60, 9
      %p580 = por %p578, %p579
      %p581 = scmp.ne.s32.totalorder %s573, %s576
      %p582 = scmp.eq.s32.totalorder %s60, 0
      %p583 = por %p581, %p582
      %p584 = scmp.ne.s32.totalorder %s573, %s576
      %p585 = scmp.eq.s32.totalorder %s65, 9
      %p586 = por %p584, %p585
      %p587 = scmp.ne.s32.totalorder %s576, %s577
      %p588 = scmp.eq.s32.totalorder %s65, 0
      %p589 = por %p587, %p588
      %p590 = scmp.ne.s32.totalorder %s576, %s577
      %p591 = scmp.eq.s32.totalorder %s66, 9
      %p592 = por %p590, %p591
      %p594 = scmp.ne.s32.totalorder %s577, %s593
      %p595 = scmp.eq.s32.totalorder %s66, 0
      %p596 = por %p594, %p595
      %s597 = ssub.s32 %s68, %s75
      %p598 = scmp.eq.s32.totalorder %s597, 0
      %s600 = sadd.s32 %s599, 1
      %s601 = scalar_select %p598, %s599, %s600
      %p604 = pneg %p598
      %p605 = scmp.eq.s32.totalorder %s60, 9
      %p606 = por %p604, %p605
      %p607 = scmp.ne.s32.totalorder %s599, %s602
      %p608 = scmp.eq.s32.totalorder %s60, 0
      %p609 = por %p607, %p608
      %p610 = scmp.ne.s32.totalorder %s599, %s602
      %p611 = scmp.eq.s32.totalorder %s65, 9
      %p612 = por %p610, %p611
      %p613 = scmp.ne.s32.totalorder %s602, %s603
      %p614 = scmp.eq.s32.totalorder %s65, 0
      %p615 = por %p613, %p614
      %p616 = scmp.ne.s32.totalorder %s602, %s603
      %p617 = scmp.eq.s32.totalorder %s66, 9
      %p618 = por %p616, %p617
      %p620 = scmp.ne.s32.totalorder %s603, %s619
      %p621 = scmp.eq.s32.totalorder %s66, 0
      %p622 = por %p620, %p621
      %s623 = ssub.s32 %s68, %s75
      %p624 = scmp.eq.s32.totalorder %s623, 0
      %s626 = sadd.s32 %s625, 1
      %s627 = scalar_select %p624, %s625, %s626
      %p630 = pneg %p624
      %p631 = scmp.eq.s32.totalorder %s60, 9
      %p632 = por %p630, %p631
      %p633 = scmp.ne.s32.totalorder %s625, %s628
      %p634 = scmp.eq.s32.totalorder %s60, 0
      %p635 = por %p633, %p634
      %p636 = scmp.ne.s32.totalorder %s625, %s628
      %p637 = scmp.eq.s32.totalorder %s65, 9
      %p638 = por %p636, %p637
      %p639 = scmp.ne.s32.totalorder %s628, %s629
      %p640 = scmp.eq.s32.totalorder %s65, 0
      %p641 = por %p639, %p640
      %p642 = scmp.ne.s32.totalorder %s628, %s629
      %p643 = scmp.eq.s32.totalorder %s66, 9
      %p644 = por %p642, %p643
      %p646 = scmp.ne.s32.totalorder %s629, %s645
      %p647 = scmp.eq.s32.totalorder %s66, 0
      %p648 = por %p646, %p647
      %s649 = ssub.s32 %s68, %s75
      %p650 = scmp.eq.s32.totalorder %s649, 0
      %s652 = sadd.s32 %s651, 1
      %s653 = scalar_select %p650, %s651, %s652
      %p656 = pneg %p650
      %p657 = scmp.eq.s32.totalorder %s60, 9
      %p658 = por %p656, %p657
      %p659 = scmp.ne.s32.totalorder %s651, %s654
      %p660 = scmp.eq.s32.totalorder %s60, 0
      %p661 = por %p659, %p660
      %p662 = scmp.ne.s32.totalorder %s651, %s654
      %p663 = scmp.eq.s32.totalorder %s65, 9
      %p664 = por %p662, %p663
      %p665 = scmp.ne.s32.totalorder %s654, %s655
      %p666 = scmp.eq.s32.totalorder %s65, 0
      %p667 = por %p665, %p666
      %p668 = scmp.ne.s32.totalorder %s654, %s655
      %p669 = scmp.eq.s32.totalorder %s66, 9
      %p670 = por %p668, %p669
      %p672 = scmp.ne.s32.totalorder %s655, %s671
      %p673 = scmp.eq.s32.totalorder %s66, 0
      %p674 = por %p672, %p673
      %s676 = sadd.s32 %s675, 1
      %p679 = scmp.eq.s32.totalorder %s60, 9
      %p680 = scmp.ne.s32.totalorder %s675, %s677
      %p681 = scmp.eq.s32.totalorder %s60, 0
      %p682 = por %p680, %p681
      %p683 = scmp.ne.s32.totalorder %s675, %s677
      %p684 = scmp.eq.s32.totalorder %s65, 9
      %p685 = por %p683, %p684
      %p686 = scmp.ne.s32.totalorder %s677, %s678
      %p687 = scmp.eq.s32.totalorder %s65, 0
      %p688 = por %p686, %p687
      %p689 = scmp.ne.s32.totalorder %s677, %s678
      %p690 = scmp.eq.s32.totalorder %s66, 9
      %p691 = por %p689, %p690
      %p693 = scmp.ne.s32.totalorder %s678, %s692
      %p694 = scmp.eq.s32.totalorder %s66, 0
      %p695 = por %p693, %p694
      %s697 = sadd.s32 %s696, 1
      %p700 = scmp.eq.s32.totalorder %s60, 9
      %p701 = scmp.ne.s32.totalorder %s696, %s698
      %p702 = scmp.eq.s32.totalorder %s60, 0
      %p703 = por %p701, %p702
      %p704 = scmp.ne.s32.totalorder %s696, %s698
      %p705 = scmp.eq.s32.totalorder %s65, 9
      %p706 = por %p704, %p705
      %p707 = scmp.ne.s32.totalorder %s698, %s699
      %p708 = scmp.eq.s32.totalorder %s65, 0
      %p709 = por %p707, %p708
      %p710 = scmp.ne.s32.totalorder %s698, %s699
      %p711 = scmp.eq.s32.totalorder %s66, 9
      %p712 = por %p710, %p711
      %p714 = scmp.ne.s32.totalorder %s699, %s713
      %p715 = scmp.eq.s32.totalorder %s66, 0
      %p716 = por %p714, %p715
      %s717 = ssub.s32 %s67, %s79
      %p718 = scmp.eq.s32.totalorder %s717, 0
      %s720 = sadd.s32 %s719, 1
      %s721 = scalar_select %p718, %s719, %s720
      %p724 = pneg %p718
      %p725 = scmp.eq.s32.totalorder %s60, 9
      %p726 = por %p724, %p725
      %p727 = scmp.ne.s32.totalorder %s719, %s722
      %p728 = scmp.eq.s32.totalorder %s60, 0
      %p729 = por %p727, %p728
      %p730 = scmp.ne.s32.totalorder %s719, %s722
      %p731 = scmp.eq.s32.totalorder %s65, 9
      %p732 = por %p730, %p731
      %p733 = scmp.ne.s32.totalorder %s722, %s723
      %p734 = scmp.eq.s32.totalorder %s65, 0
      %p735 = por %p733, %p734
      %p736 = scmp.ne.s32.totalorder %s722, %s723
      %p737 = scmp.eq.s32.totalorder %s66, 9
      %p738 = por %p736, %p737
      %p740 = scmp.ne.s32.totalorder %s723, %s739
      %p741 = scmp.eq.s32.totalorder %s66, 0
      %p742 = por %p740, %p741
      %p743 = scmp.le.s32.totalorder 1, %s60
      %p744 = scmp.lt.s32.totalorder %s60, 11
      %p745 = pnand %p743, %p744
      %p746 = pneg %p745
      // Predicated region
      $region9: #{transformer_encoder_8m.1} parent=5 // pred_check
        _
      $region10: #{transformer_encoder_8m.1} parent=5 // pred_check_branch
        %748 = sbr.rel (%p745) target = $region12
      $region11: #{transformer_encoder_8m.1} parent=5 // pred_region
        %s749 = ssub.s32 %s60, 1
        // Predicated region
        $region13: #{transformer_encoder_8m.1} parent=11 // pred_check
          %p750 = pneg %p145
        $region14: #{transformer_encoder_8m.1} parent=11 // pred_check_branch
          %752 = sbr.rel (%p750) target = $region16
        $region15: #{transformer_encoder_8m.1} parent=11 // pred_region
          _
        $region16: #{transformer_encoder_8m.1} parent=11 // pred_fallthru
          _
        // Predicated region
        $region17: #{transformer_encoder_8m.1} parent=11 // pred_check
          %p753 = pneg %p166
        $region18: #{transformer_encoder_8m.1} parent=11 // pred_check_branch
          %755 = sbr.rel (%p753) target = $region20
        $region19: #{transformer_encoder_8m.1} parent=11 // pred_region
          %s757 = ssub.s32 2048, 2048
          %758 = vsyncadd [#allocation6], %s757
          %s759 = sshll.u32 [#allocation5], 4
          %s760 = int_to_ptr.vmem [resolvable:$true] %s759
          %765 = dma.hbm_to_vmem [thread:$0]  %s3, 2048, %s760, [#allocation6], 128, 128, 8
        $region20: #{transformer_encoder_8m.1} parent=11 // pred_fallthru
          _
        // Predicated region
        $region21: #{transformer_encoder_8m.1} parent=11 // pred_check
          %p766 = pneg %p187
        $region22: #{transformer_encoder_8m.1} parent=11 // pred_check_branch
          %768 = sbr.rel (%p766) target = $region24
        $region23: #{transformer_encoder_8m.1} parent=11 // pred_region
          %s770 = ssub.s32 32, 32
          %771 = vsyncadd [#allocation6], %s770
          %s773 = sshll.u32 [#allocation7], 4
          %s774 = int_to_ptr.vmem [resolvable:$true] %s773
          %776 = dma.hbm_to_vmem [thread:$0]  %s4, 32, %s774, [#allocation6]
        $region24: #{transformer_encoder_8m.1} parent=11 // pred_fallthru
          _
        // Predicated region
        $region25: #{transformer_encoder_8m.1} parent=11 // pred_check
          %p777 = pneg %p208
        $region26: #{transformer_encoder_8m.1} parent=11 // pred_check_branch
          %779 = sbr.rel (%p777) target = $region28
        $region27: #{transformer_encoder_8m.1} parent=11 // pred_region
          %s781 = ssub.s32 4096, 4096
          %782 = vsyncadd [#allocation9], %s781
          %s783 = sshll.u32 [#allocation8], 4
          %s784 = int_to_ptr.vmem [resolvable:$true] %s783
          %789 = dma.hbm_to_vmem [thread:$0]  %s5, 4096, %s784, [#allocation9], 128, 128, 8
        $region28: #{transformer_encoder_8m.1} parent=11 // pred_fallthru
          _
        // Predicated region
        $region29: #{transformer_encoder_8m.1} parent=11 // pred_check
          %p790 = pneg %p229
        $region30: #{transformer_encoder_8m.1} parent=11 // pred_check_branch
          %792 = sbr.rel (%p790) target = $region32
        $region31: #{transformer_encoder_8m.1} parent=11 // pred_region
          %s794 = ssub.s32 32, 32
          %795 = vsyncadd [#allocation9], %s794
          %s797 = sshll.u32 [#allocation10], 4
          %s798 = int_to_ptr.vmem [resolvable:$true] %s797
          %800 = dma.hbm_to_vmem [thread:$0]  %s6, 32, %s798, [#allocation9]
        $region32: #{transformer_encoder_8m.1} parent=11 // pred_fallthru
          _
        // Predicated region
        $region33: #{transformer_encoder_8m.1} parent=11 // pred_check
          %p801 = pneg %p250
        $region34: #{transformer_encoder_8m.1} parent=11 // pred_check_branch
          %803 = sbr.rel (%p801) target = $region36
        $region35: #{transformer_encoder_8m.1} parent=11 // pred_region
          %s805 = ssub.s32 8192, 8192
          %806 = vsyncadd [#allocation12], %s805
          %s807 = sshll.u32 [#allocation11], 4
          %s808 = int_to_ptr.vmem [resolvable:$true] %s807
          %813 = dma.hbm_to_vmem [thread:$0]  %s7, 8192, %s808, [#allocation12], 512, 512, 32
        $region36: #{transformer_encoder_8m.1} parent=11 // pred_fallthru
          _
        // Predicated region
        $region37: #{transformer_encoder_8m.1} parent=11 // pred_check
          %p814 = pneg %p271
        $region38: #{transformer_encoder_8m.1} parent=11 // pred_check_branch
          %816 = sbr.rel (%p814) target = $region40
        $region39: #{transformer_encoder_8m.1} parent=11 // pred_region
          %s818 = ssub.s32 128, 128
          %819 = vsyncadd [#allocation12], %s818
          %s821 = sshll.u32 [#allocation13], 4
          %s822 = int_to_ptr.vmem [resolvable:$true] %s821
          %824 = dma.hbm_to_vmem [thread:$0]  %s8, 128, %s822, [#allocation12]
        $region40: #{transformer_encoder_8m.1} parent=11 // pred_fallthru
          _
        // Predicated region
        $region41: #{transformer_encoder_8m.1} parent=11 // pred_check
          %p825 = pneg %p292
        $region42: #{transformer_encoder_8m.1} parent=11 // pred_check_branch
          %827 = sbr.rel (%p825) target = $region44
        $region43: #{transformer_encoder_8m.1} parent=11 // pred_region
          %s829 = ssub.s32 16384, 16384
          %830 = vsyncadd [#allocation15], %s829
          %s831 = sshll.u32 [#allocation14], 4
          %s832 = int_to_ptr.vmem [resolvable:$true] %s831
          %837 = dma.hbm_to_vmem [thread:$0]  %s9, 16384, %s832, [#allocation15], 128, 128, 8
        $region44: #{transformer_encoder_8m.1} parent=11 // pred_fallthru
          _
        // Predicated region
        $region45: #{transformer_encoder_8m.1} parent=11 // pred_check
          %p838 = pneg %p313
        $region46: #{transformer_encoder_8m.1} parent=11 // pred_check_branch
          %840 = sbr.rel (%p838) target = $region48
        $region47: #{transformer_encoder_8m.1} parent=11 // pred_region
          %s842 = ssub.s32 32, 32
          %843 = vsyncadd [#allocation15], %s842
          %s845 = sshll.u32 [#allocation16], 4
          %s846 = int_to_ptr.vmem [resolvable:$true] %s845
          %848 = dma.hbm_to_vmem [thread:$0]  %s10, 32, %s846, [#allocation15]
        $region48: #{transformer_encoder_8m.1} parent=11 // pred_fallthru
          _
        // Predicated region
        $region49: #{transformer_encoder_8m.1} parent=11 // pred_check
          %p849 = pneg %p334
        $region50: #{transformer_encoder_8m.1} parent=11 // pred_check_branch
          %851 = sbr.rel (%p849) target = $region52
        $region51: #{transformer_encoder_8m.1} parent=11 // pred_region
          %s853 = ssub.s32 32, 32
          %854 = vsyncadd [#allocation18], %s853
          %s856 = sshll.u32 [#allocation17], 4
          %s857 = int_to_ptr.vmem [resolvable:$true] %s856
          %859 = dma.hbm_to_vmem [thread:$0]  %s11, 32, %s857, [#allocation18]
        $region52: #{transformer_encoder_8m.1} parent=11 // pred_fallthru
          _
        // Predicated region
        $region53: #{transformer_encoder_8m.1} parent=11 // pred_check
          %p860 = pneg %p355
        $region54: #{transformer_encoder_8m.1} parent=11 // pred_check_branch
          %862 = sbr.rel (%p860) target = $region56
        $region55: #{transformer_encoder_8m.1} parent=11 // pred_region
          %s864 = ssub.s32 32, 32
          %865 = vsyncadd [#allocation18], %s864
          %s867 = sshll.u32 [#allocation19], 4
          %s868 = int_to_ptr.vmem [resolvable:$true] %s867
          %870 = dma.hbm_to_vmem [thread:$0]  %s12, 32, %s868, [#allocation18]
        $region56: #{transformer_encoder_8m.1} parent=11 // pred_fallthru
          _
        // Predicated region
        $region57: #{transformer_encoder_8m.1} parent=11 // pred_check
          %p871 = pneg %p688
        $region58: #{transformer_encoder_8m.1} parent=11 // pred_check_branch
          %873 = sbr.rel (%p871) target = $region60
        $region59: #{transformer_encoder_8m.1} parent=11 // pred_region
          _
        $region60: #{transformer_encoder_8m.1} parent=11 // pred_fallthru
          _
        // Predicated region
        $region61: #{transformer_encoder_8m.1} parent=11 // pred_check
          %p874 = pneg %p709
        $region62: #{transformer_encoder_8m.1} parent=11 // pred_check_branch
          %876 = sbr.rel (%p874) target = $region64
        $region63: #{transformer_encoder_8m.1} parent=11 // pred_region
          %s878 = ssub.s32 16, 16
          %879 = vsyncadd [#allocation39], %s878
          %s881 = sshll.u32 [#allocation38], 4
          %s882 = int_to_ptr.vmem [resolvable:$true] %s881
          %884 = dma.hbm_to_vmem [thread:$0]  %s26, 16, %s882, [#allocation39]
        $region64: #{transformer_encoder_8m.1} parent=11 // pred_fallthru
          _
      $region12: #{transformer_encoder_8m.1} parent=5 // pred_fallthru
        _
      %p885 = scmp.lt.s32.totalorder %s60, 10
      // Predicated region
      $region65: #{transformer_encoder_8m.1} parent=5 // pred_check
        %p886 = pneg %p885
      $region66: #{transformer_encoder_8m.1} parent=5 // pred_check_branch
        %888 = sbr.rel (%p886) target = $region68
      $region67: #{transformer_encoder_8m.1} parent=5 // pred_region
        // Predicated region
        $region69: #{transformer_encoder_8m.1} parent=67 // pred_check
          %p889 = pneg %p92
        $region70: #{transformer_encoder_8m.1} parent=67 // pred_check_branch
          %891 = sbr.rel (%p889) target = $region72
        $region71: #{transformer_encoder_8m.1} parent=67 // pred_region
          %s892 = sand.u32 %s82, 1
          %s893 = scalar_lea.sflag [#allocation4], %s892
          %s894 = sand.u32 %s82, 1
          %s895 = smul.addr %s894, 8
          %s896 = scalar_lea.vmem [#allocation3], %s895
          %s898 = ssub.s32 128, 128
          %899 = vsyncadd %s893, %s898
          %s900 = smul.addr %s67, 128
          %s901 = scalar_lea.hbm %s0, %s900
          %s903 = sshll.u32 %s896, 4
          %s904 = int_to_ptr.vmem [resolvable:$true] %s903
          %906 = dma.hbm_to_vmem [thread:$0]  %s901, 128, %s904, %s893
        $region72: #{transformer_encoder_8m.1} parent=67 // pred_fallthru
          _
        // Predicated region
        $region73: #{transformer_encoder_8m.1} parent=67 // pred_check
          %p907 = pneg %p118
        $region74: #{transformer_encoder_8m.1} parent=67 // pred_check_branch
          %909 = sbr.rel (%p907) target = $region76
        $region75: #{transformer_encoder_8m.1} parent=67 // pred_region
          %p910 = scmp.lt.s32.totalorder %s67, 1
          %s911 = scalar_select %p910, %s67, 1
          %s912 = scalar_lea.vmem %s1, %s911
        $region76: #{transformer_encoder_8m.1} parent=67 // pred_fallthru
          _
        // Predicated region
        $region77: #{transformer_encoder_8m.1} parent=67 // pred_check
          %p913 = pneg %p375
        $region78: #{transformer_encoder_8m.1} parent=67 // pred_check_branch
          %915 = sbr.rel (%p913) target = $region80
        $region79: #{transformer_encoder_8m.1} parent=67 // pred_region
          %s916 = sand.u32 %s60, 1
          %s917 = scalar_lea.sflag [#allocation21], %s916
          %s918 = sand.u32 %s365, 1
          %s919 = smul.addr %s918, 768
          %s920 = scalar_lea.vmem [#allocation20], %s919
          %s922 = ssub.s32 12288, 12288
          %923 = vsyncadd %s917, %s922
          %s924 = smul.addr %s68, 192
          %s925 = smul.addr %s924, 64
          %s926 = scalar_lea.hbm %s13, %s925
          %s927 = sshll.u32 %s920, 4
          %s928 = int_to_ptr.vmem [resolvable:$true] %s927
          %933 = dma.hbm_to_vmem [thread:$0]  %s926, 12288, %s928, %s917, 384, 384, 24
        $region80: #{transformer_encoder_8m.1} parent=67 // pred_fallthru
          _
        // Predicated region
        $region81: #{transformer_encoder_8m.1} parent=67 // pred_check
          %p934 = pneg %p401
        $region82: #{transformer_encoder_8m.1} parent=67 // pred_check_branch
          %936 = sbr.rel (%p934) target = $region84
        $region83: #{transformer_encoder_8m.1} parent=67 // pred_region
          %s937 = sand.u32 %s60, 1
          %s938 = scalar_lea.sflag [#allocation21], %s937
          %s939 = sand.u32 %s391, 1
          %s940 = smul.addr %s939, 6
          %s941 = scalar_lea.vmem [#allocation22], %s940
          %s943 = ssub.s32 96, 96
          %944 = vsyncadd %s938, %s943
          %s945 = smul.addr %s68, 6
          %s946 = smul.addr %s945, 16
          %s947 = scalar_lea.hbm %s14, %s946
          %s949 = sshll.u32 %s941, 4
          %s950 = int_to_ptr.vmem [resolvable:$true] %s949
          %952 = dma.hbm_to_vmem [thread:$0]  %s947, 96, %s950, %s938
        $region84: #{transformer_encoder_8m.1} parent=67 // pred_fallthru
          _
        // Predicated region
        $region85: #{transformer_encoder_8m.1} parent=67 // pred_check
          %p953 = pneg %p427
        $region86: #{transformer_encoder_8m.1} parent=67 // pred_check_branch
          %955 = sbr.rel (%p953) target = $region88
        $region87: #{transformer_encoder_8m.1} parent=67 // pred_region
          %s956 = sand.u32 %s60, 1
          %s957 = scalar_lea.sflag [#allocation24], %s956
          %s958 = sand.u32 %s417, 1
          %s959 = smul.addr %s958, 256
          %s960 = scalar_lea.vmem [#allocation23], %s959
          %s962 = ssub.s32 4096, 4096
          %963 = vsyncadd %s957, %s962
          %s964 = smul.addr %s68, 64
          %s965 = smul.addr %s964, 64
          %s966 = scalar_lea.hbm %s15, %s965
          %s967 = sshll.u32 %s960, 4
          %s968 = int_to_ptr.vmem [resolvable:$true] %s967
          %973 = dma.hbm_to_vmem [thread:$0]  %s966, 4096, %s968, %s957, 128, 128, 8
        $region88: #{transformer_encoder_8m.1} parent=67 // pred_fallthru
          _
        // Predicated region
        $region89: #{transformer_encoder_8m.1} parent=67 // pred_check
          %p974 = pneg %p453
        $region90: #{transformer_encoder_8m.1} parent=67 // pred_check_branch
          %976 = sbr.rel (%p974) target = $region92
        $region91: #{transformer_encoder_8m.1} parent=67 // pred_region
          %s977 = sand.u32 %s60, 1
          %s978 = scalar_lea.sflag [#allocation24], %s977
          %s979 = sand.u32 %s443, 1
          %s980 = smul.addr %s979, 2
          %s981 = scalar_lea.vmem [#allocation25], %s980
          %s983 = ssub.s32 32, 32
          %984 = vsyncadd %s978, %s983
          %s985 = smul.addr %s68, 2
          %s986 = smul.addr %s985, 16
          %s987 = scalar_lea.hbm %s16, %s986
          %s989 = sshll.u32 %s981, 4
          %s990 = int_to_ptr.vmem [resolvable:$true] %s989
          %992 = dma.hbm_to_vmem [thread:$0]  %s987, 32, %s990, %s978
        $region92: #{transformer_encoder_8m.1} parent=67 // pred_fallthru
          _
        // Predicated region
        $region93: #{transformer_encoder_8m.1} parent=67 // pred_check
          %p993 = pneg %p479
        $region94: #{transformer_encoder_8m.1} parent=67 // pred_check_branch
          %995 = sbr.rel (%p993) target = $region96
        $region95: #{transformer_encoder_8m.1} parent=67 // pred_region
          %s996 = sand.u32 %s60, 1
          %s997 = scalar_lea.sflag [#allocation27], %s996
          %s998 = sand.u32 %s469, 1
          %s999 = smul.addr %s998, 2
          %s1000 = scalar_lea.vmem [#allocation26], %s999
          %s1002 = ssub.s32 32, 32
          %1003 = vsyncadd %s997, %s1002
          %s1004 = smul.addr %s68, 2
          %s1005 = smul.addr %s1004, 16
          %s1006 = scalar_lea.hbm %s17, %s1005
          %s1008 = sshll.u32 %s1000, 4
          %s1009 = int_to_ptr.vmem [resolvable:$true] %s1008
          %1011 = dma.hbm_to_vmem [thread:$0]  %s1006, 32, %s1009, %s997
        $region96: #{transformer_encoder_8m.1} parent=67 // pred_fallthru
          _
        // Predicated region
        $region97: #{transformer_encoder_8m.1} parent=67 // pred_check
          %p1012 = pneg %p505
        $region98: #{transformer_encoder_8m.1} parent=67 // pred_check_branch
          %1014 = sbr.rel (%p1012) target = $region100
        $region99: #{transformer_encoder_8m.1} parent=67 // pred_region
          %s1015 = sand.u32 %s60, 1
          %s1016 = scalar_lea.sflag [#allocation27], %s1015
          %s1017 = sand.u32 %s495, 1
          %s1018 = smul.addr %s1017, 2
          %s1019 = scalar_lea.vmem [#allocation28], %s1018
          %s1021 = ssub.s32 32, 32
          %1022 = vsyncadd %s1016, %s1021
          %s1023 = smul.addr %s68, 2
          %s1024 = smul.addr %s1023, 16
          %s1025 = scalar_lea.hbm %s18, %s1024
          %s1027 = sshll.u32 %s1019, 4
          %s1028 = int_to_ptr.vmem [resolvable:$true] %s1027
          %1030 = dma.hbm_to_vmem [thread:$0]  %s1025, 32, %s1028, %s1016
        $region100: #{transformer_encoder_8m.1} parent=67 // pred_fallthru
          _
        // Predicated region
        $region101: #{transformer_encoder_8m.1} parent=67 // pred_check
          %p1031 = pneg %p531
        $region102: #{transformer_encoder_8m.1} parent=67 // pred_check_branch
          %1033 = sbr.rel (%p1031) target = $region104
        $region103: #{transformer_encoder_8m.1} parent=67 // pred_region
          %s1034 = sand.u32 %s60, 1
          %s1035 = scalar_lea.sflag [#allocation30], %s1034
          %s1036 = sand.u32 %s521, 1
          %s1037 = smul.addr %s1036, 1024
          %s1038 = scalar_lea.vmem [#allocation29], %s1037
          %s1040 = ssub.s32 16384, 16384
          %1041 = vsyncadd %s1035, %s1040
          %s1042 = smul.addr %s68, 256
          %s1043 = smul.addr %s1042, 64
          %s1044 = scalar_lea.hbm %s19, %s1043
          %s1045 = sshll.u32 %s1038, 4
          %s1046 = int_to_ptr.vmem [resolvable:$true] %s1045
          %1051 = dma.hbm_to_vmem [thread:$0]  %s1044, 16384, %s1046, %s1035, 512, 512, 32
        $region104: #{transformer_encoder_8m.1} parent=67 // pred_fallthru
          _
        // Predicated region
        $region105: #{transformer_encoder_8m.1} parent=67 // pred_check
          %p1052 = pneg %p557
        $region106: #{transformer_encoder_8m.1} parent=67 // pred_check_branch
          %1054 = sbr.rel (%p1052) target = $region108
        $region107: #{transformer_encoder_8m.1} parent=67 // pred_region
          %s1055 = sand.u32 %s60, 1
          %s1056 = scalar_lea.sflag [#allocation30], %s1055
          %s1057 = sand.u32 %s547, 1
          %s1058 = smul.addr %s1057, 8
          %s1059 = scalar_lea.vmem [#allocation31], %s1058
          %s1061 = ssub.s32 128, 128
          %1062 = vsyncadd %s1056, %s1061
          %s1063 = smul.addr %s68, 8
          %s1064 = smul.addr %s1063, 16
          %s1065 = scalar_lea.hbm %s20, %s1064
          %s1067 = sshll.u32 %s1059, 4
          %s1068 = int_to_ptr.vmem [resolvable:$true] %s1067
          %1070 = dma.hbm_to_vmem [thread:$0]  %s1065, 128, %s1068, %s1056
        $region108: #{transformer_encoder_8m.1} parent=67 // pred_fallthru
          _
        // Predicated region
        $region109: #{transformer_encoder_8m.1} parent=67 // pred_check
          %p1071 = pneg %p583
        $region110: #{transformer_encoder_8m.1} parent=67 // pred_check_branch
          %1073 = sbr.rel (%p1071) target = $region112
        $region111: #{transformer_encoder_8m.1} parent=67 // pred_region
          %s1074 = sand.u32 %s60, 1
          %s1075 = scalar_lea.sflag [#allocation33], %s1074
          %s1076 = sand.u32 %s573, 1
          %s1077 = smul.addr %s1076, 1024
          %s1078 = scalar_lea.vmem [#allocation32], %s1077
          %s1080 = ssub.s32 16384, 16384
          %1081 = vsyncadd %s1075, %s1080
          %s1082 = smul.addr %s68, 256
          %s1083 = smul.addr %s1082, 64
          %s1084 = scalar_lea.hbm %s21, %s1083
          %s1085 = sshll.u32 %s1078, 4
          %s1086 = int_to_ptr.vmem [resolvable:$true] %s1085
          %1091 = dma.hbm_to_vmem [thread:$0]  %s1084, 16384, %s1086, %s1075, 128, 128, 8
        $region112: #{transformer_encoder_8m.1} parent=67 // pred_fallthru
          _
        // Predicated region
        $region113: #{transformer_encoder_8m.1} parent=67 // pred_check
          %p1092 = pneg %p609
        $region114: #{transformer_encoder_8m.1} parent=67 // pred_check_branch
          %1094 = sbr.rel (%p1092) target = $region116
        $region115: #{transformer_encoder_8m.1} parent=67 // pred_region
          %s1095 = sand.u32 %s60, 1
          %s1096 = scalar_lea.sflag [#allocation33], %s1095
          %s1097 = sand.u32 %s599, 1
          %s1098 = smul.addr %s1097, 2
          %s1099 = scalar_lea.vmem [#allocation34], %s1098
          %s1101 = ssub.s32 32, 32
          %1102 = vsyncadd %s1096, %s1101
          %s1103 = smul.addr %s68, 2
          %s1104 = smul.addr %s1103, 16
          %s1105 = scalar_lea.hbm %s22, %s1104
          %s1107 = sshll.u32 %s1099, 4
          %s1108 = int_to_ptr.vmem [resolvable:$true] %s1107
          %1110 = dma.hbm_to_vmem [thread:$0]  %s1105, 32, %s1108, %s1096
        $region116: #{transformer_encoder_8m.1} parent=67 // pred_fallthru
          _
        // Predicated region
        $region117: #{transformer_encoder_8m.1} parent=67 // pred_check
          %p1111 = pneg %p635
        $region118: #{transformer_encoder_8m.1} parent=67 // pred_check_branch
          %1113 = sbr.rel (%p1111) target = $region120
        $region119: #{transformer_encoder_8m.1} parent=67 // pred_region
          %s1114 = sand.u32 %s60, 1
          %s1115 = scalar_lea.sflag [#allocation36], %s1114
          %s1116 = sand.u32 %s625, 1
          %s1117 = smul.addr %s1116, 2
          %s1118 = scalar_lea.vmem [#allocation35], %s1117
          %s1120 = ssub.s32 32, 32
          %1121 = vsyncadd %s1115, %s1120
          %s1122 = smul.addr %s68, 2
          %s1123 = smul.addr %s1122, 16
          %s1124 = scalar_lea.hbm %s23, %s1123
          %s1126 = sshll.u32 %s1118, 4
          %s1127 = int_to_ptr.vmem [resolvable:$true] %s1126
          %1129 = dma.hbm_to_vmem [thread:$0]  %s1124, 32, %s1127, %s1115
        $region120: #{transformer_encoder_8m.1} parent=67 // pred_fallthru
          _
        // Predicated region
        $region121: #{transformer_encoder_8m.1} parent=67 // pred_check
          %p1130 = pneg %p661
        $region122: #{transformer_encoder_8m.1} parent=67 // pred_check_branch
          %1132 = sbr.rel (%p1130) target = $region124
        $region123: #{transformer_encoder_8m.1} parent=67 // pred_region
          %s1133 = sand.u32 %s60, 1
          %s1134 = scalar_lea.sflag [#allocation36], %s1133
          %s1135 = sand.u32 %s651, 1
          %s1136 = smul.addr %s1135, 2
          %s1137 = scalar_lea.vmem [#allocation37], %s1136
          %s1139 = ssub.s32 32, 32
          %1140 = vsyncadd %s1134, %s1139
          %s1141 = smul.addr %s68, 2
          %s1142 = smul.addr %s1141, 16
          %s1143 = scalar_lea.hbm %s24, %s1142
          %s1145 = sshll.u32 %s1137, 4
          %s1146 = int_to_ptr.vmem [resolvable:$true] %s1145
          %1148 = dma.hbm_to_vmem [thread:$0]  %s1143, 32, %s1146, %s1134
        $region124: #{transformer_encoder_8m.1} parent=67 // pred_fallthru
          _
      $region68: #{transformer_encoder_8m.1} parent=5 // pred_fallthru
        _
      %p1149 = scmp.le.s32.totalorder 1, %s60
      %p1150 = scmp.lt.s32.totalorder %s60, 11
      %p1151 = pnand %p1149, %p1150
      %p1152 = pneg %p1151
      // Predicated region
      $region125: #{transformer_encoder_8m.1} parent=5 // pred_check
        _
      $region126: #{transformer_encoder_8m.1} parent=5 // pred_check_branch
        %1154 = sbr.rel (%p1151) target = $region128
      $region127: #{transformer_encoder_8m.1} parent=5 // pred_region
        %s1155 = ssub.s32 %s60, 1
        %s1156 = sand.u32 %s85, 1
        %s1157 = scalar_lea.sflag [#allocation4], %s1156
        %s1158 = sand.u32 %s85, 1
        %s1159 = smul.addr %s1158, 8
        %s1160 = scalar_lea.vmem [#allocation3], %s1159
        // Predicated region
        $region129: #{transformer_encoder_8m.1} parent=127 // pred_check
          %p1161 = pneg %p98
        $region130: #{transformer_encoder_8m.1} parent=127 // pred_check_branch
          %1163 = sbr.rel (%p1161) target = $region132
        $region131: #{transformer_encoder_8m.1} parent=127 // pred_region
          %1164 = dma.done %s1157, 128
        $region132: #{transformer_encoder_8m.1} parent=127 // pred_fallthru
          _
        // Predicated region
        $region133: #{transformer_encoder_8m.1} parent=127 // pred_check
          %p1165 = pneg %p166
        $region134: #{transformer_encoder_8m.1} parent=127 // pred_check_branch
          %1167 = sbr.rel (%p1165) target = $region136
        $region135: #{transformer_encoder_8m.1} parent=127 // pred_region
          %1168 = dma.done [#allocation6], 2048
        $region136: #{transformer_encoder_8m.1} parent=127 // pred_fallthru
          _
        // Predicated region
        $region137: #{transformer_encoder_8m.1} parent=127 // pred_check
          %p1169 = pneg %p187
        $region138: #{transformer_encoder_8m.1} parent=127 // pred_check_branch
          %1171 = sbr.rel (%p1169) target = $region140
        $region139: #{transformer_encoder_8m.1} parent=127 // pred_region
          %1172 = dma.done [#allocation6], 32
        $region140: #{transformer_encoder_8m.1} parent=127 // pred_fallthru
          _
        // Predicated region
        $region141: #{transformer_encoder_8m.1} parent=127 // pred_check
          %p1173 = pneg %p208
        $region142: #{transformer_encoder_8m.1} parent=127 // pred_check_branch
          %1175 = sbr.rel (%p1173) target = $region144
        $region143: #{transformer_encoder_8m.1} parent=127 // pred_region
          %1176 = dma.done [#allocation9], 4096
        $region144: #{transformer_encoder_8m.1} parent=127 // pred_fallthru
          _
        // Predicated region
        $region145: #{transformer_encoder_8m.1} parent=127 // pred_check
          %p1177 = pneg %p229
        $region146: #{transformer_encoder_8m.1} parent=127 // pred_check_branch
          %1179 = sbr.rel (%p1177) target = $region148
        $region147: #{transformer_encoder_8m.1} parent=127 // pred_region
          %1180 = dma.done [#allocation9], 32
        $region148: #{transformer_encoder_8m.1} parent=127 // pred_fallthru
          _
        // Predicated region
        $region149: #{transformer_encoder_8m.1} parent=127 // pred_check
          %p1181 = pneg %p250
        $region150: #{transformer_encoder_8m.1} parent=127 // pred_check_branch
          %1183 = sbr.rel (%p1181) target = $region152
        $region151: #{transformer_encoder_8m.1} parent=127 // pred_region
          %1184 = dma.done [#allocation12], 8192
        $region152: #{transformer_encoder_8m.1} parent=127 // pred_fallthru
          _
        // Predicated region
        $region153: #{transformer_encoder_8m.1} parent=127 // pred_check
          %p1185 = pneg %p271
        $region154: #{transformer_encoder_8m.1} parent=127 // pred_check_branch
          %1187 = sbr.rel (%p1185) target = $region156
        $region155: #{transformer_encoder_8m.1} parent=127 // pred_region
          %1188 = dma.done [#allocation12], 128
        $region156: #{transformer_encoder_8m.1} parent=127 // pred_fallthru
          _
        // Predicated region
        $region157: #{transformer_encoder_8m.1} parent=127 // pred_check
          %p1189 = pneg %p292
        $region158: #{transformer_encoder_8m.1} parent=127 // pred_check_branch
          %1191 = sbr.rel (%p1189) target = $region160
        $region159: #{transformer_encoder_8m.1} parent=127 // pred_region
          %1192 = dma.done [#allocation15], 16384
        $region160: #{transformer_encoder_8m.1} parent=127 // pred_fallthru
          _
        // Predicated region
        $region161: #{transformer_encoder_8m.1} parent=127 // pred_check
          %p1193 = pneg %p313
        $region162: #{transformer_encoder_8m.1} parent=127 // pred_check_branch
          %1195 = sbr.rel (%p1193) target = $region164
        $region163: #{transformer_encoder_8m.1} parent=127 // pred_region
          %1196 = dma.done [#allocation15], 32
        $region164: #{transformer_encoder_8m.1} parent=127 // pred_fallthru
          _
        // Predicated region
        $region165: #{transformer_encoder_8m.1} parent=127 // pred_check
          %p1197 = pneg %p334
        $region166: #{transformer_encoder_8m.1} parent=127 // pred_check_branch
          %1199 = sbr.rel (%p1197) target = $region168
        $region167: #{transformer_encoder_8m.1} parent=127 // pred_region
          %1200 = dma.done [#allocation18], 32
        $region168: #{transformer_encoder_8m.1} parent=127 // pred_fallthru
          _
        // Predicated region
        $region169: #{transformer_encoder_8m.1} parent=127 // pred_check
          %p1201 = pneg %p355
        $region170: #{transformer_encoder_8m.1} parent=127 // pred_check_branch
          %1203 = sbr.rel (%p1201) target = $region172
        $region171: #{transformer_encoder_8m.1} parent=127 // pred_region
          %1204 = dma.done [#allocation18], 32
        $region172: #{transformer_encoder_8m.1} parent=127 // pred_fallthru
          _
        %s1205 = sand.u32 %s65, 1
        %s1206 = scalar_lea.sflag [#allocation21], %s1205
        %s1207 = sand.u32 %s368, 1
        %s1208 = smul.addr %s1207, 768
        %s1209 = scalar_lea.vmem [#allocation20], %s1208
        // Predicated region
        $region173: #{transformer_encoder_8m.1} parent=127 // pred_check
          %p1210 = pneg %p381
        $region174: #{transformer_encoder_8m.1} parent=127 // pred_check_branch
          %1212 = sbr.rel (%p1210) target = $region176
        $region175: #{transformer_encoder_8m.1} parent=127 // pred_region
          %1213 = dma.done %s1206, 12288
        $region176: #{transformer_encoder_8m.1} parent=127 // pred_fallthru
          _
        %s1214 = sand.u32 %s65, 1
        %s1215 = scalar_lea.sflag [#allocation21], %s1214
        %s1216 = sand.u32 %s394, 1
        %s1217 = smul.addr %s1216, 6
        %s1218 = scalar_lea.vmem [#allocation22], %s1217
        // Predicated region
        $region177: #{transformer_encoder_8m.1} parent=127 // pred_check
          %p1219 = pneg %p407
        $region178: #{transformer_encoder_8m.1} parent=127 // pred_check_branch
          %1221 = sbr.rel (%p1219) target = $region180
        $region179: #{transformer_encoder_8m.1} parent=127 // pred_region
          %1222 = dma.done %s1215, 96
        $region180: #{transformer_encoder_8m.1} parent=127 // pred_fallthru
          _
        %s1223 = sand.u32 %s65, 1
        %s1224 = scalar_lea.sflag [#allocation24], %s1223
        %s1225 = sand.u32 %s420, 1
        %s1226 = smul.addr %s1225, 256
        %s1227 = scalar_lea.vmem [#allocation23], %s1226
        // Predicated region
        $region181: #{transformer_encoder_8m.1} parent=127 // pred_check
          %p1228 = pneg %p433
        $region182: #{transformer_encoder_8m.1} parent=127 // pred_check_branch
          %1230 = sbr.rel (%p1228) target = $region184
        $region183: #{transformer_encoder_8m.1} parent=127 // pred_region
          %1231 = dma.done %s1224, 4096
        $region184: #{transformer_encoder_8m.1} parent=127 // pred_fallthru
          _
        %s1232 = sand.u32 %s65, 1
        %s1233 = scalar_lea.sflag [#allocation24], %s1232
        %s1234 = sand.u32 %s446, 1
        %s1235 = smul.addr %s1234, 2
        %s1236 = scalar_lea.vmem [#allocation25], %s1235
        // Predicated region
        $region185: #{transformer_encoder_8m.1} parent=127 // pred_check
          %p1237 = pneg %p459
        $region186: #{transformer_encoder_8m.1} parent=127 // pred_check_branch
          %1239 = sbr.rel (%p1237) target = $region188
        $region187: #{transformer_encoder_8m.1} parent=127 // pred_region
          %1240 = dma.done %s1233, 32
        $region188: #{transformer_encoder_8m.1} parent=127 // pred_fallthru
          _
        %s1241 = sand.u32 %s65, 1
        %s1242 = scalar_lea.sflag [#allocation27], %s1241
        %s1243 = sand.u32 %s472, 1
        %s1244 = smul.addr %s1243, 2
        %s1245 = scalar_lea.vmem [#allocation26], %s1244
        // Predicated region
        $region189: #{transformer_encoder_8m.1} parent=127 // pred_check
          %p1246 = pneg %p485
        $region190: #{transformer_encoder_8m.1} parent=127 // pred_check_branch
          %1248 = sbr.rel (%p1246) target = $region192
        $region191: #{transformer_encoder_8m.1} parent=127 // pred_region
          %1249 = dma.done %s1242, 32
        $region192: #{transformer_encoder_8m.1} parent=127 // pred_fallthru
          _
        %s1250 = sand.u32 %s65, 1
        %s1251 = scalar_lea.sflag [#allocation27], %s1250
        %s1252 = sand.u32 %s498, 1
        %s1253 = smul.addr %s1252, 2
        %s1254 = scalar_lea.vmem [#allocation28], %s1253
        // Predicated region
        $region193: #{transformer_encoder_8m.1} parent=127 // pred_check
          %p1255 = pneg %p511
        $region194: #{transformer_encoder_8m.1} parent=127 // pred_check_branch
          %1257 = sbr.rel (%p1255) target = $region196
        $region195: #{transformer_encoder_8m.1} parent=127 // pred_region
          %1258 = dma.done %s1251, 32
        $region196: #{transformer_encoder_8m.1} parent=127 // pred_fallthru
          _
        %s1259 = sand.u32 %s65, 1
        %s1260 = scalar_lea.sflag [#allocation30], %s1259
        %s1261 = sand.u32 %s524, 1
        %s1262 = smul.addr %s1261, 1024
        %s1263 = scalar_lea.vmem [#allocation29], %s1262
        // Predicated region
        $region197: #{transformer_encoder_8m.1} parent=127 // pred_check
          %p1264 = pneg %p537
        $region198: #{transformer_encoder_8m.1} parent=127 // pred_check_branch
          %1266 = sbr.rel (%p1264) target = $region200
        $region199: #{transformer_encoder_8m.1} parent=127 // pred_region
          %1267 = dma.done %s1260, 16384
        $region200: #{transformer_encoder_8m.1} parent=127 // pred_fallthru
          _
        %s1268 = sand.u32 %s65, 1
        %s1269 = scalar_lea.sflag [#allocation30], %s1268
        %s1270 = sand.u32 %s550, 1
        %s1271 = smul.addr %s1270, 8
        %s1272 = scalar_lea.vmem [#allocation31], %s1271
        // Predicated region
        $region201: #{transformer_encoder_8m.1} parent=127 // pred_check
          %p1273 = pneg %p563
        $region202: #{transformer_encoder_8m.1} parent=127 // pred_check_branch
          %1275 = sbr.rel (%p1273) target = $region204
        $region203: #{transformer_encoder_8m.1} parent=127 // pred_region
          %1276 = dma.done %s1269, 128
        $region204: #{transformer_encoder_8m.1} parent=127 // pred_fallthru
          _
        %s1277 = sand.u32 %s65, 1
        %s1278 = scalar_lea.sflag [#allocation33], %s1277
        %s1279 = sand.u32 %s576, 1
        %s1280 = smul.addr %s1279, 1024
        %s1281 = scalar_lea.vmem [#allocation32], %s1280
        // Predicated region
        $region205: #{transformer_encoder_8m.1} parent=127 // pred_check
          %p1282 = pneg %p589
        $region206: #{transformer_encoder_8m.1} parent=127 // pred_check_branch
          %1284 = sbr.rel (%p1282) target = $region208
        $region207: #{transformer_encoder_8m.1} parent=127 // pred_region
          %1285 = dma.done %s1278, 16384
        $region208: #{transformer_encoder_8m.1} parent=127 // pred_fallthru
          _
        %s1286 = sand.u32 %s65, 1
        %s1287 = scalar_lea.sflag [#allocation33], %s1286
        %s1288 = sand.u32 %s602, 1
        %s1289 = smul.addr %s1288, 2
        %s1290 = scalar_lea.vmem [#allocation34], %s1289
        // Predicated region
        $region209: #{transformer_encoder_8m.1} parent=127 // pred_check
          %p1291 = pneg %p615
        $region210: #{transformer_encoder_8m.1} parent=127 // pred_check_branch
          %1293 = sbr.rel (%p1291) target = $region212
        $region211: #{transformer_encoder_8m.1} parent=127 // pred_region
          %1294 = dma.done %s1287, 32
        $region212: #{transformer_encoder_8m.1} parent=127 // pred_fallthru
          _
        %s1295 = sand.u32 %s65, 1
        %s1296 = scalar_lea.sflag [#allocation36], %s1295
        %s1297 = sand.u32 %s628, 1
        %s1298 = smul.addr %s1297, 2
        %s1299 = scalar_lea.vmem [#allocation35], %s1298
        // Predicated region
        $region213: #{transformer_encoder_8m.1} parent=127 // pred_check
          %p1300 = pneg %p641
        $region214: #{transformer_encoder_8m.1} parent=127 // pred_check_branch
          %1302 = sbr.rel (%p1300) target = $region216
        $region215: #{transformer_encoder_8m.1} parent=127 // pred_region
          %1303 = dma.done %s1296, 32
        $region216: #{transformer_encoder_8m.1} parent=127 // pred_fallthru
          _
        %s1304 = sand.u32 %s65, 1
        %s1305 = scalar_lea.sflag [#allocation36], %s1304
        %s1306 = sand.u32 %s654, 1
        %s1307 = smul.addr %s1306, 2
        %s1308 = scalar_lea.vmem [#allocation37], %s1307
        // Predicated region
        $region217: #{transformer_encoder_8m.1} parent=127 // pred_check
          %p1309 = pneg %p667
        $region218: #{transformer_encoder_8m.1} parent=127 // pred_check_branch
          %1311 = sbr.rel (%p1309) target = $region220
        $region219: #{transformer_encoder_8m.1} parent=127 // pred_region
          %1312 = dma.done %s1305, 32
        $region220: #{transformer_encoder_8m.1} parent=127 // pred_fallthru
          _
        // Predicated region
        $region221: #{transformer_encoder_8m.1} parent=127 // pred_check
          %p1313 = pneg %p709
        $region222: #{transformer_encoder_8m.1} parent=127 // pred_check_branch
          %1315 = sbr.rel (%p1313) target = $region224
        $region223: #{transformer_encoder_8m.1} parent=127 // pred_region
          %1316 = dma.done [#allocation39], 16
        $region224: #{transformer_encoder_8m.1} parent=127 // pred_fallthru
          _
        %s1317 = sand.u32 %s85, 1
        %s1318 = scalar_lea.sflag [#allocation4], %s1317
        %s1319 = sand.u32 %s85, 1
        %s1320 = smul.addr %s1319, 8
        %s1321 = scalar_lea.vmem [#allocation3], %s1320
        %p1322 = pneg %p98
        %p1323 = pneg %p95
        %p1324 = scmp.lt.s32.totalorder %s69, 1
        %s1325 = scalar_select %p1324, %s69, 1
        %s1326 = scalar_lea.vmem %s1, %s1325
        %p1327 = pneg %p124
        %p1328 = pneg %p121
        %p1329 = pneg %p145
        %p1330 = pneg %p142
        %p1331 = pneg %p166
        %p1332 = pneg %p163
        %p1333 = pneg %p187
        %p1334 = pneg %p184
        %p1335 = pneg %p208
        %p1336 = pneg %p205
        %p1337 = pneg %p229
        %p1338 = pneg %p226
        %p1339 = pneg %p250
        %p1340 = pneg %p247
        %p1341 = pneg %p271
        %p1342 = pneg %p268
        %p1343 = pneg %p292
        %p1344 = pneg %p289
        %p1345 = pneg %p313
        %p1346 = pneg %p310
        %p1347 = pneg %p334
        %p1348 = pneg %p331
        %p1349 = pneg %p355
        %p1350 = pneg %p352
        %s1351 = sand.u32 %s65, 1
        %s1352 = scalar_lea.sflag [#allocation21], %s1351
        %s1353 = sand.u32 %s368, 1
        %s1354 = smul.addr %s1353, 768
        %s1355 = scalar_lea.vmem [#allocation20], %s1354
        %p1356 = pneg %p381
        %p1357 = pneg %p378
        %s1358 = sand.u32 %s65, 1
        %s1359 = scalar_lea.sflag [#allocation21], %s1358
        %s1360 = sand.u32 %s394, 1
        %s1361 = smul.addr %s1360, 6
        %s1362 = scalar_lea.vmem [#allocation22], %s1361
        %p1363 = pneg %p407
        %p1364 = pneg %p404
        %s1365 = sand.u32 %s65, 1
        %s1366 = scalar_lea.sflag [#allocation24], %s1365
        %s1367 = sand.u32 %s420, 1
        %s1368 = smul.addr %s1367, 256
        %s1369 = scalar_lea.vmem [#allocation23], %s1368
        %p1370 = pneg %p433
        %p1371 = pneg %p430
        %s1372 = sand.u32 %s65, 1
        %s1373 = scalar_lea.sflag [#allocation24], %s1372
        %s1374 = sand.u32 %s446, 1
        %s1375 = smul.addr %s1374, 2
        %s1376 = scalar_lea.vmem [#allocation25], %s1375
        %p1377 = pneg %p459
        %p1378 = pneg %p456
        %s1379 = sand.u32 %s65, 1
        %s1380 = scalar_lea.sflag [#allocation27], %s1379
        %s1381 = sand.u32 %s472, 1
        %s1382 = smul.addr %s1381, 2
        %s1383 = scalar_lea.vmem [#allocation26], %s1382
        %p1384 = pneg %p485
        %p1385 = pneg %p482
        %s1386 = sand.u32 %s65, 1
        %s1387 = scalar_lea.sflag [#allocation27], %s1386
        %s1388 = sand.u32 %s498, 1
        %s1389 = smul.addr %s1388, 2
        %s1390 = scalar_lea.vmem [#allocation28], %s1389
        %p1391 = pneg %p511
        %p1392 = pneg %p508
        %s1393 = sand.u32 %s65, 1
        %s1394 = scalar_lea.sflag [#allocation30], %s1393
        %s1395 = sand.u32 %s524, 1
        %s1396 = smul.addr %s1395, 1024
        %s1397 = scalar_lea.vmem [#allocation29], %s1396
        %p1398 = pneg %p537
        %p1399 = pneg %p534
        %s1400 = sand.u32 %s65, 1
        %s1401 = scalar_lea.sflag [#allocation30], %s1400
        %s1402 = sand.u32 %s550, 1
        %s1403 = smul.addr %s1402, 8
        %s1404 = scalar_lea.vmem [#allocation31], %s1403
        %p1405 = pneg %p563
        %p1406 = pneg %p560
        %s1407 = sand.u32 %s65, 1
        %s1408 = scalar_lea.sflag [#allocation33], %s1407
        %s1409 = sand.u32 %s576, 1
        %s1410 = smul.addr %s1409, 1024
        %s1411 = scalar_lea.vmem [#allocation32], %s1410
        %p1412 = pneg %p589
        %p1413 = pneg %p586
        %s1414 = sand.u32 %s65, 1
        %s1415 = scalar_lea.sflag [#allocation33], %s1414
        %s1416 = sand.u32 %s602, 1
        %s1417 = smul.addr %s1416, 2
        %s1418 = scalar_lea.vmem [#allocation34], %s1417
        %p1419 = pneg %p615
        %p1420 = pneg %p612
        %s1421 = sand.u32 %s65, 1
        %s1422 = scalar_lea.sflag [#allocation36], %s1421
        %s1423 = sand.u32 %s628, 1
        %s1424 = smul.addr %s1423, 2
        %s1425 = scalar_lea.vmem [#allocation35], %s1424
        %p1426 = pneg %p641
        %p1427 = pneg %p638
        %s1428 = sand.u32 %s65, 1
        %s1429 = scalar_lea.sflag [#allocation36], %s1428
        %s1430 = sand.u32 %s654, 1
        %s1431 = smul.addr %s1430, 2
        %s1432 = scalar_lea.vmem [#allocation37], %s1431
        %p1433 = pneg %p667
        %p1434 = pneg %p664
        %p1435 = pneg %p688
        %p1436 = pneg %p685
        %p1437 = pneg %p709
        %p1438 = pneg %p706
        %p1439 = pneg %p735
        %p1440 = pneg %p732
        %p1441 = scmp.lt.s32.totalorder %s69, 1
        %s1442 = scalar_select %p1441, %s69, 1
        %s1443 = smul.addr %s1442, 8
        %s1444 = scalar_lea.vmem %s27, %s1443
        %p1445 = scmp.lt.s32.totalorder %s69, 1
        %s1446 = scalar_select %p1445, %s69, 1
        %s1447 = scalar_lea.vmem %s1, %s1446
        %p1448 = scmp.lt.s32.totalorder %s69, 1
        %s1449 = scalar_select %p1448, %s69, 1
        %s1450 = smul.addr %s1449, 8
        %s1451 = scalar_lea.vmem %s27, %s1450
        %p1453 = scmp.eq.s32.totalorder %s70, 0
        // Predicated region
        $region225: #{transformer_encoder_8m.1} parent=127 // pred_check
          %p1454 = pneg %p1453
        $region226: #{transformer_encoder_8m.1} parent=127 // pred_check_branch
          %1456 = sbr.rel (%p1454) target = $region228
        $region227: #{transformer_encoder_8m.1} parent=127 // pred_region
          %v1457 = vld [vmem:[%s1160] sm:$0xff]
          %v1458 = vpack.c.bf16 %v1457, %v1457
          %v1459 = vld [vmem:[#allocation5] sm:$0xff]
          %v1460 = vld [vmem:[#allocation5 + $0x8] sm:$0xff]
          %v1461 = vld [vmem:[#allocation5 + $0x10] sm:$0xff]
          %v1462 = vld [vmem:[#allocation5 + $0x18] sm:$0xff]
          %v1463 = vld [vmem:[#allocation5 + $0x20] sm:$0xff]
          %v1464 = vld [vmem:[#allocation5 + $0x28] sm:$0xff]
          %v1465 = vld [vmem:[#allocation5 + $0x30] sm:$0xff]
          %v1466 = vld [vmem:[#allocation5 + $0x38] sm:$0xff]
          %v1467 = vld [vmem:[#allocation5 + $0x40] sm:$0xff]
          %v1468 = vld [vmem:[#allocation5 + $0x48] sm:$0xff]
          %v1469 = vld [vmem:[#allocation5 + $0x50] sm:$0xff]
          %v1470 = vld [vmem:[#allocation5 + $0x58] sm:$0xff]
          %v1471 = vld [vmem:[#allocation5 + $0x60] sm:$0xff]
          %v1472 = vld [vmem:[#allocation5 + $0x68] sm:$0xff]
          %v1473 = vld [vmem:[#allocation5 + $0x70] sm:$0xff]
          %v1474 = vld [vmem:[#allocation5 + $0x78] sm:$0xff]
          %v1475 = vld [vmem:[#allocation7] sm:$0x3]
          %v1477 = vlaneseq
          %v1478 = vshrl.u32 %v1477, 7
          %v1479 = vsub.s32 0, %v1478
          %v1480 = vrot.slane %v1475, %v1479
          %v1481 = vlaneseq
          %v1482 = vshrl.u32 %v1481, 7
          %v1483 = vsub.s32 1, %v1482
          %v1484 = vrot.slane %v1475, %v1483
          %v1503 = vunpack.c.l.b16 %v1459
          %v1504 = vunpack.c.h.b16 %v1459
          %v1505 = vunpack.c.l.b16 %v1460
          %v1506 = vunpack.c.h.b16 %v1460
          %v1507 = vunpack.c.l.b16 %v1461
          %v1508 = vunpack.c.h.b16 %v1461
          %v1509 = vunpack.c.l.b16 %v1462
          %v1510 = vunpack.c.h.b16 %v1462
          %v1511 = vunpack.c.l.b16 %v1463
          %v1512 = vunpack.c.h.b16 %v1463
          %v1513 = vunpack.c.l.b16 %v1464
          %v1514 = vunpack.c.h.b16 %v1464
          %v1515 = vunpack.c.l.b16 %v1465
          %v1516 = vunpack.c.h.b16 %v1465
          %v1517 = vunpack.c.l.b16 %v1466
          %v1518 = vunpack.c.h.b16 %v1466
          %v1519 = vunpack.c.l.b16 %v1467
          %v1520 = vunpack.c.h.b16 %v1467
          %v1521 = vunpack.c.l.b16 %v1468
          %v1522 = vunpack.c.h.b16 %v1468
          %v1523 = vunpack.c.l.b16 %v1469
          %v1524 = vunpack.c.h.b16 %v1469
          %v1525 = vunpack.c.l.b16 %v1470
          %v1526 = vunpack.c.h.b16 %v1470
          %v1527 = vunpack.c.l.b16 %v1471
          %v1528 = vunpack.c.h.b16 %v1471
          %v1529 = vunpack.c.l.b16 %v1472
          %v1530 = vunpack.c.h.b16 %v1472
          %v1531 = vunpack.c.l.b16 %v1473
          %v1532 = vunpack.c.h.b16 %v1473
          %v1533 = vunpack.c.l.b16 %v1474
          %v1534 = vunpack.c.h.b16 %v1474
          %v1535 = vpack.c.b16 %v1505, %v1503
          %v1536 = vpack.c.b16 %v1506, %v1504
          %v1537 = vpack.c.b16 %v1509, %v1507
          %v1538 = vpack.c.b16 %v1510, %v1508
          %v1539 = vpack.c.b16 %v1513, %v1511
          %v1540 = vpack.c.b16 %v1514, %v1512
          %v1541 = vpack.c.b16 %v1517, %v1515
          %v1542 = vpack.c.b16 %v1518, %v1516
          %v1543 = vpack.c.b16 %v1521, %v1519
          %v1544 = vpack.c.b16 %v1522, %v1520
          %v1545 = vpack.c.b16 %v1525, %v1523
          %v1546 = vpack.c.b16 %v1526, %v1524
          %v1547 = vpack.c.b16 %v1529, %v1527
          %v1548 = vpack.c.b16 %v1530, %v1528
          %v1549 = vpack.c.b16 %v1533, %v1531
          %v1550 = vpack.c.b16 %v1534, %v1532
          %1567 = vmatprep.subr.bf16.mxu0 %v1536
          %1568 = vmatpush1.bf16.msra.mxu0 %v1535
          %1569 = vmatprep.subr.bf16.mxu0 %v1538
          %1570 = vmatpush1.bf16.msra.mxu0 %v1537
          %1571 = vmatprep.subr.bf16.mxu0 %v1540
          %1572 = vmatpush1.bf16.msra.mxu0 %v1539
          %1573 = vmatprep.subr.bf16.mxu0 %v1542
          %1574 = vmatpush1.bf16.msra.mxu0 %v1541
          %1575 = vmatprep.subr.bf16.mxu0 %v1544
          %1576 = vmatpush1.bf16.msra.mxu0 %v1543
          %1577 = vmatprep.subr.bf16.mxu0 %v1546
          %1578 = vmatpush1.bf16.msra.mxu0 %v1545
          %1579 = vmatprep.subr.bf16.mxu0 %v1548
          %1580 = vmatpush1.bf16.msra.mxu0 %v1547
          %1581 = vmatprep.subr.bf16.mxu0 %v1550
          %1582 = vmatpush1.bf16.msra.mxu0 %v1549
          %1583 = vmatprep.subr.bf16.mxu0 0
          %1584 = vmatpush1.bf16.msra.mxu0 0
          %1585 = vmatprep.subr.bf16.mxu0 0
          %1586 = vmatpush1.bf16.msra.mxu0 0
          %1587 = vmatprep.subr.bf16.mxu0 0
          %1588 = vmatpush1.bf16.msra.mxu0 0
          %1589 = vmatprep.subr.bf16.mxu0 0
          %1590 = vmatpush1.bf16.msra.mxu0 0
          %1591 = vmatprep.subr.bf16.mxu0 0
          %1592 = vmatpush1.bf16.msra.mxu0 0
          %1593 = vmatprep.subr.bf16.mxu0 0
          %1594 = vmatpush1.bf16.msra.mxu0 0
          %1595 = vmatprep.subr.bf16.mxu0 0
          %1596 = vmatpush1.bf16.msra.mxu0 0
          %1597 = vmatprep.subr.bf16.mxu0 0
          %1598 = vmatpush1.bf16.msra.mxu0 0
          %1599 = vmatprep.mubr.bf16.mxu0 0
          %1600 = vmatmul.mubr.bf16.gmra.mrb[0].mxu0 %v1458
          %v1601 = vpop.f32.mrb[0].mxu0
          %v1602 = vadd.f32 %v1480, %v1601
          %v1603 = vpop.f32.mrb[0].mxu0
          %v1604 = vadd.f32 %v1484, %v1603
          %v1605 = vpop.f32.mrb[0].mxu0
          %v1606 = vpop.f32.mrb[0].mxu0
          %1607 = vdwg.mxu0
          %v1608 = vtanh.pop %v1602
          %v1609 = vtanh.pop %v1604
          %v1610 = vpack.c.bf16 %v1608, %v1608
          %v1611 = vpack.c.bf16 %v1609, %v1609
          %v1612 = vld [vmem:[#allocation8] sm:$0xff]
          %v1613 = vld [vmem:[#allocation8 + $0x8] sm:$0xff]
          %v1614 = vld [vmem:[#allocation8 + $0x10] sm:$0xff]
          %v1615 = vld [vmem:[#allocation8 + $0x18] sm:$0xff]
          %v1616 = vld [vmem:[#allocation8 + $0x20] sm:$0xff]
          %v1617 = vld [vmem:[#allocation8 + $0x28] sm:$0xff]
          %v1618 = vld [vmem:[#allocation8 + $0x30] sm:$0xff]
          %v1619 = vld [vmem:[#allocation8 + $0x38] sm:$0xff]
          %v1620 = vld [vmem:[#allocation8 + $0x40] sm:$0xff]
          %v1621 = vld [vmem:[#allocation8 + $0x48] sm:$0xff]
          %v1622 = vld [vmem:[#allocation8 + $0x50] sm:$0xff]
          %v1623 = vld [vmem:[#allocation8 + $0x58] sm:$0xff]
          %v1624 = vld [vmem:[#allocation8 + $0x60] sm:$0xff]
          %v1625 = vld [vmem:[#allocation8 + $0x68] sm:$0xff]
          %v1626 = vld [vmem:[#allocation8 + $0x70] sm:$0xff]
          %v1627 = vld [vmem:[#allocation8 + $0x78] sm:$0xff]
          %v1628 = vld [vmem:[#allocation8 + $0x80] sm:$0xff]
          %v1629 = vld [vmem:[#allocation8 + $0x88] sm:$0xff]
          %v1630 = vld [vmem:[#allocation8 + $0x90] sm:$0xff]
          %v1631 = vld [vmem:[#allocation8 + $0x98] sm:$0xff]
          %v1632 = vld [vmem:[#allocation8 + $0xa0] sm:$0xff]
          %v1633 = vld [vmem:[#allocation8 + $0xa8] sm:$0xff]
          %v1634 = vld [vmem:[#allocation8 + $0xb0] sm:$0xff]
          %v1635 = vld [vmem:[#allocation8 + $0xb8] sm:$0xff]
          %v1636 = vld [vmem:[#allocation8 + $0xc0] sm:$0xff]
          %v1637 = vld [vmem:[#allocation8 + $0xc8] sm:$0xff]
          %v1638 = vld [vmem:[#allocation8 + $0xd0] sm:$0xff]
          %v1639 = vld [vmem:[#allocation8 + $0xd8] sm:$0xff]
          %v1640 = vld [vmem:[#allocation8 + $0xe0] sm:$0xff]
          %v1641 = vld [vmem:[#allocation8 + $0xe8] sm:$0xff]
          %v1642 = vld [vmem:[#allocation8 + $0xf0] sm:$0xff]
          %v1643 = vld [vmem:[#allocation8 + $0xf8] sm:$0xff]
          %v1644 = vld [vmem:[#allocation10] sm:$0x3]
          %v1646 = vlaneseq
          %v1647 = vshrl.u32 %v1646, 7
          %v1648 = vsub.s32 0, %v1647
          %v1649 = vrot.slane %v1644, %v1648
          %v1650 = vlaneseq
          %v1651 = vshrl.u32 %v1650, 7
          %v1652 = vsub.s32 1, %v1651
          %v1653 = vrot.slane %v1644, %v1652
          %v1688 = vunpack.c.l.b16 %v1612
          %v1689 = vunpack.c.h.b16 %v1612
          %v1690 = vunpack.c.l.b16 %v1613
          %v1691 = vunpack.c.h.b16 %v1613
          %v1692 = vunpack.c.l.b16 %v1614
          %v1693 = vunpack.c.h.b16 %v1614
          %v1694 = vunpack.c.l.b16 %v1615
          %v1695 = vunpack.c.h.b16 %v1615
          %v1696 = vunpack.c.l.b16 %v1616
          %v1697 = vunpack.c.h.b16 %v1616
          %v1698 = vunpack.c.l.b16 %v1617
          %v1699 = vunpack.c.h.b16 %v1617
          %v1700 = vunpack.c.l.b16 %v1618
          %v1701 = vunpack.c.h.b16 %v1618
          %v1702 = vunpack.c.l.b16 %v1619
          %v1703 = vunpack.c.h.b16 %v1619
          %v1704 = vunpack.c.l.b16 %v1620
          %v1705 = vunpack.c.h.b16 %v1620
          %v1706 = vunpack.c.l.b16 %v1621
          %v1707 = vunpack.c.h.b16 %v1621
          %v1708 = vunpack.c.l.b16 %v1622
          %v1709 = vunpack.c.h.b16 %v1622
          %v1710 = vunpack.c.l.b16 %v1623
          %v1711 = vunpack.c.h.b16 %v1623
          %v1712 = vunpack.c.l.b16 %v1624
          %v1713 = vunpack.c.h.b16 %v1624
          %v1714 = vunpack.c.l.b16 %v1625
          %v1715 = vunpack.c.h.b16 %v1625
          %v1716 = vunpack.c.l.b16 %v1626
          %v1717 = vunpack.c.h.b16 %v1626
          %v1718 = vunpack.c.l.b16 %v1627
          %v1719 = vunpack.c.h.b16 %v1627
          %v1720 = vunpack.c.l.b16 %v1628
          %v1721 = vunpack.c.h.b16 %v1628
          %v1722 = vunpack.c.l.b16 %v1629
          %v1723 = vunpack.c.h.b16 %v1629
          %v1724 = vunpack.c.l.b16 %v1630
          %v1725 = vunpack.c.h.b16 %v1630
          %v1726 = vunpack.c.l.b16 %v1631
          %v1727 = vunpack.c.h.b16 %v1631
          %v1728 = vunpack.c.l.b16 %v1632
          %v1729 = vunpack.c.h.b16 %v1632
          %v1730 = vunpack.c.l.b16 %v1633
          %v1731 = vunpack.c.h.b16 %v1633
          %v1732 = vunpack.c.l.b16 %v1634
          %v1733 = vunpack.c.h.b16 %v1634
          %v1734 = vunpack.c.l.b16 %v1635
          %v1735 = vunpack.c.h.b16 %v1635
          %v1736 = vunpack.c.l.b16 %v1636
          %v1737 = vunpack.c.h.b16 %v1636
          %v1738 = vunpack.c.l.b16 %v1637
          %v1739 = vunpack.c.h.b16 %v1637
          %v1740 = vunpack.c.l.b16 %v1638
          %v1741 = vunpack.c.h.b16 %v1638
          %v1742 = vunpack.c.l.b16 %v1639
          %v1743 = vunpack.c.h.b16 %v1639
          %v1744 = vunpack.c.l.b16 %v1640
          %v1745 = vunpack.c.h.b16 %v1640
          %v1746 = vunpack.c.l.b16 %v1641
          %v1747 = vunpack.c.h.b16 %v1641
          %v1748 = vunpack.c.l.b16 %v1642
          %v1749 = vunpack.c.h.b16 %v1642
          %v1750 = vunpack.c.l.b16 %v1643
          %v1751 = vunpack.c.h.b16 %v1643
          %v1752 = vpack.c.b16 %v1690, %v1688
          %v1753 = vpack.c.b16 %v1691, %v1689
          %v1754 = vpack.c.b16 %v1694, %v1692
          %v1755 = vpack.c.b16 %v1695, %v1693
          %v1756 = vpack.c.b16 %v1698, %v1696
          %v1757 = vpack.c.b16 %v1699, %v1697
          %v1758 = vpack.c.b16 %v1702, %v1700
          %v1759 = vpack.c.b16 %v1703, %v1701
          %v1760 = vpack.c.b16 %v1706, %v1704
          %v1761 = vpack.c.b16 %v1707, %v1705
          %v1762 = vpack.c.b16 %v1710, %v1708
          %v1763 = vpack.c.b16 %v1711, %v1709
          %v1764 = vpack.c.b16 %v1714, %v1712
          %v1765 = vpack.c.b16 %v1715, %v1713
          %v1766 = vpack.c.b16 %v1718, %v1716
          %v1767 = vpack.c.b16 %v1719, %v1717
          %v1768 = vpack.c.b16 %v1722, %v1720
          %v1769 = vpack.c.b16 %v1723, %v1721
          %v1770 = vpack.c.b16 %v1726, %v1724
          %v1771 = vpack.c.b16 %v1727, %v1725
          %v1772 = vpack.c.b16 %v1730, %v1728
          %v1773 = vpack.c.b16 %v1731, %v1729
          %v1774 = vpack.c.b16 %v1734, %v1732
          %v1775 = vpack.c.b16 %v1735, %v1733
          %v1776 = vpack.c.b16 %v1738, %v1736
          %v1777 = vpack.c.b16 %v1739, %v1737
          %v1778 = vpack.c.b16 %v1742, %v1740
          %v1779 = vpack.c.b16 %v1743, %v1741
          %v1780 = vpack.c.b16 %v1746, %v1744
          %v1781 = vpack.c.b16 %v1747, %v1745
          %v1782 = vpack.c.b16 %v1750, %v1748
          %v1783 = vpack.c.b16 %v1751, %v1749
          %1816 = vmatprep.subr.bf16.mxu0 %v1753
          %1817 = vmatpush1.bf16.msra.mxu0 %v1752
          %1818 = vmatprep.subr.bf16.mxu0 %v1755
          %1819 = vmatpush1.bf16.msra.mxu0 %v1754
          %1820 = vmatprep.subr.bf16.mxu0 %v1757
          %1821 = vmatpush1.bf16.msra.mxu0 %v1756
          %1822 = vmatprep.subr.bf16.mxu0 %v1759
          %1823 = vmatpush1.bf16.msra.mxu0 %v1758
          %1824 = vmatprep.subr.bf16.mxu0 %v1761
          %1825 = vmatpush1.bf16.msra.mxu0 %v1760
          %1826 = vmatprep.subr.bf16.mxu0 %v1763
          %1827 = vmatpush1.bf16.msra.mxu0 %v1762
          %1828 = vmatprep.subr.bf16.mxu0 %v1765
          %1829 = vmatpush1.bf16.msra.mxu0 %v1764
          %1830 = vmatprep.subr.bf16.mxu0 %v1767
          %1831 = vmatpush1.bf16.msra.mxu0 %v1766
          %1832 = vmatprep.subr.bf16.mxu0 %v1769
          %1833 = vmatpush1.bf16.msra.mxu0 %v1768
          %1834 = vmatprep.subr.bf16.mxu0 %v1771
          %1835 = vmatpush1.bf16.msra.mxu0 %v1770
          %1836 = vmatprep.subr.bf16.mxu0 %v1773
          %1837 = vmatpush1.bf16.msra.mxu0 %v1772
          %1838 = vmatprep.subr.bf16.mxu0 %v1775
          %1839 = vmatpush1.bf16.msra.mxu0 %v1774
          %1840 = vmatprep.subr.bf16.mxu0 %v1777
          %1841 = vmatpush1.bf16.msra.mxu0 %v1776
          %1842 = vmatprep.subr.bf16.mxu0 %v1779
          %1843 = vmatpush1.bf16.msra.mxu0 %v1778
          %1844 = vmatprep.subr.bf16.mxu0 %v1781
          %1845 = vmatpush1.bf16.msra.mxu0 %v1780
          %1846 = vmatprep.subr.bf16.mxu0 %v1783
          %1847 = vmatpush1.bf16.msra.mxu0 %v1782
          %1848 = vmatprep.mubr.bf16.mxu0 %v1611
          %1849 = vmatmul.mubr.bf16.gmra.mrb[0].mxu0 %v1610
          %v1850 = vpop.f32.mrb[0].mxu0
          %v1851 = vadd.f32 %v1649, %v1850
          %v1852 = vpop.f32.mrb[0].mxu0
          %v1853 = vadd.f32 %v1653, %v1852
          %v1854 = vpop.f32.mrb[0].mxu0
          %v1855 = vpop.f32.mrb[0].mxu0
          %1856 = vdwg.mxu0
          %v1857 = vld [vmem:[%s1447] sm:$0x1]
          %v1858 = vpack.c.bf16 %v1857, %v1857
          %v1859 = vld [vmem:[#allocation11] sm:$0xff]
          %v1860 = vld [vmem:[#allocation11 + $0x8] sm:$0xff]
          %v1861 = vld [vmem:[#allocation11 + $0x10] sm:$0xff]
          %v1862 = vld [vmem:[#allocation11 + $0x18] sm:$0xff]
          %v1863 = vld [vmem:[#allocation11 + $0x20] sm:$0xff]
          %v1864 = vld [vmem:[#allocation11 + $0x28] sm:$0xff]
          %v1865 = vld [vmem:[#allocation11 + $0x30] sm:$0xff]
          %v1866 = vld [vmem:[#allocation11 + $0x38] sm:$0xff]
          %v1867 = vld [vmem:[#allocation11 + $0x40] sm:$0xff]
          %v1868 = vld [vmem:[#allocation11 + $0x48] sm:$0xff]
          %v1869 = vld [vmem:[#allocation11 + $0x50] sm:$0xff]
          %v1870 = vld [vmem:[#allocation11 + $0x58] sm:$0xff]
          %v1871 = vld [vmem:[#allocation11 + $0x60] sm:$0xff]
          %v1872 = vld [vmem:[#allocation11 + $0x68] sm:$0xff]
          %v1873 = vld [vmem:[#allocation11 + $0x70] sm:$0xff]
          %v1874 = vld [vmem:[#allocation11 + $0x78] sm:$0xff]
          %v1875 = vld [vmem:[#allocation11 + $0x80] sm:$0xff]
          %v1876 = vld [vmem:[#allocation11 + $0x88] sm:$0xff]
          %v1877 = vld [vmem:[#allocation11 + $0x90] sm:$0xff]
          %v1878 = vld [vmem:[#allocation11 + $0x98] sm:$0xff]
          %v1879 = vld [vmem:[#allocation11 + $0xa0] sm:$0xff]
          %v1880 = vld [vmem:[#allocation11 + $0xa8] sm:$0xff]
          %v1881 = vld [vmem:[#allocation11 + $0xb0] sm:$0xff]
          %v1882 = vld [vmem:[#allocation11 + $0xb8] sm:$0xff]
          %v1883 = vld [vmem:[#allocation11 + $0xc0] sm:$0xff]
          %v1884 = vld [vmem:[#allocation11 + $0xc8] sm:$0xff]
          %v1885 = vld [vmem:[#allocation11 + $0xd0] sm:$0xff]
          %v1886 = vld [vmem:[#allocation11 + $0xd8] sm:$0xff]
          %v1887 = vld [vmem:[#allocation11 + $0xe0] sm:$0xff]
          %v1888 = vld [vmem:[#allocation11 + $0xe8] sm:$0xff]
          %v1889 = vld [vmem:[#allocation11 + $0xf0] sm:$0xff]
          %v1890 = vld [vmem:[#allocation11 + $0xf8] sm:$0xff]
          %v1891 = vld [vmem:[#allocation11 + $0x100] sm:$0xff]
          %v1892 = vld [vmem:[#allocation11 + $0x108] sm:$0xff]
          %v1893 = vld [vmem:[#allocation11 + $0x110] sm:$0xff]
          %v1894 = vld [vmem:[#allocation11 + $0x118] sm:$0xff]
          %v1895 = vld [vmem:[#allocation11 + $0x120] sm:$0xff]
          %v1896 = vld [vmem:[#allocation11 + $0x128] sm:$0xff]
          %v1897 = vld [vmem:[#allocation11 + $0x130] sm:$0xff]
          %v1898 = vld [vmem:[#allocation11 + $0x138] sm:$0xff]
          %v1899 = vld [vmem:[#allocation11 + $0x140] sm:$0xff]
          %v1900 = vld [vmem:[#allocation11 + $0x148] sm:$0xff]
          %v1901 = vld [vmem:[#allocation11 + $0x150] sm:$0xff]
          %v1902 = vld [vmem:[#allocation11 + $0x158] sm:$0xff]
          %v1903 = vld [vmem:[#allocation11 + $0x160] sm:$0xff]
          %v1904 = vld [vmem:[#allocation11 + $0x168] sm:$0xff]
          %v1905 = vld [vmem:[#allocation11 + $0x170] sm:$0xff]
          %v1906 = vld [vmem:[#allocation11 + $0x178] sm:$0xff]
          %v1907 = vld [vmem:[#allocation11 + $0x180] sm:$0xff]
          %v1908 = vld [vmem:[#allocation11 + $0x188] sm:$0xff]
          %v1909 = vld [vmem:[#allocation11 + $0x190] sm:$0xff]
          %v1910 = vld [vmem:[#allocation11 + $0x198] sm:$0xff]
          %v1911 = vld [vmem:[#allocation11 + $0x1a0] sm:$0xff]
          %v1912 = vld [vmem:[#allocation11 + $0x1a8] sm:$0xff]
          %v1913 = vld [vmem:[#allocation11 + $0x1b0] sm:$0xff]
          %v1914 = vld [vmem:[#allocation11 + $0x1b8] sm:$0xff]
          %v1915 = vld [vmem:[#allocation11 + $0x1c0] sm:$0xff]
          %v1916 = vld [vmem:[#allocation11 + $0x1c8] sm:$0xff]
          %v1917 = vld [vmem:[#allocation11 + $0x1d0] sm:$0xff]
          %v1918 = vld [vmem:[#allocation11 + $0x1d8] sm:$0xff]
          %v1919 = vld [vmem:[#allocation11 + $0x1e0] sm:$0xff]
          %v1920 = vld [vmem:[#allocation11 + $0x1e8] sm:$0xff]
          %v1921 = vld [vmem:[#allocation11 + $0x1f0] sm:$0xff]
          %v1922 = vld [vmem:[#allocation11 + $0x1f8] sm:$0xff]
          %v1923 = vld [vmem:[#allocation13] sm:$0xff]
          %v1988 = vunpack.c.l.b16 %v1859
          %v1989 = vunpack.c.h.b16 %v1859
          %v1990 = vunpack.c.l.b16 %v1860
          %v1991 = vunpack.c.h.b16 %v1860
          %v1992 = vunpack.c.l.b16 %v1861
          %v1993 = vunpack.c.h.b16 %v1861
          %v1994 = vunpack.c.l.b16 %v1862
          %v1995 = vunpack.c.h.b16 %v1862
          %v1996 = vunpack.c.l.b16 %v1863
          %v1997 = vunpack.c.h.b16 %v1863
          %v1998 = vunpack.c.l.b16 %v1864
          %v1999 = vunpack.c.h.b16 %v1864
          %v2000 = vunpack.c.l.b16 %v1865
          %v2001 = vunpack.c.h.b16 %v1865
          %v2002 = vunpack.c.l.b16 %v1866
          %v2003 = vunpack.c.h.b16 %v1866
          %v2004 = vunpack.c.l.b16 %v1867
          %v2005 = vunpack.c.h.b16 %v1867
          %v2006 = vunpack.c.l.b16 %v1868
          %v2007 = vunpack.c.h.b16 %v1868
          %v2008 = vunpack.c.l.b16 %v1869
          %v2009 = vunpack.c.h.b16 %v1869
          %v2010 = vunpack.c.l.b16 %v1870
          %v2011 = vunpack.c.h.b16 %v1870
          %v2012 = vunpack.c.l.b16 %v1871
          %v2013 = vunpack.c.h.b16 %v1871
          %v2014 = vunpack.c.l.b16 %v1872
          %v2015 = vunpack.c.h.b16 %v1872
          %v2016 = vunpack.c.l.b16 %v1873
          %v2017 = vunpack.c.h.b16 %v1873
          %v2018 = vunpack.c.l.b16 %v1874
          %v2019 = vunpack.c.h.b16 %v1874
          %v2020 = vunpack.c.l.b16 %v1875
          %v2021 = vunpack.c.h.b16 %v1875
          %v2022 = vunpack.c.l.b16 %v1876
          %v2023 = vunpack.c.h.b16 %v1876
          %v2024 = vunpack.c.l.b16 %v1877
          %v2025 = vunpack.c.h.b16 %v1877
          %v2026 = vunpack.c.l.b16 %v1878
          %v2027 = vunpack.c.h.b16 %v1878
          %v2028 = vunpack.c.l.b16 %v1879
          %v2029 = vunpack.c.h.b16 %v1879
          %v2030 = vunpack.c.l.b16 %v1880
          %v2031 = vunpack.c.h.b16 %v1880
          %v2032 = vunpack.c.l.b16 %v1881
          %v2033 = vunpack.c.h.b16 %v1881
          %v2034 = vunpack.c.l.b16 %v1882
          %v2035 = vunpack.c.h.b16 %v1882
          %v2036 = vunpack.c.l.b16 %v1883
          %v2037 = vunpack.c.h.b16 %v1883
          %v2038 = vunpack.c.l.b16 %v1884
          %v2039 = vunpack.c.h.b16 %v1884
          %v2040 = vunpack.c.l.b16 %v1885
          %v2041 = vunpack.c.h.b16 %v1885
          %v2042 = vunpack.c.l.b16 %v1886
          %v2043 = vunpack.c.h.b16 %v1886
          %v2044 = vunpack.c.l.b16 %v1887
          %v2045 = vunpack.c.h.b16 %v1887
          %v2046 = vunpack.c.l.b16 %v1888
          %v2047 = vunpack.c.h.b16 %v1888
          %v2048 = vunpack.c.l.b16 %v1889
          %v2049 = vunpack.c.h.b16 %v1889
          %v2050 = vunpack.c.l.b16 %v1890
          %v2051 = vunpack.c.h.b16 %v1890
          %v2052 = vunpack.c.l.b16 %v1891
          %v2053 = vunpack.c.h.b16 %v1891
          %v2054 = vunpack.c.l.b16 %v1892
          %v2055 = vunpack.c.h.b16 %v1892
          %v2056 = vunpack.c.l.b16 %v1893
          %v2057 = vunpack.c.h.b16 %v1893
          %v2058 = vunpack.c.l.b16 %v1894
          %v2059 = vunpack.c.h.b16 %v1894
          %v2060 = vunpack.c.l.b16 %v1895
          %v2061 = vunpack.c.h.b16 %v1895
          %v2062 = vunpack.c.l.b16 %v1896
          %v2063 = vunpack.c.h.b16 %v1896
          %v2064 = vunpack.c.l.b16 %v1897
          %v2065 = vunpack.c.h.b16 %v1897
          %v2066 = vunpack.c.l.b16 %v1898
          %v2067 = vunpack.c.h.b16 %v1898
          %v2068 = vunpack.c.l.b16 %v1899
          %v2069 = vunpack.c.h.b16 %v1899
          %v2070 = vunpack.c.l.b16 %v1900
          %v2071 = vunpack.c.h.b16 %v1900
          %v2072 = vunpack.c.l.b16 %v1901
          %v2073 = vunpack.c.h.b16 %v1901
          %v2074 = vunpack.c.l.b16 %v1902
          %v2075 = vunpack.c.h.b16 %v1902
          %v2076 = vunpack.c.l.b16 %v1903
          %v2077 = vunpack.c.h.b16 %v1903
          %v2078 = vunpack.c.l.b16 %v1904
          %v2079 = vunpack.c.h.b16 %v1904
          %v2080 = vunpack.c.l.b16 %v1905
          %v2081 = vunpack.c.h.b16 %v1905
          %v2082 = vunpack.c.l.b16 %v1906
          %v2083 = vunpack.c.h.b16 %v1906
          %v2084 = vunpack.c.l.b16 %v1907
          %v2085 = vunpack.c.h.b16 %v1907
          %v2086 = vunpack.c.l.b16 %v1908
          %v2087 = vunpack.c.h.b16 %v1908
          %v2088 = vunpack.c.l.b16 %v1909
          %v2089 = vunpack.c.h.b16 %v1909
          %v2090 = vunpack.c.l.b16 %v1910
          %v2091 = vunpack.c.h.b16 %v1910
          %v2092 = vunpack.c.l.b16 %v1911
          %v2093 = vunpack.c.h.b16 %v1911
          %v2094 = vunpack.c.l.b16 %v1912
          %v2095 = vunpack.c.h.b16 %v1912
          %v2096 = vunpack.c.l.b16 %v1913
          %v2097 = vunpack.c.h.b16 %v1913
          %v2098 = vunpack.c.l.b16 %v1914
          %v2099 = vunpack.c.h.b16 %v1914
          %v2100 = vunpack.c.l.b16 %v1915
          %v2101 = vunpack.c.h.b16 %v1915
          %v2102 = vunpack.c.l.b16 %v1916
          %v2103 = vunpack.c.h.b16 %v1916
          %v2104 = vunpack.c.l.b16 %v1917
          %v2105 = vunpack.c.h.b16 %v1917
          %v2106 = vunpack.c.l.b16 %v1918
          %v2107 = vunpack.c.h.b16 %v1918
          %v2108 = vunpack.c.l.b16 %v1919
          %v2109 = vunpack.c.h.b16 %v1919
          %v2110 = vunpack.c.l.b16 %v1920
          %v2111 = vunpack.c.h.b16 %v1920
          %v2112 = vunpack.c.l.b16 %v1921
          %v2113 = vunpack.c.h.b16 %v1921
          %v2114 = vunpack.c.l.b16 %v1922
          %v2115 = vunpack.c.h.b16 %v1922
          %v2116 = vpack.c.b16 %v1996, %v1988
          %v2117 = vpack.c.b16 %v1997, %v1989
          %v2118 = vpack.c.b16 %v1998, %v1990
          %v2119 = vpack.c.b16 %v1999, %v1991
          %v2120 = vpack.c.b16 %v2000, %v1992
          %v2121 = vpack.c.b16 %v2001, %v1993
          %v2122 = vpack.c.b16 %v2002, %v1994
          %v2123 = vpack.c.b16 %v2003, %v1995
          %v2124 = vpack.c.b16 %v2012, %v2004
          %v2125 = vpack.c.b16 %v2013, %v2005
          %v2126 = vpack.c.b16 %v2014, %v2006
          %v2127 = vpack.c.b16 %v2015, %v2007
          %v2128 = vpack.c.b16 %v2016, %v2008
          %v2129 = vpack.c.b16 %v2017, %v2009
          %v2130 = vpack.c.b16 %v2018, %v2010
          %v2131 = vpack.c.b16 %v2019, %v2011
          %v2132 = vpack.c.b16 %v2028, %v2020
          %v2133 = vpack.c.b16 %v2029, %v2021
          %v2134 = vpack.c.b16 %v2030, %v2022
          %v2135 = vpack.c.b16 %v2031, %v2023
          %v2136 = vpack.c.b16 %v2032, %v2024
          %v2137 = vpack.c.b16 %v2033, %v2025
          %v2138 = vpack.c.b16 %v2034, %v2026
          %v2139 = vpack.c.b16 %v2035, %v2027
          %v2140 = vpack.c.b16 %v2044, %v2036
          %v2141 = vpack.c.b16 %v2045, %v2037
          %v2142 = vpack.c.b16 %v2046, %v2038
          %v2143 = vpack.c.b16 %v2047, %v2039
          %v2144 = vpack.c.b16 %v2048, %v2040
          %v2145 = vpack.c.b16 %v2049, %v2041
          %v2146 = vpack.c.b16 %v2050, %v2042
          %v2147 = vpack.c.b16 %v2051, %v2043
          %v2148 = vpack.c.b16 %v2060, %v2052
          %v2149 = vpack.c.b16 %v2061, %v2053
          %v2150 = vpack.c.b16 %v2062, %v2054
          %v2151 = vpack.c.b16 %v2063, %v2055
          %v2152 = vpack.c.b16 %v2064, %v2056
          %v2153 = vpack.c.b16 %v2065, %v2057
          %v2154 = vpack.c.b16 %v2066, %v2058
          %v2155 = vpack.c.b16 %v2067, %v2059
          %v2156 = vpack.c.b16 %v2076, %v2068
          %v2157 = vpack.c.b16 %v2077, %v2069
          %v2158 = vpack.c.b16 %v2078, %v2070
          %v2159 = vpack.c.b16 %v2079, %v2071
          %v2160 = vpack.c.b16 %v2080, %v2072
          %v2161 = vpack.c.b16 %v2081, %v2073
          %v2162 = vpack.c.b16 %v2082, %v2074
          %v2163 = vpack.c.b16 %v2083, %v2075
          %v2164 = vpack.c.b16 %v2092, %v2084
          %v2165 = vpack.c.b16 %v2093, %v2085
          %v2166 = vpack.c.b16 %v2094, %v2086
          %v2167 = vpack.c.b16 %v2095, %v2087
          %v2168 = vpack.c.b16 %v2096, %v2088
          %v2169 = vpack.c.b16 %v2097, %v2089
          %v2170 = vpack.c.b16 %v2098, %v2090
          %v2171 = vpack.c.b16 %v2099, %v2091
          %v2172 = vpack.c.b16 %v2108, %v2100
          %v2173 = vpack.c.b16 %v2109, %v2101
          %v2174 = vpack.c.b16 %v2110, %v2102
          %v2175 = vpack.c.b16 %v2111, %v2103
          %v2176 = vpack.c.b16 %v2112, %v2104
          %v2177 = vpack.c.b16 %v2113, %v2105
          %v2178 = vpack.c.b16 %v2114, %v2106
          %v2179 = vpack.c.b16 %v2115, %v2107
          %v2245 = vlaneseq
          %v2246 = vshrl.u32 %v2245, 7
          %v2247 = vsub.s32 0, %v2246
          %v2248 = vrot.slane %v1923, %v2247
          %v2249 = vlaneseq
          %v2250 = vshrl.u32 %v2249, 7
          %v2251 = vsub.s32 1, %v2250
          %v2252 = vrot.slane %v1923, %v2251
          %v2253 = vlaneseq
          %v2254 = vshrl.u32 %v2253, 7
          %v2255 = vsub.s32 2, %v2254
          %v2256 = vrot.slane %v1923, %v2255
          %v2257 = vlaneseq
          %v2258 = vshrl.u32 %v2257, 7
          %v2259 = vsub.s32 3, %v2258
          %v2260 = vrot.slane %v1923, %v2259
          %v2261 = vlaneseq
          %v2262 = vshrl.u32 %v2261, 7
          %v2263 = vsub.s32 4, %v2262
          %v2264 = vrot.slane %v1923, %v2263
          %v2265 = vlaneseq
          %v2266 = vshrl.u32 %v2265, 7
          %v2267 = vsub.s32 5, %v2266
          %v2268 = vrot.slane %v1923, %v2267
          %v2269 = vlaneseq
          %v2270 = vshrl.u32 %v2269, 7
          %v2271 = vsub.s32 6, %v2270
          %v2272 = vrot.slane %v1923, %v2271
          %v2273 = vlaneseq
          %v2274 = vshrl.u32 %v2273, 7
          %v2275 = vsub.s32 7, %v2274
          %v2276 = vrot.slane %v1923, %v2275
          %2285 = vmatprep.subr.bf16.mxu0 %v2117
          %2286 = vmatpush1.bf16.msra.mxu0 %v2116
          %2287 = vmatprep.subr.bf16.mxu0 %v2125
          %2288 = vmatpush1.bf16.msra.mxu0 %v2124
          %2289 = vmatprep.subr.bf16.mxu0 %v2133
          %2290 = vmatpush1.bf16.msra.mxu0 %v2132
          %2291 = vmatprep.subr.bf16.mxu0 %v2141
          %2292 = vmatpush1.bf16.msra.mxu0 %v2140
          %2293 = vmatprep.subr.bf16.mxu0 %v2149
          %2294 = vmatpush1.bf16.msra.mxu0 %v2148
          %2295 = vmatprep.subr.bf16.mxu0 %v2157
          %2296 = vmatpush1.bf16.msra.mxu0 %v2156
          %2297 = vmatprep.subr.bf16.mxu0 %v2165
          %2298 = vmatpush1.bf16.msra.mxu0 %v2164
          %2299 = vmatprep.subr.bf16.mxu0 %v2173
          %2300 = vmatpush1.bf16.msra.mxu0 %v2172
          %2301 = vmatprep.subr.bf16.mxu0 0
          %2302 = vmatpush1.bf16.msra.mxu0 0
          %2303 = vmatprep.subr.bf16.mxu0 0
          %2304 = vmatpush1.bf16.msra.mxu0 0
          %2305 = vmatprep.subr.bf16.mxu0 0
          %2306 = vmatpush1.bf16.msra.mxu0 0
          %2307 = vmatprep.subr.bf16.mxu0 0
          %2308 = vmatpush1.bf16.msra.mxu0 0
          %2309 = vmatprep.subr.bf16.mxu0 0
          %2310 = vmatpush1.bf16.msra.mxu0 0
          %2311 = vmatprep.subr.bf16.mxu0 0
          %2312 = vmatpush1.bf16.msra.mxu0 0
          %2313 = vmatprep.subr.bf16.mxu0 0
          %2314 = vmatpush1.bf16.msra.mxu0 0
          %2315 = vmatprep.subr.bf16.mxu0 0
          %2316 = vmatpush1.bf16.msra.mxu0 0
          %2317 = vmatprep.mubr.bf16.mxu0 0
          %2318 = vmatmul.mubr.bf16.gmra.mrb[0].mxu0 %v1858
          %v2319 = vpop.f32.mrb[0].mxu0
          %v2320 = vadd.f32 %v2248, %v2319
          %v2321 = vpop.f32.mrb[0].mxu0
          %v2322 = vadd.f32 %v2252, %v2321
          %v2323 = vpop.f32.mrb[0].mxu0
          %v2324 = vpop.f32.mrb[0].mxu0
          %2325 = vdwg.mxu0
          %2326 = vmatprep.subr.bf16.mxu0 %v2119
          %2327 = vmatpush1.bf16.msra.mxu0 %v2118
          %2328 = vmatprep.subr.bf16.mxu0 %v2127
          %2329 = vmatpush1.bf16.msra.mxu0 %v2126
          %2330 = vmatprep.subr.bf16.mxu0 %v2135
          %2331 = vmatpush1.bf16.msra.mxu0 %v2134
          %2332 = vmatprep.subr.bf16.mxu0 %v2143
          %2333 = vmatpush1.bf16.msra.mxu0 %v2142
          %2334 = vmatprep.subr.bf16.mxu0 %v2151
          %2335 = vmatpush1.bf16.msra.mxu0 %v2150
          %2336 = vmatprep.subr.bf16.mxu0 %v2159
          %2337 = vmatpush1.bf16.msra.mxu0 %v2158
          %2338 = vmatprep.subr.bf16.mxu0 %v2167
          %2339 = vmatpush1.bf16.msra.mxu0 %v2166
          %2340 = vmatprep.subr.bf16.mxu0 %v2175
          %2341 = vmatpush1.bf16.msra.mxu0 %v2174
          %2342 = vmatprep.subr.bf16.mxu0 0
          %2343 = vmatpush1.bf16.msra.mxu0 0
          %2344 = vmatprep.subr.bf16.mxu0 0
          %2345 = vmatpush1.bf16.msra.mxu0 0
          %2346 = vmatprep.subr.bf16.mxu0 0
          %2347 = vmatpush1.bf16.msra.mxu0 0
          %2348 = vmatprep.subr.bf16.mxu0 0
          %2349 = vmatpush1.bf16.msra.mxu0 0
          %2350 = vmatprep.subr.bf16.mxu0 0
          %2351 = vmatpush1.bf16.msra.mxu0 0
          %2352 = vmatprep.subr.bf16.mxu0 0
          %2353 = vmatpush1.bf16.msra.mxu0 0
          %2354 = vmatprep.subr.bf16.mxu0 0
          %2355 = vmatpush1.bf16.msra.mxu0 0
          %2356 = vmatprep.subr.bf16.mxu0 0
          %2357 = vmatpush1.bf16.msra.mxu0 0
          %2358 = vmatprep.mubr.bf16.mxu0 0
          %2359 = vmatmul.mubr.bf16.gmra.mrb[0].mxu0 %v1858
          %v2360 = vpop.f32.mrb[0].mxu0
          %v2361 = vadd.f32 %v2256, %v2360
          %v2362 = vpop.f32.mrb[0].mxu0
          %v2363 = vadd.f32 %v2260, %v2362
          %v2364 = vpop.f32.mrb[0].mxu0
          %v2365 = vpop.f32.mrb[0].mxu0
          %2366 = vdwg.mxu0
          %2367 = vmatprep.subr.bf16.mxu0 %v2121
          %2368 = vmatpush1.bf16.msra.mxu0 %v2120
          %2369 = vmatprep.subr.bf16.mxu0 %v2129
          %2370 = vmatpush1.bf16.msra.mxu0 %v2128
          %2371 = vmatprep.subr.bf16.mxu0 %v2137
          %2372 = vmatpush1.bf16.msra.mxu0 %v2136
          %2373 = vmatprep.subr.bf16.mxu0 %v2145
          %2374 = vmatpush1.bf16.msra.mxu0 %v2144
          %2375 = vmatprep.subr.bf16.mxu0 %v2153
          %2376 = vmatpush1.bf16.msra.mxu0 %v2152
          %2377 = vmatprep.subr.bf16.mxu0 %v2161
          %2378 = vmatpush1.bf16.msra.mxu0 %v2160
          %2379 = vmatprep.subr.bf16.mxu0 %v2169
          %2380 = vmatpush1.bf16.msra.mxu0 %v2168
          %2381 = vmatprep.subr.bf16.mxu0 %v2177
          %2382 = vmatpush1.bf16.msra.mxu0 %v2176
          %2383 = vmatprep.subr.bf16.mxu0 0
          %2384 = vmatpush1.bf16.msra.mxu0 0
          %2385 = vmatprep.subr.bf16.mxu0 0
          %2386 = vmatpush1.bf16.msra.mxu0 0
          %2387 = vmatprep.subr.bf16.mxu0 0
          %2388 = vmatpush1.bf16.msra.mxu0 0
          %2389 = vmatprep.subr.bf16.mxu0 0
          %2390 = vmatpush1.bf16.msra.mxu0 0
          %2391 = vmatprep.subr.bf16.mxu0 0
          %2392 = vmatpush1.bf16.msra.mxu0 0
          %2393 = vmatprep.subr.bf16.mxu0 0
          %2394 = vmatpush1.bf16.msra.mxu0 0
          %2395 = vmatprep.subr.bf16.mxu0 0
          %2396 = vmatpush1.bf16.msra.mxu0 0
          %2397 = vmatprep.subr.bf16.mxu0 0
          %2398 = vmatpush1.bf16.msra.mxu0 0
          %2399 = vmatprep.mubr.bf16.mxu0 0
          %2400 = vmatmul.mubr.bf16.gmra.mrb[0].mxu0 %v1858
          %v2401 = vpop.f32.mrb[0].mxu0
          %v2402 = vadd.f32 %v2264, %v2401
          %v2403 = vpop.f32.mrb[0].mxu0
          %v2404 = vadd.f32 %v2268, %v2403
          %v2405 = vpop.f32.mrb[0].mxu0
          %v2406 = vpop.f32.mrb[0].mxu0
          %2407 = vdwg.mxu0
          %2408 = vmatprep.subr.bf16.mxu0 %v2123
          %2409 = vmatpush1.bf16.msra.mxu0 %v2122
          %2410 = vmatprep.subr.bf16.mxu0 %v2131
          %2411 = vmatpush1.bf16.msra.mxu0 %v2130
          %2412 = vmatprep.subr.bf16.mxu0 %v2139
          %2413 = vmatpush1.bf16.msra.mxu0 %v2138
          %2414 = vmatprep.subr.bf16.mxu0 %v2147
          %2415 = vmatpush1.bf16.msra.mxu0 %v2146
          %2416 = vmatprep.subr.bf16.mxu0 %v2155
          %2417 = vmatpush1.bf16.msra.mxu0 %v2154
          %2418 = vmatprep.subr.bf16.mxu0 %v2163
          %2419 = vmatpush1.bf16.msra.mxu0 %v2162
          %2420 = vmatprep.subr.bf16.mxu0 %v2171
          %2421 = vmatpush1.bf16.msra.mxu0 %v2170
          %2422 = vmatprep.subr.bf16.mxu0 %v2179
          %2423 = vmatpush1.bf16.msra.mxu0 %v2178
          %2424 = vmatprep.subr.bf16.mxu0 0
          %2425 = vmatpush1.bf16.msra.mxu0 0
          %2426 = vmatprep.subr.bf16.mxu0 0
          %2427 = vmatpush1.bf16.msra.mxu0 0
          %2428 = vmatprep.subr.bf16.mxu0 0
          %2429 = vmatpush1.bf16.msra.mxu0 0
          %2430 = vmatprep.subr.bf16.mxu0 0
          %2431 = vmatpush1.bf16.msra.mxu0 0
          %2432 = vmatprep.subr.bf16.mxu0 0
          %2433 = vmatpush1.bf16.msra.mxu0 0
          %2434 = vmatprep.subr.bf16.mxu0 0
          %2435 = vmatpush1.bf16.msra.mxu0 0
          %2436 = vmatprep.subr.bf16.mxu0 0
          %2437 = vmatpush1.bf16.msra.mxu0 0
          %2438 = vmatprep.subr.bf16.mxu0 0
          %2439 = vmatpush1.bf16.msra.mxu0 0
          %2440 = vmatprep.mubr.bf16.mxu0 0
          %2441 = vmatmul.mubr.bf16.gmra.mrb[0].mxu0 %v1858
          %v2442 = vpop.f32.mrb[0].mxu0
          %v2443 = vadd.f32 %v2272, %v2442
          %v2444 = vpop.f32.mrb[0].mxu0
          %v2445 = vadd.f32 %v2276, %v2444
          %v2446 = vpop.f32.mrb[0].mxu0
          %v2447 = vpop.f32.mrb[0].mxu0
          %2448 = vdwg.mxu0
          %v2449 = vsub.f32 0.0, %v2320
          %v2450 = vsub.f32 0.0, %v2322
          %v2451 = vsub.f32 0.0, %v2361
          %v2452 = vsub.f32 0.0, %v2363
          %v2453 = vsub.f32 0.0, %v2402
          %v2454 = vsub.f32 0.0, %v2404
          %v2455 = vsub.f32 0.0, %v2443
          %v2456 = vsub.f32 0.0, %v2445
          %v2457 = vmul.f32 %v2449, 1.442695
          %v2458 = vpow.pop %v2457
          %v2459 = vmul.f32 %v2450, 1.442695
          %v2460 = vpow.pop %v2459
          %v2461 = vmul.f32 %v2451, 1.442695
          %v2462 = vpow.pop %v2461
          %v2463 = vmul.f32 %v2452, 1.442695
          %v2464 = vpow.pop %v2463
          %v2465 = vmul.f32 %v2453, 1.442695
          %v2466 = vpow.pop %v2465
          %v2467 = vmul.f32 %v2454, 1.442695
          %v2468 = vpow.pop %v2467
          %v2469 = vmul.f32 %v2455, 1.442695
          %v2470 = vpow.pop %v2469
          %v2471 = vmul.f32 %v2456, 1.442695
          %v2472 = vpow.pop %v2471
          %v2473 = vadd.f32 %v2458, 1.0
          %v2474 = vadd.f32 %v2460, 1.0
          %v2475 = vadd.f32 %v2462, 1.0
          %v2476 = vadd.f32 %v2464, 1.0
          %v2477 = vadd.f32 %v2466, 1.0
          %v2478 = vadd.f32 %v2468, 1.0
          %v2479 = vadd.f32 %v2470, 1.0
          %v2480 = vadd.f32 %v2472, 1.0
          %v2481 = vrcp.pop %v2473
          %v2482 = vmul.f32 1.0, %v2481
          %v2483 = vrcp.pop %v2474
          %v2484 = vmul.f32 1.0, %v2483
          %v2485 = vrcp.pop %v2475
          %v2486 = vmul.f32 1.0, %v2485
          %v2487 = vrcp.pop %v2476
          %v2488 = vmul.f32 1.0, %v2487
          %v2489 = vrcp.pop %v2477
          %v2490 = vmul.f32 1.0, %v2489
          %v2491 = vrcp.pop %v2478
          %v2492 = vmul.f32 1.0, %v2491
          %v2493 = vrcp.pop %v2479
          %v2494 = vmul.f32 1.0, %v2493
          %v2495 = vrcp.pop %v2480
          %v2496 = vmul.f32 1.0, %v2495
          %v2497 = vmul.f32 %v2320, %v2482
          %v2498 = vmul.f32 %v2322, %v2484
          %v2499 = vmul.f32 %v2361, %v2486
          %v2500 = vmul.f32 %v2363, %v2488
          %v2501 = vmul.f32 %v2402, %v2490
          %v2502 = vmul.f32 %v2404, %v2492
          %v2503 = vmul.f32 %v2443, %v2494
          %v2504 = vmul.f32 %v2445, %v2496
          %v2505 = vpack.c.bf16 %v2497, %v2497
          %v2506 = vpack.c.bf16 %v2498, %v2498
          %v2507 = vpack.c.bf16 %v2499, %v2499
          %v2508 = vpack.c.bf16 %v2500, %v2500
          %v2509 = vpack.c.bf16 %v2501, %v2501
          %v2510 = vpack.c.bf16 %v2502, %v2502
          %v2511 = vpack.c.bf16 %v2503, %v2503
          %v2512 = vpack.c.bf16 %v2504, %v2504
          %v2513 = vld [vmem:[#allocation14] sm:$0xff]
          %v2514 = vld [vmem:[#allocation14 + $0x8] sm:$0xff]
          %v2515 = vld [vmem:[#allocation14 + $0x10] sm:$0xff]
          %v2516 = vld [vmem:[#allocation14 + $0x18] sm:$0xff]
          %v2517 = vld [vmem:[#allocation14 + $0x20] sm:$0xff]
          %v2518 = vld [vmem:[#allocation14 + $0x28] sm:$0xff]
          %v2519 = vld [vmem:[#allocation14 + $0x30] sm:$0xff]
          %v2520 = vld [vmem:[#allocation14 + $0x38] sm:$0xff]
          %v2521 = vld [vmem:[#allocation14 + $0x40] sm:$0xff]
          %v2522 = vld [vmem:[#allocation14 + $0x48] sm:$0xff]
          %v2523 = vld [vmem:[#allocation14 + $0x50] sm:$0xff]
          %v2524 = vld [vmem:[#allocation14 + $0x58] sm:$0xff]
          %v2525 = vld [vmem:[#allocation14 + $0x60] sm:$0xff]
          %v2526 = vld [vmem:[#allocation14 + $0x68] sm:$0xff]
          %v2527 = vld [vmem:[#allocation14 + $0x70] sm:$0xff]
          %v2528 = vld [vmem:[#allocation14 + $0x78] sm:$0xff]
          %v2529 = vld [vmem:[#allocation14 + $0x80] sm:$0xff]
          %v2530 = vld [vmem:[#allocation14 + $0x88] sm:$0xff]
          %v2531 = vld [vmem:[#allocation14 + $0x90] sm:$0xff]
          %v2532 = vld [vmem:[#allocation14 + $0x98] sm:$0xff]
          %v2533 = vld [vmem:[#allocation14 + $0xa0] sm:$0xff]
          %v2534 = vld [vmem:[#allocation14 + $0xa8] sm:$0xff]
          %v2535 = vld [vmem:[#allocation14 + $0xb0] sm:$0xff]
          %v2536 = vld [vmem:[#allocation14 + $0xb8] sm:$0xff]
          %v2537 = vld [vmem:[#allocation14 + $0xc0] sm:$0xff]
          %v2538 = vld [vmem:[#allocation14 + $0xc8] sm:$0xff]
          %v2539 = vld [vmem:[#allocation14 + $0xd0] sm:$0xff]
          %v2540 = vld [vmem:[#allocation14 + $0xd8] sm:$0xff]
          %v2541 = vld [vmem:[#allocation14 + $0xe0] sm:$0xff]
          %v2542 = vld [vmem:[#allocation14 + $0xe8] sm:$0xff]
          %v2543 = vld [vmem:[#allocation14 + $0xf0] sm:$0xff]
          %v2544 = vld [vmem:[#allocation14 + $0xf8] sm:$0xff]
          %v2545 = vld [vmem:[#allocation14 + $0x100] sm:$0xff]
          %v2546 = vld [vmem:[#allocation14 + $0x108] sm:$0xff]
          %v2547 = vld [vmem:[#allocation14 + $0x110] sm:$0xff]
          %v2548 = vld [vmem:[#allocation14 + $0x118] sm:$0xff]
          %v2549 = vld [vmem:[#allocation14 + $0x120] sm:$0xff]
          %v2550 = vld [vmem:[#allocation14 + $0x128] sm:$0xff]
          %v2551 = vld [vmem:[#allocation14 + $0x130] sm:$0xff]
          %v2552 = vld [vmem:[#allocation14 + $0x138] sm:$0xff]
          %v2553 = vld [vmem:[#allocation14 + $0x140] sm:$0xff]
          %v2554 = vld [vmem:[#allocation14 + $0x148] sm:$0xff]
          %v2555 = vld [vmem:[#allocation14 + $0x150] sm:$0xff]
          %v2556 = vld [vmem:[#allocation14 + $0x158] sm:$0xff]
          %v2557 = vld [vmem:[#allocation14 + $0x160] sm:$0xff]
          %v2558 = vld [vmem:[#allocation14 + $0x168] sm:$0xff]
          %v2559 = vld [vmem:[#allocation14 + $0x170] sm:$0xff]
          %v2560 = vld [vmem:[#allocation14 + $0x178] sm:$0xff]
          %v2561 = vld [vmem:[#allocation14 + $0x180] sm:$0xff]
          %v2562 = vld [vmem:[#allocation14 + $0x188] sm:$0xff]
          %v2563 = vld [vmem:[#allocation14 + $0x190] sm:$0xff]
          %v2564 = vld [vmem:[#allocation14 + $0x198] sm:$0xff]
          %v2565 = vld [vmem:[#allocation14 + $0x1a0] sm:$0xff]
          %v2566 = vld [vmem:[#allocation14 + $0x1a8] sm:$0xff]
          %v2567 = vld [vmem:[#allocation14 + $0x1b0] sm:$0xff]
          %v2568 = vld [vmem:[#allocation14 + $0x1b8] sm:$0xff]
          %v2569 = vld [vmem:[#allocation14 + $0x1c0] sm:$0xff]
          %v2570 = vld [vmem:[#allocation14 + $0x1c8] sm:$0xff]
          %v2571 = vld [vmem:[#allocation14 + $0x1d0] sm:$0xff]
          %v2572 = vld [vmem:[#allocation14 + $0x1d8] sm:$0xff]
          %v2573 = vld [vmem:[#allocation14 + $0x1e0] sm:$0xff]
          %v2574 = vld [vmem:[#allocation14 + $0x1e8] sm:$0xff]
          %v2575 = vld [vmem:[#allocation14 + $0x1f0] sm:$0xff]
          %v2576 = vld [vmem:[#allocation14 + $0x1f8] sm:$0xff]
          %v2577 = vld [vmem:[#allocation14 + $0x200] sm:$0xff]
          %v2578 = vld [vmem:[#allocation14 + $0x208] sm:$0xff]
          %v2579 = vld [vmem:[#allocation14 + $0x210] sm:$0xff]
          %v2580 = vld [vmem:[#allocation14 + $0x218] sm:$0xff]
          %v2581 = vld [vmem:[#allocation14 + $0x220] sm:$0xff]
          %v2582 = vld [vmem:[#allocation14 + $0x228] sm:$0xff]
          %v2583 = vld [vmem:[#allocation14 + $0x230] sm:$0xff]
          %v2584 = vld [vmem:[#allocation14 + $0x238] sm:$0xff]
          %v2585 = vld [vmem:[#allocation14 + $0x240] sm:$0xff]
          %v2586 = vld [vmem:[#allocation14 + $0x248] sm:$0xff]
          %v2587 = vld [vmem:[#allocation14 + $0x250] sm:$0xff]
          %v2588 = vld [vmem:[#allocation14 + $0x258] sm:$0xff]
          %v2589 = vld [vmem:[#allocation14 + $0x260] sm:$0xff]
          %v2590 = vld [vmem:[#allocation14 + $0x268] sm:$0xff]
          %v2591 = vld [vmem:[#allocation14 + $0x270] sm:$0xff]
          %v2592 = vld [vmem:[#allocation14 + $0x278] sm:$0xff]
          %v2593 = vld [vmem:[#allocation14 + $0x280] sm:$0xff]
          %v2594 = vld [vmem:[#allocation14 + $0x288] sm:$0xff]
          %v2595 = vld [vmem:[#allocation14 + $0x290] sm:$0xff]
          %v2596 = vld [vmem:[#allocation14 + $0x298] sm:$0xff]
          %v2597 = vld [vmem:[#allocation14 + $0x2a0] sm:$0xff]
          %v2598 = vld [vmem:[#allocation14 + $0x2a8] sm:$0xff]
          %v2599 = vld [vmem:[#allocation14 + $0x2b0] sm:$0xff]
          %v2600 = vld [vmem:[#allocation14 + $0x2b8] sm:$0xff]
          %v2601 = vld [vmem:[#allocation14 + $0x2c0] sm:$0xff]
          %v2602 = vld [vmem:[#allocation14 + $0x2c8] sm:$0xff]
          %v2603 = vld [vmem:[#allocation14 + $0x2d0] sm:$0xff]
          %v2604 = vld [vmem:[#allocation14 + $0x2d8] sm:$0xff]
          %v2605 = vld [vmem:[#allocation14 + $0x2e0] sm:$0xff]
          %v2606 = vld [vmem:[#allocation14 + $0x2e8] sm:$0xff]
          %v2607 = vld [vmem:[#allocation14 + $0x2f0] sm:$0xff]
          %v2608 = vld [vmem:[#allocation14 + $0x2f8] sm:$0xff]
          %v2609 = vld [vmem:[#allocation14 + $0x300] sm:$0xff]
          %v2610 = vld [vmem:[#allocation14 + $0x308] sm:$0xff]
          %v2611 = vld [vmem:[#allocation14 + $0x310] sm:$0xff]
          %v2612 = vld [vmem:[#allocation14 + $0x318] sm:$0xff]
          %v2613 = vld [vmem:[#allocation14 + $0x320] sm:$0xff]
          %v2614 = vld [vmem:[#allocation14 + $0x328] sm:$0xff]
          %v2615 = vld [vmem:[#allocation14 + $0x330] sm:$0xff]
          %v2616 = vld [vmem:[#allocation14 + $0x338] sm:$0xff]
          %v2617 = vld [vmem:[#allocation14 + $0x340] sm:$0xff]
          %v2618 = vld [vmem:[#allocation14 + $0x348] sm:$0xff]
          %v2619 = vld [vmem:[#allocation14 + $0x350] sm:$0xff]
          %v2620 = vld [vmem:[#allocation14 + $0x358] sm:$0xff]
          %v2621 = vld [vmem:[#allocation14 + $0x360] sm:$0xff]
          %v2622 = vld [vmem:[#allocation14 + $0x368] sm:$0xff]
          %v2623 = vld [vmem:[#allocation14 + $0x370] sm:$0xff]
          %v2624 = vld [vmem:[#allocation14 + $0x378] sm:$0xff]
          %v2625 = vld [vmem:[#allocation14 + $0x380] sm:$0xff]
          %v2626 = vld [vmem:[#allocation14 + $0x388] sm:$0xff]
          %v2627 = vld [vmem:[#allocation14 + $0x390] sm:$0xff]
          %v2628 = vld [vmem:[#allocation14 + $0x398] sm:$0xff]
          %v2629 = vld [vmem:[#allocation14 + $0x3a0] sm:$0xff]
          %v2630 = vld [vmem:[#allocation14 + $0x3a8] sm:$0xff]
          %v2631 = vld [vmem:[#allocation14 + $0x3b0] sm:$0xff]
          %v2632 = vld [vmem:[#allocation14 + $0x3b8] sm:$0xff]
          %v2633 = vld [vmem:[#allocation14 + $0x3c0] sm:$0xff]
          %v2634 = vld [vmem:[#allocation14 + $0x3c8] sm:$0xff]
          %v2635 = vld [vmem:[#allocation14 + $0x3d0] sm:$0xff]
          %v2636 = vld [vmem:[#allocation14 + $0x3d8] sm:$0xff]
          %v2637 = vld [vmem:[#allocation14 + $0x3e0] sm:$0xff]
          %v2638 = vld [vmem:[#allocation14 + $0x3e8] sm:$0xff]
          %v2639 = vld [vmem:[#allocation14 + $0x3f0] sm:$0xff]
          %v2640 = vld [vmem:[#allocation14 + $0x3f8] sm:$0xff]
          %v2641 = vld [vmem:[#allocation16] sm:$0x3]
          %v2770 = vunpack.c.l.b16 %v2513
          %v2771 = vunpack.c.h.b16 %v2513
          %v2772 = vunpack.c.l.b16 %v2514
          %v2773 = vunpack.c.h.b16 %v2514
          %v2774 = vunpack.c.l.b16 %v2515
          %v2775 = vunpack.c.h.b16 %v2515
          %v2776 = vunpack.c.l.b16 %v2516
          %v2777 = vunpack.c.h.b16 %v2516
          %v2778 = vunpack.c.l.b16 %v2517
          %v2779 = vunpack.c.h.b16 %v2517
          %v2780 = vunpack.c.l.b16 %v2518
          %v2781 = vunpack.c.h.b16 %v2518
          %v2782 = vunpack.c.l.b16 %v2519
          %v2783 = vunpack.c.h.b16 %v2519
          %v2784 = vunpack.c.l.b16 %v2520
          %v2785 = vunpack.c.h.b16 %v2520
          %v2786 = vunpack.c.l.b16 %v2521
          %v2787 = vunpack.c.h.b16 %v2521
          %v2788 = vunpack.c.l.b16 %v2522
          %v2789 = vunpack.c.h.b16 %v2522
          %v2790 = vunpack.c.l.b16 %v2523
          %v2791 = vunpack.c.h.b16 %v2523
          %v2792 = vunpack.c.l.b16 %v2524
          %v2793 = vunpack.c.h.b16 %v2524
          %v2794 = vunpack.c.l.b16 %v2525
          %v2795 = vunpack.c.h.b16 %v2525
          %v2796 = vunpack.c.l.b16 %v2526
          %v2797 = vunpack.c.h.b16 %v2526
          %v2798 = vunpack.c.l.b16 %v2527
          %v2799 = vunpack.c.h.b16 %v2527
          %v2800 = vunpack.c.l.b16 %v2528
          %v2801 = vunpack.c.h.b16 %v2528
          %v2802 = vunpack.c.l.b16 %v2529
          %v2803 = vunpack.c.h.b16 %v2529
          %v2804 = vunpack.c.l.b16 %v2530
          %v2805 = vunpack.c.h.b16 %v2530
          %v2806 = vunpack.c.l.b16 %v2531
          %v2807 = vunpack.c.h.b16 %v2531
          %v2808 = vunpack.c.l.b16 %v2532
          %v2809 = vunpack.c.h.b16 %v2532
          %v2810 = vunpack.c.l.b16 %v2533
          %v2811 = vunpack.c.h.b16 %v2533
          %v2812 = vunpack.c.l.b16 %v2534
          %v2813 = vunpack.c.h.b16 %v2534
          %v2814 = vunpack.c.l.b16 %v2535
          %v2815 = vunpack.c.h.b16 %v2535
          %v2816 = vunpack.c.l.b16 %v2536
          %v2817 = vunpack.c.h.b16 %v2536
          %v2818 = vunpack.c.l.b16 %v2537
          %v2819 = vunpack.c.h.b16 %v2537
          %v2820 = vunpack.c.l.b16 %v2538
          %v2821 = vunpack.c.h.b16 %v2538
          %v2822 = vunpack.c.l.b16 %v2539
          %v2823 = vunpack.c.h.b16 %v2539
          %v2824 = vunpack.c.l.b16 %v2540
          %v2825 = vunpack.c.h.b16 %v2540
          %v2826 = vunpack.c.l.b16 %v2541
          %v2827 = vunpack.c.h.b16 %v2541
          %v2828 = vunpack.c.l.b16 %v2542
          %v2829 = vunpack.c.h.b16 %v2542
          %v2830 = vunpack.c.l.b16 %v2543
          %v2831 = vunpack.c.h.b16 %v2543
          %v2832 = vunpack.c.l.b16 %v2544
          %v2833 = vunpack.c.h.b16 %v2544
          %v2834 = vunpack.c.l.b16 %v2545
          %v2835 = vunpack.c.h.b16 %v2545
          %v2836 = vunpack.c.l.b16 %v2546
          %v2837 = vunpack.c.h.b16 %v2546
          %v2838 = vunpack.c.l.b16 %v2547
          %v2839 = vunpack.c.h.b16 %v2547
          %v2840 = vunpack.c.l.b16 %v2548
          %v2841 = vunpack.c.h.b16 %v2548
          %v2842 = vunpack.c.l.b16 %v2549
          %v2843 = vunpack.c.h.b16 %v2549
          %v2844 = vunpack.c.l.b16 %v2550
          %v2845 = vunpack.c.h.b16 %v2550
          %v2846 = vunpack.c.l.b16 %v2551
          %v2847 = vunpack.c.h.b16 %v2551
          %v2848 = vunpack.c.l.b16 %v2552
          %v2849 = vunpack.c.h.b16 %v2552
          %v2850 = vunpack.c.l.b16 %v2553
          %v2851 = vunpack.c.h.b16 %v2553
          %v2852 = vunpack.c.l.b16 %v2554
          %v2853 = vunpack.c.h.b16 %v2554
          %v2854 = vunpack.c.l.b16 %v2555
          %v2855 = vunpack.c.h.b16 %v2555
          %v2856 = vunpack.c.l.b16 %v2556
          %v2857 = vunpack.c.h.b16 %v2556
          %v2858 = vunpack.c.l.b16 %v2557
          %v2859 = vunpack.c.h.b16 %v2557
          %v2860 = vunpack.c.l.b16 %v2558
          %v2861 = vunpack.c.h.b16 %v2558
          %v2862 = vunpack.c.l.b16 %v2559
          %v2863 = vunpack.c.h.b16 %v2559
          %v2864 = vunpack.c.l.b16 %v2560
          %v2865 = vunpack.c.h.b16 %v2560
          %v2866 = vunpack.c.l.b16 %v2561
          %v2867 = vunpack.c.h.b16 %v2561
          %v2868 = vunpack.c.l.b16 %v2562
          %v2869 = vunpack.c.h.b16 %v2562
          %v2870 = vunpack.c.l.b16 %v2563
          %v2871 = vunpack.c.h.b16 %v2563
          %v2872 = vunpack.c.l.b16 %v2564
          %v2873 = vunpack.c.h.b16 %v2564
          %v2874 = vunpack.c.l.b16 %v2565
          %v2875 = vunpack.c.h.b16 %v2565
          %v2876 = vunpack.c.l.b16 %v2566
          %v2877 = vunpack.c.h.b16 %v2566
          %v2878 = vunpack.c.l.b16 %v2567
          %v2879 = vunpack.c.h.b16 %v2567
          %v2880 = vunpack.c.l.b16 %v2568
          %v2881 = vunpack.c.h.b16 %v2568
          %v2882 = vunpack.c.l.b16 %v2569
          %v2883 = vunpack.c.h.b16 %v2569
          %v2884 = vunpack.c.l.b16 %v2570
          %v2885 = vunpack.c.h.b16 %v2570
          %v2886 = vunpack.c.l.b16 %v2571
          %v2887 = vunpack.c.h.b16 %v2571
          %v2888 = vunpack.c.l.b16 %v2572
          %v2889 = vunpack.c.h.b16 %v2572
          %v2890 = vunpack.c.l.b16 %v2573
          %v2891 = vunpack.c.h.b16 %v2573
          %v2892 = vunpack.c.l.b16 %v2574
          %v2893 = vunpack.c.h.b16 %v2574
          %v2894 = vunpack.c.l.b16 %v2575
          %v2895 = vunpack.c.h.b16 %v2575
          %v2896 = vunpack.c.l.b16 %v2576
          %v2897 = vunpack.c.h.b16 %v2576
          %v2898 = vunpack.c.l.b16 %v2577
          %v2899 = vunpack.c.h.b16 %v2577
          %v2900 = vunpack.c.l.b16 %v2578
          %v2901 = vunpack.c.h.b16 %v2578
          %v2902 = vunpack.c.l.b16 %v2579
          %v2903 = vunpack.c.h.b16 %v2579
          %v2904 = vunpack.c.l.b16 %v2580
          %v2905 = vunpack.c.h.b16 %v2580
          %v2906 = vunpack.c.l.b16 %v2581
          %v2907 = vunpack.c.h.b16 %v2581
          %v2908 = vunpack.c.l.b16 %v2582
          %v2909 = vunpack.c.h.b16 %v2582
          %v2910 = vunpack.c.l.b16 %v2583
          %v2911 = vunpack.c.h.b16 %v2583
          %v2912 = vunpack.c.l.b16 %v2584
          %v2913 = vunpack.c.h.b16 %v2584
          %v2914 = vunpack.c.l.b16 %v2585
          %v2915 = vunpack.c.h.b16 %v2585
          %v2916 = vunpack.c.l.b16 %v2586
          %v2917 = vunpack.c.h.b16 %v2586
          %v2918 = vunpack.c.l.b16 %v2587
          %v2919 = vunpack.c.h.b16 %v2587
          %v2920 = vunpack.c.l.b16 %v2588
          %v2921 = vunpack.c.h.b16 %v2588
          %v2922 = vunpack.c.l.b16 %v2589
          %v2923 = vunpack.c.h.b16 %v2589
          %v2924 = vunpack.c.l.b16 %v2590
          %v2925 = vunpack.c.h.b16 %v2590
          %v2926 = vunpack.c.l.b16 %v2591
          %v2927 = vunpack.c.h.b16 %v2591
          %v2928 = vunpack.c.l.b16 %v2592
          %v2929 = vunpack.c.h.b16 %v2592
          %v2930 = vunpack.c.l.b16 %v2593
          %v2931 = vunpack.c.h.b16 %v2593
          %v2932 = vunpack.c.l.b16 %v2594
          %v2933 = vunpack.c.h.b16 %v2594
          %v2934 = vunpack.c.l.b16 %v2595
          %v2935 = vunpack.c.h.b16 %v2595
          %v2936 = vunpack.c.l.b16 %v2596
          %v2937 = vunpack.c.h.b16 %v2596
          %v2938 = vunpack.c.l.b16 %v2597
          %v2939 = vunpack.c.h.b16 %v2597
          %v2940 = vunpack.c.l.b16 %v2598
          %v2941 = vunpack.c.h.b16 %v2598
          %v2942 = vunpack.c.l.b16 %v2599
          %v2943 = vunpack.c.h.b16 %v2599
          %v2944 = vunpack.c.l.b16 %v2600
          %v2945 = vunpack.c.h.b16 %v2600
          %v2946 = vunpack.c.l.b16 %v2601
          %v2947 = vunpack.c.h.b16 %v2601
          %v2948 = vunpack.c.l.b16 %v2602
          %v2949 = vunpack.c.h.b16 %v2602
          %v2950 = vunpack.c.l.b16 %v2603
          %v2951 = vunpack.c.h.b16 %v2603
          %v2952 = vunpack.c.l.b16 %v2604
          %v2953 = vunpack.c.h.b16 %v2604
          %v2954 = vunpack.c.l.b16 %v2605
          %v2955 = vunpack.c.h.b16 %v2605
          %v2956 = vunpack.c.l.b16 %v2606
          %v2957 = vunpack.c.h.b16 %v2606
          %v2958 = vunpack.c.l.b16 %v2607
          %v2959 = vunpack.c.h.b16 %v2607
          %v2960 = vunpack.c.l.b16 %v2608
          %v2961 = vunpack.c.h.b16 %v2608
          %v2962 = vunpack.c.l.b16 %v2609
          %v2963 = vunpack.c.h.b16 %v2609
          %v2964 = vunpack.c.l.b16 %v2610
          %v2965 = vunpack.c.h.b16 %v2610
          %v2966 = vunpack.c.l.b16 %v2611
          %v2967 = vunpack.c.h.b16 %v2611
          %v2968 = vunpack.c.l.b16 %v2612
          %v2969 = vunpack.c.h.b16 %v2612
          %v2970 = vunpack.c.l.b16 %v2613
          %v2971 = vunpack.c.h.b16 %v2613
          %v2972 = vunpack.c.l.b16 %v2614
          %v2973 = vunpack.c.h.b16 %v2614
          %v2974 = vunpack.c.l.b16 %v2615
          %v2975 = vunpack.c.h.b16 %v2615
          %v2976 = vunpack.c.l.b16 %v2616
          %v2977 = vunpack.c.h.b16 %v2616
          %v2978 = vunpack.c.l.b16 %v2617
          %v2979 = vunpack.c.h.b16 %v2617
          %v2980 = vunpack.c.l.b16 %v2618
          %v2981 = vunpack.c.h.b16 %v2618
          %v2982 = vunpack.c.l.b16 %v2619
          %v2983 = vunpack.c.h.b16 %v2619
          %v2984 = vunpack.c.l.b16 %v2620
          %v2985 = vunpack.c.h.b16 %v2620
          %v2986 = vunpack.c.l.b16 %v2621
          %v2987 = vunpack.c.h.b16 %v2621
          %v2988 = vunpack.c.l.b16 %v2622
          %v2989 = vunpack.c.h.b16 %v2622
          %v2990 = vunpack.c.l.b16 %v2623
          %v2991 = vunpack.c.h.b16 %v2623
          %v2992 = vunpack.c.l.b16 %v2624
          %v2993 = vunpack.c.h.b16 %v2624
          %v2994 = vunpack.c.l.b16 %v2625
          %v2995 = vunpack.c.h.b16 %v2625
          %v2996 = vunpack.c.l.b16 %v2626
          %v2997 = vunpack.c.h.b16 %v2626
          %v2998 = vunpack.c.l.b16 %v2627
          %v2999 = vunpack.c.h.b16 %v2627
          %v3000 = vunpack.c.l.b16 %v2628
          %v3001 = vunpack.c.h.b16 %v2628
          %v3002 = vunpack.c.l.b16 %v2629
          %v3003 = vunpack.c.h.b16 %v2629
          %v3004 = vunpack.c.l.b16 %v2630
          %v3005 = vunpack.c.h.b16 %v2630
          %v3006 = vunpack.c.l.b16 %v2631
          %v3007 = vunpack.c.h.b16 %v2631
          %v3008 = vunpack.c.l.b16 %v2632
          %v3009 = vunpack.c.h.b16 %v2632
          %v3010 = vunpack.c.l.b16 %v2633
          %v3011 = vunpack.c.h.b16 %v2633
          %v3012 = vunpack.c.l.b16 %v2634
          %v3013 = vunpack.c.h.b16 %v2634
          %v3014 = vunpack.c.l.b16 %v2635
          %v3015 = vunpack.c.h.b16 %v2635
          %v3016 = vunpack.c.l.b16 %v2636
          %v3017 = vunpack.c.h.b16 %v2636
          %v3018 = vunpack.c.l.b16 %v2637
          %v3019 = vunpack.c.h.b16 %v2637
          %v3020 = vunpack.c.l.b16 %v2638
          %v3021 = vunpack.c.h.b16 %v2638
          %v3022 = vunpack.c.l.b16 %v2639
          %v3023 = vunpack.c.h.b16 %v2639
          %v3024 = vunpack.c.l.b16 %v2640
          %v3025 = vunpack.c.h.b16 %v2640
          %v3026 = vpack.c.b16 %v2772, %v2770
          %v3027 = vpack.c.b16 %v2773, %v2771
          %v3028 = vpack.c.b16 %v2776, %v2774
          %v3029 = vpack.c.b16 %v2777, %v2775
          %v3030 = vpack.c.b16 %v2780, %v2778
          %v3031 = vpack.c.b16 %v2781, %v2779
          %v3032 = vpack.c.b16 %v2784, %v2782
          %v3033 = vpack.c.b16 %v2785, %v2783
          %v3034 = vpack.c.b16 %v2788, %v2786
          %v3035 = vpack.c.b16 %v2789, %v2787
          %v3036 = vpack.c.b16 %v2792, %v2790
          %v3037 = vpack.c.b16 %v2793, %v2791
          %v3038 = vpack.c.b16 %v2796, %v2794
          %v3039 = vpack.c.b16 %v2797, %v2795
          %v3040 = vpack.c.b16 %v2800, %v2798
          %v3041 = vpack.c.b16 %v2801, %v2799
          %v3042 = vpack.c.b16 %v2804, %v2802
          %v3043 = vpack.c.b16 %v2805, %v2803
          %v3044 = vpack.c.b16 %v2808, %v2806
          %v3045 = vpack.c.b16 %v2809, %v2807
          %v3046 = vpack.c.b16 %v2812, %v2810
          %v3047 = vpack.c.b16 %v2813, %v2811
          %v3048 = vpack.c.b16 %v2816, %v2814
          %v3049 = vpack.c.b16 %v2817, %v2815
          %v3050 = vpack.c.b16 %v2820, %v2818
          %v3051 = vpack.c.b16 %v2821, %v2819
          %v3052 = vpack.c.b16 %v2824, %v2822
          %v3053 = vpack.c.b16 %v2825, %v2823
          %v3054 = vpack.c.b16 %v2828, %v2826
          %v3055 = vpack.c.b16 %v2829, %v2827
          %v3056 = vpack.c.b16 %v2832, %v2830
          %v3057 = vpack.c.b16 %v2833, %v2831
          %v3058 = vpack.c.b16 %v2836, %v2834
          %v3059 = vpack.c.b16 %v2837, %v2835
          %v3060 = vpack.c.b16 %v2840, %v2838
          %v3061 = vpack.c.b16 %v2841, %v2839
          %v3062 = vpack.c.b16 %v2844, %v2842
          %v3063 = vpack.c.b16 %v2845, %v2843
          %v3064 = vpack.c.b16 %v2848, %v2846
          %v3065 = vpack.c.b16 %v2849, %v2847
          %v3066 = vpack.c.b16 %v2852, %v2850
          %v3067 = vpack.c.b16 %v2853, %v2851
          %v3068 = vpack.c.b16 %v2856, %v2854
          %v3069 = vpack.c.b16 %v2857, %v2855
          %v3070 = vpack.c.b16 %v2860, %v2858
          %v3071 = vpack.c.b16 %v2861, %v2859
          %v3072 = vpack.c.b16 %v2864, %v2862
          %v3073 = vpack.c.b16 %v2865, %v2863
          %v3074 = vpack.c.b16 %v2868, %v2866
          %v3075 = vpack.c.b16 %v2869, %v2867
          %v3076 = vpack.c.b16 %v2872, %v2870
          %v3077 = vpack.c.b16 %v2873, %v2871
          %v3078 = vpack.c.b16 %v2876, %v2874
          %v3079 = vpack.c.b16 %v2877, %v2875
          %v3080 = vpack.c.b16 %v2880, %v2878
          %v3081 = vpack.c.b16 %v2881, %v2879
          %v3082 = vpack.c.b16 %v2884, %v2882
          %v3083 = vpack.c.b16 %v2885, %v2883
          %v3084 = vpack.c.b16 %v2888, %v2886
          %v3085 = vpack.c.b16 %v2889, %v2887
          %v3086 = vpack.c.b16 %v2892, %v2890
          %v3087 = vpack.c.b16 %v2893, %v2891
          %v3088 = vpack.c.b16 %v2896, %v2894
          %v3089 = vpack.c.b16 %v2897, %v2895
          %v3090 = vpack.c.b16 %v2900, %v2898
          %v3091 = vpack.c.b16 %v2901, %v2899
          %v3092 = vpack.c.b16 %v2904, %v2902
          %v3093 = vpack.c.b16 %v2905, %v2903
          %v3094 = vpack.c.b16 %v2908, %v2906
          %v3095 = vpack.c.b16 %v2909, %v2907
          %v3096 = vpack.c.b16 %v2912, %v2910
          %v3097 = vpack.c.b16 %v2913, %v2911
          %v3098 = vpack.c.b16 %v2916, %v2914
          %v3099 = vpack.c.b16 %v2917, %v2915
          %v3100 = vpack.c.b16 %v2920, %v2918
          %v3101 = vpack.c.b16 %v2921, %v2919
          %v3102 = vpack.c.b16 %v2924, %v2922
          %v3103 = vpack.c.b16 %v2925, %v2923
          %v3104 = vpack.c.b16 %v2928, %v2926
          %v3105 = vpack.c.b16 %v2929, %v2927
          %v3106 = vpack.c.b16 %v2932, %v2930
          %v3107 = vpack.c.b16 %v2933, %v2931
          %v3108 = vpack.c.b16 %v2936, %v2934
          %v3109 = vpack.c.b16 %v2937, %v2935
          %v3110 = vpack.c.b16 %v2940, %v2938
          %v3111 = vpack.c.b16 %v2941, %v2939
          %v3112 = vpack.c.b16 %v2944, %v2942
          %v3113 = vpack.c.b16 %v2945, %v2943
          %v3114 = vpack.c.b16 %v2948, %v2946
          %v3115 = vpack.c.b16 %v2949, %v2947
          %v3116 = vpack.c.b16 %v2952, %v2950
          %v3117 = vpack.c.b16 %v2953, %v2951
          %v3118 = vpack.c.b16 %v2956, %v2954
          %v3119 = vpack.c.b16 %v2957, %v2955
          %v3120 = vpack.c.b16 %v2960, %v2958
          %v3121 = vpack.c.b16 %v2961, %v2959
          %v3122 = vpack.c.b16 %v2964, %v2962
          %v3123 = vpack.c.b16 %v2965, %v2963
          %v3124 = vpack.c.b16 %v2968, %v2966
          %v3125 = vpack.c.b16 %v2969, %v2967
          %v3126 = vpack.c.b16 %v2972, %v2970
          %v3127 = vpack.c.b16 %v2973, %v2971
          %v3128 = vpack.c.b16 %v2976, %v2974
          %v3129 = vpack.c.b16 %v2977, %v2975
          %v3130 = vpack.c.b16 %v2980, %v2978
          %v3131 = vpack.c.b16 %v2981, %v2979
          %v3132 = vpack.c.b16 %v2984, %v2982
          %v3133 = vpack.c.b16 %v2985, %v2983
          %v3134 = vpack.c.b16 %v2988, %v2986
          %v3135 = vpack.c.b16 %v2989, %v2987
          %v3136 = vpack.c.b16 %v2992, %v2990
          %v3137 = vpack.c.b16 %v2993, %v2991
          %v3138 = vpack.c.b16 %v2996, %v2994
          %v3139 = vpack.c.b16 %v2997, %v2995
          %v3140 = vpack.c.b16 %v3000, %v2998
          %v3141 = vpack.c.b16 %v3001, %v2999
          %v3142 = vpack.c.b16 %v3004, %v3002
          %v3143 = vpack.c.b16 %v3005, %v3003
          %v3144 = vpack.c.b16 %v3008, %v3006
          %v3145 = vpack.c.b16 %v3009, %v3007
          %v3146 = vpack.c.b16 %v3012, %v3010
          %v3147 = vpack.c.b16 %v3013, %v3011
          %v3148 = vpack.c.b16 %v3016, %v3014
          %v3149 = vpack.c.b16 %v3017, %v3015
          %v3150 = vpack.c.b16 %v3020, %v3018
          %v3151 = vpack.c.b16 %v3021, %v3019
          %v3152 = vpack.c.b16 %v3024, %v3022
          %v3153 = vpack.c.b16 %v3025, %v3023
          %v3283 = vlaneseq
          %v3284 = vshrl.u32 %v3283, 7
          %v3285 = vsub.s32 0, %v3284
          %v3286 = vrot.slane %v2641, %v3285
          %v3287 = vlaneseq
          %v3288 = vshrl.u32 %v3287, 7
          %v3289 = vsub.s32 1, %v3288
          %v3290 = vrot.slane %v2641, %v3289
          %3293 = vmatprep.subr.bf16.mxu0 %v3027
          %3294 = vmatpush1.bf16.msra.mxu0 %v3026
          %3295 = vmatprep.subr.bf16.mxu0 %v3029
          %3296 = vmatpush1.bf16.msra.mxu0 %v3028
          %3297 = vmatprep.subr.bf16.mxu0 %v3031
          %3298 = vmatpush1.bf16.msra.mxu0 %v3030
          %3299 = vmatprep.subr.bf16.mxu0 %v3033
          %3300 = vmatpush1.bf16.msra.mxu0 %v3032
          %3301 = vmatprep.subr.bf16.mxu0 %v3035
          %3302 = vmatpush1.bf16.msra.mxu0 %v3034
          %3303 = vmatprep.subr.bf16.mxu0 %v3037
          %3304 = vmatpush1.bf16.msra.mxu0 %v3036
          %3305 = vmatprep.subr.bf16.mxu0 %v3039
          %3306 = vmatpush1.bf16.msra.mxu0 %v3038
          %3307 = vmatprep.subr.bf16.mxu0 %v3041
          %3308 = vmatpush1.bf16.msra.mxu0 %v3040
          %3309 = vmatprep.subr.bf16.mxu0 %v3043
          %3310 = vmatpush1.bf16.msra.mxu0 %v3042
          %3311 = vmatprep.subr.bf16.mxu0 %v3045
          %3312 = vmatpush1.bf16.msra.mxu0 %v3044
          %3313 = vmatprep.subr.bf16.mxu0 %v3047
          %3314 = vmatpush1.bf16.msra.mxu0 %v3046
          %3315 = vmatprep.subr.bf16.mxu0 %v3049
          %3316 = vmatpush1.bf16.msra.mxu0 %v3048
          %3317 = vmatprep.subr.bf16.mxu0 %v3051
          %3318 = vmatpush1.bf16.msra.mxu0 %v3050
          %3319 = vmatprep.subr.bf16.mxu0 %v3053
          %3320 = vmatpush1.bf16.msra.mxu0 %v3052
          %3321 = vmatprep.subr.bf16.mxu0 %v3055
          %3322 = vmatpush1.bf16.msra.mxu0 %v3054
          %3323 = vmatprep.subr.bf16.mxu0 %v3057
          %3324 = vmatpush1.bf16.msra.mxu0 %v3056
          %3325 = vmatprep.mubr.bf16.mxu0 %v2506
          %3326 = vmatmul.mubr.bf16.gmra.mrb[0].mxu0 %v2505
          %v3327 = vpop.f32.mrb[0].mxu0
          %v3328 = vadd.f32 %v3286, %v3327
          %v3329 = vpop.f32.mrb[0].mxu0
          %v3330 = vadd.f32 %v3290, %v3329
          %v3331 = vpop.f32.mrb[0].mxu0
          %v3332 = vpop.f32.mrb[0].mxu0
          %3333 = vdwg.mxu0
          %3334 = vmatprep.subr.bf16.mxu0 %v3059
          %3335 = vmatpush1.bf16.msra.mxu0 %v3058
          %3336 = vmatprep.subr.bf16.mxu0 %v3061
          %3337 = vmatpush1.bf16.msra.mxu0 %v3060
          %3338 = vmatprep.subr.bf16.mxu0 %v3063
          %3339 = vmatpush1.bf16.msra.mxu0 %v3062
          %3340 = vmatprep.subr.bf16.mxu0 %v3065
          %3341 = vmatpush1.bf16.msra.mxu0 %v3064
          %3342 = vmatprep.subr.bf16.mxu0 %v3067
          %3343 = vmatpush1.bf16.msra.mxu0 %v3066
          %3344 = vmatprep.subr.bf16.mxu0 %v3069
          %3345 = vmatpush1.bf16.msra.mxu0 %v3068
          %3346 = vmatprep.subr.bf16.mxu0 %v3071
          %3347 = vmatpush1.bf16.msra.mxu0 %v3070
          %3348 = vmatprep.subr.bf16.mxu0 %v3073
          %3349 = vmatpush1.bf16.msra.mxu0 %v3072
          %3350 = vmatprep.subr.bf16.mxu0 %v3075
          %3351 = vmatpush1.bf16.msra.mxu0 %v3074
          %3352 = vmatprep.subr.bf16.mxu0 %v3077
          %3353 = vmatpush1.bf16.msra.mxu0 %v3076
          %3354 = vmatprep.subr.bf16.mxu0 %v3079
          %3355 = vmatpush1.bf16.msra.mxu0 %v3078
          %3356 = vmatprep.subr.bf16.mxu0 %v3081
          %3357 = vmatpush1.bf16.msra.mxu0 %v3080
          %3358 = vmatprep.subr.bf16.mxu0 %v3083
          %3359 = vmatpush1.bf16.msra.mxu0 %v3082
          %3360 = vmatprep.subr.bf16.mxu0 %v3085
          %3361 = vmatpush1.bf16.msra.mxu0 %v3084
          %3362 = vmatprep.subr.bf16.mxu0 %v3087
          %3363 = vmatpush1.bf16.msra.mxu0 %v3086
          %3364 = vmatprep.subr.bf16.mxu0 %v3089
          %3365 = vmatpush1.bf16.msra.mxu0 %v3088
          %3366 = vmatprep.mubr.bf16.mxu0 %v2508
          %3367 = vmatmul.mubr.bf16.gmra.mrb[0].mxu0 %v2507
          %v3368 = vpop.f32.mrb[0].mxu0
          %v3369 = vadd.f32 %v3328, %v3368
          %v3370 = vpop.f32.mrb[0].mxu0
          %v3371 = vadd.f32 %v3330, %v3370
          %v3372 = vpop.f32.mrb[0].mxu0
          %v3373 = vpop.f32.mrb[0].mxu0
          %3374 = vdwg.mxu0
          %3375 = vmatprep.subr.bf16.mxu0 %v3091
          %3376 = vmatpush1.bf16.msra.mxu0 %v3090
          %3377 = vmatprep.subr.bf16.mxu0 %v3093
          %3378 = vmatpush1.bf16.msra.mxu0 %v3092
          %3379 = vmatprep.subr.bf16.mxu0 %v3095
          %3380 = vmatpush1.bf16.msra.mxu0 %v3094
          %3381 = vmatprep.subr.bf16.mxu0 %v3097
          %3382 = vmatpush1.bf16.msra.mxu0 %v3096
          %3383 = vmatprep.subr.bf16.mxu0 %v3099
          %3384 = vmatpush1.bf16.msra.mxu0 %v3098
          %3385 = vmatprep.subr.bf16.mxu0 %v3101
          %3386 = vmatpush1.bf16.msra.mxu0 %v3100
          %3387 = vmatprep.subr.bf16.mxu0 %v3103
          %3388 = vmatpush1.bf16.msra.mxu0 %v3102
          %3389 = vmatprep.subr.bf16.mxu0 %v3105
          %3390 = vmatpush1.bf16.msra.mxu0 %v3104
          %3391 = vmatprep.subr.bf16.mxu0 %v3107
          %3392 = vmatpush1.bf16.msra.mxu0 %v3106
          %3393 = vmatprep.subr.bf16.mxu0 %v3109
          %3394 = vmatpush1.bf16.msra.mxu0 %v3108
          %3395 = vmatprep.subr.bf16.mxu0 %v3111
          %3396 = vmatpush1.bf16.msra.mxu0 %v3110
          %3397 = vmatprep.subr.bf16.mxu0 %v3113
          %3398 = vmatpush1.bf16.msra.mxu0 %v3112
          %3399 = vmatprep.subr.bf16.mxu0 %v3115
          %3400 = vmatpush1.bf16.msra.mxu0 %v3114
          %3401 = vmatprep.subr.bf16.mxu0 %v3117
          %3402 = vmatpush1.bf16.msra.mxu0 %v3116
          %3403 = vmatprep.subr.bf16.mxu0 %v3119
          %3404 = vmatpush1.bf16.msra.mxu0 %v3118
          %3405 = vmatprep.subr.bf16.mxu0 %v3121
          %3406 = vmatpush1.bf16.msra.mxu0 %v3120
          %3407 = vmatprep.mubr.bf16.mxu0 %v2510
          %3408 = vmatmul.mubr.bf16.gmra.mrb[0].mxu0 %v2509
          %v3409 = vpop.f32.mrb[0].mxu0
          %v3410 = vadd.f32 %v3369, %v3409
          %v3411 = vpop.f32.mrb[0].mxu0
          %v3412 = vadd.f32 %v3371, %v3411
          %v3413 = vpop.f32.mrb[0].mxu0
          %v3414 = vpop.f32.mrb[0].mxu0
          %3415 = vdwg.mxu0
          %3416 = vmatprep.subr.bf16.mxu0 %v3123
          %3417 = vmatpush1.bf16.msra.mxu0 %v3122
          %3418 = vmatprep.subr.bf16.mxu0 %v3125
          %3419 = vmatpush1.bf16.msra.mxu0 %v3124
          %3420 = vmatprep.subr.bf16.mxu0 %v3127
          %3421 = vmatpush1.bf16.msra.mxu0 %v3126
          %3422 = vmatprep.subr.bf16.mxu0 %v3129
          %3423 = vmatpush1.bf16.msra.mxu0 %v3128
          %3424 = vmatprep.subr.bf16.mxu0 %v3131
          %3425 = vmatpush1.bf16.msra.mxu0 %v3130
          %3426 = vmatprep.subr.bf16.mxu0 %v3133
          %3427 = vmatpush1.bf16.msra.mxu0 %v3132
          %3428 = vmatprep.subr.bf16.mxu0 %v3135
          %3429 = vmatpush1.bf16.msra.mxu0 %v3134
          %3430 = vmatprep.subr.bf16.mxu0 %v3137
          %3431 = vmatpush1.bf16.msra.mxu0 %v3136
          %3432 = vmatprep.subr.bf16.mxu0 %v3139
          %3433 = vmatpush1.bf16.msra.mxu0 %v3138
          %3434 = vmatprep.subr.bf16.mxu0 %v3141
          %3435 = vmatpush1.bf16.msra.mxu0 %v3140
          %3436 = vmatprep.subr.bf16.mxu0 %v3143
          %3437 = vmatpush1.bf16.msra.mxu0 %v3142
          %3438 = vmatprep.subr.bf16.mxu0 %v3145
          %3439 = vmatpush1.bf16.msra.mxu0 %v3144
          %3440 = vmatprep.subr.bf16.mxu0 %v3147
          %3441 = vmatpush1.bf16.msra.mxu0 %v3146
          %3442 = vmatprep.subr.bf16.mxu0 %v3149
          %3443 = vmatpush1.bf16.msra.mxu0 %v3148
          %3444 = vmatprep.subr.bf16.mxu0 %v3151
          %3445 = vmatpush1.bf16.msra.mxu0 %v3150
          %3446 = vmatprep.subr.bf16.mxu0 %v3153
          %3447 = vmatpush1.bf16.msra.mxu0 %v3152
          %3448 = vmatprep.mubr.bf16.mxu0 %v2512
          %3449 = vmatmul.mubr.bf16.gmra.mrb[0].mxu0 %v2511
          %v3450 = vpop.f32.mrb[0].mxu0
          %v3451 = vadd.f32 %v3410, %v3450
          %v3452 = vpop.f32.mrb[0].mxu0
          %v3453 = vadd.f32 %v3412, %v3452
          %v3454 = vpop.f32.mrb[0].mxu0
          %v3455 = vpop.f32.mrb[0].mxu0
          %3456 = vdwg.mxu0
          %v3457 = vld [vmem:[%s2] sm:$0xff]
          %v3458 = vld [vmem:[%s2 + $0x8] sm:$0xff]
          %v3459 = vadd.f32 %v3457, %v1851
          %v3460 = vadd.f32 %v3458, %v1853
          %v3461 = vlaneseq
          %v3462 = vshrl.u32 %v3461, 7
          %v3463 = vsub.s32 0, %v3462
          %v3464 = vrot.slane %v3451, %v3463
          %v3465 = vlaneseq
          %v3466 = vshrl.u32 %v3465, 7
          %v3467 = vsub.s32 0, %v3466
          %v3468 = vrot.slane %v3453, %v3467
          %v3469 = vadd.f32 %v3459, %v3464
          %v3470 = vadd.f32 %v3460, %v3468
          %v3471 = vadd.f32 %v3469, %v3470
          %3472 = vadd.xlane.f32.xlu0 %v3471
          %v3473 = vpop.xlane.xlu0 %3472
          %v3474 = vrcp.pop 256.0
          %v3475 = vmul.f32 %v3473, %v3474
          %v3476 = vsub.f32 %v3469, %v3475
          %v3477 = vsub.f32 %v3470, %v3475
          %v3478 = vmul.f32 %v3476, %v3476
          %v3479 = vmul.f32 %v3477, %v3477
          %v3480 = vadd.f32 %v3478, %v3479
          %3481 = vadd.xlane.f32.xlu0 %v3480
          %v3482 = vpop.xlane.xlu0 %3481
          %v3483 = vmul.f32 %v3482, %v3474
          %v3484 = vadd.f32 %v3483, 1e-05
          %v3485 = vrsqrt.pop %v3484
          %v3486 = vmul.f32 %v3476, %v3485
          %v3487 = vmul.f32 %v3477, %v3485
          %v3488 = vld [vmem:[#allocation17] sm:$0x3]
          %v3490 = vlaneseq
          %v3491 = vshrl.u32 %v3490, 7
          %v3492 = vsub.s32 0, %v3491
          %v3493 = vrot.slane %v3488, %v3492
          %v3494 = vlaneseq
          %v3495 = vshrl.u32 %v3494, 7
          %v3496 = vsub.s32 1, %v3495
          %v3497 = vrot.slane %v3488, %v3496
          %v3500 = vmul.f32 %v3486, %v3493
          %v3501 = vmul.f32 %v3487, %v3497
          %v3502 = vld [vmem:[#allocation19] sm:$0x3]
          %v3504 = vlaneseq
          %v3505 = vshrl.u32 %v3504, 7
          %v3506 = vsub.s32 0, %v3505
          %v3507 = vrot.slane %v3502, %v3506
          %v3508 = vlaneseq
          %v3509 = vshrl.u32 %v3508, 7
          %v3510 = vsub.s32 1, %v3509
          %v3511 = vrot.slane %v3502, %v3510
          %v3514 = vadd.f32 %v3500, %v3507
          %v3515 = vadd.f32 %v3501, %v3511
          %3516 = vst [vmem:[#allocation2] sm:$0xff] %v3514
          %3517 = vst [vmem:[#allocation2 + $0x8] sm:$0xff] %v3515
        $region228: #{transformer_encoder_8m.1} parent=127 // pred_fallthru
          _
        %v3518 = vld [vmem:[#allocation2] sm:$0xff]
        %v3519 = vld [vmem:[#allocation2 + $0x8] sm:$0xff]
        %v3520 = vpack.c.bf16 %v3518, %v3518
        %v3521 = vpack.c.bf16 %v3519, %v3519
        %v3522 = vld [vmem:[%s1209] sm:$0xff]
        %v3523 = vld [vmem:[%s1209 + $0x8] sm:$0xff]
        %v3524 = vld [vmem:[%s1209 + $0x10] sm:$0xff]
        %v3525 = vld [vmem:[%s1209 + $0x18] sm:$0xff]
        %v3526 = vld [vmem:[%s1209 + $0x20] sm:$0xff]
        %v3527 = vld [vmem:[%s1209 + $0x28] sm:$0xff]
        %v3528 = vld [vmem:[%s1209 + $0x30] sm:$0xff]
        %v3529 = vld [vmem:[%s1209 + $0x38] sm:$0xff]
        %v3530 = vld [vmem:[%s1209 + $0x40] sm:$0xff]
        %v3531 = vld [vmem:[%s1209 + $0x48] sm:$0xff]
        %v3532 = vld [vmem:[%s1209 + $0x50] sm:$0xff]
        %v3533 = vld [vmem:[%s1209 + $0x58] sm:$0xff]
        %v3534 = vld [vmem:[%s1209 + $0x60] sm:$0xff]
        %v3535 = vld [vmem:[%s1209 + $0x68] sm:$0xff]
        %v3536 = vld [vmem:[%s1209 + $0x70] sm:$0xff]
        %v3537 = vld [vmem:[%s1209 + $0x78] sm:$0xff]
        %v3538 = vld [vmem:[%s1209 + $0x80] sm:$0xff]
        %v3539 = vld [vmem:[%s1209 + $0x88] sm:$0xff]
        %v3540 = vld [vmem:[%s1209 + $0x90] sm:$0xff]
        %v3541 = vld [vmem:[%s1209 + $0x98] sm:$0xff]
        %v3542 = vld [vmem:[%s1209 + $0xa0] sm:$0xff]
        %v3543 = vld [vmem:[%s1209 + $0xa8] sm:$0xff]
        %v3544 = vld [vmem:[%s1209 + $0xb0] sm:$0xff]
        %v3545 = vld [vmem:[%s1209 + $0xb8] sm:$0xff]
        %v3546 = vld [vmem:[%s1209 + $0xc0] sm:$0xff]
        %v3547 = vld [vmem:[%s1209 + $0xc8] sm:$0xff]
        %v3548 = vld [vmem:[%s1209 + $0xd0] sm:$0xff]
        %v3549 = vld [vmem:[%s1209 + $0xd8] sm:$0xff]
        %v3550 = vld [vmem:[%s1209 + $0xe0] sm:$0xff]
        %v3551 = vld [vmem:[%s1209 + $0xe8] sm:$0xff]
        %v3552 = vld [vmem:[%s1209 + $0xf0] sm:$0xff]
        %v3553 = vld [vmem:[%s1209 + $0xf8] sm:$0xff]
        %v3554 = vld [vmem:[%s1209 + $0x100] sm:$0xff]
        %v3555 = vld [vmem:[%s1209 + $0x108] sm:$0xff]
        %v3556 = vld [vmem:[%s1209 + $0x110] sm:$0xff]
        %v3557 = vld [vmem:[%s1209 + $0x118] sm:$0xff]
        %v3558 = vld [vmem:[%s1209 + $0x120] sm:$0xff]
        %v3559 = vld [vmem:[%s1209 + $0x128] sm:$0xff]
        %v3560 = vld [vmem:[%s1209 + $0x130] sm:$0xff]
        %v3561 = vld [vmem:[%s1209 + $0x138] sm:$0xff]
        %v3562 = vld [vmem:[%s1209 + $0x140] sm:$0xff]
        %v3563 = vld [vmem:[%s1209 + $0x148] sm:$0xff]
        %v3564 = vld [vmem:[%s1209 + $0x150] sm:$0xff]
        %v3565 = vld [vmem:[%s1209 + $0x158] sm:$0xff]
        %v3566 = vld [vmem:[%s1209 + $0x160] sm:$0xff]
        %v3567 = vld [vmem:[%s1209 + $0x168] sm:$0xff]
        %v3568 = vld [vmem:[%s1209 + $0x170] sm:$0xff]
        %v3569 = vld [vmem:[%s1209 + $0x178] sm:$0xff]
        %v3570 = vld [vmem:[%s1209 + $0x180] sm:$0xff]
        %v3571 = vld [vmem:[%s1209 + $0x188] sm:$0xff]
        %v3572 = vld [vmem:[%s1209 + $0x190] sm:$0xff]
        %v3573 = vld [vmem:[%s1209 + $0x198] sm:$0xff]
        %v3574 = vld [vmem:[%s1209 + $0x1a0] sm:$0xff]
        %v3575 = vld [vmem:[%s1209 + $0x1a8] sm:$0xff]
        %v3576 = vld [vmem:[%s1209 + $0x1b0] sm:$0xff]
        %v3577 = vld [vmem:[%s1209 + $0x1b8] sm:$0xff]
        %v3578 = vld [vmem:[%s1209 + $0x1c0] sm:$0xff]
        %v3579 = vld [vmem:[%s1209 + $0x1c8] sm:$0xff]
        %v3580 = vld [vmem:[%s1209 + $0x1d0] sm:$0xff]
        %v3581 = vld [vmem:[%s1209 + $0x1d8] sm:$0xff]
        %v3582 = vld [vmem:[%s1209 + $0x1e0] sm:$0xff]
        %v3583 = vld [vmem:[%s1209 + $0x1e8] sm:$0xff]
        %v3584 = vld [vmem:[%s1209 + $0x1f0] sm:$0xff]
        %v3585 = vld [vmem:[%s1209 + $0x1f8] sm:$0xff]
        %v3586 = vld [vmem:[%s1209 + $0x200] sm:$0xff]
        %v3587 = vld [vmem:[%s1209 + $0x208] sm:$0xff]
        %v3588 = vld [vmem:[%s1209 + $0x210] sm:$0xff]
        %v3589 = vld [vmem:[%s1209 + $0x218] sm:$0xff]
        %v3590 = vld [vmem:[%s1209 + $0x220] sm:$0xff]
        %v3591 = vld [vmem:[%s1209 + $0x228] sm:$0xff]
        %v3592 = vld [vmem:[%s1209 + $0x230] sm:$0xff]
        %v3593 = vld [vmem:[%s1209 + $0x238] sm:$0xff]
        %v3594 = vld [vmem:[%s1209 + $0x240] sm:$0xff]
        %v3595 = vld [vmem:[%s1209 + $0x248] sm:$0xff]
        %v3596 = vld [vmem:[%s1209 + $0x250] sm:$0xff]
        %v3597 = vld [vmem:[%s1209 + $0x258] sm:$0xff]
        %v3598 = vld [vmem:[%s1209 + $0x260] sm:$0xff]
        %v3599 = vld [vmem:[%s1209 + $0x268] sm:$0xff]
        %v3600 = vld [vmem:[%s1209 + $0x270] sm:$0xff]
        %v3601 = vld [vmem:[%s1209 + $0x278] sm:$0xff]
        %v3602 = vld [vmem:[%s1209 + $0x280] sm:$0xff]
        %v3603 = vld [vmem:[%s1209 + $0x288] sm:$0xff]
        %v3604 = vld [vmem:[%s1209 + $0x290] sm:$0xff]
        %v3605 = vld [vmem:[%s1209 + $0x298] sm:$0xff]
        %v3606 = vld [vmem:[%s1209 + $0x2a0] sm:$0xff]
        %v3607 = vld [vmem:[%s1209 + $0x2a8] sm:$0xff]
        %v3608 = vld [vmem:[%s1209 + $0x2b0] sm:$0xff]
        %v3609 = vld [vmem:[%s1209 + $0x2b8] sm:$0xff]
        %v3610 = vld [vmem:[%s1209 + $0x2c0] sm:$0xff]
        %v3611 = vld [vmem:[%s1209 + $0x2c8] sm:$0xff]
        %v3612 = vld [vmem:[%s1209 + $0x2d0] sm:$0xff]
        %v3613 = vld [vmem:[%s1209 + $0x2d8] sm:$0xff]
        %v3614 = vld [vmem:[%s1209 + $0x2e0] sm:$0xff]
        %v3615 = vld [vmem:[%s1209 + $0x2e8] sm:$0xff]
        %v3616 = vld [vmem:[%s1209 + $0x2f0] sm:$0xff]
        %v3617 = vld [vmem:[%s1209 + $0x2f8] sm:$0xff]
        %v3618 = vld [vmem:[%s1218] sm:$0x3f]
        %v3620 = vlaneseq
        %v3621 = vshrl.u32 %v3620, 7
        %v3622 = vsub.s32 0, %v3621
        %v3623 = vrot.slane %v3618, %v3622
        %v3624 = vlaneseq
        %v3625 = vshrl.u32 %v3624, 7
        %v3626 = vsub.s32 1, %v3625
        %v3627 = vrot.slane %v3618, %v3626
        %v3628 = vlaneseq
        %v3629 = vshrl.u32 %v3628, 7
        %v3630 = vsub.s32 2, %v3629
        %v3631 = vrot.slane %v3618, %v3630
        %v3632 = vlaneseq
        %v3633 = vshrl.u32 %v3632, 7
        %v3634 = vsub.s32 3, %v3633
        %v3635 = vrot.slane %v3618, %v3634
        %v3636 = vlaneseq
        %v3637 = vshrl.u32 %v3636, 7
        %v3638 = vsub.s32 4, %v3637
        %v3639 = vrot.slane %v3618, %v3638
        %v3640 = vlaneseq
        %v3641 = vshrl.u32 %v3640, 7
        %v3642 = vsub.s32 5, %v3641
        %v3643 = vrot.slane %v3618, %v3642
        %v3746 = vunpack.c.l.b16 %v3522
        %v3747 = vunpack.c.h.b16 %v3522
        %v3748 = vunpack.c.l.b16 %v3523
        %v3749 = vunpack.c.h.b16 %v3523
        %v3750 = vunpack.c.l.b16 %v3524
        %v3751 = vunpack.c.h.b16 %v3524
        %v3752 = vunpack.c.l.b16 %v3525
        %v3753 = vunpack.c.h.b16 %v3525
        %v3754 = vunpack.c.l.b16 %v3526
        %v3755 = vunpack.c.h.b16 %v3526
        %v3756 = vunpack.c.l.b16 %v3527
        %v3757 = vunpack.c.h.b16 %v3527
        %v3758 = vunpack.c.l.b16 %v3528
        %v3759 = vunpack.c.h.b16 %v3528
        %v3760 = vunpack.c.l.b16 %v3529
        %v3761 = vunpack.c.h.b16 %v3529
        %v3762 = vunpack.c.l.b16 %v3530
        %v3763 = vunpack.c.h.b16 %v3530
        %v3764 = vunpack.c.l.b16 %v3531
        %v3765 = vunpack.c.h.b16 %v3531
        %v3766 = vunpack.c.l.b16 %v3532
        %v3767 = vunpack.c.h.b16 %v3532
        %v3768 = vunpack.c.l.b16 %v3533
        %v3769 = vunpack.c.h.b16 %v3533
        %v3770 = vunpack.c.l.b16 %v3534
        %v3771 = vunpack.c.h.b16 %v3534
        %v3772 = vunpack.c.l.b16 %v3535
        %v3773 = vunpack.c.h.b16 %v3535
        %v3774 = vunpack.c.l.b16 %v3536
        %v3775 = vunpack.c.h.b16 %v3536
        %v3776 = vunpack.c.l.b16 %v3537
        %v3777 = vunpack.c.h.b16 %v3537
        %v3778 = vunpack.c.l.b16 %v3538
        %v3779 = vunpack.c.h.b16 %v3538
        %v3780 = vunpack.c.l.b16 %v3539
        %v3781 = vunpack.c.h.b16 %v3539
        %v3782 = vunpack.c.l.b16 %v3540
        %v3783 = vunpack.c.h.b16 %v3540
        %v3784 = vunpack.c.l.b16 %v3541
        %v3785 = vunpack.c.h.b16 %v3541
        %v3786 = vunpack.c.l.b16 %v3542
        %v3787 = vunpack.c.h.b16 %v3542
        %v3788 = vunpack.c.l.b16 %v3543
        %v3789 = vunpack.c.h.b16 %v3543
        %v3790 = vunpack.c.l.b16 %v3544
        %v3791 = vunpack.c.h.b16 %v3544
        %v3792 = vunpack.c.l.b16 %v3545
        %v3793 = vunpack.c.h.b16 %v3545
        %v3794 = vunpack.c.l.b16 %v3546
        %v3795 = vunpack.c.h.b16 %v3546
        %v3796 = vunpack.c.l.b16 %v3547
        %v3797 = vunpack.c.h.b16 %v3547
        %v3798 = vunpack.c.l.b16 %v3548
        %v3799 = vunpack.c.h.b16 %v3548
        %v3800 = vunpack.c.l.b16 %v3549
        %v3801 = vunpack.c.h.b16 %v3549
        %v3802 = vunpack.c.l.b16 %v3550
        %v3803 = vunpack.c.h.b16 %v3550
        %v3804 = vunpack.c.l.b16 %v3551
        %v3805 = vunpack.c.h.b16 %v3551
        %v3806 = vunpack.c.l.b16 %v3552
        %v3807 = vunpack.c.h.b16 %v3552
        %v3808 = vunpack.c.l.b16 %v3553
        %v3809 = vunpack.c.h.b16 %v3553
        %v3810 = vunpack.c.l.b16 %v3554
        %v3811 = vunpack.c.h.b16 %v3554
        %v3812 = vunpack.c.l.b16 %v3555
        %v3813 = vunpack.c.h.b16 %v3555
        %v3814 = vunpack.c.l.b16 %v3556
        %v3815 = vunpack.c.h.b16 %v3556
        %v3816 = vunpack.c.l.b16 %v3557
        %v3817 = vunpack.c.h.b16 %v3557
        %v3818 = vunpack.c.l.b16 %v3558
        %v3819 = vunpack.c.h.b16 %v3558
        %v3820 = vunpack.c.l.b16 %v3559
        %v3821 = vunpack.c.h.b16 %v3559
        %v3822 = vunpack.c.l.b16 %v3560
        %v3823 = vunpack.c.h.b16 %v3560
        %v3824 = vunpack.c.l.b16 %v3561
        %v3825 = vunpack.c.h.b16 %v3561
        %v3826 = vunpack.c.l.b16 %v3562
        %v3827 = vunpack.c.h.b16 %v3562
        %v3828 = vunpack.c.l.b16 %v3563
        %v3829 = vunpack.c.h.b16 %v3563
        %v3830 = vunpack.c.l.b16 %v3564
        %v3831 = vunpack.c.h.b16 %v3564
        %v3832 = vunpack.c.l.b16 %v3565
        %v3833 = vunpack.c.h.b16 %v3565
        %v3834 = vunpack.c.l.b16 %v3566
        %v3835 = vunpack.c.h.b16 %v3566
        %v3836 = vunpack.c.l.b16 %v3567
        %v3837 = vunpack.c.h.b16 %v3567
        %v3838 = vunpack.c.l.b16 %v3568
        %v3839 = vunpack.c.h.b16 %v3568
        %v3840 = vunpack.c.l.b16 %v3569
        %v3841 = vunpack.c.h.b16 %v3569
        %v3842 = vunpack.c.l.b16 %v3570
        %v3843 = vunpack.c.h.b16 %v3570
        %v3844 = vunpack.c.l.b16 %v3571
        %v3845 = vunpack.c.h.b16 %v3571
        %v3846 = vunpack.c.l.b16 %v3572
        %v3847 = vunpack.c.h.b16 %v3572
        %v3848 = vunpack.c.l.b16 %v3573
        %v3849 = vunpack.c.h.b16 %v3573
        %v3850 = vunpack.c.l.b16 %v3574
        %v3851 = vunpack.c.h.b16 %v3574
        %v3852 = vunpack.c.l.b16 %v3575
        %v3853 = vunpack.c.h.b16 %v3575
        %v3854 = vunpack.c.l.b16 %v3576
        %v3855 = vunpack.c.h.b16 %v3576
        %v3856 = vunpack.c.l.b16 %v3577
        %v3857 = vunpack.c.h.b16 %v3577
        %v3858 = vunpack.c.l.b16 %v3578
        %v3859 = vunpack.c.h.b16 %v3578
        %v3860 = vunpack.c.l.b16 %v3579
        %v3861 = vunpack.c.h.b16 %v3579
        %v3862 = vunpack.c.l.b16 %v3580
        %v3863 = vunpack.c.h.b16 %v3580
        %v3864 = vunpack.c.l.b16 %v3581
        %v3865 = vunpack.c.h.b16 %v3581
        %v3866 = vunpack.c.l.b16 %v3582
        %v3867 = vunpack.c.h.b16 %v3582
        %v3868 = vunpack.c.l.b16 %v3583
        %v3869 = vunpack.c.h.b16 %v3583
        %v3870 = vunpack.c.l.b16 %v3584
        %v3871 = vunpack.c.h.b16 %v3584
        %v3872 = vunpack.c.l.b16 %v3585
        %v3873 = vunpack.c.h.b16 %v3585
        %v3874 = vunpack.c.l.b16 %v3586
        %v3875 = vunpack.c.h.b16 %v3586
        %v3876 = vunpack.c.l.b16 %v3587
        %v3877 = vunpack.c.h.b16 %v3587
        %v3878 = vunpack.c.l.b16 %v3588
        %v3879 = vunpack.c.h.b16 %v3588
        %v3880 = vunpack.c.l.b16 %v3589
        %v3881 = vunpack.c.h.b16 %v3589
        %v3882 = vunpack.c.l.b16 %v3590
        %v3883 = vunpack.c.h.b16 %v3590
        %v3884 = vunpack.c.l.b16 %v3591
        %v3885 = vunpack.c.h.b16 %v3591
        %v3886 = vunpack.c.l.b16 %v3592
        %v3887 = vunpack.c.h.b16 %v3592
        %v3888 = vunpack.c.l.b16 %v3593
        %v3889 = vunpack.c.h.b16 %v3593
        %v3890 = vunpack.c.l.b16 %v3594
        %v3891 = vunpack.c.h.b16 %v3594
        %v3892 = vunpack.c.l.b16 %v3595
        %v3893 = vunpack.c.h.b16 %v3595
        %v3894 = vunpack.c.l.b16 %v3596
        %v3895 = vunpack.c.h.b16 %v3596
        %v3896 = vunpack.c.l.b16 %v3597
        %v3897 = vunpack.c.h.b16 %v3597
        %v3898 = vunpack.c.l.b16 %v3598
        %v3899 = vunpack.c.h.b16 %v3598
        %v3900 = vunpack.c.l.b16 %v3599
        %v3901 = vunpack.c.h.b16 %v3599
        %v3902 = vunpack.c.l.b16 %v3600
        %v3903 = vunpack.c.h.b16 %v3600
        %v3904 = vunpack.c.l.b16 %v3601
        %v3905 = vunpack.c.h.b16 %v3601
        %v3906 = vunpack.c.l.b16 %v3602
        %v3907 = vunpack.c.h.b16 %v3602
        %v3908 = vunpack.c.l.b16 %v3603
        %v3909 = vunpack.c.h.b16 %v3603
        %v3910 = vunpack.c.l.b16 %v3604
        %v3911 = vunpack.c.h.b16 %v3604
        %v3912 = vunpack.c.l.b16 %v3605
        %v3913 = vunpack.c.h.b16 %v3605
        %v3914 = vunpack.c.l.b16 %v3606
        %v3915 = vunpack.c.h.b16 %v3606
        %v3916 = vunpack.c.l.b16 %v3607
        %v3917 = vunpack.c.h.b16 %v3607
        %v3918 = vunpack.c.l.b16 %v3608
        %v3919 = vunpack.c.h.b16 %v3608
        %v3920 = vunpack.c.l.b16 %v3609
        %v3921 = vunpack.c.h.b16 %v3609
        %v3922 = vunpack.c.l.b16 %v3610
        %v3923 = vunpack.c.h.b16 %v3610
        %v3924 = vunpack.c.l.b16 %v3611
        %v3925 = vunpack.c.h.b16 %v3611
        %v3926 = vunpack.c.l.b16 %v3612
        %v3927 = vunpack.c.h.b16 %v3612
        %v3928 = vunpack.c.l.b16 %v3613
        %v3929 = vunpack.c.h.b16 %v3613
        %v3930 = vunpack.c.l.b16 %v3614
        %v3931 = vunpack.c.h.b16 %v3614
        %v3932 = vunpack.c.l.b16 %v3615
        %v3933 = vunpack.c.h.b16 %v3615
        %v3934 = vunpack.c.l.b16 %v3616
        %v3935 = vunpack.c.h.b16 %v3616
        %v3936 = vunpack.c.l.b16 %v3617
        %v3937 = vunpack.c.h.b16 %v3617
        %v3938 = vpack.c.b16 %v3752, %v3746
        %v3939 = vpack.c.b16 %v3753, %v3747
        %v3940 = vpack.c.b16 %v3754, %v3748
        %v3941 = vpack.c.b16 %v3755, %v3749
        %v3942 = vpack.c.b16 %v3756, %v3750
        %v3943 = vpack.c.b16 %v3757, %v3751
        %v3944 = vpack.c.b16 %v3764, %v3758
        %v3945 = vpack.c.b16 %v3765, %v3759
        %v3946 = vpack.c.b16 %v3766, %v3760
        %v3947 = vpack.c.b16 %v3767, %v3761
        %v3948 = vpack.c.b16 %v3768, %v3762
        %v3949 = vpack.c.b16 %v3769, %v3763
        %v3950 = vpack.c.b16 %v3776, %v3770
        %v3951 = vpack.c.b16 %v3777, %v3771
        %v3952 = vpack.c.b16 %v3778, %v3772
        %v3953 = vpack.c.b16 %v3779, %v3773
        %v3954 = vpack.c.b16 %v3780, %v3774
        %v3955 = vpack.c.b16 %v3781, %v3775
        %v3956 = vpack.c.b16 %v3788, %v3782
        %v3957 = vpack.c.b16 %v3789, %v3783
        %v3958 = vpack.c.b16 %v3790, %v3784
        %v3959 = vpack.c.b16 %v3791, %v3785
        %v3960 = vpack.c.b16 %v3792, %v3786
        %v3961 = vpack.c.b16 %v3793, %v3787
        %v3962 = vpack.c.b16 %v3800, %v3794
        %v3963 = vpack.c.b16 %v3801, %v3795
        %v3964 = vpack.c.b16 %v3802, %v3796
        %v3965 = vpack.c.b16 %v3803, %v3797
        %v3966 = vpack.c.b16 %v3804, %v3798
        %v3967 = vpack.c.b16 %v3805, %v3799
        %v3968 = vpack.c.b16 %v3812, %v3806
        %v3969 = vpack.c.b16 %v3813, %v3807
        %v3970 = vpack.c.b16 %v3814, %v3808
        %v3971 = vpack.c.b16 %v3815, %v3809
        %v3972 = vpack.c.b16 %v3816, %v3810
        %v3973 = vpack.c.b16 %v3817, %v3811
        %v3974 = vpack.c.b16 %v3824, %v3818
        %v3975 = vpack.c.b16 %v3825, %v3819
        %v3976 = vpack.c.b16 %v3826, %v3820
        %v3977 = vpack.c.b16 %v3827, %v3821
        %v3978 = vpack.c.b16 %v3828, %v3822
        %v3979 = vpack.c.b16 %v3829, %v3823
        %v3980 = vpack.c.b16 %v3836, %v3830
        %v3981 = vpack.c.b16 %v3837, %v3831
        %v3982 = vpack.c.b16 %v3838, %v3832
        %v3983 = vpack.c.b16 %v3839, %v3833
        %v3984 = vpack.c.b16 %v3840, %v3834
        %v3985 = vpack.c.b16 %v3841, %v3835
        %v3986 = vpack.c.b16 %v3848, %v3842
        %v3987 = vpack.c.b16 %v3849, %v3843
        %v3988 = vpack.c.b16 %v3850, %v3844
        %v3989 = vpack.c.b16 %v3851, %v3845
        %v3990 = vpack.c.b16 %v3852, %v3846
        %v3991 = vpack.c.b16 %v3853, %v3847
        %v3992 = vpack.c.b16 %v3860, %v3854
        %v3993 = vpack.c.b16 %v3861, %v3855
        %v3994 = vpack.c.b16 %v3862, %v3856
        %v3995 = vpack.c.b16 %v3863, %v3857
        %v3996 = vpack.c.b16 %v3864, %v3858
        %v3997 = vpack.c.b16 %v3865, %v3859
        %v3998 = vpack.c.b16 %v3872, %v3866
        %v3999 = vpack.c.b16 %v3873, %v3867
        %v4000 = vpack.c.b16 %v3874, %v3868
        %v4001 = vpack.c.b16 %v3875, %v3869
        %v4002 = vpack.c.b16 %v3876, %v3870
        %v4003 = vpack.c.b16 %v3877, %v3871
        %v4004 = vpack.c.b16 %v3884, %v3878
        %v4005 = vpack.c.b16 %v3885, %v3879
        %v4006 = vpack.c.b16 %v3886, %v3880
        %v4007 = vpack.c.b16 %v3887, %v3881
        %v4008 = vpack.c.b16 %v3888, %v3882
        %v4009 = vpack.c.b16 %v3889, %v3883
        %v4010 = vpack.c.b16 %v3896, %v3890
        %v4011 = vpack.c.b16 %v3897, %v3891
        %v4012 = vpack.c.b16 %v3898, %v3892
        %v4013 = vpack.c.b16 %v3899, %v3893
        %v4014 = vpack.c.b16 %v3900, %v3894
        %v4015 = vpack.c.b16 %v3901, %v3895
        %v4016 = vpack.c.b16 %v3908, %v3902
        %v4017 = vpack.c.b16 %v3909, %v3903
        %v4018 = vpack.c.b16 %v3910, %v3904
        %v4019 = vpack.c.b16 %v3911, %v3905
        %v4020 = vpack.c.b16 %v3912, %v3906
        %v4021 = vpack.c.b16 %v3913, %v3907
        %v4022 = vpack.c.b16 %v3920, %v3914
        %v4023 = vpack.c.b16 %v3921, %v3915
        %v4024 = vpack.c.b16 %v3922, %v3916
        %v4025 = vpack.c.b16 %v3923, %v3917
        %v4026 = vpack.c.b16 %v3924, %v3918
        %v4027 = vpack.c.b16 %v3925, %v3919
        %v4028 = vpack.c.b16 %v3932, %v3926
        %v4029 = vpack.c.b16 %v3933, %v3927
        %v4030 = vpack.c.b16 %v3934, %v3928
        %v4031 = vpack.c.b16 %v3935, %v3929
        %v4032 = vpack.c.b16 %v3936, %v3930
        %v4033 = vpack.c.b16 %v3937, %v3931
        %4130 = vmatprep.subr.bf16.mxu0 %v3939
        %4131 = vmatpush1.bf16.msra.mxu0 %v3938
        %4132 = vmatprep.subr.bf16.mxu0 %v3945
        %4133 = vmatpush1.bf16.msra.mxu0 %v3944
        %4134 = vmatprep.subr.bf16.mxu0 %v3951
        %4135 = vmatpush1.bf16.msra.mxu0 %v3950
        %4136 = vmatprep.subr.bf16.mxu0 %v3957
        %4137 = vmatpush1.bf16.msra.mxu0 %v3956
        %4138 = vmatprep.subr.bf16.mxu0 %v3963
        %4139 = vmatpush1.bf16.msra.mxu0 %v3962
        %4140 = vmatprep.subr.bf16.mxu0 %v3969
        %4141 = vmatpush1.bf16.msra.mxu0 %v3968
        %4142 = vmatprep.subr.bf16.mxu0 %v3975
        %4143 = vmatpush1.bf16.msra.mxu0 %v3974
        %4144 = vmatprep.subr.bf16.mxu0 %v3981
        %4145 = vmatpush1.bf16.msra.mxu0 %v3980
        %4146 = vmatprep.subr.bf16.mxu0 %v3987
        %4147 = vmatpush1.bf16.msra.mxu0 %v3986
        %4148 = vmatprep.subr.bf16.mxu0 %v3993
        %4149 = vmatpush1.bf16.msra.mxu0 %v3992
        %4150 = vmatprep.subr.bf16.mxu0 %v3999
        %4151 = vmatpush1.bf16.msra.mxu0 %v3998
        %4152 = vmatprep.subr.bf16.mxu0 %v4005
        %4153 = vmatpush1.bf16.msra.mxu0 %v4004
        %4154 = vmatprep.subr.bf16.mxu0 %v4011
        %4155 = vmatpush1.bf16.msra.mxu0 %v4010
        %4156 = vmatprep.subr.bf16.mxu0 %v4017
        %4157 = vmatpush1.bf16.msra.mxu0 %v4016
        %4158 = vmatprep.subr.bf16.mxu0 %v4023
        %4159 = vmatpush1.bf16.msra.mxu0 %v4022
        %4160 = vmatprep.subr.bf16.mxu0 %v4029
        %4161 = vmatpush1.bf16.msra.mxu0 %v4028
        %4162 = vmatprep.mubr.bf16.mxu0 %v3521
        %4163 = vmatmul.mubr.bf16.gmra.mrb[0].mxu0 %v3520
        %v4164 = vpop.f32.mrb[0].mxu0
        %v4165 = vadd.f32 %v3623, %v4164
        %v4166 = vpop.f32.mrb[0].mxu0
        %v4167 = vadd.f32 %v3627, %v4166
        %v4168 = vpop.f32.mrb[0].mxu0
        %v4169 = vpop.f32.mrb[0].mxu0
        %4170 = vdwg.mxu0
        %4171 = vmatprep.subr.bf16.mxu0 %v3941
        %4172 = vmatpush1.bf16.msra.mxu0 %v3940
        %4173 = vmatprep.subr.bf16.mxu0 %v3947
        %4174 = vmatpush1.bf16.msra.mxu0 %v3946
        %4175 = vmatprep.subr.bf16.mxu0 %v3953
        %4176 = vmatpush1.bf16.msra.mxu0 %v3952
        %4177 = vmatprep.subr.bf16.mxu0 %v3959
        %4178 = vmatpush1.bf16.msra.mxu0 %v3958
        %4179 = vmatprep.subr.bf16.mxu0 %v3965
        %4180 = vmatpush1.bf16.msra.mxu0 %v3964
        %4181 = vmatprep.subr.bf16.mxu0 %v3971
        %4182 = vmatpush1.bf16.msra.mxu0 %v3970
        %4183 = vmatprep.subr.bf16.mxu0 %v3977
        %4184 = vmatpush1.bf16.msra.mxu0 %v3976
        %4185 = vmatprep.subr.bf16.mxu0 %v3983
        %4186 = vmatpush1.bf16.msra.mxu0 %v3982
        %4187 = vmatprep.subr.bf16.mxu0 %v3989
        %4188 = vmatpush1.bf16.msra.mxu0 %v3988
        %4189 = vmatprep.subr.bf16.mxu0 %v3995
        %4190 = vmatpush1.bf16.msra.mxu0 %v3994
        %4191 = vmatprep.subr.bf16.mxu0 %v4001
        %4192 = vmatpush1.bf16.msra.mxu0 %v4000
        %4193 = vmatprep.subr.bf16.mxu0 %v4007
        %4194 = vmatpush1.bf16.msra.mxu0 %v4006
        %4195 = vmatprep.subr.bf16.mxu0 %v4013
        %4196 = vmatpush1.bf16.msra.mxu0 %v4012
        %4197 = vmatprep.subr.bf16.mxu0 %v4019
        %4198 = vmatpush1.bf16.msra.mxu0 %v4018
        %4199 = vmatprep.subr.bf16.mxu0 %v4025
        %4200 = vmatpush1.bf16.msra.mxu0 %v4024
        %4201 = vmatprep.subr.bf16.mxu0 %v4031
        %4202 = vmatpush1.bf16.msra.mxu0 %v4030
        %4203 = vmatprep.mubr.bf16.mxu0 %v3521
        %4204 = vmatmul.mubr.bf16.gmra.mrb[0].mxu0 %v3520
        %v4205 = vpop.f32.mrb[0].mxu0
        %v4206 = vadd.f32 %v3631, %v4205
        %v4207 = vpop.f32.mrb[0].mxu0
        %v4208 = vadd.f32 %v3635, %v4207
        %v4209 = vpop.f32.mrb[0].mxu0
        %v4210 = vpop.f32.mrb[0].mxu0
        %4211 = vdwg.mxu0
        %4212 = vmatprep.subr.bf16.mxu0 %v3943
        %4213 = vmatpush1.bf16.msra.mxu0 %v3942
        %4214 = vmatprep.subr.bf16.mxu0 %v3949
        %4215 = vmatpush1.bf16.msra.mxu0 %v3948
        %4216 = vmatprep.subr.bf16.mxu0 %v3955
        %4217 = vmatpush1.bf16.msra.mxu0 %v3954
        %4218 = vmatprep.subr.bf16.mxu0 %v3961
        %4219 = vmatpush1.bf16.msra.mxu0 %v3960
        %4220 = vmatprep.subr.bf16.mxu0 %v3967
        %4221 = vmatpush1.bf16.msra.mxu0 %v3966
        %4222 = vmatprep.subr.bf16.mxu0 %v3973
        %4223 = vmatpush1.bf16.msra.mxu0 %v3972
        %4224 = vmatprep.subr.bf16.mxu0 %v3979
        %4225 = vmatpush1.bf16.msra.mxu0 %v3978
        %4226 = vmatprep.subr.bf16.mxu0 %v3985
        %4227 = vmatpush1.bf16.msra.mxu0 %v3984
        %4228 = vmatprep.subr.bf16.mxu0 %v3991
        %4229 = vmatpush1.bf16.msra.mxu0 %v3990
        %4230 = vmatprep.subr.bf16.mxu0 %v3997
        %4231 = vmatpush1.bf16.msra.mxu0 %v3996
        %4232 = vmatprep.subr.bf16.mxu0 %v4003
        %4233 = vmatpush1.bf16.msra.mxu0 %v4002
        %4234 = vmatprep.subr.bf16.mxu0 %v4009
        %4235 = vmatpush1.bf16.msra.mxu0 %v4008
        %4236 = vmatprep.subr.bf16.mxu0 %v4015
        %4237 = vmatpush1.bf16.msra.mxu0 %v4014
        %4238 = vmatprep.subr.bf16.mxu0 %v4021
        %4239 = vmatpush1.bf16.msra.mxu0 %v4020
        %4240 = vmatprep.subr.bf16.mxu0 %v4027
        %4241 = vmatpush1.bf16.msra.mxu0 %v4026
        %4242 = vmatprep.subr.bf16.mxu0 %v4033
        %4243 = vmatpush1.bf16.msra.mxu0 %v4032
        %4244 = vmatprep.mubr.bf16.mxu0 %v3521
        %4245 = vmatmul.mubr.bf16.gmra.mrb[0].mxu0 %v3520
        %v4246 = vpop.f32.mrb[0].mxu0
        %v4247 = vadd.f32 %v3639, %v4246
        %v4248 = vpop.f32.mrb[0].mxu0
        %v4249 = vadd.f32 %v3643, %v4248
        %v4250 = vpop.f32.mrb[0].mxu0
        %v4251 = vpop.f32.mrb[0].mxu0
        %4252 = vdwg.mxu0
        %v4253 = vpack.c.bf16 %v4165, %v4165
        %v4254 = vpack.c.bf16 %v4206, %v4206
        %vm4255 = vcmask 261120
        %v4257 = vsel %vm4255, %v4253, 0
        %v4260 = vsel %vm4255, %v4254, 0
        %4262 = vmatprep.subr.bf16.mxu0 0
        %4263 = vmatpush1.bf16.xpose.msra.mxu0 %v4260
        %4264 = vmatprep.subr.bf16.mxu0 0
        %4265 = vmatpush1.bf16.xpose.msra.mxu0 0
        %4266 = vmatprep.subr.bf16.mxu0 0
        %4267 = vmatpush1.bf16.xpose.msra.mxu0 0
        %4268 = vmatprep.subr.bf16.mxu0 0
        %4269 = vmatpush1.bf16.xpose.msra.mxu0 0
        %4270 = vmatprep.subr.bf16.mxu0 0
        %4271 = vmatpush1.bf16.xpose.msra.mxu0 0
        %4272 = vmatprep.subr.bf16.mxu0 0
        %4273 = vmatpush1.bf16.xpose.msra.mxu0 0
        %4274 = vmatprep.subr.bf16.mxu0 0
        %4275 = vmatpush1.bf16.xpose.msra.mxu0 0
        %4276 = vmatprep.subr.bf16.mxu0 0
        %4277 = vmatpush1.bf16.xpose.msra.mxu0 0
        %4278 = vmatprep.subr.bf16.mxu0 0
        %4279 = vmatpush1.bf16.xpose.msra.mxu0 0
        %4280 = vmatprep.subr.bf16.mxu0 0
        %4281 = vmatpush1.bf16.xpose.msra.mxu0 0
        %4282 = vmatprep.subr.bf16.mxu0 0
        %4283 = vmatpush1.bf16.xpose.msra.mxu0 0
        %4284 = vmatprep.subr.bf16.mxu0 0
        %4285 = vmatpush1.bf16.xpose.msra.mxu0 0
        %4286 = vmatprep.subr.bf16.mxu0 0
        %4287 = vmatpush1.bf16.xpose.msra.mxu0 0
        %4288 = vmatprep.subr.bf16.mxu0 0
        %4289 = vmatpush1.bf16.xpose.msra.mxu0 0
        %4290 = vmatprep.subr.bf16.mxu0 0
        %4291 = vmatpush1.bf16.xpose.msra.mxu0 0
        %4292 = vmatprep.subr.bf16.mxu0 0
        %4293 = vmatpush1.bf16.xpose.msra.mxu0 0
        %4294 = vmatprep.mubr.bf16.mxu0 0
        %4295 = vmatmul.mubr.bf16.gmra.mrb[0].mxu0 %v4257
        %v4296 = vpop.f32.mrb[0].mxu0
        %v4297 = vadd.f32 0.0, %v4296
        %v4298 = vpop.f32.mrb[0].mxu0
        %v4299 = vpop.f32.mrb[0].mxu0
        %v4300 = vpop.f32.mrb[0].mxu0
        %4301 = vdwg.mxu0
        %v4302 = vmul.f32 %v4297, 0.17677669
        %vm4303 = vcmask 64512
        %v4304 = vsel %vm4303, %v4302, -inf
        %4305 = vmax.xlane.f32.xlu0 %v4304
        %v4306 = vpop.xlane.xlu0 %4305
        %v4307 = vsub.f32 %v4302, %v4306
        %v4308 = vmul.f32 %v4307, 1.442695
        %v4309 = vpow.pop %v4308
        %v4310 = vsel %vm4303, %v4309, 0.0
        %4311 = vadd.xlane.f32.xlu0 %v4310
        %v4312 = vpop.xlane.xlu0 %4311
        %v4313 = vrcp.pop %v4312
        %v4314 = vmul.f32 %v4309, %v4313
        %v4315 = vpack.c.bf16 %v4314, %v4314
        %v4316 = vpack.c.bf16 %v4247, %v4247
        %v4318 = vsel %vm4303, %v4315, 0
        %vm4320 = vcmask 1043456
        %v4322 = vsel %vm4320, %v4316, 0
        %4324 = vmatprep.subr.bf16.mxu0 0
        %4325 = vmatpush1.bf16.msra.mxu0 %v4322
        %4326 = vmatprep.subr.bf16.mxu0 0
        %4327 = vmatpush1.bf16.msra.mxu0 0
        %4328 = vmatprep.subr.bf16.mxu0 0
        %4329 = vmatpush1.bf16.msra.mxu0 0
        %4330 = vmatprep.subr.bf16.mxu0 0
        %4331 = vmatpush1.bf16.msra.mxu0 0
        %4332 = vmatprep.subr.bf16.mxu0 0
        %4333 = vmatpush1.bf16.msra.mxu0 0
        %4334 = vmatprep.subr.bf16.mxu0 0
        %4335 = vmatpush1.bf16.msra.mxu0 0
        %4336 = vmatprep.subr.bf16.mxu0 0
        %4337 = vmatpush1.bf16.msra.mxu0 0
        %4338 = vmatprep.subr.bf16.mxu0 0
        %4339 = vmatpush1.bf16.msra.mxu0 0
        %4340 = vmatprep.subr.bf16.mxu0 0
        %4341 = vmatpush1.bf16.msra.mxu0 0
        %4342 = vmatprep.subr.bf16.mxu0 0
        %4343 = vmatpush1.bf16.msra.mxu0 0
        %4344 = vmatprep.subr.bf16.mxu0 0
        %4345 = vmatpush1.bf16.msra.mxu0 0
        %4346 = vmatprep.subr.bf16.mxu0 0
        %4347 = vmatpush1.bf16.msra.mxu0 0
        %4348 = vmatprep.subr.bf16.mxu0 0
        %4349 = vmatpush1.bf16.msra.mxu0 0
        %4350 = vmatprep.subr.bf16.mxu0 0
        %4351 = vmatpush1.bf16.msra.mxu0 0
        %4352 = vmatprep.subr.bf16.mxu0 0
        %4353 = vmatpush1.bf16.msra.mxu0 0
        %4354 = vmatprep.subr.bf16.mxu0 0
        %4355 = vmatpush1.bf16.msra.mxu0 0
        %4356 = vmatprep.mubr.bf16.mxu0 0
        %4357 = vmatmul.mubr.bf16.gmra.mrb[0].mxu0 %v4318
        %v4358 = vpop.f32.mrb[0].mxu0
        %v4359 = vadd.f32 0.0, %v4358
        %v4360 = vpop.f32.mrb[0].mxu0
        %v4361 = vpop.f32.mrb[0].mxu0
        %v4362 = vpop.f32.mrb[0].mxu0
        %4363 = vdwg.mxu0
        %4365 = vrot.lane.b32.xlu0 %v4253, 96
        %v4366 = vpop.permute.xlu0 %4365
        %4368 = vrot.lane.b32.xlu0 %v4254, 96
        %v4369 = vpop.permute.xlu0 %4368
        %v4371 = vsel %vm4255, %v4366, 0
        %v4374 = vsel %vm4255, %v4369, 0
        %4376 = vmatprep.subr.bf16.mxu0 0
        %4377 = vmatpush1.bf16.xpose.msra.mxu0 %v4374
        %4378 = vmatprep.subr.bf16.mxu0 0
        %4379 = vmatpush1.bf16.xpose.msra.mxu0 0
        %4380 = vmatprep.subr.bf16.mxu0 0
        %4381 = vmatpush1.bf16.xpose.msra.mxu0 0
        %4382 = vmatprep.subr.bf16.mxu0 0
        %4383 = vmatpush1.bf16.xpose.msra.mxu0 0
        %4384 = vmatprep.subr.bf16.mxu0 0
        %4385 = vmatpush1.bf16.xpose.msra.mxu0 0
        %4386 = vmatprep.subr.bf16.mxu0 0
        %4387 = vmatpush1.bf16.xpose.msra.mxu0 0
        %4388 = vmatprep.subr.bf16.mxu0 0
        %4389 = vmatpush1.bf16.xpose.msra.mxu0 0
        %4390 = vmatprep.subr.bf16.mxu0 0
        %4391 = vmatpush1.bf16.xpose.msra.mxu0 0
        %4392 = vmatprep.subr.bf16.mxu0 0
        %4393 = vmatpush1.bf16.xpose.msra.mxu0 0
        %4394 = vmatprep.subr.bf16.mxu0 0
        %4395 = vmatpush1.bf16.xpose.msra.mxu0 0
        %4396 = vmatprep.subr.bf16.mxu0 0
        %4397 = vmatpush1.bf16.xpose.msra.mxu0 0
        %4398 = vmatprep.subr.bf16.mxu0 0
        %4399 = vmatpush1.bf16.xpose.msra.mxu0 0
        %4400 = vmatprep.subr.bf16.mxu0 0
        %4401 = vmatpush1.bf16.xpose.msra.mxu0 0
        %4402 = vmatprep.subr.bf16.mxu0 0
        %4403 = vmatpush1.bf16.xpose.msra.mxu0 0
        %4404 = vmatprep.subr.bf16.mxu0 0
        %4405 = vmatpush1.bf16.xpose.msra.mxu0 0
        %4406 = vmatprep.subr.bf16.mxu0 0
        %4407 = vmatpush1.bf16.xpose.msra.mxu0 0
        %4408 = vmatprep.mubr.bf16.mxu0 0
        %4409 = vmatmul.mubr.bf16.gmra.mrb[0].mxu0 %v4371
        %v4410 = vpop.f32.mrb[0].mxu0
        %v4411 = vadd.f32 0.0, %v4410
        %v4412 = vpop.f32.mrb[0].mxu0
        %v4413 = vpop.f32.mrb[0].mxu0
        %v4414 = vpop.f32.mrb[0].mxu0
        %4415 = vdwg.mxu0
        %v4416 = vmul.f32 %v4411, 0.17677669
        %v4417 = vsel %vm4303, %v4416, -inf
        %4418 = vmax.xlane.f32.xlu0 %v4417
        %v4419 = vpop.xlane.xlu0 %4418
        %v4420 = vsub.f32 %v4416, %v4419
        %v4421 = vmul.f32 %v4420, 1.442695
        %v4422 = vpow.pop %v4421
        %v4423 = vsel %vm4303, %v4422, 0.0
        %4424 = vadd.xlane.f32.xlu0 %v4423
        %v4425 = vpop.xlane.xlu0 %4424
        %v4426 = vrcp.pop %v4425
        %v4427 = vmul.f32 %v4422, %v4426
        %v4428 = vpack.c.bf16 %v4427, %v4427
        %4430 = vrot.lane.b32.xlu0 %v4316, 96
        %v4431 = vpop.permute.xlu0 %4430
        %v4433 = vsel %vm4303, %v4428, 0
        %v4436 = vsel %vm4320, %v4431, 0
        %4438 = vmatprep.subr.bf16.mxu0 0
        %4439 = vmatpush1.bf16.msra.mxu0 %v4436
        %4440 = vmatprep.subr.bf16.mxu0 0
        %4441 = vmatpush1.bf16.msra.mxu0 0
        %4442 = vmatprep.subr.bf16.mxu0 0
        %4443 = vmatpush1.bf16.msra.mxu0 0
        %4444 = vmatprep.subr.bf16.mxu0 0
        %4445 = vmatpush1.bf16.msra.mxu0 0
        %4446 = vmatprep.subr.bf16.mxu0 0
        %4447 = vmatpush1.bf16.msra.mxu0 0
        %4448 = vmatprep.subr.bf16.mxu0 0
        %4449 = vmatpush1.bf16.msra.mxu0 0
        %4450 = vmatprep.subr.bf16.mxu0 0
        %4451 = vmatpush1.bf16.msra.mxu0 0
        %4452 = vmatprep.subr.bf16.mxu0 0
        %4453 = vmatpush1.bf16.msra.mxu0 0
        %4454 = vmatprep.subr.bf16.mxu0 0
        %4455 = vmatpush1.bf16.msra.mxu0 0
        %4456 = vmatprep.subr.bf16.mxu0 0
        %4457 = vmatpush1.bf16.msra.mxu0 0
        %4458 = vmatprep.subr.bf16.mxu0 0
        %4459 = vmatpush1.bf16.msra.mxu0 0
        %4460 = vmatprep.subr.bf16.mxu0 0
        %4461 = vmatpush1.bf16.msra.mxu0 0
        %4462 = vmatprep.subr.bf16.mxu0 0
        %4463 = vmatpush1.bf16.msra.mxu0 0
        %4464 = vmatprep.subr.bf16.mxu0 0
        %4465 = vmatpush1.bf16.msra.mxu0 0
        %4466 = vmatprep.subr.bf16.mxu0 0
        %4467 = vmatpush1.bf16.msra.mxu0 0
        %4468 = vmatprep.subr.bf16.mxu0 0
        %4469 = vmatpush1.bf16.msra.mxu0 0
        %4470 = vmatprep.mubr.bf16.mxu0 0
        %4471 = vmatmul.mubr.bf16.gmra.mrb[0].mxu0 %v4433
        %v4472 = vpop.f32.mrb[0].mxu0
        %v4473 = vadd.f32 0.0, %v4472
        %v4474 = vpop.f32.mrb[0].mxu0
        %v4475 = vpop.f32.mrb[0].mxu0
        %v4476 = vpop.f32.mrb[0].mxu0
        %4477 = vdwg.mxu0
        %4478 = vrot.lane.b32.xlu0 %v4253, 64
        %v4479 = vpop.permute.xlu0 %4478
        %4480 = vrot.lane.b32.xlu0 %v4254, 64
        %v4481 = vpop.permute.xlu0 %4480
        %v4483 = vsel %vm4255, %v4479, 0
        %v4486 = vsel %vm4255, %v4481, 0
        %4488 = vmatprep.subr.bf16.mxu0 0
        %4489 = vmatpush1.bf16.xpose.msra.mxu0 %v4486
        %4490 = vmatprep.subr.bf16.mxu0 0
        %4491 = vmatpush1.bf16.xpose.msra.mxu0 0
        %4492 = vmatprep.subr.bf16.mxu0 0
        %4493 = vmatpush1.bf16.xpose.msra.mxu0 0
        %4494 = vmatprep.subr.bf16.mxu0 0
        %4495 = vmatpush1.bf16.xpose.msra.mxu0 0
        %4496 = vmatprep.subr.bf16.mxu0 0
        %4497 = vmatpush1.bf16.xpose.msra.mxu0 0
        %4498 = vmatprep.subr.bf16.mxu0 0
        %4499 = vmatpush1.bf16.xpose.msra.mxu0 0
        %4500 = vmatprep.subr.bf16.mxu0 0
        %4501 = vmatpush1.bf16.xpose.msra.mxu0 0
        %4502 = vmatprep.subr.bf16.mxu0 0
        %4503 = vmatpush1.bf16.xpose.msra.mxu0 0
        %4504 = vmatprep.subr.bf16.mxu0 0
        %4505 = vmatpush1.bf16.xpose.msra.mxu0 0
        %4506 = vmatprep.subr.bf16.mxu0 0
        %4507 = vmatpush1.bf16.xpose.msra.mxu0 0
        %4508 = vmatprep.subr.bf16.mxu0 0
        %4509 = vmatpush1.bf16.xpose.msra.mxu0 0
        %4510 = vmatprep.subr.bf16.mxu0 0
        %4511 = vmatpush1.bf16.xpose.msra.mxu0 0
        %4512 = vmatprep.subr.bf16.mxu0 0
        %4513 = vmatpush1.bf16.xpose.msra.mxu0 0
        %4514 = vmatprep.subr.bf16.mxu0 0
        %4515 = vmatpush1.bf16.xpose.msra.mxu0 0
        %4516 = vmatprep.subr.bf16.mxu0 0
        %4517 = vmatpush1.bf16.xpose.msra.mxu0 0
        %4518 = vmatprep.subr.bf16.mxu0 0
        %4519 = vmatpush1.bf16.xpose.msra.mxu0 0
        %4520 = vmatprep.mubr.bf16.mxu0 0
        %4521 = vmatmul.mubr.bf16.gmra.mrb[0].mxu0 %v4483
        %v4522 = vpop.f32.mrb[0].mxu0
        %v4523 = vadd.f32 0.0, %v4522
        %v4524 = vpop.f32.mrb[0].mxu0
        %v4525 = vpop.f32.mrb[0].mxu0
        %v4526 = vpop.f32.mrb[0].mxu0
        %4527 = vdwg.mxu0
        %v4528 = vmul.f32 %v4523, 0.17677669
        %v4529 = vsel %vm4303, %v4528, -inf
        %4530 = vmax.xlane.f32.xlu0 %v4529
        %v4531 = vpop.xlane.xlu0 %4530
        %v4532 = vsub.f32 %v4528, %v4531
        %v4533 = vmul.f32 %v4532, 1.442695
        %v4534 = vpow.pop %v4533
        %v4535 = vsel %vm4303, %v4534, 0.0
        %4536 = vadd.xlane.f32.xlu0 %v4535
        %v4537 = vpop.xlane.xlu0 %4536
        %v4538 = vrcp.pop %v4537
        %v4539 = vmul.f32 %v4534, %v4538
        %v4540 = vpack.c.bf16 %v4539, %v4539
        %4541 = vrot.lane.b32.xlu0 %v4316, 64
        %v4542 = vpop.permute.xlu0 %4541
        %v4544 = vsel %vm4303, %v4540, 0
        %v4547 = vsel %vm4320, %v4542, 0
        %4549 = vmatprep.subr.bf16.mxu0 0
        %4550 = vmatpush1.bf16.msra.mxu0 %v4547
        %4551 = vmatprep.subr.bf16.mxu0 0
        %4552 = vmatpush1.bf16.msra.mxu0 0
        %4553 = vmatprep.subr.bf16.mxu0 0
        %4554 = vmatpush1.bf16.msra.mxu0 0
        %4555 = vmatprep.subr.bf16.mxu0 0
        %4556 = vmatpush1.bf16.msra.mxu0 0
        %4557 = vmatprep.subr.bf16.mxu0 0
        %4558 = vmatpush1.bf16.msra.mxu0 0
        %4559 = vmatprep.subr.bf16.mxu0 0
        %4560 = vmatpush1.bf16.msra.mxu0 0
        %4561 = vmatprep.subr.bf16.mxu0 0
        %4562 = vmatpush1.bf16.msra.mxu0 0
        %4563 = vmatprep.subr.bf16.mxu0 0
        %4564 = vmatpush1.bf16.msra.mxu0 0
        %4565 = vmatprep.subr.bf16.mxu0 0
        %4566 = vmatpush1.bf16.msra.mxu0 0
        %4567 = vmatprep.subr.bf16.mxu0 0
        %4568 = vmatpush1.bf16.msra.mxu0 0
        %4569 = vmatprep.subr.bf16.mxu0 0
        %4570 = vmatpush1.bf16.msra.mxu0 0
        %4571 = vmatprep.subr.bf16.mxu0 0
        %4572 = vmatpush1.bf16.msra.mxu0 0
        %4573 = vmatprep.subr.bf16.mxu0 0
        %4574 = vmatpush1.bf16.msra.mxu0 0
        %4575 = vmatprep.subr.bf16.mxu0 0
        %4576 = vmatpush1.bf16.msra.mxu0 0
        %4577 = vmatprep.subr.bf16.mxu0 0
        %4578 = vmatpush1.bf16.msra.mxu0 0
        %4579 = vmatprep.subr.bf16.mxu0 0
        %4580 = vmatpush1.bf16.msra.mxu0 0
        %4581 = vmatprep.mubr.bf16.mxu0 0
        %4582 = vmatmul.mubr.bf16.gmra.mrb[0].mxu0 %v4544
        %v4583 = vpop.f32.mrb[0].mxu0
        %v4584 = vadd.f32 0.0, %v4583
        %v4585 = vpop.f32.mrb[0].mxu0
        %v4586 = vpop.f32.mrb[0].mxu0
        %v4587 = vpop.f32.mrb[0].mxu0
        %4588 = vdwg.mxu0
        %4589 = vrot.lane.b32.xlu0 %v4253, 32
        %v4590 = vpop.permute.xlu0 %4589
        %4591 = vrot.lane.b32.xlu0 %v4254, 32
        %v4592 = vpop.permute.xlu0 %4591
        %v4594 = vsel %vm4255, %v4590, 0
        %v4597 = vsel %vm4255, %v4592, 0
        %4599 = vmatprep.subr.bf16.mxu0 0
        %4600 = vmatpush1.bf16.xpose.msra.mxu0 %v4597
        %4601 = vmatprep.subr.bf16.mxu0 0
        %4602 = vmatpush1.bf16.xpose.msra.mxu0 0
        %4603 = vmatprep.subr.bf16.mxu0 0
        %4604 = vmatpush1.bf16.xpose.msra.mxu0 0
        %4605 = vmatprep.subr.bf16.mxu0 0
        %4606 = vmatpush1.bf16.xpose.msra.mxu0 0
        %4607 = vmatprep.subr.bf16.mxu0 0
        %4608 = vmatpush1.bf16.xpose.msra.mxu0 0
        %4609 = vmatprep.subr.bf16.mxu0 0
        %4610 = vmatpush1.bf16.xpose.msra.mxu0 0
        %4611 = vmatprep.subr.bf16.mxu0 0
        %4612 = vmatpush1.bf16.xpose.msra.mxu0 0
        %4613 = vmatprep.subr.bf16.mxu0 0
        %4614 = vmatpush1.bf16.xpose.msra.mxu0 0
        %4615 = vmatprep.subr.bf16.mxu0 0
        %4616 = vmatpush1.bf16.xpose.msra.mxu0 0
        %4617 = vmatprep.subr.bf16.mxu0 0
        %4618 = vmatpush1.bf16.xpose.msra.mxu0 0
        %4619 = vmatprep.subr.bf16.mxu0 0
        %4620 = vmatpush1.bf16.xpose.msra.mxu0 0
        %4621 = vmatprep.subr.bf16.mxu0 0
        %4622 = vmatpush1.bf16.xpose.msra.mxu0 0
        %4623 = vmatprep.subr.bf16.mxu0 0
        %4624 = vmatpush1.bf16.xpose.msra.mxu0 0
        %4625 = vmatprep.subr.bf16.mxu0 0
        %4626 = vmatpush1.bf16.xpose.msra.mxu0 0
        %4627 = vmatprep.subr.bf16.mxu0 0
        %4628 = vmatpush1.bf16.xpose.msra.mxu0 0
        %4629 = vmatprep.subr.bf16.mxu0 0
        %4630 = vmatpush1.bf16.xpose.msra.mxu0 0
        %4631 = vmatprep.mubr.bf16.mxu0 0
        %4632 = vmatmul.mubr.bf16.gmra.mrb[0].mxu0 %v4594
        %v4633 = vpop.f32.mrb[0].mxu0
        %v4634 = vadd.f32 0.0, %v4633
        %v4635 = vpop.f32.mrb[0].mxu0
        %v4636 = vpop.f32.mrb[0].mxu0
        %v4637 = vpop.f32.mrb[0].mxu0
        %4638 = vdwg.mxu0
        %v4639 = vmul.f32 %v4634, 0.17677669
        %v4640 = vsel %vm4303, %v4639, -inf
        %4641 = vmax.xlane.f32.xlu0 %v4640
        %v4642 = vpop.xlane.xlu0 %4641
        %v4643 = vsub.f32 %v4639, %v4642
        %v4644 = vmul.f32 %v4643, 1.442695
        %v4645 = vpow.pop %v4644
        %v4646 = vsel %vm4303, %v4645, 0.0
        %4647 = vadd.xlane.f32.xlu0 %v4646
        %v4648 = vpop.xlane.xlu0 %4647
        %v4649 = vrcp.pop %v4648
        %v4650 = vmul.f32 %v4645, %v4649
        %v4651 = vpack.c.bf16 %v4650, %v4650
        %4652 = vrot.lane.b32.xlu0 %v4316, 32
        %v4653 = vpop.permute.xlu0 %4652
        %v4655 = vsel %vm4303, %v4651, 0
        %v4658 = vsel %vm4320, %v4653, 0
        %4660 = vmatprep.subr.bf16.mxu0 0
        %4661 = vmatpush1.bf16.msra.mxu0 %v4658
        %4662 = vmatprep.subr.bf16.mxu0 0
        %4663 = vmatpush1.bf16.msra.mxu0 0
        %4664 = vmatprep.subr.bf16.mxu0 0
        %4665 = vmatpush1.bf16.msra.mxu0 0
        %4666 = vmatprep.subr.bf16.mxu0 0
        %4667 = vmatpush1.bf16.msra.mxu0 0
        %4668 = vmatprep.subr.bf16.mxu0 0
        %4669 = vmatpush1.bf16.msra.mxu0 0
        %4670 = vmatprep.subr.bf16.mxu0 0
        %4671 = vmatpush1.bf16.msra.mxu0 0
        %4672 = vmatprep.subr.bf16.mxu0 0
        %4673 = vmatpush1.bf16.msra.mxu0 0
        %4674 = vmatprep.subr.bf16.mxu0 0
        %4675 = vmatpush1.bf16.msra.mxu0 0
        %4676 = vmatprep.subr.bf16.mxu0 0
        %4677 = vmatpush1.bf16.msra.mxu0 0
        %4678 = vmatprep.subr.bf16.mxu0 0
        %4679 = vmatpush1.bf16.msra.mxu0 0
        %4680 = vmatprep.subr.bf16.mxu0 0
        %4681 = vmatpush1.bf16.msra.mxu0 0
        %4682 = vmatprep.subr.bf16.mxu0 0
        %4683 = vmatpush1.bf16.msra.mxu0 0
        %4684 = vmatprep.subr.bf16.mxu0 0
        %4685 = vmatpush1.bf16.msra.mxu0 0
        %4686 = vmatprep.subr.bf16.mxu0 0
        %4687 = vmatpush1.bf16.msra.mxu0 0
        %4688 = vmatprep.subr.bf16.mxu0 0
        %4689 = vmatpush1.bf16.msra.mxu0 0
        %4690 = vmatprep.subr.bf16.mxu0 0
        %4691 = vmatpush1.bf16.msra.mxu0 0
        %4692 = vmatprep.mubr.bf16.mxu0 0
        %4693 = vmatmul.mubr.bf16.gmra.mrb[0].mxu0 %v4655
        %v4694 = vpop.f32.mrb[0].mxu0
        %v4695 = vadd.f32 0.0, %v4694
        %v4696 = vpop.f32.mrb[0].mxu0
        %v4697 = vpop.f32.mrb[0].mxu0
        %v4698 = vpop.f32.mrb[0].mxu0
        %4699 = vdwg.mxu0
        %v4700 = vpack.c.bf16 %v4167, %v4167
        %v4701 = vpack.c.bf16 %v4208, %v4208
        %v4703 = vsel %vm4255, %v4700, 0
        %v4706 = vsel %vm4255, %v4701, 0
        %4708 = vmatprep.subr.bf16.mxu0 0
        %4709 = vmatpush1.bf16.xpose.msra.mxu0 %v4706
        %4710 = vmatprep.subr.bf16.mxu0 0
        %4711 = vmatpush1.bf16.xpose.msra.mxu0 0
        %4712 = vmatprep.subr.bf16.mxu0 0
        %4713 = vmatpush1.bf16.xpose.msra.mxu0 0
        %4714 = vmatprep.subr.bf16.mxu0 0
        %4715 = vmatpush1.bf16.xpose.msra.mxu0 0
        %4716 = vmatprep.subr.bf16.mxu0 0
        %4717 = vmatpush1.bf16.xpose.msra.mxu0 0
        %4718 = vmatprep.subr.bf16.mxu0 0
        %4719 = vmatpush1.bf16.xpose.msra.mxu0 0
        %4720 = vmatprep.subr.bf16.mxu0 0
        %4721 = vmatpush1.bf16.xpose.msra.mxu0 0
        %4722 = vmatprep.subr.bf16.mxu0 0
        %4723 = vmatpush1.bf16.xpose.msra.mxu0 0
        %4724 = vmatprep.subr.bf16.mxu0 0
        %4725 = vmatpush1.bf16.xpose.msra.mxu0 0
        %4726 = vmatprep.subr.bf16.mxu0 0
        %4727 = vmatpush1.bf16.xpose.msra.mxu0 0
        %4728 = vmatprep.subr.bf16.mxu0 0
        %4729 = vmatpush1.bf16.xpose.msra.mxu0 0
        %4730 = vmatprep.subr.bf16.mxu0 0
        %4731 = vmatpush1.bf16.xpose.msra.mxu0 0
        %4732 = vmatprep.subr.bf16.mxu0 0
        %4733 = vmatpush1.bf16.xpose.msra.mxu0 0
        %4734 = vmatprep.subr.bf16.mxu0 0
        %4735 = vmatpush1.bf16.xpose.msra.mxu0 0
        %4736 = vmatprep.subr.bf16.mxu0 0
        %4737 = vmatpush1.bf16.xpose.msra.mxu0 0
        %4738 = vmatprep.subr.bf16.mxu0 0
        %4739 = vmatpush1.bf16.xpose.msra.mxu0 0
        %4740 = vmatprep.mubr.bf16.mxu0 0
        %4741 = vmatmul.mubr.bf16.gmra.mrb[0].mxu0 %v4703
        %v4742 = vpop.f32.mrb[0].mxu0
        %v4743 = vadd.f32 0.0, %v4742
        %v4744 = vpop.f32.mrb[0].mxu0
        %v4745 = vpop.f32.mrb[0].mxu0
        %v4746 = vpop.f32.mrb[0].mxu0
        %4747 = vdwg.mxu0
        %v4748 = vmul.f32 %v4743, 0.17677669
        %v4749 = vsel %vm4303, %v4748, -inf
        %4750 = vmax.xlane.f32.xlu0 %v4749
        %v4751 = vpop.xlane.xlu0 %4750
        %v4752 = vsub.f32 %v4748, %v4751
        %v4753 = vmul.f32 %v4752, 1.442695
        %v4754 = vpow.pop %v4753
        %v4755 = vsel %vm4303, %v4754, 0.0
        %4756 = vadd.xlane.f32.xlu0 %v4755
        %v4757 = vpop.xlane.xlu0 %4756
        %v4758 = vrcp.pop %v4757
        %v4759 = vmul.f32 %v4754, %v4758
        %v4760 = vpack.c.bf16 %v4759, %v4759
        %v4761 = vpack.c.bf16 %v4249, %v4249
        %v4763 = vsel %vm4303, %v4760, 0
        %v4766 = vsel %vm4320, %v4761, 0
        %4768 = vmatprep.subr.bf16.mxu0 0
        %4769 = vmatpush1.bf16.msra.mxu0 %v4766
        %4770 = vmatprep.subr.bf16.mxu0 0
        %4771 = vmatpush1.bf16.msra.mxu0 0
        %4772 = vmatprep.subr.bf16.mxu0 0
        %4773 = vmatpush1.bf16.msra.mxu0 0
        %4774 = vmatprep.subr.bf16.mxu0 0
        %4775 = vmatpush1.bf16.msra.mxu0 0
        %4776 = vmatprep.subr.bf16.mxu0 0
        %4777 = vmatpush1.bf16.msra.mxu0 0
        %4778 = vmatprep.subr.bf16.mxu0 0
        %4779 = vmatpush1.bf16.msra.mxu0 0
        %4780 = vmatprep.subr.bf16.mxu0 0
        %4781 = vmatpush1.bf16.msra.mxu0 0
        %4782 = vmatprep.subr.bf16.mxu0 0
        %4783 = vmatpush1.bf16.msra.mxu0 0
        %4784 = vmatprep.subr.bf16.mxu0 0
        %4785 = vmatpush1.bf16.msra.mxu0 0
        %4786 = vmatprep.subr.bf16.mxu0 0
        %4787 = vmatpush1.bf16.msra.mxu0 0
        %4788 = vmatprep.subr.bf16.mxu0 0
        %4789 = vmatpush1.bf16.msra.mxu0 0
        %4790 = vmatprep.subr.bf16.mxu0 0
        %4791 = vmatpush1.bf16.msra.mxu0 0
        %4792 = vmatprep.subr.bf16.mxu0 0
        %4793 = vmatpush1.bf16.msra.mxu0 0
        %4794 = vmatprep.subr.bf16.mxu0 0
        %4795 = vmatpush1.bf16.msra.mxu0 0
        %4796 = vmatprep.subr.bf16.mxu0 0
        %4797 = vmatpush1.bf16.msra.mxu0 0
        %4798 = vmatprep.subr.bf16.mxu0 0
        %4799 = vmatpush1.bf16.msra.mxu0 0
        %4800 = vmatprep.mubr.bf16.mxu0 0
        %4801 = vmatmul.mubr.bf16.gmra.mrb[0].mxu0 %v4763
        %v4802 = vpop.f32.mrb[0].mxu0
        %v4803 = vadd.f32 0.0, %v4802
        %v4804 = vpop.f32.mrb[0].mxu0
        %v4805 = vpop.f32.mrb[0].mxu0
        %v4806 = vpop.f32.mrb[0].mxu0
        %4807 = vdwg.mxu0
        %4809 = vrot.lane.b32.xlu0 %v4700, 96
        %v4810 = vpop.permute.xlu0 %4809
        %4812 = vrot.lane.b32.xlu0 %v4701, 96
        %v4813 = vpop.permute.xlu0 %4812
        %v4815 = vsel %vm4255, %v4810, 0
        %v4818 = vsel %vm4255, %v4813, 0
        %4820 = vmatprep.subr.bf16.mxu0 0
        %4821 = vmatpush1.bf16.xpose.msra.mxu0 %v4818
        %4822 = vmatprep.subr.bf16.mxu0 0
        %4823 = vmatpush1.bf16.xpose.msra.mxu0 0
        %4824 = vmatprep.subr.bf16.mxu0 0
        %4825 = vmatpush1.bf16.xpose.msra.mxu0 0
        %4826 = vmatprep.subr.bf16.mxu0 0
        %4827 = vmatpush1.bf16.xpose.msra.mxu0 0
        %4828 = vmatprep.subr.bf16.mxu0 0
        %4829 = vmatpush1.bf16.xpose.msra.mxu0 0
        %4830 = vmatprep.subr.bf16.mxu0 0
        %4831 = vmatpush1.bf16.xpose.msra.mxu0 0
        %4832 = vmatprep.subr.bf16.mxu0 0
        %4833 = vmatpush1.bf16.xpose.msra.mxu0 0
        %4834 = vmatprep.subr.bf16.mxu0 0
        %4835 = vmatpush1.bf16.xpose.msra.mxu0 0
        %4836 = vmatprep.subr.bf16.mxu0 0
        %4837 = vmatpush1.bf16.xpose.msra.mxu0 0
        %4838 = vmatprep.subr.bf16.mxu0 0
        %4839 = vmatpush1.bf16.xpose.msra.mxu0 0
        %4840 = vmatprep.subr.bf16.mxu0 0
        %4841 = vmatpush1.bf16.xpose.msra.mxu0 0
        %4842 = vmatprep.subr.bf16.mxu0 0
        %4843 = vmatpush1.bf16.xpose.msra.mxu0 0
        %4844 = vmatprep.subr.bf16.mxu0 0
        %4845 = vmatpush1.bf16.xpose.msra.mxu0 0
        %4846 = vmatprep.subr.bf16.mxu0 0
        %4847 = vmatpush1.bf16.xpose.msra.mxu0 0
        %4848 = vmatprep.subr.bf16.mxu0 0
        %4849 = vmatpush1.bf16.xpose.msra.mxu0 0
        %4850 = vmatprep.subr.bf16.mxu0 0
        %4851 = vmatpush1.bf16.xpose.msra.mxu0 0
        %4852 = vmatprep.mubr.bf16.mxu0 0
        %4853 = vmatmul.mubr.bf16.gmra.mrb[0].mxu0 %v4815
        %v4854 = vpop.f32.mrb[0].mxu0
        %v4855 = vadd.f32 0.0, %v4854
        %v4856 = vpop.f32.mrb[0].mxu0
        %v4857 = vpop.f32.mrb[0].mxu0
        %v4858 = vpop.f32.mrb[0].mxu0
        %4859 = vdwg.mxu0
        %v4860 = vmul.f32 %v4855, 0.17677669
        %v4861 = vsel %vm4303, %v4860, -inf
        %4862 = vmax.xlane.f32.xlu0 %v4861
        %v4863 = vpop.xlane.xlu0 %4862
        %v4864 = vsub.f32 %v4860, %v4863
        %v4865 = vmul.f32 %v4864, 1.442695
        %v4866 = vpow.pop %v4865
        %v4867 = vsel %vm4303, %v4866, 0.0
        %4868 = vadd.xlane.f32.xlu0 %v4867
        %v4869 = vpop.xlane.xlu0 %4868
        %v4870 = vrcp.pop %v4869
        %v4871 = vmul.f32 %v4866, %v4870
        %v4872 = vpack.c.bf16 %v4871, %v4871
        %4874 = vrot.lane.b32.xlu0 %v4761, 96
        %v4875 = vpop.permute.xlu0 %4874
        %v4877 = vsel %vm4303, %v4872, 0
        %v4880 = vsel %vm4320, %v4875, 0
        %4882 = vmatprep.subr.bf16.mxu0 0
        %4883 = vmatpush1.bf16.msra.mxu0 %v4880
        %4884 = vmatprep.subr.bf16.mxu0 0
        %4885 = vmatpush1.bf16.msra.mxu0 0
        %4886 = vmatprep.subr.bf16.mxu0 0
        %4887 = vmatpush1.bf16.msra.mxu0 0
        %4888 = vmatprep.subr.bf16.mxu0 0
        %4889 = vmatpush1.bf16.msra.mxu0 0
        %4890 = vmatprep.subr.bf16.mxu0 0
        %4891 = vmatpush1.bf16.msra.mxu0 0
        %4892 = vmatprep.subr.bf16.mxu0 0
        %4893 = vmatpush1.bf16.msra.mxu0 0
        %4894 = vmatprep.subr.bf16.mxu0 0
        %4895 = vmatpush1.bf16.msra.mxu0 0
        %4896 = vmatprep.subr.bf16.mxu0 0
        %4897 = vmatpush1.bf16.msra.mxu0 0
        %4898 = vmatprep.subr.bf16.mxu0 0
        %4899 = vmatpush1.bf16.msra.mxu0 0
        %4900 = vmatprep.subr.bf16.mxu0 0
        %4901 = vmatpush1.bf16.msra.mxu0 0
        %4902 = vmatprep.subr.bf16.mxu0 0
        %4903 = vmatpush1.bf16.msra.mxu0 0
        %4904 = vmatprep.subr.bf16.mxu0 0
        %4905 = vmatpush1.bf16.msra.mxu0 0
        %4906 = vmatprep.subr.bf16.mxu0 0
        %4907 = vmatpush1.bf16.msra.mxu0 0
        %4908 = vmatprep.subr.bf16.mxu0 0
        %4909 = vmatpush1.bf16.msra.mxu0 0
        %4910 = vmatprep.subr.bf16.mxu0 0
        %4911 = vmatpush1.bf16.msra.mxu0 0
        %4912 = vmatprep.subr.bf16.mxu0 0
        %4913 = vmatpush1.bf16.msra.mxu0 0
        %4914 = vmatprep.mubr.bf16.mxu0 0
        %4915 = vmatmul.mubr.bf16.gmra.mrb[0].mxu0 %v4877
        %v4916 = vpop.f32.mrb[0].mxu0
        %v4917 = vadd.f32 0.0, %v4916
        %v4918 = vpop.f32.mrb[0].mxu0
        %v4919 = vpop.f32.mrb[0].mxu0
        %v4920 = vpop.f32.mrb[0].mxu0
        %4921 = vdwg.mxu0
        %4922 = vrot.lane.b32.xlu0 %v4700, 64
        %v4923 = vpop.permute.xlu0 %4922
        %4924 = vrot.lane.b32.xlu0 %v4701, 64
        %v4925 = vpop.permute.xlu0 %4924
        %v4927 = vsel %vm4255, %v4923, 0
        %v4930 = vsel %vm4255, %v4925, 0
        %4932 = vmatprep.subr.bf16.mxu0 0
        %4933 = vmatpush1.bf16.xpose.msra.mxu0 %v4930
        %4934 = vmatprep.subr.bf16.mxu0 0
        %4935 = vmatpush1.bf16.xpose.msra.mxu0 0
        %4936 = vmatprep.subr.bf16.mxu0 0
        %4937 = vmatpush1.bf16.xpose.msra.mxu0 0
        %4938 = vmatprep.subr.bf16.mxu0 0
        %4939 = vmatpush1.bf16.xpose.msra.mxu0 0
        %4940 = vmatprep.subr.bf16.mxu0 0
        %4941 = vmatpush1.bf16.xpose.msra.mxu0 0
        %4942 = vmatprep.subr.bf16.mxu0 0
        %4943 = vmatpush1.bf16.xpose.msra.mxu0 0
        %4944 = vmatprep.subr.bf16.mxu0 0
        %4945 = vmatpush1.bf16.xpose.msra.mxu0 0
        %4946 = vmatprep.subr.bf16.mxu0 0
        %4947 = vmatpush1.bf16.xpose.msra.mxu0 0
        %4948 = vmatprep.subr.bf16.mxu0 0
        %4949 = vmatpush1.bf16.xpose.msra.mxu0 0
        %4950 = vmatprep.subr.bf16.mxu0 0
        %4951 = vmatpush1.bf16.xpose.msra.mxu0 0
        %4952 = vmatprep.subr.bf16.mxu0 0
        %4953 = vmatpush1.bf16.xpose.msra.mxu0 0
        %4954 = vmatprep.subr.bf16.mxu0 0
        %4955 = vmatpush1.bf16.xpose.msra.mxu0 0
        %4956 = vmatprep.subr.bf16.mxu0 0
        %4957 = vmatpush1.bf16.xpose.msra.mxu0 0
        %4958 = vmatprep.subr.bf16.mxu0 0
        %4959 = vmatpush1.bf16.xpose.msra.mxu0 0
        %4960 = vmatprep.subr.bf16.mxu0 0
        %4961 = vmatpush1.bf16.xpose.msra.mxu0 0
        %4962 = vmatprep.subr.bf16.mxu0 0
        %4963 = vmatpush1.bf16.xpose.msra.mxu0 0
        %4964 = vmatprep.mubr.bf16.mxu0 0
        %4965 = vmatmul.mubr.bf16.gmra.mrb[0].mxu0 %v4927
        %v4966 = vpop.f32.mrb[0].mxu0
        %v4967 = vadd.f32 0.0, %v4966
        %v4968 = vpop.f32.mrb[0].mxu0
        %v4969 = vpop.f32.mrb[0].mxu0
        %v4970 = vpop.f32.mrb[0].mxu0
        %4971 = vdwg.mxu0
        %v4972 = vmul.f32 %v4967, 0.17677669
        %v4973 = vsel %vm4303, %v4972, -inf
        %4974 = vmax.xlane.f32.xlu0 %v4973
        %v4975 = vpop.xlane.xlu0 %4974
        %v4976 = vsub.f32 %v4972, %v4975
        %v4977 = vmul.f32 %v4976, 1.442695
        %v4978 = vpow.pop %v4977
        %v4979 = vsel %vm4303, %v4978, 0.0
        %4980 = vadd.xlane.f32.xlu0 %v4979
        %v4981 = vpop.xlane.xlu0 %4980
        %v4982 = vrcp.pop %v4981
        %v4983 = vmul.f32 %v4978, %v4982
        %v4984 = vpack.c.bf16 %v4983, %v4983
        %4985 = vrot.lane.b32.xlu0 %v4761, 64
        %v4986 = vpop.permute.xlu0 %4985
        %v4988 = vsel %vm4303, %v4984, 0
        %v4991 = vsel %vm4320, %v4986, 0
        %4993 = vmatprep.subr.bf16.mxu0 0
        %4994 = vmatpush1.bf16.msra.mxu0 %v4991
        %4995 = vmatprep.subr.bf16.mxu0 0
        %4996 = vmatpush1.bf16.msra.mxu0 0
        %4997 = vmatprep.subr.bf16.mxu0 0
        %4998 = vmatpush1.bf16.msra.mxu0 0
        %4999 = vmatprep.subr.bf16.mxu0 0
        %5000 = vmatpush1.bf16.msra.mxu0 0
        %5001 = vmatprep.subr.bf16.mxu0 0
        %5002 = vmatpush1.bf16.msra.mxu0 0
        %5003 = vmatprep.subr.bf16.mxu0 0
        %5004 = vmatpush1.bf16.msra.mxu0 0
        %5005 = vmatprep.subr.bf16.mxu0 0
        %5006 = vmatpush1.bf16.msra.mxu0 0
        %5007 = vmatprep.subr.bf16.mxu0 0
        %5008 = vmatpush1.bf16.msra.mxu0 0
        %5009 = vmatprep.subr.bf16.mxu0 0
        %5010 = vmatpush1.bf16.msra.mxu0 0
        %5011 = vmatprep.subr.bf16.mxu0 0
        %5012 = vmatpush1.bf16.msra.mxu0 0
        %5013 = vmatprep.subr.bf16.mxu0 0
        %5014 = vmatpush1.bf16.msra.mxu0 0
        %5015 = vmatprep.subr.bf16.mxu0 0
        %5016 = vmatpush1.bf16.msra.mxu0 0
        %5017 = vmatprep.subr.bf16.mxu0 0
        %5018 = vmatpush1.bf16.msra.mxu0 0
        %5019 = vmatprep.subr.bf16.mxu0 0
        %5020 = vmatpush1.bf16.msra.mxu0 0
        %5021 = vmatprep.subr.bf16.mxu0 0
        %5022 = vmatpush1.bf16.msra.mxu0 0
        %5023 = vmatprep.subr.bf16.mxu0 0
        %5024 = vmatpush1.bf16.msra.mxu0 0
        %5025 = vmatprep.mubr.bf16.mxu0 0
        %5026 = vmatmul.mubr.bf16.gmra.mrb[0].mxu0 %v4988
        %v5027 = vpop.f32.mrb[0].mxu0
        %v5028 = vadd.f32 0.0, %v5027
        %v5029 = vpop.f32.mrb[0].mxu0
        %v5030 = vpop.f32.mrb[0].mxu0
        %v5031 = vpop.f32.mrb[0].mxu0
        %5032 = vdwg.mxu0
        %5033 = vrot.lane.b32.xlu0 %v4700, 32
        %v5034 = vpop.permute.xlu0 %5033
        %5035 = vrot.lane.b32.xlu0 %v4701, 32
        %v5036 = vpop.permute.xlu0 %5035
        %v5038 = vsel %vm4255, %v5034, 0
        %v5041 = vsel %vm4255, %v5036, 0
        %5043 = vmatprep.subr.bf16.mxu0 0
        %5044 = vmatpush1.bf16.xpose.msra.mxu0 %v5041
        %5045 = vmatprep.subr.bf16.mxu0 0
        %5046 = vmatpush1.bf16.xpose.msra.mxu0 0
        %5047 = vmatprep.subr.bf16.mxu0 0
        %5048 = vmatpush1.bf16.xpose.msra.mxu0 0
        %5049 = vmatprep.subr.bf16.mxu0 0
        %5050 = vmatpush1.bf16.xpose.msra.mxu0 0
        %5051 = vmatprep.subr.bf16.mxu0 0
        %5052 = vmatpush1.bf16.xpose.msra.mxu0 0
        %5053 = vmatprep.subr.bf16.mxu0 0
        %5054 = vmatpush1.bf16.xpose.msra.mxu0 0
        %5055 = vmatprep.subr.bf16.mxu0 0
        %5056 = vmatpush1.bf16.xpose.msra.mxu0 0
        %5057 = vmatprep.subr.bf16.mxu0 0
        %5058 = vmatpush1.bf16.xpose.msra.mxu0 0
        %5059 = vmatprep.subr.bf16.mxu0 0
        %5060 = vmatpush1.bf16.xpose.msra.mxu0 0
        %5061 = vmatprep.subr.bf16.mxu0 0
        %5062 = vmatpush1.bf16.xpose.msra.mxu0 0
        %5063 = vmatprep.subr.bf16.mxu0 0
        %5064 = vmatpush1.bf16.xpose.msra.mxu0 0
        %5065 = vmatprep.subr.bf16.mxu0 0
        %5066 = vmatpush1.bf16.xpose.msra.mxu0 0
        %5067 = vmatprep.subr.bf16.mxu0 0
        %5068 = vmatpush1.bf16.xpose.msra.mxu0 0
        %5069 = vmatprep.subr.bf16.mxu0 0
        %5070 = vmatpush1.bf16.xpose.msra.mxu0 0
        %5071 = vmatprep.subr.bf16.mxu0 0
        %5072 = vmatpush1.bf16.xpose.msra.mxu0 0
        %5073 = vmatprep.subr.bf16.mxu0 0
        %5074 = vmatpush1.bf16.xpose.msra.mxu0 0
        %5075 = vmatprep.mubr.bf16.mxu0 0
        %5076 = vmatmul.mubr.bf16.gmra.mrb[0].mxu0 %v5038
        %v5077 = vpop.f32.mrb[0].mxu0
        %v5078 = vadd.f32 0.0, %v5077
        %v5079 = vpop.f32.mrb[0].mxu0
        %v5080 = vpop.f32.mrb[0].mxu0
        %v5081 = vpop.f32.mrb[0].mxu0
        %5082 = vdwg.mxu0
        %v5083 = vmul.f32 %v5078, 0.17677669
        %v5084 = vsel %vm4303, %v5083, -inf
        %5085 = vmax.xlane.f32.xlu0 %v5084
        %v5086 = vpop.xlane.xlu0 %5085
        %v5087 = vsub.f32 %v5083, %v5086
        %v5088 = vmul.f32 %v5087, 1.442695
        %v5089 = vpow.pop %v5088
        %v5090 = vsel %vm4303, %v5089, 0.0
        %5091 = vadd.xlane.f32.xlu0 %v5090
        %v5092 = vpop.xlane.xlu0 %5091
        %v5093 = vrcp.pop %v5092
        %v5094 = vmul.f32 %v5089, %v5093
        %v5095 = vpack.c.bf16 %v5094, %v5094
        %5096 = vrot.lane.b32.xlu0 %v4761, 32
        %v5097 = vpop.permute.xlu0 %5096
        %v5099 = vsel %vm4303, %v5095, 0
        %v5102 = vsel %vm4320, %v5097, 0
        %5104 = vmatprep.subr.bf16.mxu0 0
        %5105 = vmatpush1.bf16.msra.mxu0 %v5102
        %5106 = vmatprep.subr.bf16.mxu0 0
        %5107 = vmatpush1.bf16.msra.mxu0 0
        %5108 = vmatprep.subr.bf16.mxu0 0
        %5109 = vmatpush1.bf16.msra.mxu0 0
        %5110 = vmatprep.subr.bf16.mxu0 0
        %5111 = vmatpush1.bf16.msra.mxu0 0
        %5112 = vmatprep.subr.bf16.mxu0 0
        %5113 = vmatpush1.bf16.msra.mxu0 0
        %5114 = vmatprep.subr.bf16.mxu0 0
        %5115 = vmatpush1.bf16.msra.mxu0 0
        %5116 = vmatprep.subr.bf16.mxu0 0
        %5117 = vmatpush1.bf16.msra.mxu0 0
        %5118 = vmatprep.subr.bf16.mxu0 0
        %5119 = vmatpush1.bf16.msra.mxu0 0
        %5120 = vmatprep.subr.bf16.mxu0 0
        %5121 = vmatpush1.bf16.msra.mxu0 0
        %5122 = vmatprep.subr.bf16.mxu0 0
        %5123 = vmatpush1.bf16.msra.mxu0 0
        %5124 = vmatprep.subr.bf16.mxu0 0
        %5125 = vmatpush1.bf16.msra.mxu0 0
        %5126 = vmatprep.subr.bf16.mxu0 0
        %5127 = vmatpush1.bf16.msra.mxu0 0
        %5128 = vmatprep.subr.bf16.mxu0 0
        %5129 = vmatpush1.bf16.msra.mxu0 0
        %5130 = vmatprep.subr.bf16.mxu0 0
        %5131 = vmatpush1.bf16.msra.mxu0 0
        %5132 = vmatprep.subr.bf16.mxu0 0
        %5133 = vmatpush1.bf16.msra.mxu0 0
        %5134 = vmatprep.subr.bf16.mxu0 0
        %5135 = vmatpush1.bf16.msra.mxu0 0
        %5136 = vmatprep.mubr.bf16.mxu0 0
        %5137 = vmatmul.mubr.bf16.gmra.mrb[0].mxu0 %v5099
        %v5138 = vpop.f32.mrb[0].mxu0
        %v5139 = vadd.f32 0.0, %v5138
        %v5140 = vpop.f32.mrb[0].mxu0
        %v5141 = vpop.f32.mrb[0].mxu0
        %v5142 = vpop.f32.mrb[0].mxu0
        %5143 = vdwg.mxu0
        %5145 = vrot.lane.b32.xlu0 %v4473, 32
        %v5146 = vpop.permute.xlu0 %5145
        %5149 = vrot.lane.b32.xlu0 %v4584, 64
        %v5150 = vpop.permute.xlu0 %5149
        %5153 = vrot.lane.b32.xlu0 %v4695, 96
        %v5154 = vpop.permute.xlu0 %5153
        %5157 = vrot.lane.b32.xlu0 %v4917, 32
        %v5158 = vpop.permute.xlu0 %5157
        %5161 = vrot.lane.b32.xlu0 %v5028, 64
        %v5162 = vpop.permute.xlu0 %5161
        %5165 = vrot.lane.b32.xlu0 %v5139, 96
        %v5166 = vpop.permute.xlu0 %5165
        %v5168 = vsel %vm4255, %v4359, %v5146
        %vm5169 = vcmask 523264
        %v5170 = vsel %vm5169, %v5168, %v5150
        %vm5171 = vcmask 785408
        %v5172 = vsel %vm5171, %v5170, %v5154
        %v5173 = vsel %vm4255, %v4803, %v5158
        %v5174 = vsel %vm5169, %v5173, %v5162
        %v5175 = vsel %vm5171, %v5174, %v5166
        %v5176 = vpack.c.bf16 %v5172, %v5172
        %v5177 = vpack.c.bf16 %v5175, %v5175
        %v5178 = vld [vmem:[%s1227] sm:$0xff]
        %v5179 = vld [vmem:[%s1227 + $0x8] sm:$0xff]
        %v5180 = vld [vmem:[%s1227 + $0x10] sm:$0xff]
        %v5181 = vld [vmem:[%s1227 + $0x18] sm:$0xff]
        %v5182 = vld [vmem:[%s1227 + $0x20] sm:$0xff]
        %v5183 = vld [vmem:[%s1227 + $0x28] sm:$0xff]
        %v5184 = vld [vmem:[%s1227 + $0x30] sm:$0xff]
        %v5185 = vld [vmem:[%s1227 + $0x38] sm:$0xff]
        %v5186 = vld [vmem:[%s1227 + $0x40] sm:$0xff]
        %v5187 = vld [vmem:[%s1227 + $0x48] sm:$0xff]
        %v5188 = vld [vmem:[%s1227 + $0x50] sm:$0xff]
        %v5189 = vld [vmem:[%s1227 + $0x58] sm:$0xff]
        %v5190 = vld [vmem:[%s1227 + $0x60] sm:$0xff]
        %v5191 = vld [vmem:[%s1227 + $0x68] sm:$0xff]
        %v5192 = vld [vmem:[%s1227 + $0x70] sm:$0xff]
        %v5193 = vld [vmem:[%s1227 + $0x78] sm:$0xff]
        %v5194 = vld [vmem:[%s1227 + $0x80] sm:$0xff]
        %v5195 = vld [vmem:[%s1227 + $0x88] sm:$0xff]
        %v5196 = vld [vmem:[%s1227 + $0x90] sm:$0xff]
        %v5197 = vld [vmem:[%s1227 + $0x98] sm:$0xff]
        %v5198 = vld [vmem:[%s1227 + $0xa0] sm:$0xff]
        %v5199 = vld [vmem:[%s1227 + $0xa8] sm:$0xff]
        %v5200 = vld [vmem:[%s1227 + $0xb0] sm:$0xff]
        %v5201 = vld [vmem:[%s1227 + $0xb8] sm:$0xff]
        %v5202 = vld [vmem:[%s1227 + $0xc0] sm:$0xff]
        %v5203 = vld [vmem:[%s1227 + $0xc8] sm:$0xff]
        %v5204 = vld [vmem:[%s1227 + $0xd0] sm:$0xff]
        %v5205 = vld [vmem:[%s1227 + $0xd8] sm:$0xff]
        %v5206 = vld [vmem:[%s1227 + $0xe0] sm:$0xff]
        %v5207 = vld [vmem:[%s1227 + $0xe8] sm:$0xff]
        %v5208 = vld [vmem:[%s1227 + $0xf0] sm:$0xff]
        %v5209 = vld [vmem:[%s1227 + $0xf8] sm:$0xff]
        %v5210 = vld [vmem:[%s1236] sm:$0x3]
        %v5212 = vlaneseq
        %v5213 = vshrl.u32 %v5212, 7
        %v5214 = vsub.s32 0, %v5213
        %v5215 = vrot.slane %v5210, %v5214
        %v5216 = vlaneseq
        %v5217 = vshrl.u32 %v5216, 7
        %v5218 = vsub.s32 1, %v5217
        %v5219 = vrot.slane %v5210, %v5218
        %v5254 = vunpack.c.l.b16 %v5178
        %v5255 = vunpack.c.h.b16 %v5178
        %v5256 = vunpack.c.l.b16 %v5179
        %v5257 = vunpack.c.h.b16 %v5179
        %v5258 = vunpack.c.l.b16 %v5180
        %v5259 = vunpack.c.h.b16 %v5180
        %v5260 = vunpack.c.l.b16 %v5181
        %v5261 = vunpack.c.h.b16 %v5181
        %v5262 = vunpack.c.l.b16 %v5182
        %v5263 = vunpack.c.h.b16 %v5182
        %v5264 = vunpack.c.l.b16 %v5183
        %v5265 = vunpack.c.h.b16 %v5183
        %v5266 = vunpack.c.l.b16 %v5184
        %v5267 = vunpack.c.h.b16 %v5184
        %v5268 = vunpack.c.l.b16 %v5185
        %v5269 = vunpack.c.h.b16 %v5185
        %v5270 = vunpack.c.l.b16 %v5186
        %v5271 = vunpack.c.h.b16 %v5186
        %v5272 = vunpack.c.l.b16 %v5187
        %v5273 = vunpack.c.h.b16 %v5187
        %v5274 = vunpack.c.l.b16 %v5188
        %v5275 = vunpack.c.h.b16 %v5188
        %v5276 = vunpack.c.l.b16 %v5189
        %v5277 = vunpack.c.h.b16 %v5189
        %v5278 = vunpack.c.l.b16 %v5190
        %v5279 = vunpack.c.h.b16 %v5190
        %v5280 = vunpack.c.l.b16 %v5191
        %v5281 = vunpack.c.h.b16 %v5191
        %v5282 = vunpack.c.l.b16 %v5192
        %v5283 = vunpack.c.h.b16 %v5192
        %v5284 = vunpack.c.l.b16 %v5193
        %v5285 = vunpack.c.h.b16 %v5193
        %v5286 = vunpack.c.l.b16 %v5194
        %v5287 = vunpack.c.h.b16 %v5194
        %v5288 = vunpack.c.l.b16 %v5195
        %v5289 = vunpack.c.h.b16 %v5195
        %v5290 = vunpack.c.l.b16 %v5196
        %v5291 = vunpack.c.h.b16 %v5196
        %v5292 = vunpack.c.l.b16 %v5197
        %v5293 = vunpack.c.h.b16 %v5197
        %v5294 = vunpack.c.l.b16 %v5198
        %v5295 = vunpack.c.h.b16 %v5198
        %v5296 = vunpack.c.l.b16 %v5199
        %v5297 = vunpack.c.h.b16 %v5199
        %v5298 = vunpack.c.l.b16 %v5200
        %v5299 = vunpack.c.h.b16 %v5200
        %v5300 = vunpack.c.l.b16 %v5201
        %v5301 = vunpack.c.h.b16 %v5201
        %v5302 = vunpack.c.l.b16 %v5202
        %v5303 = vunpack.c.h.b16 %v5202
        %v5304 = vunpack.c.l.b16 %v5203
        %v5305 = vunpack.c.h.b16 %v5203
        %v5306 = vunpack.c.l.b16 %v5204
        %v5307 = vunpack.c.h.b16 %v5204
        %v5308 = vunpack.c.l.b16 %v5205
        %v5309 = vunpack.c.h.b16 %v5205
        %v5310 = vunpack.c.l.b16 %v5206
        %v5311 = vunpack.c.h.b16 %v5206
        %v5312 = vunpack.c.l.b16 %v5207
        %v5313 = vunpack.c.h.b16 %v5207
        %v5314 = vunpack.c.l.b16 %v5208
        %v5315 = vunpack.c.h.b16 %v5208
        %v5316 = vunpack.c.l.b16 %v5209
        %v5317 = vunpack.c.h.b16 %v5209
        %v5318 = vpack.c.b16 %v5256, %v5254
        %v5319 = vpack.c.b16 %v5257, %v5255
        %v5320 = vpack.c.b16 %v5260, %v5258
        %v5321 = vpack.c.b16 %v5261, %v5259
        %v5322 = vpack.c.b16 %v5264, %v5262
        %v5323 = vpack.c.b16 %v5265, %v5263
        %v5324 = vpack.c.b16 %v5268, %v5266
        %v5325 = vpack.c.b16 %v5269, %v5267
        %v5326 = vpack.c.b16 %v5272, %v5270
        %v5327 = vpack.c.b16 %v5273, %v5271
        %v5328 = vpack.c.b16 %v5276, %v5274
        %v5329 = vpack.c.b16 %v5277, %v5275
        %v5330 = vpack.c.b16 %v5280, %v5278
        %v5331 = vpack.c.b16 %v5281, %v5279
        %v5332 = vpack.c.b16 %v5284, %v5282
        %v5333 = vpack.c.b16 %v5285, %v5283
        %v5334 = vpack.c.b16 %v5288, %v5286
        %v5335 = vpack.c.b16 %v5289, %v5287
        %v5336 = vpack.c.b16 %v5292, %v5290
        %v5337 = vpack.c.b16 %v5293, %v5291
        %v5338 = vpack.c.b16 %v5296, %v5294
        %v5339 = vpack.c.b16 %v5297, %v5295
        %v5340 = vpack.c.b16 %v5300, %v5298
        %v5341 = vpack.c.b16 %v5301, %v5299
        %v5342 = vpack.c.b16 %v5304, %v5302
        %v5343 = vpack.c.b16 %v5305, %v5303
        %v5344 = vpack.c.b16 %v5308, %v5306
        %v5345 = vpack.c.b16 %v5309, %v5307
        %v5346 = vpack.c.b16 %v5312, %v5310
        %v5347 = vpack.c.b16 %v5313, %v5311
        %v5348 = vpack.c.b16 %v5316, %v5314
        %v5349 = vpack.c.b16 %v5317, %v5315
        %5382 = vmatprep.subr.bf16.mxu0 %v5319
        %5383 = vmatpush1.bf16.msra.mxu0 %v5318
        %5384 = vmatprep.subr.bf16.mxu0 %v5321
        %5385 = vmatpush1.bf16.msra.mxu0 %v5320
        %5386 = vmatprep.subr.bf16.mxu0 %v5323
        %5387 = vmatpush1.bf16.msra.mxu0 %v5322
        %5388 = vmatprep.subr.bf16.mxu0 %v5325
        %5389 = vmatpush1.bf16.msra.mxu0 %v5324
        %5390 = vmatprep.subr.bf16.mxu0 %v5327
        %5391 = vmatpush1.bf16.msra.mxu0 %v5326
        %5392 = vmatprep.subr.bf16.mxu0 %v5329
        %5393 = vmatpush1.bf16.msra.mxu0 %v5328
        %5394 = vmatprep.subr.bf16.mxu0 %v5331
        %5395 = vmatpush1.bf16.msra.mxu0 %v5330
        %5396 = vmatprep.subr.bf16.mxu0 %v5333
        %5397 = vmatpush1.bf16.msra.mxu0 %v5332
        %5398 = vmatprep.subr.bf16.mxu0 %v5335
        %5399 = vmatpush1.bf16.msra.mxu0 %v5334
        %5400 = vmatprep.subr.bf16.mxu0 %v5337
        %5401 = vmatpush1.bf16.msra.mxu0 %v5336
        %5402 = vmatprep.subr.bf16.mxu0 %v5339
        %5403 = vmatpush1.bf16.msra.mxu0 %v5338
        %5404 = vmatprep.subr.bf16.mxu0 %v5341
        %5405 = vmatpush1.bf16.msra.mxu0 %v5340
        %5406 = vmatprep.subr.bf16.mxu0 %v5343
        %5407 = vmatpush1.bf16.msra.mxu0 %v5342
        %5408 = vmatprep.subr.bf16.mxu0 %v5345
        %5409 = vmatpush1.bf16.msra.mxu0 %v5344
        %5410 = vmatprep.subr.bf16.mxu0 %v5347
        %5411 = vmatpush1.bf16.msra.mxu0 %v5346
        %5412 = vmatprep.subr.bf16.mxu0 %v5349
        %5413 = vmatpush1.bf16.msra.mxu0 %v5348
        %5414 = vmatprep.mubr.bf16.mxu0 %v5177
        %5415 = vmatmul.mubr.bf16.gmra.mrb[0].mxu0 %v5176
        %v5416 = vpop.f32.mrb[0].mxu0
        %v5417 = vadd.f32 %v5215, %v5416
        %v5418 = vpop.f32.mrb[0].mxu0
        %v5419 = vadd.f32 %v5219, %v5418
        %v5420 = vpop.f32.mrb[0].mxu0
        %v5421 = vpop.f32.mrb[0].mxu0
        %5422 = vdwg.mxu0
        %v5423 = vadd.f32 %v3518, %v5417
        %v5424 = vadd.f32 %v3519, %v5419
        %v5425 = vadd.f32 %v5423, %v5424
        %5426 = vadd.xlane.f32.xlu0 %v5425
        %v5427 = vpop.xlane.xlu0 %5426
        %v5428 = vrcp.pop 256.0
        %v5429 = vmul.f32 %v5427, %v5428
        %v5430 = vsub.f32 %v5423, %v5429
        %v5431 = vsub.f32 %v5424, %v5429
        %v5432 = vmul.f32 %v5430, %v5430
        %v5433 = vmul.f32 %v5431, %v5431
        %v5434 = vadd.f32 %v5432, %v5433
        %5435 = vadd.xlane.f32.xlu0 %v5434
        %v5436 = vpop.xlane.xlu0 %5435
        %v5437 = vmul.f32 %v5436, %v5428
        %v5438 = vadd.f32 %v5437, 1e-05
        %v5439 = vrsqrt.pop %v5438
        %v5440 = vmul.f32 %v5430, %v5439
        %v5441 = vmul.f32 %v5431, %v5439
        %v5442 = vld [vmem:[%s1245] sm:$0x3]
        %v5444 = vlaneseq
        %v5445 = vshrl.u32 %v5444, 7
        %v5446 = vsub.s32 0, %v5445
        %v5447 = vrot.slane %v5442, %v5446
        %v5448 = vlaneseq
        %v5449 = vshrl.u32 %v5448, 7
        %v5450 = vsub.s32 1, %v5449
        %v5451 = vrot.slane %v5442, %v5450
        %v5454 = vmul.f32 %v5440, %v5447
        %v5455 = vmul.f32 %v5441, %v5451
        %v5456 = vld [vmem:[%s1254] sm:$0x3]
        %v5458 = vlaneseq
        %v5459 = vshrl.u32 %v5458, 7
        %v5460 = vsub.s32 0, %v5459
        %v5461 = vrot.slane %v5456, %v5460
        %v5462 = vlaneseq
        %v5463 = vshrl.u32 %v5462, 7
        %v5464 = vsub.s32 1, %v5463
        %v5465 = vrot.slane %v5456, %v5464
        %v5468 = vadd.f32 %v5454, %v5461
        %v5469 = vadd.f32 %v5455, %v5465
        %v5470 = vpack.c.bf16 %v5468, %v5468
        %v5471 = vpack.c.bf16 %v5469, %v5469
        %v5472 = vld [vmem:[%s1263] sm:$0xff]
        %v5473 = vld [vmem:[%s1263 + $0x8] sm:$0xff]
        %v5474 = vld [vmem:[%s1263 + $0x10] sm:$0xff]
        %v5475 = vld [vmem:[%s1263 + $0x18] sm:$0xff]
        %v5476 = vld [vmem:[%s1263 + $0x20] sm:$0xff]
        %v5477 = vld [vmem:[%s1263 + $0x28] sm:$0xff]
        %v5478 = vld [vmem:[%s1263 + $0x30] sm:$0xff]
        %v5479 = vld [vmem:[%s1263 + $0x38] sm:$0xff]
        %v5480 = vld [vmem:[%s1263 + $0x40] sm:$0xff]
        %v5481 = vld [vmem:[%s1263 + $0x48] sm:$0xff]
        %v5482 = vld [vmem:[%s1263 + $0x50] sm:$0xff]
        %v5483 = vld [vmem:[%s1263 + $0x58] sm:$0xff]
        %v5484 = vld [vmem:[%s1263 + $0x60] sm:$0xff]
        %v5485 = vld [vmem:[%s1263 + $0x68] sm:$0xff]
        %v5486 = vld [vmem:[%s1263 + $0x70] sm:$0xff]
        %v5487 = vld [vmem:[%s1263 + $0x78] sm:$0xff]
        %v5488 = vld [vmem:[%s1263 + $0x80] sm:$0xff]
        %v5489 = vld [vmem:[%s1263 + $0x88] sm:$0xff]
        %v5490 = vld [vmem:[%s1263 + $0x90] sm:$0xff]
        %v5491 = vld [vmem:[%s1263 + $0x98] sm:$0xff]
        %v5492 = vld [vmem:[%s1263 + $0xa0] sm:$0xff]
        %v5493 = vld [vmem:[%s1263 + $0xa8] sm:$0xff]
        %v5494 = vld [vmem:[%s1263 + $0xb0] sm:$0xff]
        %v5495 = vld [vmem:[%s1263 + $0xb8] sm:$0xff]
        %v5496 = vld [vmem:[%s1263 + $0xc0] sm:$0xff]
        %v5497 = vld [vmem:[%s1263 + $0xc8] sm:$0xff]
        %v5498 = vld [vmem:[%s1263 + $0xd0] sm:$0xff]
        %v5499 = vld [vmem:[%s1263 + $0xd8] sm:$0xff]
        %v5500 = vld [vmem:[%s1263 + $0xe0] sm:$0xff]
        %v5501 = vld [vmem:[%s1263 + $0xe8] sm:$0xff]
        %v5502 = vld [vmem:[%s1263 + $0xf0] sm:$0xff]
        %v5503 = vld [vmem:[%s1263 + $0xf8] sm:$0xff]
        %v5504 = vld [vmem:[%s1263 + $0x100] sm:$0xff]
        %v5505 = vld [vmem:[%s1263 + $0x108] sm:$0xff]
        %v5506 = vld [vmem:[%s1263 + $0x110] sm:$0xff]
        %v5507 = vld [vmem:[%s1263 + $0x118] sm:$0xff]
        %v5508 = vld [vmem:[%s1263 + $0x120] sm:$0xff]
        %v5509 = vld [vmem:[%s1263 + $0x128] sm:$0xff]
        %v5510 = vld [vmem:[%s1263 + $0x130] sm:$0xff]
        %v5511 = vld [vmem:[%s1263 + $0x138] sm:$0xff]
        %v5512 = vld [vmem:[%s1263 + $0x140] sm:$0xff]
        %v5513 = vld [vmem:[%s1263 + $0x148] sm:$0xff]
        %v5514 = vld [vmem:[%s1263 + $0x150] sm:$0xff]
        %v5515 = vld [vmem:[%s1263 + $0x158] sm:$0xff]
        %v5516 = vld [vmem:[%s1263 + $0x160] sm:$0xff]
        %v5517 = vld [vmem:[%s1263 + $0x168] sm:$0xff]
        %v5518 = vld [vmem:[%s1263 + $0x170] sm:$0xff]
        %v5519 = vld [vmem:[%s1263 + $0x178] sm:$0xff]
        %v5520 = vld [vmem:[%s1263 + $0x180] sm:$0xff]
        %v5521 = vld [vmem:[%s1263 + $0x188] sm:$0xff]
        %v5522 = vld [vmem:[%s1263 + $0x190] sm:$0xff]
        %v5523 = vld [vmem:[%s1263 + $0x198] sm:$0xff]
        %v5524 = vld [vmem:[%s1263 + $0x1a0] sm:$0xff]
        %v5525 = vld [vmem:[%s1263 + $0x1a8] sm:$0xff]
        %v5526 = vld [vmem:[%s1263 + $0x1b0] sm:$0xff]
        %v5527 = vld [vmem:[%s1263 + $0x1b8] sm:$0xff]
        %v5528 = vld [vmem:[%s1263 + $0x1c0] sm:$0xff]
        %v5529 = vld [vmem:[%s1263 + $0x1c8] sm:$0xff]
        %v5530 = vld [vmem:[%s1263 + $0x1d0] sm:$0xff]
        %v5531 = vld [vmem:[%s1263 + $0x1d8] sm:$0xff]
        %v5532 = vld [vmem:[%s1263 + $0x1e0] sm:$0xff]
        %v5533 = vld [vmem:[%s1263 + $0x1e8] sm:$0xff]
        %v5534 = vld [vmem:[%s1263 + $0x1f0] sm:$0xff]
        %v5535 = vld [vmem:[%s1263 + $0x1f8] sm:$0xff]
        %v5536 = vld [vmem:[%s1263 + $0x200] sm:$0xff]
        %v5537 = vld [vmem:[%s1263 + $0x208] sm:$0xff]
        %v5538 = vld [vmem:[%s1263 + $0x210] sm:$0xff]
        %v5539 = vld [vmem:[%s1263 + $0x218] sm:$0xff]
        %v5540 = vld [vmem:[%s1263 + $0x220] sm:$0xff]
        %v5541 = vld [vmem:[%s1263 + $0x228] sm:$0xff]
        %v5542 = vld [vmem:[%s1263 + $0x230] sm:$0xff]
        %v5543 = vld [vmem:[%s1263 + $0x238] sm:$0xff]
        %v5544 = vld [vmem:[%s1263 + $0x240] sm:$0xff]
        %v5545 = vld [vmem:[%s1263 + $0x248] sm:$0xff]
        %v5546 = vld [vmem:[%s1263 + $0x250] sm:$0xff]
        %v5547 = vld [vmem:[%s1263 + $0x258] sm:$0xff]
        %v5548 = vld [vmem:[%s1263 + $0x260] sm:$0xff]
        %v5549 = vld [vmem:[%s1263 + $0x268] sm:$0xff]
        %v5550 = vld [vmem:[%s1263 + $0x270] sm:$0xff]
        %v5551 = vld [vmem:[%s1263 + $0x278] sm:$0xff]
        %v5552 = vld [vmem:[%s1263 + $0x280] sm:$0xff]
        %v5553 = vld [vmem:[%s1263 + $0x288] sm:$0xff]
        %v5554 = vld [vmem:[%s1263 + $0x290] sm:$0xff]
        %v5555 = vld [vmem:[%s1263 + $0x298] sm:$0xff]
        %v5556 = vld [vmem:[%s1263 + $0x2a0] sm:$0xff]
        %v5557 = vld [vmem:[%s1263 + $0x2a8] sm:$0xff]
        %v5558 = vld [vmem:[%s1263 + $0x2b0] sm:$0xff]
        %v5559 = vld [vmem:[%s1263 + $0x2b8] sm:$0xff]
        %v5560 = vld [vmem:[%s1263 + $0x2c0] sm:$0xff]
        %v5561 = vld [vmem:[%s1263 + $0x2c8] sm:$0xff]
        %v5562 = vld [vmem:[%s1263 + $0x2d0] sm:$0xff]
        %v5563 = vld [vmem:[%s1263 + $0x2d8] sm:$0xff]
        %v5564 = vld [vmem:[%s1263 + $0x2e0] sm:$0xff]
        %v5565 = vld [vmem:[%s1263 + $0x2e8] sm:$0xff]
        %v5566 = vld [vmem:[%s1263 + $0x2f0] sm:$0xff]
        %v5567 = vld [vmem:[%s1263 + $0x2f8] sm:$0xff]
        %v5568 = vld [vmem:[%s1263 + $0x300] sm:$0xff]
        %v5569 = vld [vmem:[%s1263 + $0x308] sm:$0xff]
        %v5570 = vld [vmem:[%s1263 + $0x310] sm:$0xff]
        %v5571 = vld [vmem:[%s1263 + $0x318] sm:$0xff]
        %v5572 = vld [vmem:[%s1263 + $0x320] sm:$0xff]
        %v5573 = vld [vmem:[%s1263 + $0x328] sm:$0xff]
        %v5574 = vld [vmem:[%s1263 + $0x330] sm:$0xff]
        %v5575 = vld [vmem:[%s1263 + $0x338] sm:$0xff]
        %v5576 = vld [vmem:[%s1263 + $0x340] sm:$0xff]
        %v5577 = vld [vmem:[%s1263 + $0x348] sm:$0xff]
        %v5578 = vld [vmem:[%s1263 + $0x350] sm:$0xff]
        %v5579 = vld [vmem:[%s1263 + $0x358] sm:$0xff]
        %v5580 = vld [vmem:[%s1263 + $0x360] sm:$0xff]
        %v5581 = vld [vmem:[%s1263 + $0x368] sm:$0xff]
        %v5582 = vld [vmem:[%s1263 + $0x370] sm:$0xff]
        %v5583 = vld [vmem:[%s1263 + $0x378] sm:$0xff]
        %v5584 = vld [vmem:[%s1263 + $0x380] sm:$0xff]
        %v5585 = vld [vmem:[%s1263 + $0x388] sm:$0xff]
        %v5586 = vld [vmem:[%s1263 + $0x390] sm:$0xff]
        %v5587 = vld [vmem:[%s1263 + $0x398] sm:$0xff]
        %v5588 = vld [vmem:[%s1263 + $0x3a0] sm:$0xff]
        %v5589 = vld [vmem:[%s1263 + $0x3a8] sm:$0xff]
        %v5590 = vld [vmem:[%s1263 + $0x3b0] sm:$0xff]
        %v5591 = vld [vmem:[%s1263 + $0x3b8] sm:$0xff]
        %v5592 = vld [vmem:[%s1263 + $0x3c0] sm:$0xff]
        %v5593 = vld [vmem:[%s1263 + $0x3c8] sm:$0xff]
        %v5594 = vld [vmem:[%s1263 + $0x3d0] sm:$0xff]
        %v5595 = vld [vmem:[%s1263 + $0x3d8] sm:$0xff]
        %v5596 = vld [vmem:[%s1263 + $0x3e0] sm:$0xff]
        %v5597 = vld [vmem:[%s1263 + $0x3e8] sm:$0xff]
        %v5598 = vld [vmem:[%s1263 + $0x3f0] sm:$0xff]
        %v5599 = vld [vmem:[%s1263 + $0x3f8] sm:$0xff]
        %v5600 = vld [vmem:[%s1272] sm:$0xff]
        %v5602 = vlaneseq
        %v5603 = vshrl.u32 %v5602, 7
        %v5604 = vsub.s32 0, %v5603
        %v5605 = vrot.slane %v5600, %v5604
        %v5606 = vlaneseq
        %v5607 = vshrl.u32 %v5606, 7
        %v5608 = vsub.s32 1, %v5607
        %v5609 = vrot.slane %v5600, %v5608
        %v5610 = vlaneseq
        %v5611 = vshrl.u32 %v5610, 7
        %v5612 = vsub.s32 2, %v5611
        %v5613 = vrot.slane %v5600, %v5612
        %v5614 = vlaneseq
        %v5615 = vshrl.u32 %v5614, 7
        %v5616 = vsub.s32 3, %v5615
        %v5617 = vrot.slane %v5600, %v5616
        %v5618 = vlaneseq
        %v5619 = vshrl.u32 %v5618, 7
        %v5620 = vsub.s32 4, %v5619
        %v5621 = vrot.slane %v5600, %v5620
        %v5622 = vlaneseq
        %v5623 = vshrl.u32 %v5622, 7
        %v5624 = vsub.s32 5, %v5623
        %v5625 = vrot.slane %v5600, %v5624
        %v5626 = vlaneseq
        %v5627 = vshrl.u32 %v5626, 7
        %v5628 = vsub.s32 6, %v5627
        %v5629 = vrot.slane %v5600, %v5628
        %v5630 = vlaneseq
        %v5631 = vshrl.u32 %v5630, 7
        %v5632 = vsub.s32 7, %v5631
        %v5633 = vrot.slane %v5600, %v5632
        %v5770 = vunpack.c.l.b16 %v5472
        %v5771 = vunpack.c.h.b16 %v5472
        %v5772 = vunpack.c.l.b16 %v5473
        %v5773 = vunpack.c.h.b16 %v5473
        %v5774 = vunpack.c.l.b16 %v5474
        %v5775 = vunpack.c.h.b16 %v5474
        %v5776 = vunpack.c.l.b16 %v5475
        %v5777 = vunpack.c.h.b16 %v5475
        %v5778 = vunpack.c.l.b16 %v5476
        %v5779 = vunpack.c.h.b16 %v5476
        %v5780 = vunpack.c.l.b16 %v5477
        %v5781 = vunpack.c.h.b16 %v5477
        %v5782 = vunpack.c.l.b16 %v5478
        %v5783 = vunpack.c.h.b16 %v5478
        %v5784 = vunpack.c.l.b16 %v5479
        %v5785 = vunpack.c.h.b16 %v5479
        %v5786 = vunpack.c.l.b16 %v5480
        %v5787 = vunpack.c.h.b16 %v5480
        %v5788 = vunpack.c.l.b16 %v5481
        %v5789 = vunpack.c.h.b16 %v5481
        %v5790 = vunpack.c.l.b16 %v5482
        %v5791 = vunpack.c.h.b16 %v5482
        %v5792 = vunpack.c.l.b16 %v5483
        %v5793 = vunpack.c.h.b16 %v5483
        %v5794 = vunpack.c.l.b16 %v5484
        %v5795 = vunpack.c.h.b16 %v5484
        %v5796 = vunpack.c.l.b16 %v5485
        %v5797 = vunpack.c.h.b16 %v5485
        %v5798 = vunpack.c.l.b16 %v5486
        %v5799 = vunpack.c.h.b16 %v5486
        %v5800 = vunpack.c.l.b16 %v5487
        %v5801 = vunpack.c.h.b16 %v5487
        %v5802 = vunpack.c.l.b16 %v5488
        %v5803 = vunpack.c.h.b16 %v5488
        %v5804 = vunpack.c.l.b16 %v5489
        %v5805 = vunpack.c.h.b16 %v5489
        %v5806 = vunpack.c.l.b16 %v5490
        %v5807 = vunpack.c.h.b16 %v5490
        %v5808 = vunpack.c.l.b16 %v5491
        %v5809 = vunpack.c.h.b16 %v5491
        %v5810 = vunpack.c.l.b16 %v5492
        %v5811 = vunpack.c.h.b16 %v5492
        %v5812 = vunpack.c.l.b16 %v5493
        %v5813 = vunpack.c.h.b16 %v5493
        %v5814 = vunpack.c.l.b16 %v5494
        %v5815 = vunpack.c.h.b16 %v5494
        %v5816 = vunpack.c.l.b16 %v5495
        %v5817 = vunpack.c.h.b16 %v5495
        %v5818 = vunpack.c.l.b16 %v5496
        %v5819 = vunpack.c.h.b16 %v5496
        %v5820 = vunpack.c.l.b16 %v5497
        %v5821 = vunpack.c.h.b16 %v5497
        %v5822 = vunpack.c.l.b16 %v5498
        %v5823 = vunpack.c.h.b16 %v5498
        %v5824 = vunpack.c.l.b16 %v5499
        %v5825 = vunpack.c.h.b16 %v5499
        %v5826 = vunpack.c.l.b16 %v5500
        %v5827 = vunpack.c.h.b16 %v5500
        %v5828 = vunpack.c.l.b16 %v5501
        %v5829 = vunpack.c.h.b16 %v5501
        %v5830 = vunpack.c.l.b16 %v5502
        %v5831 = vunpack.c.h.b16 %v5502
        %v5832 = vunpack.c.l.b16 %v5503
        %v5833 = vunpack.c.h.b16 %v5503
        %v5834 = vunpack.c.l.b16 %v5504
        %v5835 = vunpack.c.h.b16 %v5504
        %v5836 = vunpack.c.l.b16 %v5505
        %v5837 = vunpack.c.h.b16 %v5505
        %v5838 = vunpack.c.l.b16 %v5506
        %v5839 = vunpack.c.h.b16 %v5506
        %v5840 = vunpack.c.l.b16 %v5507
        %v5841 = vunpack.c.h.b16 %v5507
        %v5842 = vunpack.c.l.b16 %v5508
        %v5843 = vunpack.c.h.b16 %v5508
        %v5844 = vunpack.c.l.b16 %v5509
        %v5845 = vunpack.c.h.b16 %v5509
        %v5846 = vunpack.c.l.b16 %v5510
        %v5847 = vunpack.c.h.b16 %v5510
        %v5848 = vunpack.c.l.b16 %v5511
        %v5849 = vunpack.c.h.b16 %v5511
        %v5850 = vunpack.c.l.b16 %v5512
        %v5851 = vunpack.c.h.b16 %v5512
        %v5852 = vunpack.c.l.b16 %v5513
        %v5853 = vunpack.c.h.b16 %v5513
        %v5854 = vunpack.c.l.b16 %v5514
        %v5855 = vunpack.c.h.b16 %v5514
        %v5856 = vunpack.c.l.b16 %v5515
        %v5857 = vunpack.c.h.b16 %v5515
        %v5858 = vunpack.c.l.b16 %v5516
        %v5859 = vunpack.c.h.b16 %v5516
        %v5860 = vunpack.c.l.b16 %v5517
        %v5861 = vunpack.c.h.b16 %v5517
        %v5862 = vunpack.c.l.b16 %v5518
        %v5863 = vunpack.c.h.b16 %v5518
        %v5864 = vunpack.c.l.b16 %v5519
        %v5865 = vunpack.c.h.b16 %v5519
        %v5866 = vunpack.c.l.b16 %v5520
        %v5867 = vunpack.c.h.b16 %v5520
        %v5868 = vunpack.c.l.b16 %v5521
        %v5869 = vunpack.c.h.b16 %v5521
        %v5870 = vunpack.c.l.b16 %v5522
        %v5871 = vunpack.c.h.b16 %v5522
        %v5872 = vunpack.c.l.b16 %v5523
        %v5873 = vunpack.c.h.b16 %v5523
        %v5874 = vunpack.c.l.b16 %v5524
        %v5875 = vunpack.c.h.b16 %v5524
        %v5876 = vunpack.c.l.b16 %v5525
        %v5877 = vunpack.c.h.b16 %v5525
        %v5878 = vunpack.c.l.b16 %v5526
        %v5879 = vunpack.c.h.b16 %v5526
        %v5880 = vunpack.c.l.b16 %v5527
        %v5881 = vunpack.c.h.b16 %v5527
        %v5882 = vunpack.c.l.b16 %v5528
        %v5883 = vunpack.c.h.b16 %v5528
        %v5884 = vunpack.c.l.b16 %v5529
        %v5885 = vunpack.c.h.b16 %v5529
        %v5886 = vunpack.c.l.b16 %v5530
        %v5887 = vunpack.c.h.b16 %v5530
        %v5888 = vunpack.c.l.b16 %v5531
        %v5889 = vunpack.c.h.b16 %v5531
        %v5890 = vunpack.c.l.b16 %v5532
        %v5891 = vunpack.c.h.b16 %v5532
        %v5892 = vunpack.c.l.b16 %v5533
        %v5893 = vunpack.c.h.b16 %v5533
        %v5894 = vunpack.c.l.b16 %v5534
        %v5895 = vunpack.c.h.b16 %v5534
        %v5896 = vunpack.c.l.b16 %v5535
        %v5897 = vunpack.c.h.b16 %v5535
        %v5898 = vunpack.c.l.b16 %v5536
        %v5899 = vunpack.c.h.b16 %v5536
        %v5900 = vunpack.c.l.b16 %v5537
        %v5901 = vunpack.c.h.b16 %v5537
        %v5902 = vunpack.c.l.b16 %v5538
        %v5903 = vunpack.c.h.b16 %v5538
        %v5904 = vunpack.c.l.b16 %v5539
        %v5905 = vunpack.c.h.b16 %v5539
        %v5906 = vunpack.c.l.b16 %v5540
        %v5907 = vunpack.c.h.b16 %v5540
        %v5908 = vunpack.c.l.b16 %v5541
        %v5909 = vunpack.c.h.b16 %v5541
        %v5910 = vunpack.c.l.b16 %v5542
        %v5911 = vunpack.c.h.b16 %v5542
        %v5912 = vunpack.c.l.b16 %v5543
        %v5913 = vunpack.c.h.b16 %v5543
        %v5914 = vunpack.c.l.b16 %v5544
        %v5915 = vunpack.c.h.b16 %v5544
        %v5916 = vunpack.c.l.b16 %v5545
        %v5917 = vunpack.c.h.b16 %v5545
        %v5918 = vunpack.c.l.b16 %v5546
        %v5919 = vunpack.c.h.b16 %v5546
        %v5920 = vunpack.c.l.b16 %v5547
        %v5921 = vunpack.c.h.b16 %v5547
        %v5922 = vunpack.c.l.b16 %v5548
        %v5923 = vunpack.c.h.b16 %v5548
        %v5924 = vunpack.c.l.b16 %v5549
        %v5925 = vunpack.c.h.b16 %v5549
        %v5926 = vunpack.c.l.b16 %v5550
        %v5927 = vunpack.c.h.b16 %v5550
        %v5928 = vunpack.c.l.b16 %v5551
        %v5929 = vunpack.c.h.b16 %v5551
        %v5930 = vunpack.c.l.b16 %v5552
        %v5931 = vunpack.c.h.b16 %v5552
        %v5932 = vunpack.c.l.b16 %v5553
        %v5933 = vunpack.c.h.b16 %v5553
        %v5934 = vunpack.c.l.b16 %v5554
        %v5935 = vunpack.c.h.b16 %v5554
        %v5936 = vunpack.c.l.b16 %v5555
        %v5937 = vunpack.c.h.b16 %v5555
        %v5938 = vunpack.c.l.b16 %v5556
        %v5939 = vunpack.c.h.b16 %v5556
        %v5940 = vunpack.c.l.b16 %v5557
        %v5941 = vunpack.c.h.b16 %v5557
        %v5942 = vunpack.c.l.b16 %v5558
        %v5943 = vunpack.c.h.b16 %v5558
        %v5944 = vunpack.c.l.b16 %v5559
        %v5945 = vunpack.c.h.b16 %v5559
        %v5946 = vunpack.c.l.b16 %v5560
        %v5947 = vunpack.c.h.b16 %v5560
        %v5948 = vunpack.c.l.b16 %v5561
        %v5949 = vunpack.c.h.b16 %v5561
        %v5950 = vunpack.c.l.b16 %v5562
        %v5951 = vunpack.c.h.b16 %v5562
        %v5952 = vunpack.c.l.b16 %v5563
        %v5953 = vunpack.c.h.b16 %v5563
        %v5954 = vunpack.c.l.b16 %v5564
        %v5955 = vunpack.c.h.b16 %v5564
        %v5956 = vunpack.c.l.b16 %v5565
        %v5957 = vunpack.c.h.b16 %v5565
        %v5958 = vunpack.c.l.b16 %v5566
        %v5959 = vunpack.c.h.b16 %v5566
        %v5960 = vunpack.c.l.b16 %v5567
        %v5961 = vunpack.c.h.b16 %v5567
        %v5962 = vunpack.c.l.b16 %v5568
        %v5963 = vunpack.c.h.b16 %v5568
        %v5964 = vunpack.c.l.b16 %v5569
        %v5965 = vunpack.c.h.b16 %v5569
        %v5966 = vunpack.c.l.b16 %v5570
        %v5967 = vunpack.c.h.b16 %v5570
        %v5968 = vunpack.c.l.b16 %v5571
        %v5969 = vunpack.c.h.b16 %v5571
        %v5970 = vunpack.c.l.b16 %v5572
        %v5971 = vunpack.c.h.b16 %v5572
        %v5972 = vunpack.c.l.b16 %v5573
        %v5973 = vunpack.c.h.b16 %v5573
        %v5974 = vunpack.c.l.b16 %v5574
        %v5975 = vunpack.c.h.b16 %v5574
        %v5976 = vunpack.c.l.b16 %v5575
        %v5977 = vunpack.c.h.b16 %v5575
        %v5978 = vunpack.c.l.b16 %v5576
        %v5979 = vunpack.c.h.b16 %v5576
        %v5980 = vunpack.c.l.b16 %v5577
        %v5981 = vunpack.c.h.b16 %v5577
        %v5982 = vunpack.c.l.b16 %v5578
        %v5983 = vunpack.c.h.b16 %v5578
        %v5984 = vunpack.c.l.b16 %v5579
        %v5985 = vunpack.c.h.b16 %v5579
        %v5986 = vunpack.c.l.b16 %v5580
        %v5987 = vunpack.c.h.b16 %v5580
        %v5988 = vunpack.c.l.b16 %v5581
        %v5989 = vunpack.c.h.b16 %v5581
        %v5990 = vunpack.c.l.b16 %v5582
        %v5991 = vunpack.c.h.b16 %v5582
        %v5992 = vunpack.c.l.b16 %v5583
        %v5993 = vunpack.c.h.b16 %v5583
        %v5994 = vunpack.c.l.b16 %v5584
        %v5995 = vunpack.c.h.b16 %v5584
        %v5996 = vunpack.c.l.b16 %v5585
        %v5997 = vunpack.c.h.b16 %v5585
        %v5998 = vunpack.c.l.b16 %v5586
        %v5999 = vunpack.c.h.b16 %v5586
        %v6000 = vunpack.c.l.b16 %v5587
        %v6001 = vunpack.c.h.b16 %v5587
        %v6002 = vunpack.c.l.b16 %v5588
        %v6003 = vunpack.c.h.b16 %v5588
        %v6004 = vunpack.c.l.b16 %v5589
        %v6005 = vunpack.c.h.b16 %v5589
        %v6006 = vunpack.c.l.b16 %v5590
        %v6007 = vunpack.c.h.b16 %v5590
        %v6008 = vunpack.c.l.b16 %v5591
        %v6009 = vunpack.c.h.b16 %v5591
        %v6010 = vunpack.c.l.b16 %v5592
        %v6011 = vunpack.c.h.b16 %v5592
        %v6012 = vunpack.c.l.b16 %v5593
        %v6013 = vunpack.c.h.b16 %v5593
        %v6014 = vunpack.c.l.b16 %v5594
        %v6015 = vunpack.c.h.b16 %v5594
        %v6016 = vunpack.c.l.b16 %v5595
        %v6017 = vunpack.c.h.b16 %v5595
        %v6018 = vunpack.c.l.b16 %v5596
        %v6019 = vunpack.c.h.b16 %v5596
        %v6020 = vunpack.c.l.b16 %v5597
        %v6021 = vunpack.c.h.b16 %v5597
        %v6022 = vunpack.c.l.b16 %v5598
        %v6023 = vunpack.c.h.b16 %v5598
        %v6024 = vunpack.c.l.b16 %v5599
        %v6025 = vunpack.c.h.b16 %v5599
        %v6026 = vpack.c.b16 %v5778, %v5770
        %v6027 = vpack.c.b16 %v5779, %v5771
        %v6028 = vpack.c.b16 %v5780, %v5772
        %v6029 = vpack.c.b16 %v5781, %v5773
        %v6030 = vpack.c.b16 %v5782, %v5774
        %v6031 = vpack.c.b16 %v5783, %v5775
        %v6032 = vpack.c.b16 %v5784, %v5776
        %v6033 = vpack.c.b16 %v5785, %v5777
        %v6034 = vpack.c.b16 %v5794, %v5786
        %v6035 = vpack.c.b16 %v5795, %v5787
        %v6036 = vpack.c.b16 %v5796, %v5788
        %v6037 = vpack.c.b16 %v5797, %v5789
        %v6038 = vpack.c.b16 %v5798, %v5790
        %v6039 = vpack.c.b16 %v5799, %v5791
        %v6040 = vpack.c.b16 %v5800, %v5792
        %v6041 = vpack.c.b16 %v5801, %v5793
        %v6042 = vpack.c.b16 %v5810, %v5802
        %v6043 = vpack.c.b16 %v5811, %v5803
        %v6044 = vpack.c.b16 %v5812, %v5804
        %v6045 = vpack.c.b16 %v5813, %v5805
        %v6046 = vpack.c.b16 %v5814, %v5806
        %v6047 = vpack.c.b16 %v5815, %v5807
        %v6048 = vpack.c.b16 %v5816, %v5808
        %v6049 = vpack.c.b16 %v5817, %v5809
        %v6050 = vpack.c.b16 %v5826, %v5818
        %v6051 = vpack.c.b16 %v5827, %v5819
        %v6052 = vpack.c.b16 %v5828, %v5820
        %v6053 = vpack.c.b16 %v5829, %v5821
        %v6054 = vpack.c.b16 %v5830, %v5822
        %v6055 = vpack.c.b16 %v5831, %v5823
        %v6056 = vpack.c.b16 %v5832, %v5824
        %v6057 = vpack.c.b16 %v5833, %v5825
        %v6058 = vpack.c.b16 %v5842, %v5834
        %v6059 = vpack.c.b16 %v5843, %v5835
        %v6060 = vpack.c.b16 %v5844, %v5836
        %v6061 = vpack.c.b16 %v5845, %v5837
        %v6062 = vpack.c.b16 %v5846, %v5838
        %v6063 = vpack.c.b16 %v5847, %v5839
        %v6064 = vpack.c.b16 %v5848, %v5840
        %v6065 = vpack.c.b16 %v5849, %v5841
        %v6066 = vpack.c.b16 %v5858, %v5850
        %v6067 = vpack.c.b16 %v5859, %v5851
        %v6068 = vpack.c.b16 %v5860, %v5852
        %v6069 = vpack.c.b16 %v5861, %v5853
        %v6070 = vpack.c.b16 %v5862, %v5854
        %v6071 = vpack.c.b16 %v5863, %v5855
        %v6072 = vpack.c.b16 %v5864, %v5856
        %v6073 = vpack.c.b16 %v5865, %v5857
        %v6074 = vpack.c.b16 %v5874, %v5866
        %v6075 = vpack.c.b16 %v5875, %v5867
        %v6076 = vpack.c.b16 %v5876, %v5868
        %v6077 = vpack.c.b16 %v5877, %v5869
        %v6078 = vpack.c.b16 %v5878, %v5870
        %v6079 = vpack.c.b16 %v5879, %v5871
        %v6080 = vpack.c.b16 %v5880, %v5872
        %v6081 = vpack.c.b16 %v5881, %v5873
        %v6082 = vpack.c.b16 %v5890, %v5882
        %v6083 = vpack.c.b16 %v5891, %v5883
        %v6084 = vpack.c.b16 %v5892, %v5884
        %v6085 = vpack.c.b16 %v5893, %v5885
        %v6086 = vpack.c.b16 %v5894, %v5886
        %v6087 = vpack.c.b16 %v5895, %v5887
        %v6088 = vpack.c.b16 %v5896, %v5888
        %v6089 = vpack.c.b16 %v5897, %v5889
        %v6090 = vpack.c.b16 %v5906, %v5898
        %v6091 = vpack.c.b16 %v5907, %v5899
        %v6092 = vpack.c.b16 %v5908, %v5900
        %v6093 = vpack.c.b16 %v5909, %v5901
        %v6094 = vpack.c.b16 %v5910, %v5902
        %v6095 = vpack.c.b16 %v5911, %v5903
        %v6096 = vpack.c.b16 %v5912, %v5904
        %v6097 = vpack.c.b16 %v5913, %v5905
        %v6098 = vpack.c.b16 %v5922, %v5914
        %v6099 = vpack.c.b16 %v5923, %v5915
        %v6100 = vpack.c.b16 %v5924, %v5916
        %v6101 = vpack.c.b16 %v5925, %v5917
        %v6102 = vpack.c.b16 %v5926, %v5918
        %v6103 = vpack.c.b16 %v5927, %v5919
        %v6104 = vpack.c.b16 %v5928, %v5920
        %v6105 = vpack.c.b16 %v5929, %v5921
        %v6106 = vpack.c.b16 %v5938, %v5930
        %v6107 = vpack.c.b16 %v5939, %v5931
        %v6108 = vpack.c.b16 %v5940, %v5932
        %v6109 = vpack.c.b16 %v5941, %v5933
        %v6110 = vpack.c.b16 %v5942, %v5934
        %v6111 = vpack.c.b16 %v5943, %v5935
        %v6112 = vpack.c.b16 %v5944, %v5936
        %v6113 = vpack.c.b16 %v5945, %v5937
        %v6114 = vpack.c.b16 %v5954, %v5946
        %v6115 = vpack.c.b16 %v5955, %v5947
        %v6116 = vpack.c.b16 %v5956, %v5948
        %v6117 = vpack.c.b16 %v5957, %v5949
        %v6118 = vpack.c.b16 %v5958, %v5950
        %v6119 = vpack.c.b16 %v5959, %v5951
        %v6120 = vpack.c.b16 %v5960, %v5952
        %v6121 = vpack.c.b16 %v5961, %v5953
        %v6122 = vpack.c.b16 %v5970, %v5962
        %v6123 = vpack.c.b16 %v5971, %v5963
        %v6124 = vpack.c.b16 %v5972, %v5964
        %v6125 = vpack.c.b16 %v5973, %v5965
        %v6126 = vpack.c.b16 %v5974, %v5966
        %v6127 = vpack.c.b16 %v5975, %v5967
        %v6128 = vpack.c.b16 %v5976, %v5968
        %v6129 = vpack.c.b16 %v5977, %v5969
        %v6130 = vpack.c.b16 %v5986, %v5978
        %v6131 = vpack.c.b16 %v5987, %v5979
        %v6132 = vpack.c.b16 %v5988, %v5980
        %v6133 = vpack.c.b16 %v5989, %v5981
        %v6134 = vpack.c.b16 %v5990, %v5982
        %v6135 = vpack.c.b16 %v5991, %v5983
        %v6136 = vpack.c.b16 %v5992, %v5984
        %v6137 = vpack.c.b16 %v5993, %v5985
        %v6138 = vpack.c.b16 %v6002, %v5994
        %v6139 = vpack.c.b16 %v6003, %v5995
        %v6140 = vpack.c.b16 %v6004, %v5996
        %v6141 = vpack.c.b16 %v6005, %v5997
        %v6142 = vpack.c.b16 %v6006, %v5998
        %v6143 = vpack.c.b16 %v6007, %v5999
        %v6144 = vpack.c.b16 %v6008, %v6000
        %v6145 = vpack.c.b16 %v6009, %v6001
        %v6146 = vpack.c.b16 %v6018, %v6010
        %v6147 = vpack.c.b16 %v6019, %v6011
        %v6148 = vpack.c.b16 %v6020, %v6012
        %v6149 = vpack.c.b16 %v6021, %v6013
        %v6150 = vpack.c.b16 %v6022, %v6014
        %v6151 = vpack.c.b16 %v6023, %v6015
        %v6152 = vpack.c.b16 %v6024, %v6016
        %v6153 = vpack.c.b16 %v6025, %v6017
        %6282 = vmatprep.subr.bf16.mxu0 %v6027
        %6283 = vmatpush1.bf16.msra.mxu0 %v6026
        %6284 = vmatprep.subr.bf16.mxu0 %v6035
        %6285 = vmatpush1.bf16.msra.mxu0 %v6034
        %6286 = vmatprep.subr.bf16.mxu0 %v6043
        %6287 = vmatpush1.bf16.msra.mxu0 %v6042
        %6288 = vmatprep.subr.bf16.mxu0 %v6051
        %6289 = vmatpush1.bf16.msra.mxu0 %v6050
        %6290 = vmatprep.subr.bf16.mxu0 %v6059
        %6291 = vmatpush1.bf16.msra.mxu0 %v6058
        %6292 = vmatprep.subr.bf16.mxu0 %v6067
        %6293 = vmatpush1.bf16.msra.mxu0 %v6066
        %6294 = vmatprep.subr.bf16.mxu0 %v6075
        %6295 = vmatpush1.bf16.msra.mxu0 %v6074
        %6296 = vmatprep.subr.bf16.mxu0 %v6083
        %6297 = vmatpush1.bf16.msra.mxu0 %v6082
        %6298 = vmatprep.subr.bf16.mxu0 %v6091
        %6299 = vmatpush1.bf16.msra.mxu0 %v6090
        %6300 = vmatprep.subr.bf16.mxu0 %v6099
        %6301 = vmatpush1.bf16.msra.mxu0 %v6098
        %6302 = vmatprep.subr.bf16.mxu0 %v6107
        %6303 = vmatpush1.bf16.msra.mxu0 %v6106
        %6304 = vmatprep.subr.bf16.mxu0 %v6115
        %6305 = vmatpush1.bf16.msra.mxu0 %v6114
        %6306 = vmatprep.subr.bf16.mxu0 %v6123
        %6307 = vmatpush1.bf16.msra.mxu0 %v6122
        %6308 = vmatprep.subr.bf16.mxu0 %v6131
        %6309 = vmatpush1.bf16.msra.mxu0 %v6130
        %6310 = vmatprep.subr.bf16.mxu0 %v6139
        %6311 = vmatpush1.bf16.msra.mxu0 %v6138
        %6312 = vmatprep.subr.bf16.mxu0 %v6147
        %6313 = vmatpush1.bf16.msra.mxu0 %v6146
        %6314 = vmatprep.mubr.bf16.mxu0 %v5471
        %6315 = vmatmul.mubr.bf16.gmra.mrb[0].mxu0 %v5470
        %v6316 = vpop.f32.mrb[0].mxu0
        %v6317 = vadd.f32 %v5605, %v6316
        %v6318 = vpop.f32.mrb[0].mxu0
        %v6319 = vadd.f32 %v5609, %v6318
        %v6320 = vpop.f32.mrb[0].mxu0
        %v6321 = vpop.f32.mrb[0].mxu0
        %6322 = vdwg.mxu0
        %6323 = vmatprep.subr.bf16.mxu0 %v6029
        %6324 = vmatpush1.bf16.msra.mxu0 %v6028
        %6325 = vmatprep.subr.bf16.mxu0 %v6037
        %6326 = vmatpush1.bf16.msra.mxu0 %v6036
        %6327 = vmatprep.subr.bf16.mxu0 %v6045
        %6328 = vmatpush1.bf16.msra.mxu0 %v6044
        %6329 = vmatprep.subr.bf16.mxu0 %v6053
        %6330 = vmatpush1.bf16.msra.mxu0 %v6052
        %6331 = vmatprep.subr.bf16.mxu0 %v6061
        %6332 = vmatpush1.bf16.msra.mxu0 %v6060
        %6333 = vmatprep.subr.bf16.mxu0 %v6069
        %6334 = vmatpush1.bf16.msra.mxu0 %v6068
        %6335 = vmatprep.subr.bf16.mxu0 %v6077
        %6336 = vmatpush1.bf16.msra.mxu0 %v6076
        %6337 = vmatprep.subr.bf16.mxu0 %v6085
        %6338 = vmatpush1.bf16.msra.mxu0 %v6084
        %6339 = vmatprep.subr.bf16.mxu0 %v6093
        %6340 = vmatpush1.bf16.msra.mxu0 %v6092
        %6341 = vmatprep.subr.bf16.mxu0 %v6101
        %6342 = vmatpush1.bf16.msra.mxu0 %v6100
        %6343 = vmatprep.subr.bf16.mxu0 %v6109
        %6344 = vmatpush1.bf16.msra.mxu0 %v6108
        %6345 = vmatprep.subr.bf16.mxu0 %v6117
        %6346 = vmatpush1.bf16.msra.mxu0 %v6116
        %6347 = vmatprep.subr.bf16.mxu0 %v6125
        %6348 = vmatpush1.bf16.msra.mxu0 %v6124
        %6349 = vmatprep.subr.bf16.mxu0 %v6133
        %6350 = vmatpush1.bf16.msra.mxu0 %v6132
        %6351 = vmatprep.subr.bf16.mxu0 %v6141
        %6352 = vmatpush1.bf16.msra.mxu0 %v6140
        %6353 = vmatprep.subr.bf16.mxu0 %v6149
        %6354 = vmatpush1.bf16.msra.mxu0 %v6148
        %6355 = vmatprep.mubr.bf16.mxu0 %v5471
        %6356 = vmatmul.mubr.bf16.gmra.mrb[0].mxu0 %v5470
        %v6357 = vpop.f32.mrb[0].mxu0
        %v6358 = vadd.f32 %v5613, %v6357
        %v6359 = vpop.f32.mrb[0].mxu0
        %v6360 = vadd.f32 %v5617, %v6359
        %v6361 = vpop.f32.mrb[0].mxu0
        %v6362 = vpop.f32.mrb[0].mxu0
        %6363 = vdwg.mxu0
        %6364 = vmatprep.subr.bf16.mxu0 %v6031
        %6365 = vmatpush1.bf16.msra.mxu0 %v6030
        %6366 = vmatprep.subr.bf16.mxu0 %v6039
        %6367 = vmatpush1.bf16.msra.mxu0 %v6038
        %6368 = vmatprep.subr.bf16.mxu0 %v6047
        %6369 = vmatpush1.bf16.msra.mxu0 %v6046
        %6370 = vmatprep.subr.bf16.mxu0 %v6055
        %6371 = vmatpush1.bf16.msra.mxu0 %v6054
        %6372 = vmatprep.subr.bf16.mxu0 %v6063
        %6373 = vmatpush1.bf16.msra.mxu0 %v6062
        %6374 = vmatprep.subr.bf16.mxu0 %v6071
        %6375 = vmatpush1.bf16.msra.mxu0 %v6070
        %6376 = vmatprep.subr.bf16.mxu0 %v6079
        %6377 = vmatpush1.bf16.msra.mxu0 %v6078
        %6378 = vmatprep.subr.bf16.mxu0 %v6087
        %6379 = vmatpush1.bf16.msra.mxu0 %v6086
        %6380 = vmatprep.subr.bf16.mxu0 %v6095
        %6381 = vmatpush1.bf16.msra.mxu0 %v6094
        %6382 = vmatprep.subr.bf16.mxu0 %v6103
        %6383 = vmatpush1.bf16.msra.mxu0 %v6102
        %6384 = vmatprep.subr.bf16.mxu0 %v6111
        %6385 = vmatpush1.bf16.msra.mxu0 %v6110
        %6386 = vmatprep.subr.bf16.mxu0 %v6119
        %6387 = vmatpush1.bf16.msra.mxu0 %v6118
        %6388 = vmatprep.subr.bf16.mxu0 %v6127
        %6389 = vmatpush1.bf16.msra.mxu0 %v6126
        %6390 = vmatprep.subr.bf16.mxu0 %v6135
        %6391 = vmatpush1.bf16.msra.mxu0 %v6134
        %6392 = vmatprep.subr.bf16.mxu0 %v6143
        %6393 = vmatpush1.bf16.msra.mxu0 %v6142
        %6394 = vmatprep.subr.bf16.mxu0 %v6151
        %6395 = vmatpush1.bf16.msra.mxu0 %v6150
        %6396 = vmatprep.mubr.bf16.mxu0 %v5471
        %6397 = vmatmul.mubr.bf16.gmra.mrb[0].mxu0 %v5470
        %v6398 = vpop.f32.mrb[0].mxu0
        %v6399 = vadd.f32 %v5621, %v6398
        %v6400 = vpop.f32.mrb[0].mxu0
        %v6401 = vadd.f32 %v5625, %v6400
        %v6402 = vpop.f32.mrb[0].mxu0
        %v6403 = vpop.f32.mrb[0].mxu0
        %6404 = vdwg.mxu0
        %6405 = vmatprep.subr.bf16.mxu0 %v6033
        %6406 = vmatpush1.bf16.msra.mxu0 %v6032
        %6407 = vmatprep.subr.bf16.mxu0 %v6041
        %6408 = vmatpush1.bf16.msra.mxu0 %v6040
        %6409 = vmatprep.subr.bf16.mxu0 %v6049
        %6410 = vmatpush1.bf16.msra.mxu0 %v6048
        %6411 = vmatprep.subr.bf16.mxu0 %v6057
        %6412 = vmatpush1.bf16.msra.mxu0 %v6056
        %6413 = vmatprep.subr.bf16.mxu0 %v6065
        %6414 = vmatpush1.bf16.msra.mxu0 %v6064
        %6415 = vmatprep.subr.bf16.mxu0 %v6073
        %6416 = vmatpush1.bf16.msra.mxu0 %v6072
        %6417 = vmatprep.subr.bf16.mxu0 %v6081
        %6418 = vmatpush1.bf16.msra.mxu0 %v6080
        %6419 = vmatprep.subr.bf16.mxu0 %v6089
        %6420 = vmatpush1.bf16.msra.mxu0 %v6088
        %6421 = vmatprep.subr.bf16.mxu0 %v6097
        %6422 = vmatpush1.bf16.msra.mxu0 %v6096
        %6423 = vmatprep.subr.bf16.mxu0 %v6105
        %6424 = vmatpush1.bf16.msra.mxu0 %v6104
        %6425 = vmatprep.subr.bf16.mxu0 %v6113
        %6426 = vmatpush1.bf16.msra.mxu0 %v6112
        %6427 = vmatprep.subr.bf16.mxu0 %v6121
        %6428 = vmatpush1.bf16.msra.mxu0 %v6120
        %6429 = vmatprep.subr.bf16.mxu0 %v6129
        %6430 = vmatpush1.bf16.msra.mxu0 %v6128
        %6431 = vmatprep.subr.bf16.mxu0 %v6137
        %6432 = vmatpush1.bf16.msra.mxu0 %v6136
        %6433 = vmatprep.subr.bf16.mxu0 %v6145
        %6434 = vmatpush1.bf16.msra.mxu0 %v6144
        %6435 = vmatprep.subr.bf16.mxu0 %v6153
        %6436 = vmatpush1.bf16.msra.mxu0 %v6152
        %6437 = vmatprep.mubr.bf16.mxu0 %v5471
        %6438 = vmatmul.mubr.bf16.gmra.mrb[0].mxu0 %v5470
        %v6439 = vpop.f32.mrb[0].mxu0
        %v6440 = vadd.f32 %v5629, %v6439
        %v6441 = vpop.f32.mrb[0].mxu0
        %v6442 = vadd.f32 %v5633, %v6441
        %v6443 = vpop.f32.mrb[0].mxu0
        %v6444 = vpop.f32.mrb[0].mxu0
        %6445 = vdwg.mxu0
        %v6446 = vmul.f32 %v6317, 0.5
        %v6447 = vmul.f32 %v6319, 0.5
        %v6448 = vmul.f32 %v6358, 0.5
        %v6449 = vmul.f32 %v6360, 0.5
        %v6450 = vmul.f32 %v6399, 0.5
        %v6451 = vmul.f32 %v6401, 0.5
        %v6452 = vmul.f32 %v6440, 0.5
        %v6453 = vmul.f32 %v6442, 0.5
        %v6454 = vmul.f32 %v6317, 0.044715
        %v6455 = vmul.f32 %v6319, 0.044715
        %v6456 = vmul.f32 %v6358, 0.044715
        %v6457 = vmul.f32 %v6360, 0.044715
        %v6458 = vmul.f32 %v6399, 0.044715
        %v6459 = vmul.f32 %v6401, 0.044715
        %v6460 = vmul.f32 %v6440, 0.044715
        %v6461 = vmul.f32 %v6442, 0.044715
        %v6462 = vmul.f32 %v6454, %v6317
        %v6463 = vmul.f32 %v6455, %v6319
        %v6464 = vmul.f32 %v6456, %v6358
        %v6465 = vmul.f32 %v6457, %v6360
        %v6466 = vmul.f32 %v6458, %v6399
        %v6467 = vmul.f32 %v6459, %v6401
        %v6468 = vmul.f32 %v6460, %v6440
        %v6469 = vmul.f32 %v6461, %v6442
        %v6470 = vmul.f32 %v6462, %v6317
        %v6471 = vmul.f32 %v6463, %v6319
        %v6472 = vmul.f32 %v6464, %v6358
        %v6473 = vmul.f32 %v6465, %v6360
        %v6474 = vmul.f32 %v6466, %v6399
        %v6475 = vmul.f32 %v6467, %v6401
        %v6476 = vmul.f32 %v6468, %v6440
        %v6477 = vmul.f32 %v6469, %v6442
        %v6478 = vadd.f32 %v6317, %v6470
        %v6479 = vadd.f32 %v6319, %v6471
        %v6480 = vadd.f32 %v6358, %v6472
        %v6481 = vadd.f32 %v6360, %v6473
        %v6482 = vadd.f32 %v6399, %v6474
        %v6483 = vadd.f32 %v6401, %v6475
        %v6484 = vadd.f32 %v6440, %v6476
        %v6485 = vadd.f32 %v6442, %v6477
        %v6486 = vmul.f32 %v6478, 0.7978846
        %v6487 = vmul.f32 %v6479, 0.7978846
        %v6488 = vmul.f32 %v6480, 0.7978846
        %v6489 = vmul.f32 %v6481, 0.7978846
        %v6490 = vmul.f32 %v6482, 0.7978846
        %v6491 = vmul.f32 %v6483, 0.7978846
        %v6492 = vmul.f32 %v6484, 0.7978846
        %v6493 = vmul.f32 %v6485, 0.7978846
        %v6494 = vtanh.pop %v6486
        %v6495 = vtanh.pop %v6487
        %v6496 = vtanh.pop %v6488
        %v6497 = vtanh.pop %v6489
        %v6498 = vtanh.pop %v6490
        %v6499 = vtanh.pop %v6491
        %v6500 = vtanh.pop %v6492
        %v6501 = vtanh.pop %v6493
        %v6502 = vadd.f32 %v6494, 1.0
        %v6503 = vadd.f32 %v6495, 1.0
        %v6504 = vadd.f32 %v6496, 1.0
        %v6505 = vadd.f32 %v6497, 1.0
        %v6506 = vadd.f32 %v6498, 1.0
        %v6507 = vadd.f32 %v6499, 1.0
        %v6508 = vadd.f32 %v6500, 1.0
        %v6509 = vadd.f32 %v6501, 1.0
        %v6510 = vmul.f32 %v6446, %v6502
        %v6511 = vmul.f32 %v6447, %v6503
        %v6512 = vmul.f32 %v6448, %v6504
        %v6513 = vmul.f32 %v6449, %v6505
        %v6514 = vmul.f32 %v6450, %v6506
        %v6515 = vmul.f32 %v6451, %v6507
        %v6516 = vmul.f32 %v6452, %v6508
        %v6517 = vmul.f32 %v6453, %v6509
        %v6518 = vpack.c.bf16 %v6510, %v6510
        %v6519 = vpack.c.bf16 %v6511, %v6511
        %v6520 = vpack.c.bf16 %v6512, %v6512
        %v6521 = vpack.c.bf16 %v6513, %v6513
        %v6522 = vpack.c.bf16 %v6514, %v6514
        %v6523 = vpack.c.bf16 %v6515, %v6515
        %v6524 = vpack.c.bf16 %v6516, %v6516
        %v6525 = vpack.c.bf16 %v6517, %v6517
        %v6526 = vld [vmem:[%s1281] sm:$0xff]
        %v6527 = vld [vmem:[%s1281 + $0x8] sm:$0xff]
        %v6528 = vld [vmem:[%s1281 + $0x10] sm:$0xff]
        %v6529 = vld [vmem:[%s1281 + $0x18] sm:$0xff]
        %v6530 = vld [vmem:[%s1281 + $0x20] sm:$0xff]
        %v6531 = vld [vmem:[%s1281 + $0x28] sm:$0xff]
        %v6532 = vld [vmem:[%s1281 + $0x30] sm:$0xff]
        %v6533 = vld [vmem:[%s1281 + $0x38] sm:$0xff]
        %v6534 = vld [vmem:[%s1281 + $0x40] sm:$0xff]
        %v6535 = vld [vmem:[%s1281 + $0x48] sm:$0xff]
        %v6536 = vld [vmem:[%s1281 + $0x50] sm:$0xff]
        %v6537 = vld [vmem:[%s1281 + $0x58] sm:$0xff]
        %v6538 = vld [vmem:[%s1281 + $0x60] sm:$0xff]
        %v6539 = vld [vmem:[%s1281 + $0x68] sm:$0xff]
        %v6540 = vld [vmem:[%s1281 + $0x70] sm:$0xff]
        %v6541 = vld [vmem:[%s1281 + $0x78] sm:$0xff]
        %v6542 = vld [vmem:[%s1281 + $0x80] sm:$0xff]
        %v6543 = vld [vmem:[%s1281 + $0x88] sm:$0xff]
        %v6544 = vld [vmem:[%s1281 + $0x90] sm:$0xff]
        %v6545 = vld [vmem:[%s1281 + $0x98] sm:$0xff]
        %v6546 = vld [vmem:[%s1281 + $0xa0] sm:$0xff]
        %v6547 = vld [vmem:[%s1281 + $0xa8] sm:$0xff]
        %v6548 = vld [vmem:[%s1281 + $0xb0] sm:$0xff]
        %v6549 = vld [vmem:[%s1281 + $0xb8] sm:$0xff]
        %v6550 = vld [vmem:[%s1281 + $0xc0] sm:$0xff]
        %v6551 = vld [vmem:[%s1281 + $0xc8] sm:$0xff]
        %v6552 = vld [vmem:[%s1281 + $0xd0] sm:$0xff]
        %v6553 = vld [vmem:[%s1281 + $0xd8] sm:$0xff]
        %v6554 = vld [vmem:[%s1281 + $0xe0] sm:$0xff]
        %v6555 = vld [vmem:[%s1281 + $0xe8] sm:$0xff]
        %v6556 = vld [vmem:[%s1281 + $0xf0] sm:$0xff]
        %v6557 = vld [vmem:[%s1281 + $0xf8] sm:$0xff]
        %v6558 = vld [vmem:[%s1281 + $0x100] sm:$0xff]
        %v6559 = vld [vmem:[%s1281 + $0x108] sm:$0xff]
        %v6560 = vld [vmem:[%s1281 + $0x110] sm:$0xff]
        %v6561 = vld [vmem:[%s1281 + $0x118] sm:$0xff]
        %v6562 = vld [vmem:[%s1281 + $0x120] sm:$0xff]
        %v6563 = vld [vmem:[%s1281 + $0x128] sm:$0xff]
        %v6564 = vld [vmem:[%s1281 + $0x130] sm:$0xff]
        %v6565 = vld [vmem:[%s1281 + $0x138] sm:$0xff]
        %v6566 = vld [vmem:[%s1281 + $0x140] sm:$0xff]
        %v6567 = vld [vmem:[%s1281 + $0x148] sm:$0xff]
        %v6568 = vld [vmem:[%s1281 + $0x150] sm:$0xff]
        %v6569 = vld [vmem:[%s1281 + $0x158] sm:$0xff]
        %v6570 = vld [vmem:[%s1281 + $0x160] sm:$0xff]
        %v6571 = vld [vmem:[%s1281 + $0x168] sm:$0xff]
        %v6572 = vld [vmem:[%s1281 + $0x170] sm:$0xff]
        %v6573 = vld [vmem:[%s1281 + $0x178] sm:$0xff]
        %v6574 = vld [vmem:[%s1281 + $0x180] sm:$0xff]
        %v6575 = vld [vmem:[%s1281 + $0x188] sm:$0xff]
        %v6576 = vld [vmem:[%s1281 + $0x190] sm:$0xff]
        %v6577 = vld [vmem:[%s1281 + $0x198] sm:$0xff]
        %v6578 = vld [vmem:[%s1281 + $0x1a0] sm:$0xff]
        %v6579 = vld [vmem:[%s1281 + $0x1a8] sm:$0xff]
        %v6580 = vld [vmem:[%s1281 + $0x1b0] sm:$0xff]
        %v6581 = vld [vmem:[%s1281 + $0x1b8] sm:$0xff]
        %v6582 = vld [vmem:[%s1281 + $0x1c0] sm:$0xff]
        %v6583 = vld [vmem:[%s1281 + $0x1c8] sm:$0xff]
        %v6584 = vld [vmem:[%s1281 + $0x1d0] sm:$0xff]
        %v6585 = vld [vmem:[%s1281 + $0x1d8] sm:$0xff]
        %v6586 = vld [vmem:[%s1281 + $0x1e0] sm:$0xff]
        %v6587 = vld [vmem:[%s1281 + $0x1e8] sm:$0xff]
        %v6588 = vld [vmem:[%s1281 + $0x1f0] sm:$0xff]
        %v6589 = vld [vmem:[%s1281 + $0x1f8] sm:$0xff]
        %v6590 = vld [vmem:[%s1281 + $0x200] sm:$0xff]
        %v6591 = vld [vmem:[%s1281 + $0x208] sm:$0xff]
        %v6592 = vld [vmem:[%s1281 + $0x210] sm:$0xff]
        %v6593 = vld [vmem:[%s1281 + $0x218] sm:$0xff]
        %v6594 = vld [vmem:[%s1281 + $0x220] sm:$0xff]
        %v6595 = vld [vmem:[%s1281 + $0x228] sm:$0xff]
        %v6596 = vld [vmem:[%s1281 + $0x230] sm:$0xff]
        %v6597 = vld [vmem:[%s1281 + $0x238] sm:$0xff]
        %v6598 = vld [vmem:[%s1281 + $0x240] sm:$0xff]
        %v6599 = vld [vmem:[%s1281 + $0x248] sm:$0xff]
        %v6600 = vld [vmem:[%s1281 + $0x250] sm:$0xff]
        %v6601 = vld [vmem:[%s1281 + $0x258] sm:$0xff]
        %v6602 = vld [vmem:[%s1281 + $0x260] sm:$0xff]
        %v6603 = vld [vmem:[%s1281 + $0x268] sm:$0xff]
        %v6604 = vld [vmem:[%s1281 + $0x270] sm:$0xff]
        %v6605 = vld [vmem:[%s1281 + $0x278] sm:$0xff]
        %v6606 = vld [vmem:[%s1281 + $0x280] sm:$0xff]
        %v6607 = vld [vmem:[%s1281 + $0x288] sm:$0xff]
        %v6608 = vld [vmem:[%s1281 + $0x290] sm:$0xff]
        %v6609 = vld [vmem:[%s1281 + $0x298] sm:$0xff]
        %v6610 = vld [vmem:[%s1281 + $0x2a0] sm:$0xff]
        %v6611 = vld [vmem:[%s1281 + $0x2a8] sm:$0xff]
        %v6612 = vld [vmem:[%s1281 + $0x2b0] sm:$0xff]
        %v6613 = vld [vmem:[%s1281 + $0x2b8] sm:$0xff]
        %v6614 = vld [vmem:[%s1281 + $0x2c0] sm:$0xff]
        %v6615 = vld [vmem:[%s1281 + $0x2c8] sm:$0xff]
        %v6616 = vld [vmem:[%s1281 + $0x2d0] sm:$0xff]
        %v6617 = vld [vmem:[%s1281 + $0x2d8] sm:$0xff]
        %v6618 = vld [vmem:[%s1281 + $0x2e0] sm:$0xff]
        %v6619 = vld [vmem:[%s1281 + $0x2e8] sm:$0xff]
        %v6620 = vld [vmem:[%s1281 + $0x2f0] sm:$0xff]
        %v6621 = vld [vmem:[%s1281 + $0x2f8] sm:$0xff]
        %v6622 = vld [vmem:[%s1281 + $0x300] sm:$0xff]
        %v6623 = vld [vmem:[%s1281 + $0x308] sm:$0xff]
        %v6624 = vld [vmem:[%s1281 + $0x310] sm:$0xff]
        %v6625 = vld [vmem:[%s1281 + $0x318] sm:$0xff]
        %v6626 = vld [vmem:[%s1281 + $0x320] sm:$0xff]
        %v6627 = vld [vmem:[%s1281 + $0x328] sm:$0xff]
        %v6628 = vld [vmem:[%s1281 + $0x330] sm:$0xff]
        %v6629 = vld [vmem:[%s1281 + $0x338] sm:$0xff]
        %v6630 = vld [vmem:[%s1281 + $0x340] sm:$0xff]
        %v6631 = vld [vmem:[%s1281 + $0x348] sm:$0xff]
        %v6632 = vld [vmem:[%s1281 + $0x350] sm:$0xff]
        %v6633 = vld [vmem:[%s1281 + $0x358] sm:$0xff]
        %v6634 = vld [vmem:[%s1281 + $0x360] sm:$0xff]
        %v6635 = vld [vmem:[%s1281 + $0x368] sm:$0xff]
        %v6636 = vld [vmem:[%s1281 + $0x370] sm:$0xff]
        %v6637 = vld [vmem:[%s1281 + $0x378] sm:$0xff]
        %v6638 = vld [vmem:[%s1281 + $0x380] sm:$0xff]
        %v6639 = vld [vmem:[%s1281 + $0x388] sm:$0xff]
        %v6640 = vld [vmem:[%s1281 + $0x390] sm:$0xff]
        %v6641 = vld [vmem:[%s1281 + $0x398] sm:$0xff]
        %v6642 = vld [vmem:[%s1281 + $0x3a0] sm:$0xff]
        %v6643 = vld [vmem:[%s1281 + $0x3a8] sm:$0xff]
        %v6644 = vld [vmem:[%s1281 + $0x3b0] sm:$0xff]
        %v6645 = vld [vmem:[%s1281 + $0x3b8] sm:$0xff]
        %v6646 = vld [vmem:[%s1281 + $0x3c0] sm:$0xff]
        %v6647 = vld [vmem:[%s1281 + $0x3c8] sm:$0xff]
        %v6648 = vld [vmem:[%s1281 + $0x3d0] sm:$0xff]
        %v6649 = vld [vmem:[%s1281 + $0x3d8] sm:$0xff]
        %v6650 = vld [vmem:[%s1281 + $0x3e0] sm:$0xff]
        %v6651 = vld [vmem:[%s1281 + $0x3e8] sm:$0xff]
        %v6652 = vld [vmem:[%s1281 + $0x3f0] sm:$0xff]
        %v6653 = vld [vmem:[%s1281 + $0x3f8] sm:$0xff]
        %v6654 = vld [vmem:[%s1290] sm:$0x3]
        %v6656 = vlaneseq
        %v6657 = vshrl.u32 %v6656, 7
        %v6658 = vsub.s32 0, %v6657
        %v6659 = vrot.slane %v6654, %v6658
        %v6660 = vlaneseq
        %v6661 = vshrl.u32 %v6660, 7
        %v6662 = vsub.s32 1, %v6661
        %v6663 = vrot.slane %v6654, %v6662
        %v6794 = vunpack.c.l.b16 %v6526
        %v6795 = vunpack.c.h.b16 %v6526
        %v6796 = vunpack.c.l.b16 %v6527
        %v6797 = vunpack.c.h.b16 %v6527
        %v6798 = vunpack.c.l.b16 %v6528
        %v6799 = vunpack.c.h.b16 %v6528
        %v6800 = vunpack.c.l.b16 %v6529
        %v6801 = vunpack.c.h.b16 %v6529
        %v6802 = vunpack.c.l.b16 %v6530
        %v6803 = vunpack.c.h.b16 %v6530
        %v6804 = vunpack.c.l.b16 %v6531
        %v6805 = vunpack.c.h.b16 %v6531
        %v6806 = vunpack.c.l.b16 %v6532
        %v6807 = vunpack.c.h.b16 %v6532
        %v6808 = vunpack.c.l.b16 %v6533
        %v6809 = vunpack.c.h.b16 %v6533
        %v6810 = vunpack.c.l.b16 %v6534
        %v6811 = vunpack.c.h.b16 %v6534
        %v6812 = vunpack.c.l.b16 %v6535
        %v6813 = vunpack.c.h.b16 %v6535
        %v6814 = vunpack.c.l.b16 %v6536
        %v6815 = vunpack.c.h.b16 %v6536
        %v6816 = vunpack.c.l.b16 %v6537
        %v6817 = vunpack.c.h.b16 %v6537
        %v6818 = vunpack.c.l.b16 %v6538
        %v6819 = vunpack.c.h.b16 %v6538
        %v6820 = vunpack.c.l.b16 %v6539
        %v6821 = vunpack.c.h.b16 %v6539
        %v6822 = vunpack.c.l.b16 %v6540
        %v6823 = vunpack.c.h.b16 %v6540
        %v6824 = vunpack.c.l.b16 %v6541
        %v6825 = vunpack.c.h.b16 %v6541
        %v6826 = vunpack.c.l.b16 %v6542
        %v6827 = vunpack.c.h.b16 %v6542
        %v6828 = vunpack.c.l.b16 %v6543
        %v6829 = vunpack.c.h.b16 %v6543
        %v6830 = vunpack.c.l.b16 %v6544
        %v6831 = vunpack.c.h.b16 %v6544
        %v6832 = vunpack.c.l.b16 %v6545
        %v6833 = vunpack.c.h.b16 %v6545
        %v6834 = vunpack.c.l.b16 %v6546
        %v6835 = vunpack.c.h.b16 %v6546
        %v6836 = vunpack.c.l.b16 %v6547
        %v6837 = vunpack.c.h.b16 %v6547
        %v6838 = vunpack.c.l.b16 %v6548
        %v6839 = vunpack.c.h.b16 %v6548
        %v6840 = vunpack.c.l.b16 %v6549
        %v6841 = vunpack.c.h.b16 %v6549
        %v6842 = vunpack.c.l.b16 %v6550
        %v6843 = vunpack.c.h.b16 %v6550
        %v6844 = vunpack.c.l.b16 %v6551
        %v6845 = vunpack.c.h.b16 %v6551
        %v6846 = vunpack.c.l.b16 %v6552
        %v6847 = vunpack.c.h.b16 %v6552
        %v6848 = vunpack.c.l.b16 %v6553
        %v6849 = vunpack.c.h.b16 %v6553
        %v6850 = vunpack.c.l.b16 %v6554
        %v6851 = vunpack.c.h.b16 %v6554
        %v6852 = vunpack.c.l.b16 %v6555
        %v6853 = vunpack.c.h.b16 %v6555
        %v6854 = vunpack.c.l.b16 %v6556
        %v6855 = vunpack.c.h.b16 %v6556
        %v6856 = vunpack.c.l.b16 %v6557
        %v6857 = vunpack.c.h.b16 %v6557
        %v6858 = vunpack.c.l.b16 %v6558
        %v6859 = vunpack.c.h.b16 %v6558
        %v6860 = vunpack.c.l.b16 %v6559
        %v6861 = vunpack.c.h.b16 %v6559
        %v6862 = vunpack.c.l.b16 %v6560
        %v6863 = vunpack.c.h.b16 %v6560
        %v6864 = vunpack.c.l.b16 %v6561
        %v6865 = vunpack.c.h.b16 %v6561
        %v6866 = vunpack.c.l.b16 %v6562
        %v6867 = vunpack.c.h.b16 %v6562
        %v6868 = vunpack.c.l.b16 %v6563
        %v6869 = vunpack.c.h.b16 %v6563
        %v6870 = vunpack.c.l.b16 %v6564
        %v6871 = vunpack.c.h.b16 %v6564
        %v6872 = vunpack.c.l.b16 %v6565
        %v6873 = vunpack.c.h.b16 %v6565
        %v6874 = vunpack.c.l.b16 %v6566
        %v6875 = vunpack.c.h.b16 %v6566
        %v6876 = vunpack.c.l.b16 %v6567
        %v6877 = vunpack.c.h.b16 %v6567
        %v6878 = vunpack.c.l.b16 %v6568
        %v6879 = vunpack.c.h.b16 %v6568
        %v6880 = vunpack.c.l.b16 %v6569
        %v6881 = vunpack.c.h.b16 %v6569
        %v6882 = vunpack.c.l.b16 %v6570
        %v6883 = vunpack.c.h.b16 %v6570
        %v6884 = vunpack.c.l.b16 %v6571
        %v6885 = vunpack.c.h.b16 %v6571
        %v6886 = vunpack.c.l.b16 %v6572
        %v6887 = vunpack.c.h.b16 %v6572
        %v6888 = vunpack.c.l.b16 %v6573
        %v6889 = vunpack.c.h.b16 %v6573
        %v6890 = vunpack.c.l.b16 %v6574
        %v6891 = vunpack.c.h.b16 %v6574
        %v6892 = vunpack.c.l.b16 %v6575
        %v6893 = vunpack.c.h.b16 %v6575
        %v6894 = vunpack.c.l.b16 %v6576
        %v6895 = vunpack.c.h.b16 %v6576
        %v6896 = vunpack.c.l.b16 %v6577
        %v6897 = vunpack.c.h.b16 %v6577
        %v6898 = vunpack.c.l.b16 %v6578
        %v6899 = vunpack.c.h.b16 %v6578
        %v6900 = vunpack.c.l.b16 %v6579
        %v6901 = vunpack.c.h.b16 %v6579
        %v6902 = vunpack.c.l.b16 %v6580
        %v6903 = vunpack.c.h.b16 %v6580
        %v6904 = vunpack.c.l.b16 %v6581
        %v6905 = vunpack.c.h.b16 %v6581
        %v6906 = vunpack.c.l.b16 %v6582
        %v6907 = vunpack.c.h.b16 %v6582
        %v6908 = vunpack.c.l.b16 %v6583
        %v6909 = vunpack.c.h.b16 %v6583
        %v6910 = vunpack.c.l.b16 %v6584
        %v6911 = vunpack.c.h.b16 %v6584
        %v6912 = vunpack.c.l.b16 %v6585
        %v6913 = vunpack.c.h.b16 %v6585
        %v6914 = vunpack.c.l.b16 %v6586
        %v6915 = vunpack.c.h.b16 %v6586
        %v6916 = vunpack.c.l.b16 %v6587
        %v6917 = vunpack.c.h.b16 %v6587
        %v6918 = vunpack.c.l.b16 %v6588
        %v6919 = vunpack.c.h.b16 %v6588
        %v6920 = vunpack.c.l.b16 %v6589
        %v6921 = vunpack.c.h.b16 %v6589
        %v6922 = vunpack.c.l.b16 %v6590
        %v6923 = vunpack.c.h.b16 %v6590
        %v6924 = vunpack.c.l.b16 %v6591
        %v6925 = vunpack.c.h.b16 %v6591
        %v6926 = vunpack.c.l.b16 %v6592
        %v6927 = vunpack.c.h.b16 %v6592
        %v6928 = vunpack.c.l.b16 %v6593
        %v6929 = vunpack.c.h.b16 %v6593
        %v6930 = vunpack.c.l.b16 %v6594
        %v6931 = vunpack.c.h.b16 %v6594
        %v6932 = vunpack.c.l.b16 %v6595
        %v6933 = vunpack.c.h.b16 %v6595
        %v6934 = vunpack.c.l.b16 %v6596
        %v6935 = vunpack.c.h.b16 %v6596
        %v6936 = vunpack.c.l.b16 %v6597
        %v6937 = vunpack.c.h.b16 %v6597
        %v6938 = vunpack.c.l.b16 %v6598
        %v6939 = vunpack.c.h.b16 %v6598
        %v6940 = vunpack.c.l.b16 %v6599
        %v6941 = vunpack.c.h.b16 %v6599
        %v6942 = vunpack.c.l.b16 %v6600
        %v6943 = vunpack.c.h.b16 %v6600
        %v6944 = vunpack.c.l.b16 %v6601
        %v6945 = vunpack.c.h.b16 %v6601
        %v6946 = vunpack.c.l.b16 %v6602
        %v6947 = vunpack.c.h.b16 %v6602
        %v6948 = vunpack.c.l.b16 %v6603
        %v6949 = vunpack.c.h.b16 %v6603
        %v6950 = vunpack.c.l.b16 %v6604
        %v6951 = vunpack.c.h.b16 %v6604
        %v6952 = vunpack.c.l.b16 %v6605
        %v6953 = vunpack.c.h.b16 %v6605
        %v6954 = vunpack.c.l.b16 %v6606
        %v6955 = vunpack.c.h.b16 %v6606
        %v6956 = vunpack.c.l.b16 %v6607
        %v6957 = vunpack.c.h.b16 %v6607
        %v6958 = vunpack.c.l.b16 %v6608
        %v6959 = vunpack.c.h.b16 %v6608
        %v6960 = vunpack.c.l.b16 %v6609
        %v6961 = vunpack.c.h.b16 %v6609
        %v6962 = vunpack.c.l.b16 %v6610
        %v6963 = vunpack.c.h.b16 %v6610
        %v6964 = vunpack.c.l.b16 %v6611
        %v6965 = vunpack.c.h.b16 %v6611
        %v6966 = vunpack.c.l.b16 %v6612
        %v6967 = vunpack.c.h.b16 %v6612
        %v6968 = vunpack.c.l.b16 %v6613
        %v6969 = vunpack.c.h.b16 %v6613
        %v6970 = vunpack.c.l.b16 %v6614
        %v6971 = vunpack.c.h.b16 %v6614
        %v6972 = vunpack.c.l.b16 %v6615
        %v6973 = vunpack.c.h.b16 %v6615
        %v6974 = vunpack.c.l.b16 %v6616
        %v6975 = vunpack.c.h.b16 %v6616
        %v6976 = vunpack.c.l.b16 %v6617
        %v6977 = vunpack.c.h.b16 %v6617
        %v6978 = vunpack.c.l.b16 %v6618
        %v6979 = vunpack.c.h.b16 %v6618
        %v6980 = vunpack.c.l.b16 %v6619
        %v6981 = vunpack.c.h.b16 %v6619
        %v6982 = vunpack.c.l.b16 %v6620
        %v6983 = vunpack.c.h.b16 %v6620
        %v6984 = vunpack.c.l.b16 %v6621
        %v6985 = vunpack.c.h.b16 %v6621
        %v6986 = vunpack.c.l.b16 %v6622
        %v6987 = vunpack.c.h.b16 %v6622
        %v6988 = vunpack.c.l.b16 %v6623
        %v6989 = vunpack.c.h.b16 %v6623
        %v6990 = vunpack.c.l.b16 %v6624
        %v6991 = vunpack.c.h.b16 %v6624
        %v6992 = vunpack.c.l.b16 %v6625
        %v6993 = vunpack.c.h.b16 %v6625
        %v6994 = vunpack.c.l.b16 %v6626
        %v6995 = vunpack.c.h.b16 %v6626
        %v6996 = vunpack.c.l.b16 %v6627
        %v6997 = vunpack.c.h.b16 %v6627
        %v6998 = vunpack.c.l.b16 %v6628
        %v6999 = vunpack.c.h.b16 %v6628
        %v7000 = vunpack.c.l.b16 %v6629
        %v7001 = vunpack.c.h.b16 %v6629
        %v7002 = vunpack.c.l.b16 %v6630
        %v7003 = vunpack.c.h.b16 %v6630
        %v7004 = vunpack.c.l.b16 %v6631
        %v7005 = vunpack.c.h.b16 %v6631
        %v7006 = vunpack.c.l.b16 %v6632
        %v7007 = vunpack.c.h.b16 %v6632
        %v7008 = vunpack.c.l.b16 %v6633
        %v7009 = vunpack.c.h.b16 %v6633
        %v7010 = vunpack.c.l.b16 %v6634
        %v7011 = vunpack.c.h.b16 %v6634
        %v7012 = vunpack.c.l.b16 %v6635
        %v7013 = vunpack.c.h.b16 %v6635
        %v7014 = vunpack.c.l.b16 %v6636
        %v7015 = vunpack.c.h.b16 %v6636
        %v7016 = vunpack.c.l.b16 %v6637
        %v7017 = vunpack.c.h.b16 %v6637
        %v7018 = vunpack.c.l.b16 %v6638
        %v7019 = vunpack.c.h.b16 %v6638
        %v7020 = vunpack.c.l.b16 %v6639
        %v7021 = vunpack.c.h.b16 %v6639
        %v7022 = vunpack.c.l.b16 %v6640
        %v7023 = vunpack.c.h.b16 %v6640
        %v7024 = vunpack.c.l.b16 %v6641
        %v7025 = vunpack.c.h.b16 %v6641
        %v7026 = vunpack.c.l.b16 %v6642
        %v7027 = vunpack.c.h.b16 %v6642
        %v7028 = vunpack.c.l.b16 %v6643
        %v7029 = vunpack.c.h.b16 %v6643
        %v7030 = vunpack.c.l.b16 %v6644
        %v7031 = vunpack.c.h.b16 %v6644
        %v7032 = vunpack.c.l.b16 %v6645
        %v7033 = vunpack.c.h.b16 %v6645
        %v7034 = vunpack.c.l.b16 %v6646
        %v7035 = vunpack.c.h.b16 %v6646
        %v7036 = vunpack.c.l.b16 %v6647
        %v7037 = vunpack.c.h.b16 %v6647
        %v7038 = vunpack.c.l.b16 %v6648
        %v7039 = vunpack.c.h.b16 %v6648
        %v7040 = vunpack.c.l.b16 %v6649
        %v7041 = vunpack.c.h.b16 %v6649
        %v7042 = vunpack.c.l.b16 %v6650
        %v7043 = vunpack.c.h.b16 %v6650
        %v7044 = vunpack.c.l.b16 %v6651
        %v7045 = vunpack.c.h.b16 %v6651
        %v7046 = vunpack.c.l.b16 %v6652
        %v7047 = vunpack.c.h.b16 %v6652
        %v7048 = vunpack.c.l.b16 %v6653
        %v7049 = vunpack.c.h.b16 %v6653
        %v7050 = vpack.c.b16 %v6796, %v6794
        %v7051 = vpack.c.b16 %v6797, %v6795
        %v7052 = vpack.c.b16 %v6800, %v6798
        %v7053 = vpack.c.b16 %v6801, %v6799
        %v7054 = vpack.c.b16 %v6804, %v6802
        %v7055 = vpack.c.b16 %v6805, %v6803
        %v7056 = vpack.c.b16 %v6808, %v6806
        %v7057 = vpack.c.b16 %v6809, %v6807
        %v7058 = vpack.c.b16 %v6812, %v6810
        %v7059 = vpack.c.b16 %v6813, %v6811
        %v7060 = vpack.c.b16 %v6816, %v6814
        %v7061 = vpack.c.b16 %v6817, %v6815
        %v7062 = vpack.c.b16 %v6820, %v6818
        %v7063 = vpack.c.b16 %v6821, %v6819
        %v7064 = vpack.c.b16 %v6824, %v6822
        %v7065 = vpack.c.b16 %v6825, %v6823
        %v7066 = vpack.c.b16 %v6828, %v6826
        %v7067 = vpack.c.b16 %v6829, %v6827
        %v7068 = vpack.c.b16 %v6832, %v6830
        %v7069 = vpack.c.b16 %v6833, %v6831
        %v7070 = vpack.c.b16 %v6836, %v6834
        %v7071 = vpack.c.b16 %v6837, %v6835
        %v7072 = vpack.c.b16 %v6840, %v6838
        %v7073 = vpack.c.b16 %v6841, %v6839
        %v7074 = vpack.c.b16 %v6844, %v6842
        %v7075 = vpack.c.b16 %v6845, %v6843
        %v7076 = vpack.c.b16 %v6848, %v6846
        %v7077 = vpack.c.b16 %v6849, %v6847
        %v7078 = vpack.c.b16 %v6852, %v6850
        %v7079 = vpack.c.b16 %v6853, %v6851
        %v7080 = vpack.c.b16 %v6856, %v6854
        %v7081 = vpack.c.b16 %v6857, %v6855
        %v7082 = vpack.c.b16 %v6860, %v6858
        %v7083 = vpack.c.b16 %v6861, %v6859
        %v7084 = vpack.c.b16 %v6864, %v6862
        %v7085 = vpack.c.b16 %v6865, %v6863
        %v7086 = vpack.c.b16 %v6868, %v6866
        %v7087 = vpack.c.b16 %v6869, %v6867
        %v7088 = vpack.c.b16 %v6872, %v6870
        %v7089 = vpack.c.b16 %v6873, %v6871
        %v7090 = vpack.c.b16 %v6876, %v6874
        %v7091 = vpack.c.b16 %v6877, %v6875
        %v7092 = vpack.c.b16 %v6880, %v6878
        %v7093 = vpack.c.b16 %v6881, %v6879
        %v7094 = vpack.c.b16 %v6884, %v6882
        %v7095 = vpack.c.b16 %v6885, %v6883
        %v7096 = vpack.c.b16 %v6888, %v6886
        %v7097 = vpack.c.b16 %v6889, %v6887
        %v7098 = vpack.c.b16 %v6892, %v6890
        %v7099 = vpack.c.b16 %v6893, %v6891
        %v7100 = vpack.c.b16 %v6896, %v6894
        %v7101 = vpack.c.b16 %v6897, %v6895
        %v7102 = vpack.c.b16 %v6900, %v6898
        %v7103 = vpack.c.b16 %v6901, %v6899
        %v7104 = vpack.c.b16 %v6904, %v6902
        %v7105 = vpack.c.b16 %v6905, %v6903
        %v7106 = vpack.c.b16 %v6908, %v6906
        %v7107 = vpack.c.b16 %v6909, %v6907
        %v7108 = vpack.c.b16 %v6912, %v6910
        %v7109 = vpack.c.b16 %v6913, %v6911
        %v7110 = vpack.c.b16 %v6916, %v6914
        %v7111 = vpack.c.b16 %v6917, %v6915
        %v7112 = vpack.c.b16 %v6920, %v6918
        %v7113 = vpack.c.b16 %v6921, %v6919
        %v7114 = vpack.c.b16 %v6924, %v6922
        %v7115 = vpack.c.b16 %v6925, %v6923
        %v7116 = vpack.c.b16 %v6928, %v6926
        %v7117 = vpack.c.b16 %v6929, %v6927
        %v7118 = vpack.c.b16 %v6932, %v6930
        %v7119 = vpack.c.b16 %v6933, %v6931
        %v7120 = vpack.c.b16 %v6936, %v6934
        %v7121 = vpack.c.b16 %v6937, %v6935
        %v7122 = vpack.c.b16 %v6940, %v6938
        %v7123 = vpack.c.b16 %v6941, %v6939
        %v7124 = vpack.c.b16 %v6944, %v6942
        %v7125 = vpack.c.b16 %v6945, %v6943
        %v7126 = vpack.c.b16 %v6948, %v6946
        %v7127 = vpack.c.b16 %v6949, %v6947
        %v7128 = vpack.c.b16 %v6952, %v6950
        %v7129 = vpack.c.b16 %v6953, %v6951
        %v7130 = vpack.c.b16 %v6956, %v6954
        %v7131 = vpack.c.b16 %v6957, %v6955
        %v7132 = vpack.c.b16 %v6960, %v6958
        %v7133 = vpack.c.b16 %v6961, %v6959
        %v7134 = vpack.c.b16 %v6964, %v6962
        %v7135 = vpack.c.b16 %v6965, %v6963
        %v7136 = vpack.c.b16 %v6968, %v6966
        %v7137 = vpack.c.b16 %v6969, %v6967
        %v7138 = vpack.c.b16 %v6972, %v6970
        %v7139 = vpack.c.b16 %v6973, %v6971
        %v7140 = vpack.c.b16 %v6976, %v6974
        %v7141 = vpack.c.b16 %v6977, %v6975
        %v7142 = vpack.c.b16 %v6980, %v6978
        %v7143 = vpack.c.b16 %v6981, %v6979
        %v7144 = vpack.c.b16 %v6984, %v6982
        %v7145 = vpack.c.b16 %v6985, %v6983
        %v7146 = vpack.c.b16 %v6988, %v6986
        %v7147 = vpack.c.b16 %v6989, %v6987
        %v7148 = vpack.c.b16 %v6992, %v6990
        %v7149 = vpack.c.b16 %v6993, %v6991
        %v7150 = vpack.c.b16 %v6996, %v6994
        %v7151 = vpack.c.b16 %v6997, %v6995
        %v7152 = vpack.c.b16 %v7000, %v6998
        %v7153 = vpack.c.b16 %v7001, %v6999
        %v7154 = vpack.c.b16 %v7004, %v7002
        %v7155 = vpack.c.b16 %v7005, %v7003
        %v7156 = vpack.c.b16 %v7008, %v7006
        %v7157 = vpack.c.b16 %v7009, %v7007
        %v7158 = vpack.c.b16 %v7012, %v7010
        %v7159 = vpack.c.b16 %v7013, %v7011
        %v7160 = vpack.c.b16 %v7016, %v7014
        %v7161 = vpack.c.b16 %v7017, %v7015
        %v7162 = vpack.c.b16 %v7020, %v7018
        %v7163 = vpack.c.b16 %v7021, %v7019
        %v7164 = vpack.c.b16 %v7024, %v7022
        %v7165 = vpack.c.b16 %v7025, %v7023
        %v7166 = vpack.c.b16 %v7028, %v7026
        %v7167 = vpack.c.b16 %v7029, %v7027
        %v7168 = vpack.c.b16 %v7032, %v7030
        %v7169 = vpack.c.b16 %v7033, %v7031
        %v7170 = vpack.c.b16 %v7036, %v7034
        %v7171 = vpack.c.b16 %v7037, %v7035
        %v7172 = vpack.c.b16 %v7040, %v7038
        %v7173 = vpack.c.b16 %v7041, %v7039
        %v7174 = vpack.c.b16 %v7044, %v7042
        %v7175 = vpack.c.b16 %v7045, %v7043
        %v7176 = vpack.c.b16 %v7048, %v7046
        %v7177 = vpack.c.b16 %v7049, %v7047
        %7306 = vmatprep.subr.bf16.mxu0 %v7051
        %7307 = vmatpush1.bf16.msra.mxu0 %v7050
        %7308 = vmatprep.subr.bf16.mxu0 %v7053
        %7309 = vmatpush1.bf16.msra.mxu0 %v7052
        %7310 = vmatprep.subr.bf16.mxu0 %v7055
        %7311 = vmatpush1.bf16.msra.mxu0 %v7054
        %7312 = vmatprep.subr.bf16.mxu0 %v7057
        %7313 = vmatpush1.bf16.msra.mxu0 %v7056
        %7314 = vmatprep.subr.bf16.mxu0 %v7059
        %7315 = vmatpush1.bf16.msra.mxu0 %v7058
        %7316 = vmatprep.subr.bf16.mxu0 %v7061
        %7317 = vmatpush1.bf16.msra.mxu0 %v7060
        %7318 = vmatprep.subr.bf16.mxu0 %v7063
        %7319 = vmatpush1.bf16.msra.mxu0 %v7062
        %7320 = vmatprep.subr.bf16.mxu0 %v7065
        %7321 = vmatpush1.bf16.msra.mxu0 %v7064
        %7322 = vmatprep.subr.bf16.mxu0 %v7067
        %7323 = vmatpush1.bf16.msra.mxu0 %v7066
        %7324 = vmatprep.subr.bf16.mxu0 %v7069
        %7325 = vmatpush1.bf16.msra.mxu0 %v7068
        %7326 = vmatprep.subr.bf16.mxu0 %v7071
        %7327 = vmatpush1.bf16.msra.mxu0 %v7070
        %7328 = vmatprep.subr.bf16.mxu0 %v7073
        %7329 = vmatpush1.bf16.msra.mxu0 %v7072
        %7330 = vmatprep.subr.bf16.mxu0 %v7075
        %7331 = vmatpush1.bf16.msra.mxu0 %v7074
        %7332 = vmatprep.subr.bf16.mxu0 %v7077
        %7333 = vmatpush1.bf16.msra.mxu0 %v7076
        %7334 = vmatprep.subr.bf16.mxu0 %v7079
        %7335 = vmatpush1.bf16.msra.mxu0 %v7078
        %7336 = vmatprep.subr.bf16.mxu0 %v7081
        %7337 = vmatpush1.bf16.msra.mxu0 %v7080
        %7338 = vmatprep.mubr.bf16.mxu0 %v6519
        %7339 = vmatmul.mubr.bf16.gmra.mrb[0].mxu0 %v6518
        %v7340 = vpop.f32.mrb[0].mxu0
        %v7341 = vadd.f32 %v6659, %v7340
        %v7342 = vpop.f32.mrb[0].mxu0
        %v7343 = vadd.f32 %v6663, %v7342
        %v7344 = vpop.f32.mrb[0].mxu0
        %v7345 = vpop.f32.mrb[0].mxu0
        %7346 = vdwg.mxu0
        %7347 = vmatprep.subr.bf16.mxu0 %v7083
        %7348 = vmatpush1.bf16.msra.mxu0 %v7082
        %7349 = vmatprep.subr.bf16.mxu0 %v7085
        %7350 = vmatpush1.bf16.msra.mxu0 %v7084
        %7351 = vmatprep.subr.bf16.mxu0 %v7087
        %7352 = vmatpush1.bf16.msra.mxu0 %v7086
        %7353 = vmatprep.subr.bf16.mxu0 %v7089
        %7354 = vmatpush1.bf16.msra.mxu0 %v7088
        %7355 = vmatprep.subr.bf16.mxu0 %v7091
        %7356 = vmatpush1.bf16.msra.mxu0 %v7090
        %7357 = vmatprep.subr.bf16.mxu0 %v7093
        %7358 = vmatpush1.bf16.msra.mxu0 %v7092
        %7359 = vmatprep.subr.bf16.mxu0 %v7095
        %7360 = vmatpush1.bf16.msra.mxu0 %v7094
        %7361 = vmatprep.subr.bf16.mxu0 %v7097
        %7362 = vmatpush1.bf16.msra.mxu0 %v7096
        %7363 = vmatprep.subr.bf16.mxu0 %v7099
        %7364 = vmatpush1.bf16.msra.mxu0 %v7098
        %7365 = vmatprep.subr.bf16.mxu0 %v7101
        %7366 = vmatpush1.bf16.msra.mxu0 %v7100
        %7367 = vmatprep.subr.bf16.mxu0 %v7103
        %7368 = vmatpush1.bf16.msra.mxu0 %v7102
        %7369 = vmatprep.subr.bf16.mxu0 %v7105
        %7370 = vmatpush1.bf16.msra.mxu0 %v7104
        %7371 = vmatprep.subr.bf16.mxu0 %v7107
        %7372 = vmatpush1.bf16.msra.mxu0 %v7106
        %7373 = vmatprep.subr.bf16.mxu0 %v7109
        %7374 = vmatpush1.bf16.msra.mxu0 %v7108
        %7375 = vmatprep.subr.bf16.mxu0 %v7111
        %7376 = vmatpush1.bf16.msra.mxu0 %v7110
        %7377 = vmatprep.subr.bf16.mxu0 %v7113
        %7378 = vmatpush1.bf16.msra.mxu0 %v7112
        %7379 = vmatprep.mubr.bf16.mxu0 %v6521
        %7380 = vmatmul.mubr.bf16.gmra.mrb[0].mxu0 %v6520
        %v7381 = vpop.f32.mrb[0].mxu0
        %v7382 = vadd.f32 %v7341, %v7381
        %v7383 = vpop.f32.mrb[0].mxu0
        %v7384 = vadd.f32 %v7343, %v7383
        %v7385 = vpop.f32.mrb[0].mxu0
        %v7386 = vpop.f32.mrb[0].mxu0
        %7387 = vdwg.mxu0
        %7388 = vmatprep.subr.bf16.mxu0 %v7115
        %7389 = vmatpush1.bf16.msra.mxu0 %v7114
        %7390 = vmatprep.subr.bf16.mxu0 %v7117
        %7391 = vmatpush1.bf16.msra.mxu0 %v7116
        %7392 = vmatprep.subr.bf16.mxu0 %v7119
        %7393 = vmatpush1.bf16.msra.mxu0 %v7118
        %7394 = vmatprep.subr.bf16.mxu0 %v7121
        %7395 = vmatpush1.bf16.msra.mxu0 %v7120
        %7396 = vmatprep.subr.bf16.mxu0 %v7123
        %7397 = vmatpush1.bf16.msra.mxu0 %v7122
        %7398 = vmatprep.subr.bf16.mxu0 %v7125
        %7399 = vmatpush1.bf16.msra.mxu0 %v7124
        %7400 = vmatprep.subr.bf16.mxu0 %v7127
        %7401 = vmatpush1.bf16.msra.mxu0 %v7126
        %7402 = vmatprep.subr.bf16.mxu0 %v7129
        %7403 = vmatpush1.bf16.msra.mxu0 %v7128
        %7404 = vmatprep.subr.bf16.mxu0 %v7131
        %7405 = vmatpush1.bf16.msra.mxu0 %v7130
        %7406 = vmatprep.subr.bf16.mxu0 %v7133
        %7407 = vmatpush1.bf16.msra.mxu0 %v7132
        %7408 = vmatprep.subr.bf16.mxu0 %v7135
        %7409 = vmatpush1.bf16.msra.mxu0 %v7134
        %7410 = vmatprep.subr.bf16.mxu0 %v7137
        %7411 = vmatpush1.bf16.msra.mxu0 %v7136
        %7412 = vmatprep.subr.bf16.mxu0 %v7139
        %7413 = vmatpush1.bf16.msra.mxu0 %v7138
        %7414 = vmatprep.subr.bf16.mxu0 %v7141
        %7415 = vmatpush1.bf16.msra.mxu0 %v7140
        %7416 = vmatprep.subr.bf16.mxu0 %v7143
        %7417 = vmatpush1.bf16.msra.mxu0 %v7142
        %7418 = vmatprep.subr.bf16.mxu0 %v7145
        %7419 = vmatpush1.bf16.msra.mxu0 %v7144
        %7420 = vmatprep.mubr.bf16.mxu0 %v6523
        %7421 = vmatmul.mubr.bf16.gmra.mrb[0].mxu0 %v6522
        %v7422 = vpop.f32.mrb[0].mxu0
        %v7423 = vadd.f32 %v7382, %v7422
        %v7424 = vpop.f32.mrb[0].mxu0
        %v7425 = vadd.f32 %v7384, %v7424
        %v7426 = vpop.f32.mrb[0].mxu0
        %v7427 = vpop.f32.mrb[0].mxu0
        %7428 = vdwg.mxu0
        %7429 = vmatprep.subr.bf16.mxu0 %v7147
        %7430 = vmatpush1.bf16.msra.mxu0 %v7146
        %7431 = vmatprep.subr.bf16.mxu0 %v7149
        %7432 = vmatpush1.bf16.msra.mxu0 %v7148
        %7433 = vmatprep.subr.bf16.mxu0 %v7151
        %7434 = vmatpush1.bf16.msra.mxu0 %v7150
        %7435 = vmatprep.subr.bf16.mxu0 %v7153
        %7436 = vmatpush1.bf16.msra.mxu0 %v7152
        %7437 = vmatprep.subr.bf16.mxu0 %v7155
        %7438 = vmatpush1.bf16.msra.mxu0 %v7154
        %7439 = vmatprep.subr.bf16.mxu0 %v7157
        %7440 = vmatpush1.bf16.msra.mxu0 %v7156
        %7441 = vmatprep.subr.bf16.mxu0 %v7159
        %7442 = vmatpush1.bf16.msra.mxu0 %v7158
        %7443 = vmatprep.subr.bf16.mxu0 %v7161
        %7444 = vmatpush1.bf16.msra.mxu0 %v7160
        %7445 = vmatprep.subr.bf16.mxu0 %v7163
        %7446 = vmatpush1.bf16.msra.mxu0 %v7162
        %7447 = vmatprep.subr.bf16.mxu0 %v7165
        %7448 = vmatpush1.bf16.msra.mxu0 %v7164
        %7449 = vmatprep.subr.bf16.mxu0 %v7167
        %7450 = vmatpush1.bf16.msra.mxu0 %v7166
        %7451 = vmatprep.subr.bf16.mxu0 %v7169
        %7452 = vmatpush1.bf16.msra.mxu0 %v7168
        %7453 = vmatprep.subr.bf16.mxu0 %v7171
        %7454 = vmatpush1.bf16.msra.mxu0 %v7170
        %7455 = vmatprep.subr.bf16.mxu0 %v7173
        %7456 = vmatpush1.bf16.msra.mxu0 %v7172
        %7457 = vmatprep.subr.bf16.mxu0 %v7175
        %7458 = vmatpush1.bf16.msra.mxu0 %v7174
        %7459 = vmatprep.subr.bf16.mxu0 %v7177
        %7460 = vmatpush1.bf16.msra.mxu0 %v7176
        %7461 = vmatprep.mubr.bf16.mxu0 %v6525
        %7462 = vmatmul.mubr.bf16.gmra.mrb[0].mxu0 %v6524
        %v7463 = vpop.f32.mrb[0].mxu0
        %v7464 = vadd.f32 %v7423, %v7463
        %v7465 = vpop.f32.mrb[0].mxu0
        %v7466 = vadd.f32 %v7425, %v7465
        %v7467 = vpop.f32.mrb[0].mxu0
        %v7468 = vpop.f32.mrb[0].mxu0
        %7469 = vdwg.mxu0
        %v7470 = vadd.f32 %v5468, %v7464
        %v7471 = vadd.f32 %v5469, %v7466
        %v7472 = vadd.f32 %v7470, %v7471
        %7473 = vadd.xlane.f32.xlu0 %v7472
        %v7474 = vpop.xlane.xlu0 %7473
        %v7475 = vmul.f32 %v7474, %v5428
        %v7476 = vsub.f32 %v7470, %v7475
        %v7477 = vsub.f32 %v7471, %v7475
        %v7478 = vmul.f32 %v7476, %v7476
        %v7479 = vmul.f32 %v7477, %v7477
        %v7480 = vadd.f32 %v7478, %v7479
        %7481 = vadd.xlane.f32.xlu0 %v7480
        %v7482 = vpop.xlane.xlu0 %7481
        %v7483 = vmul.f32 %v7482, %v5428
        %v7484 = vadd.f32 %v7483, 1e-05
        %v7485 = vrsqrt.pop %v7484
        %v7486 = vmul.f32 %v7476, %v7485
        %v7487 = vmul.f32 %v7477, %v7485
        %v7488 = vld [vmem:[%s1299] sm:$0x3]
        %v7490 = vlaneseq
        %v7491 = vshrl.u32 %v7490, 7
        %v7492 = vsub.s32 0, %v7491
        %v7493 = vrot.slane %v7488, %v7492
        %v7494 = vlaneseq
        %v7495 = vshrl.u32 %v7494, 7
        %v7496 = vsub.s32 1, %v7495
        %v7497 = vrot.slane %v7488, %v7496
        %v7500 = vmul.f32 %v7486, %v7493
        %v7501 = vmul.f32 %v7487, %v7497
        %v7502 = vld [vmem:[%s1308] sm:$0x3]
        %v7504 = vlaneseq
        %v7505 = vshrl.u32 %v7504, 7
        %v7506 = vsub.s32 0, %v7505
        %v7507 = vrot.slane %v7502, %v7506
        %v7508 = vlaneseq
        %v7509 = vshrl.u32 %v7508, 7
        %v7510 = vsub.s32 1, %v7509
        %v7511 = vrot.slane %v7502, %v7510
        %v7514 = vadd.f32 %v7500, %v7507
        %v7515 = vadd.f32 %v7501, %v7511
        %7516 = vst [vmem:[#allocation2] sm:$0xff] %v7514
        %7517 = vst [vmem:[#allocation2 + $0x8] sm:$0xff] %v7515
        %p7518 = scmp.eq.s32.totalorder %s70, 4
        // Predicated region
        $region229: #{transformer_encoder_8m.1} parent=127 // pred_check
          %p7519 = pneg %p7518
        $region230: #{transformer_encoder_8m.1} parent=127 // pred_check_branch
          %7521 = sbr.rel (%p7519) target = $region232
        $region231: #{transformer_encoder_8m.1} parent=127 // pred_region
          %v7522 = vld [vmem:[%s25] sm:$0xff]
          %v7523 = vld [vmem:[%s25 + $0x8] sm:$0xff]
          %v7524 = vld [vmem:[%s25 + $0x10] sm:$0xff]
          %v7525 = vld [vmem:[%s25 + $0x18] sm:$0xff]
          %v7526 = vld [vmem:[%s25 + $0x20] sm:$0xff]
          %v7527 = vld [vmem:[%s25 + $0x28] sm:$0xff]
          %v7528 = vld [vmem:[%s25 + $0x30] sm:$0xff]
          %v7529 = vld [vmem:[%s25 + $0x38] sm:$0xff]
          %v7530 = vld [vmem:[%s25 + $0x40] sm:$0xff]
          %v7531 = vld [vmem:[%s25 + $0x48] sm:$0xff]
          %v7532 = vld [vmem:[%s25 + $0x50] sm:$0xff]
          %v7533 = vld [vmem:[%s25 + $0x58] sm:$0xff]
          %v7534 = vld [vmem:[%s25 + $0x60] sm:$0xff]
          %v7535 = vld [vmem:[%s25 + $0x68] sm:$0xff]
          %v7536 = vld [vmem:[%s25 + $0x70] sm:$0xff]
          %v7537 = vld [vmem:[%s25 + $0x78] sm:$0xff]
          %v7538 = vld [vmem:[%s25 + $0x80] sm:$0xff]
          %v7539 = vld [vmem:[%s25 + $0x88] sm:$0xff]
          %v7540 = vld [vmem:[%s25 + $0x90] sm:$0xff]
          %v7541 = vld [vmem:[%s25 + $0x98] sm:$0xff]
          %v7542 = vld [vmem:[%s25 + $0xa0] sm:$0xff]
          %v7543 = vld [vmem:[%s25 + $0xa8] sm:$0xff]
          %v7544 = vld [vmem:[%s25 + $0xb0] sm:$0xff]
          %v7545 = vld [vmem:[%s25 + $0xb8] sm:$0xff]
          %v7546 = vld [vmem:[%s25 + $0xc0] sm:$0xff]
          %v7547 = vld [vmem:[%s25 + $0xc8] sm:$0xff]
          %v7548 = vld [vmem:[%s25 + $0xd0] sm:$0xff]
          %v7549 = vld [vmem:[%s25 + $0xd8] sm:$0xff]
          %v7550 = vld [vmem:[%s25 + $0xe0] sm:$0xff]
          %v7551 = vld [vmem:[%s25 + $0xe8] sm:$0xff]
          %v7552 = vld [vmem:[%s25 + $0xf0] sm:$0xff]
          %v7553 = vld [vmem:[%s25 + $0xf8] sm:$0xff]
          %v7554 = vld [vmem:[#allocation38] sm:$0x1]
          %v7556 = vlaneseq
          %v7557 = vshrl.u32 %v7556, 7
          %v7558 = vsub.s32 0, %v7557
          %v7559 = vrot.slane %v7554, %v7558
          %7561 = vmatprep.subr.mxu0 0.0
          %7562 = vmatpush1.msra.mxu0 %v7522
          %7563 = vmatprep.subr.mxu0 0.0
          %7564 = vmatpush1.msra.mxu0 %v7523
          %7565 = vmatprep.subr.mxu0 0.0
          %7566 = vmatpush1.msra.mxu0 %v7524
          %7567 = vmatprep.subr.mxu0 0.0
          %7568 = vmatpush1.msra.mxu0 %v7525
          %7569 = vmatprep.subr.mxu0 0.0
          %7570 = vmatpush1.msra.mxu0 %v7526
          %7571 = vmatprep.subr.mxu0 0.0
          %7572 = vmatpush1.msra.mxu0 %v7527
          %7573 = vmatprep.subr.mxu0 0.0
          %7574 = vmatpush1.msra.mxu0 %v7528
          %7575 = vmatprep.subr.mxu0 0.0
          %7576 = vmatpush1.msra.mxu0 %v7529
          %7577 = vmatprep.subr.mxu0 0.0
          %7578 = vmatpush1.msra.mxu0 %v7530
          %7579 = vmatprep.subr.mxu0 0.0
          %7580 = vmatpush1.msra.mxu0 %v7531
          %7581 = vmatprep.subr.mxu0 0.0
          %7582 = vmatpush1.msra.mxu0 %v7532
          %7583 = vmatprep.subr.mxu0 0.0
          %7584 = vmatpush1.msra.mxu0 %v7533
          %7585 = vmatprep.subr.mxu0 0.0
          %7586 = vmatpush1.msra.mxu0 %v7534
          %7587 = vmatprep.subr.mxu0 0.0
          %7588 = vmatpush1.msra.mxu0 %v7535
          %7589 = vmatprep.subr.mxu0 0.0
          %7590 = vmatpush1.msra.mxu0 %v7536
          %7591 = vmatprep.subr.mxu0 0.0
          %7592 = vmatpush1.msra.mxu0 %v7537
          %7593 = vmatprep.subr.mxu0 0.0
          %7594 = vmatpush1.msra.mxu0 %v7538
          %7595 = vmatprep.subr.mxu0 0.0
          %7596 = vmatpush1.msra.mxu0 %v7539
          %7597 = vmatprep.subr.mxu0 0.0
          %7598 = vmatpush1.msra.mxu0 %v7540
          %7599 = vmatprep.subr.mxu0 0.0
          %7600 = vmatpush1.msra.mxu0 %v7541
          %7601 = vmatprep.subr.mxu0 0.0
          %7602 = vmatpush1.msra.mxu0 %v7542
          %7603 = vmatprep.subr.mxu0 0.0
          %7604 = vmatpush1.msra.mxu0 %v7543
          %7605 = vmatprep.subr.mxu0 0.0
          %7606 = vmatpush1.msra.mxu0 %v7544
          %7607 = vmatprep.subr.mxu0 0.0
          %7608 = vmatpush1.msra.mxu0 %v7545
          %7609 = vmatprep.subr.mxu0 0.0
          %7610 = vmatpush1.msra.mxu0 %v7546
          %7611 = vmatprep.subr.mxu0 0.0
          %7612 = vmatpush1.msra.mxu0 %v7547
          %7613 = vmatprep.subr.mxu0 0.0
          %7614 = vmatpush1.msra.mxu0 %v7548
          %7615 = vmatprep.subr.mxu0 0.0
          %7616 = vmatpush1.msra.mxu0 %v7549
          %7617 = vmatprep.subr.mxu0 0.0
          %7618 = vmatpush1.msra.mxu0 %v7550
          %7619 = vmatprep.subr.mxu0 0.0
          %7620 = vmatpush1.msra.mxu0 %v7551
          %7621 = vmatprep.subr.mxu0 0.0
          %7622 = vmatpush1.msra.mxu0 %v7552
          %7623 = vmatprep.subr.mxu0 0.0
          %7624 = vmatpush1.msra.mxu0 %v7553
          %7625 = vmatprep.mubr.f32.mxu0 %v7515
          %7626 = vmatmul.mubr.f32.gmra.mrb[0].mxu0 %v7514
          %v7627 = vpop.f32.mrb[0].mxu0
          %v7628 = vadd.f32 %v7559, %v7627
          %v7629 = vpop.f32.mrb[0].mxu0
          %7630 = vdwg.mxu0
          %vm7631 = vcmask 15360
          %7632 = vst.msk [vmem:[%s1451] sm:$0xff] %vm7631, %v7628
        $region232: #{transformer_encoder_8m.1} parent=127 // pred_fallthru
          _
        %p7633 = scmp.lt.s32.totalorder %s69, 1
        %s7634 = scalar_select %p7633, %s69, 1
        %s7635 = smul.addr %s7634, 8
        %s7636 = scalar_lea.vmem %s27, %s7635
        // Predicated region
        $region233: #{transformer_encoder_8m.1} parent=127 // pred_check
          %p7637 = pneg %p732
        $region234: #{transformer_encoder_8m.1} parent=127 // pred_check_branch
          %7639 = sbr.rel (%p7637) target = $region236
        $region235: #{transformer_encoder_8m.1} parent=127 // pred_region
          _
        $region236: #{transformer_encoder_8m.1} parent=127 // pred_fallthru
          _
      $region128: #{transformer_encoder_8m.1} parent=5 // pred_fallthru
        _
      %p7640 = scmp.le.s32.totalorder 2, %s60
      // Predicated region
      $region237: #{transformer_encoder_8m.1} parent=5 // pred_check
        %p7641 = pneg %p7640
      $region238: #{transformer_encoder_8m.1} parent=5 // pred_check_branch
        %7643 = sbr.rel (%p7641) target = $region240
      $region239: #{transformer_encoder_8m.1} parent=5 // pred_region
        %s7644 = ssub.s32 %s60, 2
        // Predicated region
        $region241: #{transformer_encoder_8m.1} parent=239 // pred_check
          %p7645 = pneg %p738
        $region242: #{transformer_encoder_8m.1} parent=239 // pred_check_branch
          %7647 = sbr.rel (%p7645) target = $region244
        $region243: #{transformer_encoder_8m.1} parent=239 // pred_region
          %p7648 = scmp.lt.s32.totalorder %s71, 1
          %s7649 = scalar_select %p7648, %s71, 1
          %s7650 = smul.addr %s7649, 8
          %s7651 = scalar_lea.vmem %s27, %s7650
        $region244: #{transformer_encoder_8m.1} parent=239 // pred_fallthru
          _
      $region240: #{transformer_encoder_8m.1} parent=5 // pred_fallthru
        _
    $region6: #{transformer_encoder_8m.1} parent=1 // loop_footer
      %s64 = sadd.s32 1, %s60
    $region7: #{transformer_encoder_8m.1} parent=1 // loop_footer_branch
      %59 = sbr.rel target = $region3
    $region8: #{transformer_encoder_8m.1} parent=1 // loop_exit
      _
    %7652 = vsyncpa [#allocation4], 1
    %s7653 = scalar_lea.sflag [#allocation4], 1
    %7654 = vsyncpa %s7653, 1
    %7655 = vsyncpa [#allocation6], 1
    %7656 = vsyncpa [#allocation9], 1
    %7657 = vsyncpa [#allocation12], 1
    %7658 = vsyncpa [#allocation15], 1
    %7659 = vsyncpa [#allocation18], 1
    %7660 = vsyncpa [#allocation21], 1
    %s7661 = scalar_lea.sflag [#allocation21], 1
    %7662 = vsyncpa %s7661, 1
    %7663 = vsyncpa [#allocation24], 1
    %s7664 = scalar_lea.sflag [#allocation24], 1
    %7665 = vsyncpa %s7664, 1
    %7666 = vsyncpa [#allocation27], 1
    %s7667 = scalar_lea.sflag [#allocation27], 1
    %7668 = vsyncpa %s7667, 1
    %7669 = vsyncpa [#allocation30], 1
    %s7670 = scalar_lea.sflag [#allocation30], 1
    %7671 = vsyncpa %s7670, 1
    %7672 = vsyncpa [#allocation33], 1
    %s7673 = scalar_lea.sflag [#allocation33], 1
    %7674 = vsyncpa %s7673, 1
    %7675 = vsyncpa [#allocation36], 1
    %s7676 = scalar_lea.sflag [#allocation36], 1
    %7677 = vsyncpa %s7676, 1
    %7678 = vsyncpa [#allocation39], 1

</llo_original>
